<compile_context>
chip_gen: v7x
topology: tpu7x:2x2x1
jax: 0.10.0
libtpu: 0.0.40
codegen_flags: <defaults>
</compile_context>

<pallas_src>
import functools
import math

import jax
import jax.numpy as jnp
from jax.experimental import pallas as pl
from jax.experimental.pallas import tpu as pltpu


# 48 MiB scoped VMEM: above v5e's 16 MiB default (weight residency needs it), below v7x's
# 64 MiB physical budget.
VMEM_LIMIT_BYTES = 48 * 1024 * 1024


def _pick_tile(dim, pref, align):
    """Largest tile <= pref that divides dim and is a multiple of align, else full dim."""
    if dim <= pref:
        return dim
    t = (pref // align) * align
    while t >= align:
        if dim % t == 0:
            return t
        t -= align
    return dim


# ---------------------- weight-resident fused linear ------------------------

def _linear_kernel(*refs, normalize, activation, has_residual, eps):
    """One row-tile per grid step: y = act(LNnorm?(x) @ W + b) (+ residual).

    Weights are full-(K,N) and resident in VMEM (constant index_map); LN gamma/beta are already
    folded into W/b at init, so `normalize` only does mean/var/rsqrt.
    """
    if has_residual:
        x_ref, w_ref, b_ref, r_ref, o_ref = refs
    else:
        x_ref, w_ref, b_ref, o_ref = refs

    if normalize:
        x = x_ref[...].astype(jnp.float32)
        mean = jnp.mean(x, axis=-1, keepdims=True)
        xc = x - mean
        var = jnp.mean(xc * xc, axis=-1, keepdims=True)
        x_mm = (xc * jax.lax.rsqrt(var + eps)).astype(jnp.bfloat16)
    else:
        x_mm = x_ref[...]

    y = jnp.dot(x_mm, w_ref[...], preferred_element_type=jnp.float32) + b_ref[...]
    if activation == "relu":
        y = jnp.maximum(y, 0.0)
    elif activation == "gelu":
        y = jax.nn.gelu(y, approximate=True)
    if has_residual:
        # Output is written only here (single step per (i) block), after r_ref was read:
        # this makes the residual->output buffer alias safe.
        y = y + r_ref[...].astype(jnp.float32)
    o_ref[...] = y.astype(o_ref.dtype)


def linear(x, w, b, *, normalize=False, activation="none", residual=None, eps=1e-5):
    """x:[M,K], w:[K,N] bf16, b:[N] f32 -> [M,N] bf16.  Grid over M row-tiles only."""
    M, K = x.shape
    Kw, N = w.shape
    assert K == Kw, (K, Kw)
    x = x.astype(jnp.bfloat16)
    w = w.astype(jnp.bfloat16)
    b2 = b.reshape(1, N).astype(jnp.float32)

    tm = _pick_tile(M, 256, 8)          # 256 rows feed the v6e/v7x 256x256 MXU; fine on v5e too
    grid = (M // tm,)

    args = [x, w, b2]
    in_specs = [
        pl.BlockSpec((tm, K), lambda i: (i, 0)),
        pl.BlockSpec((K, N), lambda i: (0, 0)),    # constant index -> weight resident in VMEM
        pl.BlockSpec((1, N), lambda i: (0, 0)),
    ]
    io_alias = {}
    if residual is not None:
        args.append(residual.astype(jnp.bfloat16))
        in_specs.append(pl.BlockSpec((tm, N), lambda i: (i, 0)))
        io_alias = {len(args) - 1: 0}   # residual HBM buffer reused as the output buffer

    kernel = functools.partial(_linear_kernel, normalize=normalize, activation=activation,
                               has_residual=residual is not None, eps=eps)
    return pl.pallas_call(
        kernel,
        out_shape=jax.ShapeDtypeStruct((M, N), jnp.bfloat16),
        grid=grid,
        in_specs=in_specs,
        out_specs=pl.BlockSpec((tm, N), lambda i: (i, 0)),
        input_output_aliases=io_alias,
        compiler_params=pltpu.CompilerParams(
            dimension_semantics=("parallel",),
            vmem_limit_bytes=VMEM_LIMIT_BYTES),
    )(*args)


# ----------------------------- standalone LN --------------------------------

def _layernorm_kernel(x_ref, g_ref, b_ref, o_ref, *, eps):
    x = x_ref[...].astype(jnp.float32)
    mean = jnp.mean(x, axis=-1, keepdims=True)
    xc = x - mean
    var = jnp.mean(xc * xc, axis=-1, keepdims=True)
    o_ref[...] = (xc * jax.lax.rsqrt(var + eps) * g_ref[...] + b_ref[...]).astype(o_ref.dtype)


def layernorm(x, gamma, beta, eps=1e-5):
    """Only used for ln_pre (its output IS the residual stream, so it cannot be folded)."""
    M, D = x.shape
    tm = _pick_tile(M, 256, 8)
    return pl.pallas_call(
        functools.partial(_layernorm_kernel, eps=eps),
        out_shape=jax.ShapeDtypeStruct((M, D), jnp.bfloat16),
        grid=(M // tm,),
        in_specs=[pl.BlockSpec((tm, D), lambda i: (i, 0)),
                  pl.BlockSpec((1, D), lambda i: (0, 0)),
                  pl.BlockSpec((1, D), lambda i: (0, 0))],
        out_specs=pl.BlockSpec((tm, D), lambda i: (i, 0)),
        compiler_params=pltpu.CompilerParams(dimension_semantics=("parallel",)),
    )(x.astype(jnp.bfloat16), gamma.reshape(1, D).astype(jnp.float32),
      beta.reshape(1, D).astype(jnp.float32))


# -------------------------------- attention ---------------------------------

def _attention_kernel(qkv_ref, o_ref, *, heads, head_dim, width, valid_len):
    """All heads of one batch element.  Static per-head lane slices + plain 2-D MXU matmuls
    (no (S,H,Dh) reshape / head transpose); lane-dense (S, width) output.  The 1/sqrt(Dh)
    scale is folded into the q columns of w_qkv at init."""
    S = qkv_ref.shape[1]
    key_mask = jax.lax.broadcasted_iota(jnp.int32, (1, S), 1) < valid_len
    for h in range(heads):
        lo = h * head_dim
        q = qkv_ref[0, :, lo:lo + head_dim]                            # (S, Dh) bf16
        k = qkv_ref[0, :, width + lo:width + lo + head_dim]            # (S, Dh)
        v = qkv_ref[0, :, 2 * width + lo:2 * width + lo + head_dim]    # (S, Dh)
        s = jax.lax.dot_general(q, k, (((1,), (1,)), ((), ())),
                                preferred_element_type=jnp.float32)    # (S, S) = q @ k^T
        s = jnp.where(key_mask, s, -1e30)                              # mask padded keys
        s = s - jnp.max(s, axis=-1, keepdims=True)
        p = jnp.exp(s)
        p = p * pl.reciprocal(jnp.sum(p, axis=-1, keepdims=True), approx=True)
        o = jnp.dot(p.astype(jnp.bfloat16), v, preferred_element_type=jnp.float32)
        o_ref[0, :, lo:lo + head_dim] = o.astype(o_ref.dtype)


def attention(qkv, *, heads, valid_len):
    """Non-causal MHA.  qkv: [B, S, 3*width] -> [B, S, width]."""
    B, S, threeW = qkv.shape
    width = threeW // 3
    head_dim = width // heads
    return pl.pallas_call(
        functools.partial(_attention_kernel, heads=heads, head_dim=head_dim,
                          width=width, valid_len=valid_len),
        out_shape=jax.ShapeDtypeStruct((B, S, width), jnp.bfloat16),
        grid=(B,),
        in_specs=[pl.BlockSpec((1, S, threeW), lambda b: (b, 0, 0))],
        out_specs=pl.BlockSpec((1, S, width), lambda b: (b, 0, 0)),
        compiler_params=pltpu.CompilerParams(
            dimension_semantics=("parallel",),
            vmem_limit_bytes=VMEM_LIMIT_BYTES),
    )(qkv.astype(jnp.bfloat16))


# ------------------------- fused pooled head ---------------------------------

def _head_kernel(x_ref, pw_ref, pb_ref, w1_ref, b1_ref, w2_ref, b2_ref, o_ref, *, eps):
    """ln_post-normalize (gamma/beta folded into proj) -> visual proj -> Linear -> ReLU -> Linear."""
    x = x_ref[...].astype(jnp.float32)
    mean = jnp.mean(x, axis=-1, keepdims=True)
    xc = x - mean
    var = jnp.mean(xc * xc, axis=-1, keepdims=True)
    xn = (xc * jax.lax.rsqrt(var + eps)).astype(jnp.bfloat16)

    feat = jnp.dot(xn, pw_ref[...], preferred_element_type=jnp.float32) + pb_ref[...]
    h = jnp.dot(feat.astype(jnp.bfloat16), w1_ref[...],
                preferred_element_type=jnp.float32) + b1_ref[...]
    h = jnp.maximum(h, 0.0)
    y = jnp.dot(h.astype(jnp.bfloat16), w2_ref[...],
                preferred_element_type=jnp.float32) + b2_ref[...]
    o_ref[...] = y.astype(o_ref.dtype)


def head_forward(cls_tok, proj_w, proj_b, w1, b1, w2, b2, eps=1e-5):
    B, width = cls_tok.shape
    feat_dim = proj_w.shape[1]
    hidden = w1.shape[1]
    embed = w2.shape[1]
    tb = _pick_tile(B, 256, 8)
    return pl.pallas_call(
        functools.partial(_head_kernel, eps=eps),
        out_shape=jax.ShapeDtypeStruct((B, embed), jnp.float32),
        grid=(B // tb,),
        in_specs=[
            pl.BlockSpec((tb, width), lambda i: (i, 0)),
            pl.BlockSpec((width, feat_dim), lambda i: (0, 0)),
            pl.BlockSpec((1, feat_dim), lambda i: (0, 0)),
            pl.BlockSpec((feat_dim, hidden), lambda i: (0, 0)),
            pl.BlockSpec((1, hidden), lambda i: (0, 0)),
            pl.BlockSpec((hidden, embed), lambda i: (0, 0)),
            pl.BlockSpec((1, embed), lambda i: (0, 0)),
        ],
        out_specs=pl.BlockSpec((tb, embed), lambda i: (i, 0)),
        compiler_params=pltpu.CompilerParams(
            dimension_semantics=("parallel",),
            vmem_limit_bytes=VMEM_LIMIT_BYTES),
    )(cls_tok.astype(jnp.bfloat16),
      proj_w.astype(jnp.bfloat16), proj_b.reshape(1, feat_dim).astype(jnp.float32),
      w1.astype(jnp.bfloat16), b1.reshape(1, hidden).astype(jnp.float32),
      w2.astype(jnp.bfloat16), b2.reshape(1, embed).astype(jnp.float32))


# ----------------------------- Parameter init --------------------------------

def init_raw_params(key, *, width, layers, patch, in_ch, feature_dim, mlp_hidden,
                    embed_dim, seq):
    """Raw f32 parameters (stand-in for the frozen open_clip checkpoint)."""
    keys = iter(jax.random.split(key, 64 + 8 * layers))

    def nrm(shape, std=0.02):
        return jax.random.normal(next(keys), shape, jnp.float32) * std

    def ln():
        return (1.0 + nrm((width,)), nrm((width,)))

    params = {
        # Conv2d(3, width, P, stride=P, bias=False), pre-flattened to [C*P*P, width]
        "conv_w": nrm((in_ch * patch * patch, width)),
        "cls": nrm((width,)),
        "pos": nrm((seq, width)),
        "ln_pre": ln(),
        "ln_post": ln(),
        "proj": nrm((width, feature_dim)),            # CLIP visual projection (no bias)
        "mlp_w1": nrm((feature_dim, mlp_hidden)),     # trainable MLP head
        "mlp_b1": jnp.zeros((mlp_hidden,), jnp.float32),
        "mlp_w2": nrm((mlp_hidden, embed_dim)),
        "mlp_b2": jnp.zeros((embed_dim,), jnp.float32),
        "blocks": [dict(
            ln1=ln(),
            w_qkv=nrm((width, 3 * width)), b_qkv=jnp.zeros((3 * width,), jnp.float32),
            w_o=nrm((width, width)), b_o=jnp.zeros((width,), jnp.float32),
            ln2=ln(),
            w_fc=nrm((width, 4 * width)), b_fc=jnp.zeros((4 * width,), jnp.float32),
            w_pr=nrm((4 * width, width)), b_pr=jnp.zeros((width,), jnp.float32),
        ) for _ in range(layers)],
    }
    return params


def fold_frozen_params(raw, *, width, heads):
    """Host-side, zero-runtime-cost transform on the FROZEN backbone:
       x_norm*g + bt followed by @W + b  ==  x_norm @ (diag(g) W) + (bt @ W + b)
       plus the attention scale folded into the q columns of w_qkv / b_qkv,
       and ln_post folded into the bias-free CLIP visual projection."""
    head_dim = width // heads
    scale = 1.0 / math.sqrt(head_dim)

    def fold_ln(gamma, beta, w, b):
        return w * gamma[:, None], b + beta @ w

    def bf16(a):
        return a.astype(jnp.bfloat16)

    g_post, bt_post = raw["ln_post"]
    p = {
        "conv_w": bf16(raw["conv_w"]),
        "cls": raw["cls"],
        "pos": raw["pos"],
        "ln_pre": raw["ln_pre"],                       # standalone (output is the residual stream)
        "proj_w": bf16(raw["proj"] * g_post[:, None]),
        "proj_b": bt_post @ raw["proj"],
        "mlp_w1": bf16(raw["mlp_w1"]), "mlp_b1": raw["mlp_b1"],
        "mlp_w2": bf16(raw["mlp_w2"]), "mlp_b2": raw["mlp_b2"],
    }
    blocks = []
    for blk in raw["blocks"]:
        g1, bt1 = blk["ln1"]
        w_qkv, b_qkv = fold_ln(g1, bt1, blk["w_qkv"], blk["b_qkv"])
        w_qkv = w_qkv.at[:, :width].multiply(scale)    # fold 1/sqrt(Dh) into q columns
        b_qkv = b_qkv.at[:width].multiply(scale)
        g2, bt2 = blk["ln2"]
        w_fc, b_fc = fold_ln(g2, bt2, blk["w_fc"], blk["b_fc"])
        blocks.append(dict(
            w_qkv=bf16(w_qkv), b_qkv=b_qkv,
            w_o=bf16(blk["w_o"]), b_o=blk["b_o"],
            w_fc=bf16(w_fc), b_fc=b_fc,
            w_pr=bf16(blk["w_pr"]), b_pr=blk["b_pr"],
        ))
    p["blocks"] = blocks
    return p


# ------------------------------- Forward pass ---------------------------------

def image_encoder_forward(params, x, *, patch, heads, seq_valid, seq_pad):
    # layout: x is NCHW float32 [B, 3, H, W]  (PyTorch convention)
    B, C, H, W = x.shape
    gh, gw = H // patch, W // patch
    n_patch = gh * gw
    width = params["pos"].shape[1]

    # --- patch embedding: Conv2d(3, width, P, stride=P, bias=False) == patchify + matmul ---
    patches = x.reshape(B, C, gh, patch, gw, patch)
    patches = patches.transpose(0, 2, 4, 1, 3, 5).reshape(B * n_patch, C * patch * patch)
    tok = linear(patches, params["conv_w"], jnp.zeros((width,), jnp.float32))
    tok = tok.reshape(B, n_patch, width)

    # --- class token + positional embedding, padded to a multiple-of-16 sequence length ---
    cls = jnp.broadcast_to(params["cls"].reshape(1, 1, width), (B, 1, width)).astype(jnp.bfloat16)
    xt = jnp.concatenate([cls, tok], axis=1) + params["pos"][None].astype(jnp.bfloat16)
    xt = jnp.pad(xt, ((0, 0), (0, seq_pad - seq_valid), (0, 0)))   # padded keys masked in attn
    xt = xt.reshape(B * seq_pad, width)

    # --- ln_pre (standalone: its output IS the residual stream) ---
    xt = layernorm(xt, *params["ln_pre"])

    # --- transformer residual blocks (ln1/ln2 gamma/beta + attn scale folded into weights) ---
    for blk in params["blocks"]:
        qkv = linear(xt, blk["w_qkv"], blk["b_qkv"], normalize=True)          # [B*S, 3W]
        a = attention(qkv.reshape(B, seq_pad, 3 * width),
                      heads=heads, valid_len=seq_valid)                        # [B, S, W]
        xt = linear(a.reshape(B * seq_pad, width), blk["w_o"], blk["b_o"], residual=xt)
        h2 = linear(xt, blk["w_fc"], blk["b_fc"], normalize=True, activation="gelu")
        xt = linear(h2, blk["w_pr"], blk["b_pr"], residual=xt)

    # --- pool class token -> fused (folded) ln_post + visual proj + trainable MLP head ---
    cls_tok = xt.reshape(B, seq_pad, width)[:, 0, :]                           # [B, width]
    return head_forward(cls_tok, params["proj_w"], params["proj_b"],
                        params["mlp_w1"], params["mlp_b1"],
                        params["mlp_w2"], params["mlp_b2"])                    # [B, embed] f32


# ----------------------------------- Main --------------------------------------

if __name__ == "__main__":
    # Scaled-down ViT config for the demo (true ViT-B-16: width=768, layers=12, heads=12,
    # image 224x224, seq 197 -> pad 208).  Head dims (512 -> 1024 -> 512) match the module.
    B, C, IMG, PATCH = 2, 3, 32, 16
    WIDTH, HEADS, LAYERS = 128, 4, 2
    FEATURE_DIM, MLP_HIDDEN, EMBED_DIM = 512, 1024, 512
    SEQ = (IMG // PATCH) ** 2 + 1           # 5 tokens (4 patches + cls)
    SEQ_PAD = ((SEQ + 15) // 16) * 16       # pad to a multiple of 16 (bf16 sublane packing)

    key = jax.random.PRNGKey(0)
    pkey, xkey = jax.random.split(key)
    raw = init_raw_params(pkey, width=WIDTH, layers=LAYERS, patch=PATCH, in_ch=C,
                          feature_dim=FEATURE_DIM, mlp_hidden=MLP_HIDDEN,
                          embed_dim=EMBED_DIM, seq=SEQ)
    params = fold_frozen_params(raw, width=WIDTH, heads=HEADS)
    x = jax.random.normal(xkey, (B, C, IMG, IMG), jnp.float32)

    fwd = jax.jit(functools.partial(image_encoder_forward, patch=PATCH, heads=HEADS,
                                    seq_valid=SEQ, seq_pad=SEQ_PAD))
    out = jax.block_until_ready(fwd(params, x))
    assert out.shape == (B, EMBED_DIM), out.shape
    assert bool(jnp.all(jnp.isfinite(out)))
    print("KERNEL_OK")
</pallas_src>

<mosaic_0001>
module attributes {stable_mosaic.version = 11 : i64} {
  func.func @_linear_kernel(%arg0: i32, %arg1: memref<8x768xbf16, #tpu.memory_space<vmem>>, %arg2: memref<768x128xbf16, #tpu.memory_space<vmem>>, %arg3: memref<1x128xf32, #tpu.memory_space<vmem>>, %arg4: memref<8x128xbf16, #tpu.memory_space<vmem>>) attributes {dimension_semantics = [#tpu.dimension_semantics<parallel>], iteration_bounds = array<i64: 1>, scalar_prefetch = 0 : i64, scratch_operands = 0 : i64, tpu.core_type = #tpu.core_type<tc>, window_params = [{transform_indices = @transform_0, window_bounds = array<i64: 8, 768>}, {pipeline_mode = #tpu.pipeline_mode<synchronous>, transform_indices = @transform_1, window_bounds = array<i64: 768, 128>}, {pipeline_mode = #tpu.pipeline_mode<synchronous>, transform_indices = @transform_2, window_bounds = array<i64: 1, 128>}, {transform_indices = @transform_3, window_bounds = array<i64: 8, 128>}]} {
    %c0 = arith.constant 0 : index
    %c0_0 = arith.constant 0 : index
    %0 = vector.load %arg1[%c0, %c0_0] : memref<8x768xbf16, #tpu.memory_space<vmem>>, vector<8x768xbf16>
    %c0_1 = arith.constant 0 : index
    %c0_2 = arith.constant 0 : index
    %1 = vector.load %arg2[%c0_1, %c0_2] : memref<768x128xbf16, #tpu.memory_space<vmem>>, vector<768x128xbf16>
    %cst = arith.constant dense<0.000000e+00> : vector<8x128xf32>
    %2 = tpu.matmul %0, %1, %cst {dimension_numbers = #tpu.dot_dimension_numbers<[1], [0], [0], [1], [0, 0, 1, 1], [], []>} : vector<8x768xbf16>, vector<768x128xbf16>, vector<8x128xf32> -> vector<8x128xf32>
    %c0_3 = arith.constant 0 : index
    %c0_4 = arith.constant 0 : index
    %3 = vector.load %arg3[%c0_3, %c0_4] : memref<1x128xf32, #tpu.memory_space<vmem>>, vector<1x128xf32>
    %4 = vector.broadcast %3 : vector<1x128xf32> to vector<8x128xf32>
    %5 = arith.addf %2, %4 : vector<8x128xf32>
    %6 = arith.truncf %5 : vector<8x128xf32> to vector<8x128xbf16>
    %c0_5 = arith.constant 0 : index
    %c0_6 = arith.constant 0 : index
    %7 = vector.load %arg4[%c0_5, %c0_6] : memref<8x128xbf16, #tpu.memory_space<vmem>>, vector<8x128xbf16>
    tpu.vector_store %arg4[%c0_5, %c0_6], %6 {strides = array<i32>} : memref<8x128xbf16, #tpu.memory_space<vmem>>, vector<8x128xbf16>,
    return
  }
  func.func @transform_0(%arg0: i32) -> (i32, i32) {
    %c0_i32 = arith.constant 0 : i32
    %c0_i32_0 = arith.constant 0 : i32
    return %arg0, %c0_i32 : i32, i32
  }
  func.func @transform_1(%arg0: i32) -> (i32, i32) {
    %c0_i32 = arith.constant 0 : i32
    %c0_i32_0 = arith.constant 0 : i32
    %c0_i32_1 = arith.constant 0 : i32
    return %c0_i32, %c0_i32_0 : i32, i32
  }
  func.func @transform_2(%arg0: i32) -> (i32, i32) {
    %c0_i32 = arith.constant 0 : i32
    %c0_i32_0 = arith.constant 0 : i32
    %c0_i32_1 = arith.constant 0 : i32
    return %c0_i32, %c0_i32_0 : i32, i32
  }
  func.func @transform_3(%arg0: i32) -> (i32, i32) {
    %c0_i32 = arith.constant 0 : i32
    %c0_i32_0 = arith.constant 0 : i32
    return %arg0, %c0_i32 : i32, i32
  }
}

module attributes {stable_mosaic.version = 11 : i64} {
  func.func @_layernorm_kernel(%arg0: i32, %arg1: memref<32x128xbf16, #tpu.memory_space<vmem>>, %arg2: memref<1x128xf32, #tpu.memory_space<vmem>>, %arg3: memref<1x128xf32, #tpu.memory_space<vmem>>, %arg4: memref<32x128xbf16, #tpu.memory_space<vmem>>) attributes {dimension_semantics = [#tpu.dimension_semantics<parallel>], iteration_bounds = array<i64: 1>, scalar_prefetch = 0 : i64, scratch_operands = 0 : i64, tpu.core_type = #tpu.core_type<tc>, window_params = [{transform_indices = @transform_0, window_bounds = array<i64: 32, 128>}, {pipeline_mode = #tpu.pipeline_mode<synchronous>, transform_indices = @transform_1, window_bounds = array<i64: 1, 128>}, {pipeline_mode = #tpu.pipeline_mode<synchronous>, transform_indices = @transform_2, window_bounds = array<i64: 1, 128>}, {transform_indices = @transform_3, window_bounds = array<i64: 32, 128>}]} {
    %c0 = arith.constant 0 : index
    %c0_0 = arith.constant 0 : index
    %0 = vector.load %arg1[%c0, %c0_0] : memref<32x128xbf16, #tpu.memory_space<vmem>>, vector<32x128xbf16>
    %1 = arith.extf %0 : vector<32x128xbf16> to vector<32x128xf32>
    %cst = arith.constant dense<0.000000e+00> : vector<32xf32>
    %2 = vector.multi_reduction <add>, %1, %cst [1] : vector<32x128xf32> to vector<32xf32>
    %3 = vector.shape_cast %2 : vector<32xf32> to vector<32x1xf32>
    %cst_1 = arith.constant 1.280000e+02 : f32
    %4 = vector.broadcast %cst_1 : f32 to vector<32x1xf32>
    %5 = arith.divf %3, %4 : vector<32x1xf32>
    %6 = vector.broadcast %5 : vector<32x1xf32> to vector<32x128xf32>
    %7 = arith.subf %1, %6 : vector<32x128xf32>
    %8 = arith.mulf %7, %7 : vector<32x128xf32>
    %cst_2 = arith.constant dense<0.000000e+00> : vector<32xf32>
    %9 = vector.multi_reduction <add>, %8, %cst_2 [1] : vector<32x128xf32> to vector<32xf32>
    %10 = vector.shape_cast %9 : vector<32xf32> to vector<32x1xf32>
    %cst_3 = arith.constant 1.280000e+02 : f32
    %11 = vector.broadcast %cst_3 : f32 to vector<32x1xf32>
    %12 = arith.divf %10, %11 : vector<32x1xf32>
    %cst_4 = arith.constant 9.99999974E-6 : f32
    %13 = vector.broadcast %cst_4 : f32 to vector<32x1xf32>
    %14 = arith.addf %12, %13 : vector<32x1xf32>
    %15 = math.rsqrt %14 : vector<32x1xf32>
    %16 = vector.broadcast %15 : vector<32x1xf32> to vector<32x128xf32>
    %17 = arith.mulf %7, %16 : vector<32x128xf32>
    %c0_5 = arith.constant 0 : index
    %c0_6 = arith.constant 0 : index
    %18 = vector.load %arg2[%c0_5, %c0_6] : memref<1x128xf32, #tpu.memory_space<vmem>>, vector<1x128xf32>
    %19 = vector.broadcast %18 : vector<1x128xf32> to vector<32x128xf32>
    %20 = arith.mulf %17, %19 : vector<32x128xf32>
    %c0_7 = arith.constant 0 : index
    %c0_8 = arith.constant 0 : index
    %21 = vector.load %arg3[%c0_7, %c0_8] : memref<1x128xf32, #tpu.memory_space<vmem>>, vector<1x128xf32>
    %22 = vector.broadcast %21 : vector<1x128xf32> to vector<32x128xf32>
    %23 = arith.addf %20, %22 : vector<32x128xf32>
    %24 = arith.truncf %23 : vector<32x128xf32> to vector<32x128xbf16>
    %c0_9 = arith.constant 0 : index
    %c0_10 = arith.constant 0 : index
    %25 = vector.load %arg4[%c0_9, %c0_10] : memref<32x128xbf16, #tpu.memory_space<vmem>>, vector<32x128xbf16>
    tpu.vector_store %arg4[%c0_9, %c0_10], %24 {strides = array<i32>} : memref<32x128xbf16, #tpu.memory_space<vmem>>, vector<32x128xbf16>,
    return
  }
  func.func @transform_0(%arg0: i32) -> (i32, i32) {
    %c0_i32 = arith.constant 0 : i32
    %c0_i32_0 = arith.constant 0 : i32
    return %arg0, %c0_i32 : i32, i32
  }
  func.func @transform_1(%arg0: i32) -> (i32, i32) {
    %c0_i32 = arith.constant 0 : i32
    %c0_i32_0 = arith.constant 0 : i32
    %c0_i32_1 = arith.constant 0 : i32
    return %c0_i32, %c0_i32_0 : i32, i32
  }
  func.func @transform_2(%arg0: i32) -> (i32, i32) {
    %c0_i32 = arith.constant 0 : i32
    %c0_i32_0 = arith.constant 0 : i32
    %c0_i32_1 = arith.constant 0 : i32
    return %c0_i32, %c0_i32_0 : i32, i32
  }
  func.func @transform_3(%arg0: i32) -> (i32, i32) {
    %c0_i32 = arith.constant 0 : i32
    %c0_i32_0 = arith.constant 0 : i32
    return %arg0, %c0_i32 : i32, i32
  }
}

module attributes {stable_mosaic.version = 11 : i64} {
  func.func @_linear_kernel(%arg0: i32, %arg1: memref<32x128xbf16, #tpu.memory_space<vmem>>, %arg2: memref<128x384xbf16, #tpu.memory_space<vmem>>, %arg3: memref<1x384xf32, #tpu.memory_space<vmem>>, %arg4: memref<32x384xbf16, #tpu.memory_space<vmem>>) attributes {dimension_semantics = [#tpu.dimension_semantics<parallel>], iteration_bounds = array<i64: 1>, scalar_prefetch = 0 : i64, scratch_operands = 0 : i64, tpu.core_type = #tpu.core_type<tc>, window_params = [{transform_indices = @transform_0, window_bounds = array<i64: 32, 128>}, {pipeline_mode = #tpu.pipeline_mode<synchronous>, transform_indices = @transform_1, window_bounds = array<i64: 128, 384>}, {pipeline_mode = #tpu.pipeline_mode<synchronous>, transform_indices = @transform_2, window_bounds = array<i64: 1, 384>}, {transform_indices = @transform_3, window_bounds = array<i64: 32, 384>}]} {
    %c0 = arith.constant 0 : index
    %c0_0 = arith.constant 0 : index
    %0 = vector.load %arg1[%c0, %c0_0] : memref<32x128xbf16, #tpu.memory_space<vmem>>, vector<32x128xbf16>
    %1 = arith.extf %0 : vector<32x128xbf16> to vector<32x128xf32>
    %cst = arith.constant dense<0.000000e+00> : vector<32xf32>
    %2 = vector.multi_reduction <add>, %1, %cst [1] : vector<32x128xf32> to vector<32xf32>
    %3 = vector.shape_cast %2 : vector<32xf32> to vector<32x1xf32>
    %cst_1 = arith.constant 1.280000e+02 : f32
    %4 = vector.broadcast %cst_1 : f32 to vector<32x1xf32>
    %5 = arith.divf %3, %4 : vector<32x1xf32>
    %6 = vector.broadcast %5 : vector<32x1xf32> to vector<32x128xf32>
    %7 = arith.subf %1, %6 : vector<32x128xf32>
    %8 = arith.mulf %7, %7 : vector<32x128xf32>
    %cst_2 = arith.constant dense<0.000000e+00> : vector<32xf32>
    %9 = vector.multi_reduction <add>, %8, %cst_2 [1] : vector<32x128xf32> to vector<32xf32>
    %10 = vector.shape_cast %9 : vector<32xf32> to vector<32x1xf32>
    %cst_3 = arith.constant 1.280000e+02 : f32
    %11 = vector.broadcast %cst_3 : f32 to vector<32x1xf32>
    %12 = arith.divf %10, %11 : vector<32x1xf32>
    %cst_4 = arith.constant 9.99999974E-6 : f32
    %13 = vector.broadcast %cst_4 : f32 to vector<32x1xf32>
    %14 = arith.addf %12, %13 : vector<32x1xf32>
    %15 = math.rsqrt %14 : vector<32x1xf32>
    %16 = vector.broadcast %15 : vector<32x1xf32> to vector<32x128xf32>
    %17 = arith.mulf %7, %16 : vector<32x128xf32>
    %18 = arith.truncf %17 : vector<32x128xf32> to vector<32x128xbf16>
    %c0_5 = arith.constant 0 : index
    %c0_6 = arith.constant 0 : index
    %19 = vector.load %arg2[%c0_5, %c0_6] : memref<128x384xbf16, #tpu.memory_space<vmem>>, vector<128x384xbf16>
    %cst_7 = arith.constant dense<0.000000e+00> : vector<32x384xf32>
    %20 = tpu.matmul %18, %19, %cst_7 {dimension_numbers = #tpu.dot_dimension_numbers<[1], [0], [0], [1], [0, 0, 1, 1], [], []>} : vector<32x128xbf16>, vector<128x384xbf16>, vector<32x384xf32> -> vector<32x384xf32>
    %c0_8 = arith.constant 0 : index
    %c0_9 = arith.constant 0 : index
    %21 = vector.load %arg3[%c0_8, %c0_9] : memref<1x384xf32, #tpu.memory_space<vmem>>, vector<1x384xf32>
    %22 = vector.broadcast %21 : vector<1x384xf32> to vector<32x384xf32>
    %23 = arith.addf %20, %22 : vector<32x384xf32>
    %24 = arith.truncf %23 : vector<32x384xf32> to vector<32x384xbf16>
    %c0_10 = arith.constant 0 : index
    %c0_11 = arith.constant 0 : index
    %25 = vector.load %arg4[%c0_10, %c0_11] : memref<32x384xbf16, #tpu.memory_space<vmem>>, vector<32x384xbf16>
    tpu.vector_store %arg4[%c0_10, %c0_11], %24 {strides = array<i32>} : memref<32x384xbf16, #tpu.memory_space<vmem>>, vector<32x384xbf16>,
    return
  }
  func.func @transform_0(%arg0: i32) -> (i32, i32) {
    %c0_i32 = arith.constant 0 : i32
    %c0_i32_0 = arith.constant 0 : i32
    return %arg0, %c0_i32 : i32, i32
  }
  func.func @transform_1(%arg0: i32) -> (i32, i32) {
    %c0_i32 = arith.constant 0 : i32
    %c0_i32_0 = arith.constant 0 : i32
    %c0_i32_1 = arith.constant 0 : i32
    return %c0_i32, %c0_i32_0 : i32, i32
  }
  func.func @transform_2(%arg0: i32) -> (i32, i32) {
    %c0_i32 = arith.constant 0 : i32
    %c0_i32_0 = arith.constant 0 : i32
    %c0_i32_1 = arith.constant 0 : i32
    return %c0_i32, %c0_i32_0 : i32, i32
  }
  func.func @transform_3(%arg0: i32) -> (i32, i32) {
    %c0_i32 = arith.constant 0 : i32
    %c0_i32_0 = arith.constant 0 : i32
    return %arg0, %c0_i32 : i32, i32
  }
}

module attributes {stable_mosaic.version = 11 : i64} {
  func.func @_attention_kernel(%arg0: i32, %arg1: memref<1x16x384xbf16, #tpu.memory_space<vmem>>, %arg2: memref<1x16x128xbf16, #tpu.memory_space<vmem>>) attributes {dimension_semantics = [#tpu.dimension_semantics<parallel>], iteration_bounds = array<i64: 2>, scalar_prefetch = 0 : i64, scratch_operands = 0 : i64, tpu.core_type = #tpu.core_type<tc>, window_params = [{transform_indices = @transform_0, window_bounds = array<i64: 1, 16, 384>}, {transform_indices = @transform_1, window_bounds = array<i64: 1, 16, 128>}]} {
    %0 = tpu.iota {dimensions = array<i32: 1>} : vector<1x16xi32>
    %c5_i32 = arith.constant 5 : i32
    %1 = vector.broadcast %c5_i32 : i32 to vector<1x16xi32>
    %2 = arith.cmpi slt, %0, %1 : vector<1x16xi32>
    %c0 = arith.constant 0 : index
    %c0_0 = arith.constant 0 : index
    %c0_1 = arith.constant 0 : index
    %3 = vector.load %arg1[%c0, %c0_0, %c0_1] : memref<1x16x384xbf16, #tpu.memory_space<vmem>>, vector<1x16x32xbf16>
    %4 = vector.shape_cast %3 : vector<1x16x32xbf16> to vector<16x32xbf16>
    %c0_2 = arith.constant 0 : index
    %c0_3 = arith.constant 0 : index
    %c128 = arith.constant 128 : index
    %5 = vector.load %arg1[%c0_2, %c0_3, %c128] : memref<1x16x384xbf16, #tpu.memory_space<vmem>>, vector<1x16x32xbf16>
    %6 = vector.shape_cast %5 : vector<1x16x32xbf16> to vector<16x32xbf16>
    %c0_4 = arith.constant 0 : index
    %c0_5 = arith.constant 0 : index
    %c256 = arith.constant 256 : index
    %7 = vector.load %arg1[%c0_4, %c0_5, %c256] : memref<1x16x384xbf16, #tpu.memory_space<vmem>>, vector<1x16x32xbf16>
    %8 = vector.shape_cast %7 : vector<1x16x32xbf16> to vector<16x32xbf16>
    %cst = arith.constant dense<0.000000e+00> : vector<16x16xf32>
    %9 = tpu.matmul %4, %6, %cst {dimension_numbers = #tpu.dot_dimension_numbers<[1], [1], [0], [0], [0, 0, 1, 0], [], []>} : vector<16x32xbf16>, vector<16x32xbf16>, vector<16x16xf32> -> vector<16x16xf32>
    %cst_6 = arith.constant -1.000000e+30 : f32
    %10 = vector.shape_cast %2 : vector<1x16xi1> to vector<1x16xi1>
    %11 = vector.broadcast %10 : vector<1x16xi1> to vector<16x16xi1>
    %12 = vector.broadcast %cst_6 : f32 to vector<16x16xf32>
    %13 = arith.select %11, %9, %12 : vector<16x16xi1>, vector<16x16xf32>
    %cst_7 = arith.constant dense<0xFF800000> : vector<16xf32>
    %14 = vector.multi_reduction <maximumf>, %13, %cst_7 [1] : vector<16x16xf32> to vector<16xf32>
    %15 = vector.shape_cast %14 : vector<16xf32> to vector<16x1xf32>
    %16 = vector.broadcast %15 : vector<16x1xf32> to vector<16x16xf32>
    %17 = arith.subf %13, %16 : vector<16x16xf32>
    %18 = math.exp %17 : vector<16x16xf32>
    %cst_8 = arith.constant dense<0.000000e+00> : vector<16xf32>
    %19 = vector.multi_reduction <add>, %18, %cst_8 [1] : vector<16x16xf32> to vector<16xf32>
    %20 = vector.shape_cast %19 : vector<16xf32> to vector<16x1xf32>
    %21 = tpu.reciprocal %20 {approx = true} : vector<16x1xf32> -> vector<16x1xf32>
    %22 = vector.broadcast %21 : vector<16x1xf32> to vector<16x16xf32>
    %23 = arith.mulf %18, %22 : vector<16x16xf32>
    %24 = arith.truncf %23 : vector<16x16xf32> to vector<16x16xbf16>
    %cst_9 = arith.constant dense<0.000000e+00> : vector<16x32xf32>
    %25 = tpu.matmul %24, %8, %cst_9 {dimension_numbers = #tpu.dot_dimension_numbers<[1], [0], [0], [1], [0, 0, 1, 1], [], []>} : vector<16x16xbf16>, vector<16x32xbf16>, vector<16x32xf32> -> vector<16x32xf32>
    %26 = arith.truncf %25 : vector<16x32xf32> to vector<16x32xbf16>
    %c0_10 = arith.constant 0 : index
    %c0_11 = arith.constant 0 : index
    %c0_12 = arith.constant 0 : index
    %27 = vector.load %arg2[%c0_10, %c0_11, %c0_12] : memref<1x16x128xbf16, #tpu.memory_space<vmem>>, vector<1x16x32xbf16>
    %28 = vector.shape_cast %27 : vector<1x16x32xbf16> to vector<16x32xbf16>
    %29 = vector.shape_cast %26 : vector<16x32xbf16> to vector<1x16x32xbf16>
    tpu.vector_store %arg2[%c0_10, %c0_11, %c0_12], %29 {strides = array<i32>} : memref<1x16x128xbf16, #tpu.memory_space<vmem>>, vector<1x16x32xbf16>,
    %c0_13 = arith.constant 0 : index
    %c0_14 = arith.constant 0 : index
    %c32 = arith.constant 32 : index
    %30 = vector.load %arg1[%c0_13, %c0_14, %c32] : memref<1x16x384xbf16, #tpu.memory_space<vmem>>, vector<1x16x32xbf16>
    %31 = vector.shape_cast %30 : vector<1x16x32xbf16> to vector<16x32xbf16>
    %c0_15 = arith.constant 0 : index
    %c0_16 = arith.constant 0 : index
    %c160 = arith.constant 160 : index
    %32 = vector.load %arg1[%c0_15, %c0_16, %c160] : memref<1x16x384xbf16, #tpu.memory_space<vmem>>, vector<1x16x32xbf16>
    %33 = vector.shape_cast %32 : vector<1x16x32xbf16> to vector<16x32xbf16>
    %c0_17 = arith.constant 0 : index
    %c0_18 = arith.constant 0 : index
    %c288 = arith.constant 288 : index
    %34 = vector.load %arg1[%c0_17, %c0_18, %c288] : memref<1x16x384xbf16, #tpu.memory_space<vmem>>, vector<1x16x32xbf16>
    %35 = vector.shape_cast %34 : vector<1x16x32xbf16> to vector<16x32xbf16>
    %cst_19 = arith.constant dense<0.000000e+00> : vector<16x16xf32>
    %36 = tpu.matmul %31, %33, %cst_19 {dimension_numbers = #tpu.dot_dimension_numbers<[1], [1], [0], [0], [0, 0, 1, 0], [], []>} : vector<16x32xbf16>, vector<16x32xbf16>, vector<16x16xf32> -> vector<16x16xf32>
    %cst_20 = arith.constant -1.000000e+30 : f32
    %37 = vector.shape_cast %2 : vector<1x16xi1> to vector<1x16xi1>
    %38 = vector.broadcast %37 : vector<1x16xi1> to vector<16x16xi1>
    %39 = vector.broadcast %cst_20 : f32 to vector<16x16xf32>
    %40 = arith.select %38, %36, %39 : vector<16x16xi1>, vector<16x16xf32>
    %cst_21 = arith.constant dense<0xFF800000> : vector<16xf32>
    %41 = vector.multi_reduction <maximumf>, %40, %cst_21 [1] : vector<16x16xf32> to vector<16xf32>
    %42 = vector.shape_cast %41 : vector<16xf32> to vector<16x1xf32>
    %43 = vector.broadcast %42 : vector<16x1xf32> to vector<16x16xf32>
    %44 = arith.subf %40, %43 : vector<16x16xf32>
    %45 = math.exp %44 : vector<16x16xf32>
    %cst_22 = arith.constant dense<0.000000e+00> : vector<16xf32>
    %46 = vector.multi_reduction <add>, %45, %cst_22 [1] : vector<16x16xf32> to vector<16xf32>
    %47 = vector.shape_cast %46 : vector<16xf32> to vector<16x1xf32>
    %48 = tpu.reciprocal %47 {approx = true} : vector<16x1xf32> -> vector<16x1xf32>
    %49 = vector.broadcast %48 : vector<16x1xf32> to vector<16x16xf32>
    %50 = arith.mulf %45, %49 : vector<16x16xf32>
    %51 = arith.truncf %50 : vector<16x16xf32> to vector<16x16xbf16>
    %cst_23 = arith.constant dense<0.000000e+00> : vector<16x32xf32>
    %52 = tpu.matmul %51, %35, %cst_23 {dimension_numbers = #tpu.dot_dimension_numbers<[1], [0], [0], [1], [0, 0, 1, 1], [], []>} : vector<16x16xbf16>, vector<16x32xbf16>, vector<16x32xf32> -> vector<16x32xf32>
    %53 = arith.truncf %52 : vector<16x32xf32> to vector<16x32xbf16>
    %c0_24 = arith.constant 0 : index
    %c0_25 = arith.constant 0 : index
    %c32_26 = arith.constant 32 : index
    %54 = vector.load %arg2[%c0_24, %c0_25, %c32_26] : memref<1x16x128xbf16, #tpu.memory_space<vmem>>, vector<1x16x32xbf16>
    %55 = vector.shape_cast %54 : vector<1x16x32xbf16> to vector<16x32xbf16>
    %56 = vector.shape_cast %53 : vector<16x32xbf16> to vector<1x16x32xbf16>
    tpu.vector_store %arg2[%c0_24, %c0_25, %c32_26], %56 {strides = array<i32>} : memref<1x16x128xbf16, #tpu.memory_space<vmem>>, vector<1x16x32xbf16>,
    %c0_27 = arith.constant 0 : index
    %c0_28 = arith.constant 0 : index
    %c64 = arith.constant 64 : index
    %57 = vector.load %arg1[%c0_27, %c0_28, %c64] : memref<1x16x384xbf16, #tpu.memory_space<vmem>>, vector<1x16x32xbf16>
    %58 = vector.shape_cast %57 : vector<1x16x32xbf16> to vector<16x32xbf16>
    %c0_29 = arith.constant 0 : index
    %c0_30 = arith.constant 0 : index
    %c192 = arith.constant 192 : index
    %59 = vector.load %arg1[%c0_29, %c0_30, %c192] : memref<1x16x384xbf16, #tpu.memory_space<vmem>>, vector<1x16x32xbf16>
    %60 = vector.shape_cast %59 : vector<1x16x32xbf16> to vector<16x32xbf16>
    %c0_31 = arith.constant 0 : index
    %c0_32 = arith.constant 0 : index
    %c320 = arith.constant 320 : index
    %61 = vector.load %arg1[%c0_31, %c0_32, %c320] : memref<1x16x384xbf16, #tpu.memory_space<vmem>>, vector<1x16x32xbf16>
    %62 = vector.shape_cast %61 : vector<1x16x32xbf16> to vector<16x32xbf16>
    %cst_33 = arith.constant dense<0.000000e+00> : vector<16x16xf32>
    %63 = tpu.matmul %58, %60, %cst_33 {dimension_numbers = #tpu.dot_dimension_numbers<[1], [1], [0], [0], [0, 0, 1, 0], [], []>} : vector<16x32xbf16>, vector<16x32xbf16>, vector<16x16xf32> -> vector<16x16xf32>
    %cst_34 = arith.constant -1.000000e+30 : f32
    %64 = vector.shape_cast %2 : vector<1x16xi1> to vector<1x16xi1>
    %65 = vector.broadcast %64 : vector<1x16xi1> to vector<16x16xi1>
    %66 = vector.broadcast %cst_34 : f32 to vector<16x16xf32>
    %67 = arith.select %65, %63, %66 : vector<16x16xi1>, vector<16x16xf32>
    %cst_35 = arith.constant dense<0xFF800000> : vector<16xf32>
    %68 = vector.multi_reduction <maximumf>, %67, %cst_35 [1] : vector<16x16xf32> to vector<16xf32>
    %69 = vector.shape_cast %68 : vector<16xf32> to vector<16x1xf32>
    %70 = vector.broadcast %69 : vector<16x1xf32> to vector<16x16xf32>
    %71 = arith.subf %67, %70 : vector<16x16xf32>
    %72 = math.exp %71 : vector<16x16xf32>
    %cst_36 = arith.constant dense<0.000000e+00> : vector<16xf32>
    %73 = vector.multi_reduction <add>, %72, %cst_36 [1] : vector<16x16xf32> to vector<16xf32>
    %74 = vector.shape_cast %73 : vector<16xf32> to vector<16x1xf32>
    %75 = tpu.reciprocal %74 {approx = true} : vector<16x1xf32> -> vector<16x1xf32>
    %76 = vector.broadcast %75 : vector<16x1xf32> to vector<16x16xf32>
    %77 = arith.mulf %72, %76 : vector<16x16xf32>
    %78 = arith.truncf %77 : vector<16x16xf32> to vector<16x16xbf16>
    %cst_37 = arith.constant dense<0.000000e+00> : vector<16x32xf32>
    %79 = tpu.matmul %78, %62, %cst_37 {dimension_numbers = #tpu.dot_dimension_numbers<[1], [0], [0], [1], [0, 0, 1, 1], [], []>} : vector<16x16xbf16>, vector<16x32xbf16>, vector<16x32xf32> -> vector<16x32xf32>
    %80 = arith.truncf %79 : vector<16x32xf32> to vector<16x32xbf16>
    %c0_38 = arith.constant 0 : index
    %c0_39 = arith.constant 0 : index
    %c64_40 = arith.constant 64 : index
    %81 = vector.load %arg2[%c0_38, %c0_39, %c64_40] : memref<1x16x128xbf16, #tpu.memory_space<vmem>>, vector<1x16x32xbf16>
    %82 = vector.shape_cast %81 : vector<1x16x32xbf16> to vector<16x32xbf16>
    %83 = vector.shape_cast %80 : vector<16x32xbf16> to vector<1x16x32xbf16>
    tpu.vector_store %arg2[%c0_38, %c0_39, %c64_40], %83 {strides = array<i32>} : memref<1x16x128xbf16, #tpu.memory_space<vmem>>, vector<1x16x32xbf16>,
    %c0_41 = arith.constant 0 : index
    %c0_42 = arith.constant 0 : index
    %c96 = arith.constant 96 : index
    %84 = vector.load %arg1[%c0_41, %c0_42, %c96] : memref<1x16x384xbf16, #tpu.memory_space<vmem>>, vector<1x16x32xbf16>
    %85 = vector.shape_cast %84 : vector<1x16x32xbf16> to vector<16x32xbf16>
    %c0_43 = arith.constant 0 : index
    %c0_44 = arith.constant 0 : index
    %c224 = arith.constant 224 : index
    %86 = vector.load %arg1[%c0_43, %c0_44, %c224] : memref<1x16x384xbf16, #tpu.memory_space<vmem>>, vector<1x16x32xbf16>
    %87 = vector.shape_cast %86 : vector<1x16x32xbf16> to vector<16x32xbf16>
    %c0_45 = arith.constant 0 : index
    %c0_46 = arith.constant 0 : index
    %c352 = arith.constant 352 : index
    %88 = vector.load %arg1[%c0_45, %c0_46, %c352] : memref<1x16x384xbf16, #tpu.memory_space<vmem>>, vector<1x16x32xbf16>
    %89 = vector.shape_cast %88 : vector<1x16x32xbf16> to vector<16x32xbf16>
    %cst_47 = arith.constant dense<0.000000e+00> : vector<16x16xf32>
    %90 = tpu.matmul %85, %87, %cst_47 {dimension_numbers = #tpu.dot_dimension_numbers<[1], [1], [0], [0], [0, 0, 1, 0], [], []>} : vector<16x32xbf16>, vector<16x32xbf16>, vector<16x16xf32> -> vector<16x16xf32>
    %cst_48 = arith.constant -1.000000e+30 : f32
    %91 = vector.shape_cast %2 : vector<1x16xi1> to vector<1x16xi1>
    %92 = vector.broadcast %91 : vector<1x16xi1> to vector<16x16xi1>
    %93 = vector.broadcast %cst_48 : f32 to vector<16x16xf32>
    %94 = arith.select %92, %90, %93 : vector<16x16xi1>, vector<16x16xf32>
    %cst_49 = arith.constant dense<0xFF800000> : vector<16xf32>
    %95 = vector.multi_reduction <maximumf>, %94, %cst_49 [1] : vector<16x16xf32> to vector<16xf32>
    %96 = vector.shape_cast %95 : vector<16xf32> to vector<16x1xf32>
    %97 = vector.broadcast %96 : vector<16x1xf32> to vector<16x16xf32>
    %98 = arith.subf %94, %97 : vector<16x16xf32>
    %99 = math.exp %98 : vector<16x16xf32>
    %cst_50 = arith.constant dense<0.000000e+00> : vector<16xf32>
    %100 = vector.multi_reduction <add>, %99, %cst_50 [1] : vector<16x16xf32> to vector<16xf32>
    %101 = vector.shape_cast %100 : vector<16xf32> to vector<16x1xf32>
    %102 = tpu.reciprocal %101 {approx = true} : vector<16x1xf32> -> vector<16x1xf32>
    %103 = vector.broadcast %102 : vector<16x1xf32> to vector<16x16xf32>
    %104 = arith.mulf %99, %103 : vector<16x16xf32>
    %105 = arith.truncf %104 : vector<16x16xf32> to vector<16x16xbf16>
    %cst_51 = arith.constant dense<0.000000e+00> : vector<16x32xf32>
    %106 = tpu.matmul %105, %89, %cst_51 {dimension_numbers = #tpu.dot_dimension_numbers<[1], [0], [0], [1], [0, 0, 1, 1], [], []>} : vector<16x16xbf16>, vector<16x32xbf16>, vector<16x32xf32> -> vector<16x32xf32>
    %107 = arith.truncf %106 : vector<16x32xf32> to vector<16x32xbf16>
    %c0_52 = arith.constant 0 : index
    %c0_53 = arith.constant 0 : index
    %c96_54 = arith.constant 96 : index
    %108 = vector.load %arg2[%c0_52, %c0_53, %c96_54] : memref<1x16x128xbf16, #tpu.memory_space<vmem>>, vector<1x16x32xbf16>
    %109 = vector.shape_cast %108 : vector<1x16x32xbf16> to vector<16x32xbf16>
    %110 = vector.shape_cast %107 : vector<16x32xbf16> to vector<1x16x32xbf16>
    tpu.vector_store %arg2[%c0_52, %c0_53, %c96_54], %110 {strides = array<i32>} : memref<1x16x128xbf16, #tpu.memory_space<vmem>>, vector<1x16x32xbf16>,
    return
  }
  func.func @transform_0(%arg0: i32) -> (i32, i32, i32) {
    %c0_i32 = arith.constant 0 : i32
    %c0_i32_0 = arith.constant 0 : i32
    %c0_i32_1 = arith.constant 0 : i32
    return %arg0, %c0_i32, %c0_i32_0 : i32, i32, i32
  }
  func.func @transform_1(%arg0: i32) -> (i32, i32, i32) {
    %c0_i32 = arith.constant 0 : i32
    %c0_i32_0 = arith.constant 0 : i32
    %c0_i32_1 = arith.constant 0 : i32
    return %arg0, %c0_i32, %c0_i32_0 : i32, i32, i32
  }
}

module attributes {stable_mosaic.version = 11 : i64} {
  func.func @_linear_kernel(%arg0: i32, %arg1: memref<32x128xbf16, #tpu.memory_space<vmem>>, %arg2: memref<128x128xbf16, #tpu.memory_space<vmem>>, %arg3: memref<1x128xf32, #tpu.memory_space<vmem>>, %arg4: memref<32x128xbf16, #tpu.memory_space<vmem>>, %arg5: memref<32x128xbf16, #tpu.memory_space<vmem>>) attributes {dimension_semantics = [#tpu.dimension_semantics<parallel>], iteration_bounds = array<i64: 1>, scalar_prefetch = 0 : i64, scratch_operands = 0 : i64, tpu.core_type = #tpu.core_type<tc>, window_params = [{transform_indices = @transform_0, window_bounds = array<i64: 32, 128>}, {pipeline_mode = #tpu.pipeline_mode<synchronous>, transform_indices = @transform_1, window_bounds = array<i64: 128, 128>}, {pipeline_mode = #tpu.pipeline_mode<synchronous>, transform_indices = @transform_2, window_bounds = array<i64: 1, 128>}, {transform_indices = @transform_3, window_bounds = array<i64: 32, 128>}, {transform_indices = @transform_4, window_bounds = array<i64: 32, 128>}]} {
    %c0 = arith.constant 0 : index
    %c0_0 = arith.constant 0 : index
    %0 = vector.load %arg1[%c0, %c0_0] : memref<32x128xbf16, #tpu.memory_space<vmem>>, vector<32x128xbf16>
    %c0_1 = arith.constant 0 : index
    %c0_2 = arith.constant 0 : index
    %1 = vector.load %arg2[%c0_1, %c0_2] : memref<128x128xbf16, #tpu.memory_space<vmem>>, vector<128x128xbf16>
    %cst = arith.constant dense<0.000000e+00> : vector<32x128xf32>
    %2 = tpu.matmul %0, %1, %cst {dimension_numbers = #tpu.dot_dimension_numbers<[1], [0], [0], [1], [0, 0, 1, 1], [], []>} : vector<32x128xbf16>, vector<128x128xbf16>, vector<32x128xf32> -> vector<32x128xf32>
    %c0_3 = arith.constant 0 : index
    %c0_4 = arith.constant 0 : index
    %3 = vector.load %arg3[%c0_3, %c0_4] : memref<1x128xf32, #tpu.memory_space<vmem>>, vector<1x128xf32>
    %4 = vector.broadcast %3 : vector<1x128xf32> to vector<32x128xf32>
    %5 = arith.addf %2, %4 : vector<32x128xf32>
    %c0_5 = arith.constant 0 : index
    %c0_6 = arith.constant 0 : index
    %6 = vector.load %arg4[%c0_5, %c0_6] : memref<32x128xbf16, #tpu.memory_space<vmem>>, vector<32x128xbf16>
    %7 = arith.extf %6 : vector<32x128xbf16> to vector<32x128xf32>
    %8 = arith.addf %5, %7 : vector<32x128xf32>
    %9 = arith.truncf %8 : vector<32x128xf32> to vector<32x128xbf16>
    %c0_7 = arith.constant 0 : index
    %c0_8 = arith.constant 0 : index
    %10 = vector.load %arg5[%c0_7, %c0_8] : memref<32x128xbf16, #tpu.memory_space<vmem>>, vector<32x128xbf16>
    tpu.vector_store %arg5[%c0_7, %c0_8], %9 {strides = array<i32>} : memref<32x128xbf16, #tpu.memory_space<vmem>>, vector<32x128xbf16>,
    return
  }
  func.func @transform_0(%arg0: i32) -> (i32, i32) {
    %c0_i32 = arith.constant 0 : i32
    %c0_i32_0 = arith.constant 0 : i32
    return %arg0, %c0_i32 : i32, i32
  }
  func.func @transform_1(%arg0: i32) -> (i32, i32) {
    %c0_i32 = arith.constant 0 : i32
    %c0_i32_0 = arith.constant 0 : i32
    %c0_i32_1 = arith.constant 0 : i32
    return %c0_i32, %c0_i32_0 : i32, i32
  }
  func.func @transform_2(%arg0: i32) -> (i32, i32) {
    %c0_i32 = arith.constant 0 : i32
    %c0_i32_0 = arith.constant 0 : i32
    %c0_i32_1 = arith.constant 0 : i32
    return %c0_i32, %c0_i32_0 : i32, i32
  }
  func.func @transform_3(%arg0: i32) -> (i32, i32) {
    %c0_i32 = arith.constant 0 : i32
    %c0_i32_0 = arith.constant 0 : i32
    return %arg0, %c0_i32 : i32, i32
  }
  func.func @transform_4(%arg0: i32) -> (i32, i32) {
    %c0_i32 = arith.constant 0 : i32
    %c0_i32_0 = arith.constant 0 : i32
    return %arg0, %c0_i32 : i32, i32
  }
}

module attributes {stable_mosaic.version = 11 : i64} {
  func.func @_linear_kernel(%arg0: i32, %arg1: memref<32x512xbf16, #tpu.memory_space<vmem>>, %arg2: memref<512x128xbf16, #tpu.memory_space<vmem>>, %arg3: memref<1x128xf32, #tpu.memory_space<vmem>>, %arg4: memref<32x128xbf16, #tpu.memory_space<vmem>>, %arg5: memref<32x128xbf16, #tpu.memory_space<vmem>>) attributes {dimension_semantics = [#tpu.dimension_semantics<parallel>], iteration_bounds = array<i64: 1>, scalar_prefetch = 0 : i64, scratch_operands = 0 : i64, tpu.core_type = #tpu.core_type<tc>, window_params = [{transform_indices = @transform_0, window_bounds = array<i64: 32, 512>}, {pipeline_mode = #tpu.pipeline_mode<synchronous>, transform_indices = @transform_1, window_bounds = array<i64: 512, 128>}, {pipeline_mode = #tpu.pipeline_mode<synchronous>, transform_indices = @transform_2, window_bounds = array<i64: 1, 128>}, {transform_indices = @transform_3, window_bounds = array<i64: 32, 128>}, {transform_indices = @transform_4, window_bounds = array<i64: 32, 128>}]} {
    %c0 = arith.constant 0 : index
    %c0_0 = arith.constant 0 : index
    %0 = vector.load %arg1[%c0, %c0_0] : memref<32x512xbf16, #tpu.memory_space<vmem>>, vector<32x512xbf16>
    %c0_1 = arith.constant 0 : index
    %c0_2 = arith.constant 0 : index
    %1 = vector.load %arg2[%c0_1, %c0_2] : memref<512x128xbf16, #tpu.memory_space<vmem>>, vector<512x128xbf16>
    %cst = arith.constant dense<0.000000e+00> : vector<32x128xf32>
    %2 = tpu.matmul %0, %1, %cst {dimension_numbers = #tpu.dot_dimension_numbers<[1], [0], [0], [1], [0, 0, 1, 1], [], []>} : vector<32x512xbf16>, vector<512x128xbf16>, vector<32x128xf32> -> vector<32x128xf32>
    %c0_3 = arith.constant 0 : index
    %c0_4 = arith.constant 0 : index
    %3 = vector.load %arg3[%c0_3, %c0_4] : memref<1x128xf32, #tpu.memory_space<vmem>>, vector<1x128xf32>
    %4 = vector.broadcast %3 : vector<1x128xf32> to vector<32x128xf32>
    %5 = arith.addf %2, %4 : vector<32x128xf32>
    %c0_5 = arith.constant 0 : index
    %c0_6 = arith.constant 0 : index
    %6 = vector.load %arg4[%c0_5, %c0_6] : memref<32x128xbf16, #tpu.memory_space<vmem>>, vector<32x128xbf16>
    %7 = arith.extf %6 : vector<32x128xbf16> to vector<32x128xf32>
    %8 = arith.addf %5, %7 : vector<32x128xf32>
    %9 = arith.truncf %8 : vector<32x128xf32> to vector<32x128xbf16>
    %c0_7 = arith.constant 0 : index
    %c0_8 = arith.constant 0 : index
    %10 = vector.load %arg5[%c0_7, %c0_8] : memref<32x128xbf16, #tpu.memory_space<vmem>>, vector<32x128xbf16>
    tpu.vector_store %arg5[%c0_7, %c0_8], %9 {strides = array<i32>} : memref<32x128xbf16, #tpu.memory_space<vmem>>, vector<32x128xbf16>,
    return
  }
  func.func @transform_0(%arg0: i32) -> (i32, i32) {
    %c0_i32 = arith.constant 0 : i32
    %c0_i32_0 = arith.constant 0 : i32
    return %arg0, %c0_i32 : i32, i32
  }
  func.func @transform_1(%arg0: i32) -> (i32, i32) {
    %c0_i32 = arith.constant 0 : i32
    %c0_i32_0 = arith.constant 0 : i32
    %c0_i32_1 = arith.constant 0 : i32
    return %c0_i32, %c0_i32_0 : i32, i32
  }
  func.func @transform_2(%arg0: i32) -> (i32, i32) {
    %c0_i32 = arith.constant 0 : i32
    %c0_i32_0 = arith.constant 0 : i32
    %c0_i32_1 = arith.constant 0 : i32
    return %c0_i32, %c0_i32_0 : i32, i32
  }
  func.func @transform_3(%arg0: i32) -> (i32, i32) {
    %c0_i32 = arith.constant 0 : i32
    %c0_i32_0 = arith.constant 0 : i32
    return %arg0, %c0_i32 : i32, i32
  }
  func.func @transform_4(%arg0: i32) -> (i32, i32) {
    %c0_i32 = arith.constant 0 : i32
    %c0_i32_0 = arith.constant 0 : i32
    return %arg0, %c0_i32 : i32, i32
  }
}

module attributes {stable_mosaic.version = 11 : i64} {
  func.func @_linear_kernel(%arg0: i32, %arg1: memref<32x128xbf16, #tpu.memory_space<vmem>>, %arg2: memref<128x512xbf16, #tpu.memory_space<vmem>>, %arg3: memref<1x512xf32, #tpu.memory_space<vmem>>, %arg4: memref<32x512xbf16, #tpu.memory_space<vmem>>) attributes {dimension_semantics = [#tpu.dimension_semantics<parallel>], iteration_bounds = array<i64: 1>, scalar_prefetch = 0 : i64, scratch_operands = 0 : i64, tpu.core_type = #tpu.core_type<tc>, window_params = [{transform_indices = @transform_0, window_bounds = array<i64: 32, 128>}, {pipeline_mode = #tpu.pipeline_mode<synchronous>, transform_indices = @transform_1, window_bounds = array<i64: 128, 512>}, {pipeline_mode = #tpu.pipeline_mode<synchronous>, transform_indices = @transform_2, window_bounds = array<i64: 1, 512>}, {transform_indices = @transform_3, window_bounds = array<i64: 32, 512>}]} {
    %c0 = arith.constant 0 : index
    %c0_0 = arith.constant 0 : index
    %0 = vector.load %arg1[%c0, %c0_0] : memref<32x128xbf16, #tpu.memory_space<vmem>>, vector<32x128xbf16>
    %1 = arith.extf %0 : vector<32x128xbf16> to vector<32x128xf32>
    %cst = arith.constant dense<0.000000e+00> : vector<32xf32>
    %2 = vector.multi_reduction <add>, %1, %cst [1] : vector<32x128xf32> to vector<32xf32>
    %3 = vector.shape_cast %2 : vector<32xf32> to vector<32x1xf32>
    %cst_1 = arith.constant 1.280000e+02 : f32
    %4 = vector.broadcast %cst_1 : f32 to vector<32x1xf32>
    %5 = arith.divf %3, %4 : vector<32x1xf32>
    %6 = vector.broadcast %5 : vector<32x1xf32> to vector<32x128xf32>
    %7 = arith.subf %1, %6 : vector<32x128xf32>
    %8 = arith.mulf %7, %7 : vector<32x128xf32>
    %cst_2 = arith.constant dense<0.000000e+00> : vector<32xf32>
    %9 = vector.multi_reduction <add>, %8, %cst_2 [1] : vector<32x128xf32> to vector<32xf32>
    %10 = vector.shape_cast %9 : vector<32xf32> to vector<32x1xf32>
    %cst_3 = arith.constant 1.280000e+02 : f32
    %11 = vector.broadcast %cst_3 : f32 to vector<32x1xf32>
    %12 = arith.divf %10, %11 : vector<32x1xf32>
    %cst_4 = arith.constant 9.99999974E-6 : f32
    %13 = vector.broadcast %cst_4 : f32 to vector<32x1xf32>
    %14 = arith.addf %12, %13 : vector<32x1xf32>
    %15 = math.rsqrt %14 : vector<32x1xf32>
    %16 = vector.broadcast %15 : vector<32x1xf32> to vector<32x128xf32>
    %17 = arith.mulf %7, %16 : vector<32x128xf32>
    %18 = arith.truncf %17 : vector<32x128xf32> to vector<32x128xbf16>
    %c0_5 = arith.constant 0 : index
    %c0_6 = arith.constant 0 : index
    %19 = vector.load %arg2[%c0_5, %c0_6] : memref<128x512xbf16, #tpu.memory_space<vmem>>, vector<128x512xbf16>
    %cst_7 = arith.constant dense<0.000000e+00> : vector<32x512xf32>
    %20 = tpu.matmul %18, %19, %cst_7 {dimension_numbers = #tpu.dot_dimension_numbers<[1], [0], [0], [1], [0, 0, 1, 1], [], []>} : vector<32x128xbf16>, vector<128x512xbf16>, vector<32x512xf32> -> vector<32x512xf32>
    %c0_8 = arith.constant 0 : index
    %c0_9 = arith.constant 0 : index
    %21 = vector.load %arg3[%c0_8, %c0_9] : memref<1x512xf32, #tpu.memory_space<vmem>>, vector<1x512xf32>
    %22 = vector.broadcast %21 : vector<1x512xf32> to vector<32x512xf32>
    %23 = arith.addf %20, %22 : vector<32x512xf32>
    %24 = arith.mulf %23, %23 : vector<32x512xf32>
    %25 = arith.mulf %23, %24 : vector<32x512xf32>
    %cst_10 = arith.constant 4.471500e-02 : f32
    %26 = vector.broadcast %cst_10 : f32 to vector<32x512xf32>
    %27 = arith.mulf %26, %25 : vector<32x512xf32>
    %28 = arith.addf %23, %27 : vector<32x512xf32>
    %cst_11 = arith.constant 0.797884583 : f32
    %29 = vector.broadcast %cst_11 : f32 to vector<32x512xf32>
    %30 = arith.mulf %29, %28 : vector<32x512xf32>
    %31 = math.tanh %30 : vector<32x512xf32>
    %cst_12 = arith.constant 1.000000e+00 : f32
    %32 = vector.broadcast %cst_12 : f32 to vector<32x512xf32>
    %33 = arith.addf %32, %31 : vector<32x512xf32>
    %cst_13 = arith.constant 5.000000e-01 : f32
    %34 = vector.broadcast %cst_13 : f32 to vector<32x512xf32>
    %35 = arith.mulf %34, %33 : vector<32x512xf32>
    %36 = arith.mulf %23, %35 : vector<32x512xf32>
    %37 = arith.truncf %36 : vector<32x512xf32> to vector<32x512xbf16>
    %c0_14 = arith.constant 0 : index
    %c0_15 = arith.constant 0 : index
    %38 = vector.load %arg4[%c0_14, %c0_15] : memref<32x512xbf16, #tpu.memory_space<vmem>>, vector<32x512xbf16>
    tpu.vector_store %arg4[%c0_14, %c0_15], %37 {strides = array<i32>} : memref<32x512xbf16, #tpu.memory_space<vmem>>, vector<32x512xbf16>,
    return
  }
  func.func @transform_0(%arg0: i32) -> (i32, i32) {
    %c0_i32 = arith.constant 0 : i32
    %c0_i32_0 = arith.constant 0 : i32
    return %arg0, %c0_i32 : i32, i32
  }
  func.func @transform_1(%arg0: i32) -> (i32, i32) {
    %c0_i32 = arith.constant 0 : i32
    %c0_i32_0 = arith.constant 0 : i32
    %c0_i32_1 = arith.constant 0 : i32
    return %c0_i32, %c0_i32_0 : i32, i32
  }
  func.func @transform_2(%arg0: i32) -> (i32, i32) {
    %c0_i32 = arith.constant 0 : i32
    %c0_i32_0 = arith.constant 0 : i32
    %c0_i32_1 = arith.constant 0 : i32
    return %c0_i32, %c0_i32_0 : i32, i32
  }
  func.func @transform_3(%arg0: i32) -> (i32, i32) {
    %c0_i32 = arith.constant 0 : i32
    %c0_i32_0 = arith.constant 0 : i32
    return %arg0, %c0_i32 : i32, i32
  }
}

module attributes {stable_mosaic.version = 11 : i64} {
  func.func @_head_kernel(%arg0: i32, %arg1: memref<2x128xbf16, #tpu.memory_space<vmem>>, %arg2: memref<128x512xbf16, #tpu.memory_space<vmem>>, %arg3: memref<1x512xf32, #tpu.memory_space<vmem>>, %arg4: memref<512x1024xbf16, #tpu.memory_space<vmem>>, %arg5: memref<1x1024xf32, #tpu.memory_space<vmem>>, %arg6: memref<1024x512xbf16, #tpu.memory_space<vmem>>, %arg7: memref<1x512xf32, #tpu.memory_space<vmem>>, %arg8: memref<2x512xf32, #tpu.memory_space<vmem>>) attributes {dimension_semantics = [#tpu.dimension_semantics<parallel>], iteration_bounds = array<i64: 1>, scalar_prefetch = 0 : i64, scratch_operands = 0 : i64, tpu.core_type = #tpu.core_type<tc>, window_params = [{transform_indices = @transform_0, window_bounds = array<i64: 2, 128>}, {pipeline_mode = #tpu.pipeline_mode<synchronous>, transform_indices = @transform_1, window_bounds = array<i64: 128, 512>}, {pipeline_mode = #tpu.pipeline_mode<synchronous>, transform_indices = @transform_2, window_bounds = array<i64: 1, 512>}, {pipeline_mode = #tpu.pipeline_mode<synchronous>, transform_indices = @transform_3, window_bounds = array<i64: 512, 1024>}, {pipeline_mode = #tpu.pipeline_mode<synchronous>, transform_indices = @transform_4, window_bounds = array<i64: 1, 1024>}, {pipeline_mode = #tpu.pipeline_mode<synchronous>, transform_indices = @transform_5, window_bounds = array<i64: 1024, 512>}, {pipeline_mode = #tpu.pipeline_mode<synchronous>, transform_indices = @transform_6, window_bounds = array<i64: 1, 512>}, {transform_indices = @transform_7, window_bounds = array<i64: 2, 512>}]} {
    %c0 = arith.constant 0 : index
    %c0_0 = arith.constant 0 : index
    %0 = vector.load %arg1[%c0, %c0_0] : memref<2x128xbf16, #tpu.memory_space<vmem>>, vector<2x128xbf16>
    %1 = arith.extf %0 : vector<2x128xbf16> to vector<2x128xf32>
    %cst = arith.constant dense<0.000000e+00> : vector<2xf32>
    %2 = vector.multi_reduction <add>, %1, %cst [1] : vector<2x128xf32> to vector<2xf32>
    %3 = vector.shape_cast %2 : vector<2xf32> to vector<2x1xf32>
    %cst_1 = arith.constant 1.280000e+02 : f32
    %4 = vector.broadcast %cst_1 : f32 to vector<2x1xf32>
    %5 = arith.divf %3, %4 : vector<2x1xf32>
    %6 = vector.broadcast %5 : vector<2x1xf32> to vector<2x128xf32>
    %7 = arith.subf %1, %6 : vector<2x128xf32>
    %8 = arith.mulf %7, %7 : vector<2x128xf32>
    %cst_2 = arith.constant dense<0.000000e+00> : vector<2xf32>
    %9 = vector.multi_reduction <add>, %8, %cst_2 [1] : vector<2x128xf32> to vector<2xf32>
    %10 = vector.shape_cast %9 : vector<2xf32> to vector<2x1xf32>
    %cst_3 = arith.constant 1.280000e+02 : f32
    %11 = vector.broadcast %cst_3 : f32 to vector<2x1xf32>
    %12 = arith.divf %10, %11 : vector<2x1xf32>
    %cst_4 = arith.constant 9.99999974E-6 : f32
    %13 = vector.broadcast %cst_4 : f32 to vector<2x1xf32>
    %14 = arith.addf %12, %13 : vector<2x1xf32>
    %15 = math.rsqrt %14 : vector<2x1xf32>
    %16 = vector.broadcast %15 : vector<2x1xf32> to vector<2x128xf32>
    %17 = arith.mulf %7, %16 : vector<2x128xf32>
    %18 = arith.truncf %17 : vector<2x128xf32> to vector<2x128xbf16>
    %c0_5 = arith.constant 0 : index
    %c0_6 = arith.constant 0 : index
    %19 = vector.load %arg2[%c0_5, %c0_6] : memref<128x512xbf16, #tpu.memory_space<vmem>>, vector<128x512xbf16>
    %cst_7 = arith.constant dense<0.000000e+00> : vector<2x512xf32>
    %20 = tpu.matmul %18, %19, %cst_7 {dimension_numbers = #tpu.dot_dimension_numbers<[1], [0], [0], [1], [0, 0, 1, 1], [], []>} : vector<2x128xbf16>, vector<128x512xbf16>, vector<2x512xf32> -> vector<2x512xf32>
    %c0_8 = arith.constant 0 : index
    %c0_9 = arith.constant 0 : index
    %21 = vector.load %arg3[%c0_8, %c0_9] : memref<1x512xf32, #tpu.memory_space<vmem>>, vector<1x512xf32>
    %22 = vector.broadcast %21 : vector<1x512xf32> to vector<2x512xf32>
    %23 = arith.addf %20, %22 : vector<2x512xf32>
    %24 = arith.truncf %23 : vector<2x512xf32> to vector<2x512xbf16>
    %c0_10 = arith.constant 0 : index
    %c0_11 = arith.constant 0 : index
    %25 = vector.load %arg4[%c0_10, %c0_11] : memref<512x1024xbf16, #tpu.memory_space<vmem>>, vector<512x1024xbf16>
    %cst_12 = arith.constant dense<0.000000e+00> : vector<2x1024xf32>
    %26 = tpu.matmul %24, %25, %cst_12 {dimension_numbers = #tpu.dot_dimension_numbers<[1], [0], [0], [1], [0, 0, 1, 1], [], []>} : vector<2x512xbf16>, vector<512x1024xbf16>, vector<2x1024xf32> -> vector<2x1024xf32>
    %c0_13 = arith.constant 0 : index
    %c0_14 = arith.constant 0 : index
    %27 = vector.load %arg5[%c0_13, %c0_14] : memref<1x1024xf32, #tpu.memory_space<vmem>>, vector<1x1024xf32>
    %28 = vector.broadcast %27 : vector<1x1024xf32> to vector<2x1024xf32>
    %29 = arith.addf %26, %28 : vector<2x1024xf32>
    %cst_15 = arith.constant 0.000000e+00 : f32
    %30 = vector.broadcast %cst_15 : f32 to vector<2x1024xf32>
    %31 = arith.maximumf %29, %30 : vector<2x1024xf32>
    %32 = arith.truncf %31 : vector<2x1024xf32> to vector<2x1024xbf16>
    %c0_16 = arith.constant 0 : index
    %c0_17 = arith.constant 0 : index
    %33 = vector.load %arg6[%c0_16, %c0_17] : memref<1024x512xbf16, #tpu.memory_space<vmem>>, vector<1024x512xbf16>
    %cst_18 = arith.constant dense<0.000000e+00> : vector<2x512xf32>
    %34 = tpu.matmul %32, %33, %cst_18 {dimension_numbers = #tpu.dot_dimension_numbers<[1], [0], [0], [1], [0, 0, 1, 1], [], []>} : vector<2x1024xbf16>, vector<1024x512xbf16>, vector<2x512xf32> -> vector<2x512xf32>
    %c0_19 = arith.constant 0 : index
    %c0_20 = arith.constant 0 : index
    %35 = vector.load %arg7[%c0_19, %c0_20] : memref<1x512xf32, #tpu.memory_space<vmem>>, vector<1x512xf32>
    %36 = vector.broadcast %35 : vector<1x512xf32> to vector<2x512xf32>
    %37 = arith.addf %34, %36 : vector<2x512xf32>
    %c0_21 = arith.constant 0 : index
    %c0_22 = arith.constant 0 : index
    %38 = vector.load %arg8[%c0_21, %c0_22] : memref<2x512xf32, #tpu.memory_space<vmem>>, vector<2x512xf32>
    tpu.vector_store %arg8[%c0_21, %c0_22], %37 {strides = array<i32>} : memref<2x512xf32, #tpu.memory_space<vmem>>, vector<2x512xf32>,
    return
  }
  func.func @transform_0(%arg0: i32) -> (i32, i32) {
    %c0_i32 = arith.constant 0 : i32
    %c0_i32_0 = arith.constant 0 : i32
    return %arg0, %c0_i32 : i32, i32
  }
  func.func @transform_1(%arg0: i32) -> (i32, i32) {
    %c0_i32 = arith.constant 0 : i32
    %c0_i32_0 = arith.constant 0 : i32
    %c0_i32_1 = arith.constant 0 : i32
    return %c0_i32, %c0_i32_0 : i32, i32
  }
  func.func @transform_2(%arg0: i32) -> (i32, i32) {
    %c0_i32 = arith.constant 0 : i32
    %c0_i32_0 = arith.constant 0 : i32
    %c0_i32_1 = arith.constant 0 : i32
    return %c0_i32, %c0_i32_0 : i32, i32
  }
  func.func @transform_3(%arg0: i32) -> (i32, i32) {
    %c0_i32 = arith.constant 0 : i32
    %c0_i32_0 = arith.constant 0 : i32
    %c0_i32_1 = arith.constant 0 : i32
    return %c0_i32, %c0_i32_0 : i32, i32
  }
  func.func @transform_4(%arg0: i32) -> (i32, i32) {
    %c0_i32 = arith.constant 0 : i32
    %c0_i32_0 = arith.constant 0 : i32
    %c0_i32_1 = arith.constant 0 : i32
    return %c0_i32, %c0_i32_0 : i32, i32
  }
  func.func @transform_5(%arg0: i32) -> (i32, i32) {
    %c0_i32 = arith.constant 0 : i32
    %c0_i32_0 = arith.constant 0 : i32
    %c0_i32_1 = arith.constant 0 : i32
    return %c0_i32, %c0_i32_0 : i32, i32
  }
  func.func @transform_6(%arg0: i32) -> (i32, i32) {
    %c0_i32 = arith.constant 0 : i32
    %c0_i32_0 = arith.constant 0 : i32
    %c0_i32_1 = arith.constant 0 : i32
    return %c0_i32, %c0_i32_0 : i32, i32
  }
  func.func @transform_7(%arg0: i32) -> (i32, i32) {
    %c0_i32 = arith.constant 0 : i32
    %c0_i32_0 = arith.constant 0 : i32
    return %arg0, %c0_i32 : i32, i32
  }
}

</mosaic_0001>

<llo_original>
// kernel: image_encoder_forward.14
$region0: #{image_encoder_forward.14}
  #allocation0 [shape = 'u32[]', space=smem, size = 0x4, offset = 0x4, fixed_abs, tag = 'smem constant byte address 0x4 - core index']
  #allocation1 [shape = 'u32[144,128]{1,0:T(1,128)}', space=vmem, size = 0x12000, scoped, tag = 'internal scratch']
  %s0 = inlined_call_operand.vmem [shape: bf16[32,128], index: 0, kind: input, shape index: {}]
  %s1 = inlined_call_operand.vmem [shape: f32[1,128], index: 1, kind: input, shape index: {}]
  %s2 = inlined_call_operand.vmem [shape: f32[1,128], index: 2, kind: input, shape index: {}]
  %s3 = inlined_call_operand.vmem [shape: bf16[32,128], index: 3, kind: output, shape index: {}]
  %s4 = sld [smem:[#allocation0]]
  $region22: #{image_encoder_forward.14} parent=0
    _
  %s6 = ssub.s32 1, %s4
  %s7 = scalar_select 0, %s6, %s4
  // Predicated region
  $region2: #{image_encoder_forward.14} parent=0 // pred_check
    _
  $region3: #{image_encoder_forward.14} parent=0 // pred_check_branch
    %9 = sbr.rel (0) target = $region5
  $region4: #{image_encoder_forward.14} parent=0 // pred_region
    _
  $region5: #{image_encoder_forward.14} parent=0 // pred_fallthru
    _
  // Predicated region
  $region6: #{image_encoder_forward.14} parent=0 // pred_check
    _
  $region7: #{image_encoder_forward.14} parent=0 // pred_check_branch
    %11 = sbr.rel (0) target = $region9
  $region8: #{image_encoder_forward.14} parent=0 // pred_region
    _
  $region9: #{image_encoder_forward.14} parent=0 // pred_fallthru
    _
  // Predicated region
  $region10: #{image_encoder_forward.14} parent=0 // pred_check
    _
  $region11: #{image_encoder_forward.14} parent=0 // pred_check_branch
    %13 = sbr.rel (0) target = $region13
  $region12: #{image_encoder_forward.14} parent=0 // pred_region
    _
  $region13: #{image_encoder_forward.14} parent=0 // pred_fallthru
    _
  %v14 = vld [vmem:[%s0] sm:$0xf]
  %v15 = vld [vmem:[%s0 + $0x4] sm:$0xf]
  %v16 = vld [vmem:[%s0 + $0x8] sm:$0xf]
  %v17 = vld [vmem:[%s0 + $0xc] sm:$0xf]
  %v18 = vunpack.c.l.bf16 %v14
  %v19 = vunpack.c.l.bf16 %v15
  %v20 = vunpack.c.l.bf16 %v16
  %v21 = vunpack.c.l.bf16 %v17
  %22 = vadd.xlane.f32.xlu0 %v18
  %v23 = vpop.xlane.xlu0 %22
  %24 = vadd.xlane.f32.xlu0 %v19
  %v25 = vpop.xlane.xlu0 %24
  %26 = vadd.xlane.f32.xlu0 %v20
  %v27 = vpop.xlane.xlu0 %26
  %28 = vadd.xlane.f32.xlu0 %v21
  %v29 = vpop.xlane.xlu0 %28
  %v30 = vrcp.pop 128.0
  %v31 = vmul.f32 %v23, %v30
  %v32 = vmul.f32 %v25, %v30
  %v33 = vmul.f32 %v27, %v30
  %v34 = vmul.f32 %v29, %v30
  %v35 = vsub.f32 %v18, %v31
  %v36 = vsub.f32 %v19, %v32
  %v37 = vsub.f32 %v20, %v33
  %v38 = vsub.f32 %v21, %v34
  %v39 = vmul.f32 %v35, %v35
  %v40 = vmul.f32 %v36, %v36
  %v41 = vmul.f32 %v37, %v37
  %v42 = vmul.f32 %v38, %v38
  %43 = vadd.xlane.f32.xlu0 %v39
  %v44 = vpop.xlane.xlu0 %43
  %45 = vadd.xlane.f32.xlu0 %v40
  %v46 = vpop.xlane.xlu0 %45
  %47 = vadd.xlane.f32.xlu0 %v41
  %v48 = vpop.xlane.xlu0 %47
  %49 = vadd.xlane.f32.xlu0 %v42
  %v50 = vpop.xlane.xlu0 %49
  %v51 = vmul.f32 %v44, %v30
  %v52 = vmul.f32 %v46, %v30
  %v53 = vmul.f32 %v48, %v30
  %v54 = vmul.f32 %v50, %v30
  %v55 = vadd.f32 %v51, 1e-05
  %v56 = vadd.f32 %v52, 1e-05
  %v57 = vadd.f32 %v53, 1e-05
  %v58 = vadd.f32 %v54, 1e-05
  %v59 = vrsqrt.pop %v55
  %v60 = vrsqrt.pop %v56
  %v61 = vrsqrt.pop %v57
  %v62 = vrsqrt.pop %v58
  %v63 = vmul.f32 %v35, %v59
  %v64 = vmul.f32 %v36, %v60
  %v65 = vmul.f32 %v37, %v61
  %v66 = vmul.f32 %v38, %v62
  %v67 = vld [vmem:[%s1] sm:$0x1]
  %v69 = vlaneseq
  %v70 = vshrl.u32 %v69, 7
  %v71 = vsub.s32 0, %v70
  %v72 = vrot.slane %v67, %v71
  %v74 = vmul.f32 %v63, %v72
  %v75 = vmul.f32 %v64, %v72
  %v76 = vmul.f32 %v65, %v72
  %v77 = vmul.f32 %v66, %v72
  %v78 = vld [vmem:[%s2] sm:$0x1]
  %v80 = vlaneseq
  %v81 = vshrl.u32 %v80, 7
  %v82 = vsub.s32 0, %v81
  %v83 = vrot.slane %v78, %v82
  %v85 = vadd.f32 %v74, %v83
  %v86 = vadd.f32 %v75, %v83
  %v87 = vadd.f32 %v76, %v83
  %v88 = vadd.f32 %v77, %v83
  %v89 = vpack.c.bf16 %v86, %v85
  %v90 = vpack.c.bf16 %v88, %v87
  %v93 = vunpack.c.l.b16 %v89
  %v94 = vunpack.c.h.b16 %v89
  %v95 = vunpack.c.l.b16 %v90
  %v96 = vunpack.c.h.b16 %v90
  %v97 = vpack.c.b16 %v93, %v93
  %v98 = vpack.c.b16 %v94, %v94
  %v99 = vpack.c.b16 %v95, %v95
  %v100 = vpack.c.b16 %v96, %v96
  %105 = vst [vmem:[%s3] sm:$0xf] %v97
  %106 = vst [vmem:[%s3 + $0x4] sm:$0xf] %v98
  %107 = vst [vmem:[%s3 + $0x8] sm:$0xf] %v99
  %108 = vst [vmem:[%s3 + $0xc] sm:$0xf] %v100
  // Predicated region
  $region14: #{image_encoder_forward.14} parent=0 // pred_check
    _
  $region15: #{image_encoder_forward.14} parent=0 // pred_check_branch
    %110 = sbr.rel (0) target = $region17
  $region16: #{image_encoder_forward.14} parent=0 // pred_region
    _
  $region17: #{image_encoder_forward.14} parent=0 // pred_fallthru
    _
  // Predicated region
  $region18: #{image_encoder_forward.14} parent=0 // pred_check
    _
  $region19: #{image_encoder_forward.14} parent=0 // pred_check_branch
    %112 = sbr.rel (0) target = $region21
  $region20: #{image_encoder_forward.14} parent=0 // pred_region
    _
  $region21: #{image_encoder_forward.14} parent=0 // pred_fallthru
    _

// kernel: image_encoder_forward.15
$region0: #{image_encoder_forward.15}
  #allocation0 [shape = 'u32[]', space=smem, size = 0x4, offset = 0x4, fixed_abs, tag = 'smem constant byte address 0x4 - core index']
  #allocation1 [shape = 'u32[144,128]{1,0:T(1,128)}', space=vmem, size = 0x12000, scoped, tag = 'internal scratch']
  %s0 = inlined_call_operand.vmem [shape: bf16[32,128], index: 0, kind: input, shape index: {}]
  %s1 = inlined_call_operand.hbm [shape: bf16[128,384], index: 1, kind: input, shape index: {}]
  %s2 = inlined_call_operand.vmem [shape: f32[1,384], index: 2, kind: input, shape index: {}]
  %s3 = inlined_call_operand.vmem [shape: bf16[32,384], index: 3, kind: output, shape index: {}]
  %s4 = sld [smem:[#allocation0]]
  $region26: #{image_encoder_forward.15} parent=0
    _
  %s6 = ssub.s32 1, %s4
  %s7 = scalar_select 0, %s6, %s4
  $region1: #{image_encoder_forward.15} parent=0
    #allocation2 [shape = 'u8[98304]{0}', space=vmem, size = 0x18000, scoped, tag = 'input window, operand 1, single buffered']
    #allocation3 [shape = 's32[1]{0}', space=sflag, size = 0x4, scoped, tag = 'scoped memory for image_encoder_forward.15']
    %8 = vsyncpa [#allocation3], 0
    // Predicated region
    $region2: #{image_encoder_forward.15} parent=1 // pred_check
      _
    $region3: #{image_encoder_forward.15} parent=1 // pred_check_branch
      %10 = sbr.rel (0) target = $region5
    $region4: #{image_encoder_forward.15} parent=1 // pred_region
      _
    $region5: #{image_encoder_forward.15} parent=1 // pred_fallthru
      _
    // Predicated region
    $region6: #{image_encoder_forward.15} parent=1 // pred_check
      _
    $region7: #{image_encoder_forward.15} parent=1 // pred_check_branch
      %12 = sbr.rel (0) target = $region9
    $region8: #{image_encoder_forward.15} parent=1 // pred_region
      %s14 = ssub.s32 3072, 3072
      %15 = vsyncadd [#allocation3], %s14
      %s16 = sshll.u32 [#allocation2], 4
      %s17 = int_to_ptr.vmem [resolvable:$true] %s16
      %22 = dma.hbm_to_vmem [thread:$0]  %s1, 3072, %s17, [#allocation3], 192, 192, 12
    $region9: #{image_encoder_forward.15} parent=1 // pred_fallthru
      _
    // Predicated region
    $region10: #{image_encoder_forward.15} parent=1 // pred_check
      _
    $region11: #{image_encoder_forward.15} parent=1 // pred_check_branch
      %24 = sbr.rel (0) target = $region13
    $region12: #{image_encoder_forward.15} parent=1 // pred_region
      _
    $region13: #{image_encoder_forward.15} parent=1 // pred_fallthru
      _
    // Predicated region
    $region14: #{image_encoder_forward.15} parent=1 // pred_check
      _
    $region15: #{image_encoder_forward.15} parent=1 // pred_check_branch
      %26 = sbr.rel (0) target = $region17
    $region16: #{image_encoder_forward.15} parent=1 // pred_region
      %27 = dma.done [#allocation3], 3072
    $region17: #{image_encoder_forward.15} parent=1 // pred_fallthru
      _
    %v29 = vld [vmem:[%s0] sm:$0xf]
    %v30 = vld [vmem:[%s0 + $0x4] sm:$0xf]
    %v31 = vld [vmem:[%s0 + $0x8] sm:$0xf]
    %v32 = vld [vmem:[%s0 + $0xc] sm:$0xf]
    %v33 = vunpack.c.l.bf16 %v29
    %v34 = vunpack.c.l.bf16 %v30
    %v35 = vunpack.c.l.bf16 %v31
    %v36 = vunpack.c.l.bf16 %v32
    %37 = vadd.xlane.f32.xlu0 %v33
    %v38 = vpop.xlane.xlu0 %37
    %39 = vadd.xlane.f32.xlu0 %v34
    %v40 = vpop.xlane.xlu0 %39
    %41 = vadd.xlane.f32.xlu0 %v35
    %v42 = vpop.xlane.xlu0 %41
    %43 = vadd.xlane.f32.xlu0 %v36
    %v44 = vpop.xlane.xlu0 %43
    %v45 = vrcp.pop 128.0
    %v46 = vmul.f32 %v38, %v45
    %v47 = vmul.f32 %v40, %v45
    %v48 = vmul.f32 %v42, %v45
    %v49 = vmul.f32 %v44, %v45
    %v50 = vsub.f32 %v33, %v46
    %v51 = vsub.f32 %v34, %v47
    %v52 = vsub.f32 %v35, %v48
    %v53 = vsub.f32 %v36, %v49
    %v54 = vmul.f32 %v50, %v50
    %v55 = vmul.f32 %v51, %v51
    %v56 = vmul.f32 %v52, %v52
    %v57 = vmul.f32 %v53, %v53
    %58 = vadd.xlane.f32.xlu0 %v54
    %v59 = vpop.xlane.xlu0 %58
    %60 = vadd.xlane.f32.xlu0 %v55
    %v61 = vpop.xlane.xlu0 %60
    %62 = vadd.xlane.f32.xlu0 %v56
    %v63 = vpop.xlane.xlu0 %62
    %64 = vadd.xlane.f32.xlu0 %v57
    %v65 = vpop.xlane.xlu0 %64
    %v66 = vmul.f32 %v59, %v45
    %v67 = vmul.f32 %v61, %v45
    %v68 = vmul.f32 %v63, %v45
    %v69 = vmul.f32 %v65, %v45
    %v70 = vadd.f32 %v66, 1e-05
    %v71 = vadd.f32 %v67, 1e-05
    %v72 = vadd.f32 %v68, 1e-05
    %v73 = vadd.f32 %v69, 1e-05
    %v74 = vrsqrt.pop %v70
    %v75 = vrsqrt.pop %v71
    %v76 = vrsqrt.pop %v72
    %v77 = vrsqrt.pop %v73
    %v78 = vmul.f32 %v50, %v74
    %v79 = vmul.f32 %v51, %v75
    %v80 = vmul.f32 %v52, %v76
    %v81 = vmul.f32 %v53, %v77
    %v82 = vpack.c.bf16 %v79, %v78
    %v83 = vpack.c.bf16 %v81, %v80
    %v84 = vld [vmem:[#allocation2] sm:$0xff]
    %v85 = vld [vmem:[#allocation2 + $0x8] sm:$0xf]
    %v86 = vld [vmem:[#allocation2 + $0xc] sm:$0xff]
    %v87 = vld [vmem:[#allocation2 + $0x14] sm:$0xf]
    %v88 = vld [vmem:[#allocation2 + $0x18] sm:$0xff]
    %v89 = vld [vmem:[#allocation2 + $0x20] sm:$0xf]
    %v90 = vld [vmem:[#allocation2 + $0x24] sm:$0xff]
    %v91 = vld [vmem:[#allocation2 + $0x2c] sm:$0xf]
    %v92 = vld [vmem:[#allocation2 + $0x30] sm:$0xff]
    %v93 = vld [vmem:[#allocation2 + $0x38] sm:$0xf]
    %v94 = vld [vmem:[#allocation2 + $0x3c] sm:$0xff]
    %v95 = vld [vmem:[#allocation2 + $0x44] sm:$0xf]
    %v96 = vld [vmem:[#allocation2 + $0x48] sm:$0xff]
    %v97 = vld [vmem:[#allocation2 + $0x50] sm:$0xf]
    %v98 = vld [vmem:[#allocation2 + $0x54] sm:$0xff]
    %v99 = vld [vmem:[#allocation2 + $0x5c] sm:$0xf]
    %v100 = vld [vmem:[#allocation2 + $0x60] sm:$0xff]
    %v101 = vld [vmem:[#allocation2 + $0x68] sm:$0xf]
    %v102 = vld [vmem:[#allocation2 + $0x6c] sm:$0xff]
    %v103 = vld [vmem:[#allocation2 + $0x74] sm:$0xf]
    %v104 = vld [vmem:[#allocation2 + $0x78] sm:$0xff]
    %v105 = vld [vmem:[#allocation2 + $0x80] sm:$0xf]
    %v106 = vld [vmem:[#allocation2 + $0x84] sm:$0xff]
    %v107 = vld [vmem:[#allocation2 + $0x8c] sm:$0xf]
    %v108 = vld [vmem:[#allocation2 + $0x90] sm:$0xff]
    %v109 = vld [vmem:[#allocation2 + $0x98] sm:$0xf]
    %v110 = vld [vmem:[#allocation2 + $0x9c] sm:$0xff]
    %v111 = vld [vmem:[#allocation2 + $0xa4] sm:$0xf]
    %v112 = vld [vmem:[#allocation2 + $0xa8] sm:$0xff]
    %v113 = vld [vmem:[#allocation2 + $0xb0] sm:$0xf]
    %v114 = vld [vmem:[#allocation2 + $0xb4] sm:$0xff]
    %v115 = vld [vmem:[#allocation2 + $0xbc] sm:$0xf]
    %v116 = vld [vmem:[%s2] sm:$0x7]
    %v118 = vlaneseq
    %v119 = vshrl.u32 %v118, 7
    %v120 = vsub.s32 0, %v119
    %v121 = vrot.slane %v116, %v120
    %v122 = vlaneseq
    %v123 = vshrl.u32 %v122, 7
    %v124 = vsub.s32 1, %v123
    %v125 = vrot.slane %v116, %v124
    %v126 = vlaneseq
    %v127 = vshrl.u32 %v126, 7
    %v128 = vsub.s32 2, %v127
    %v129 = vrot.slane %v116, %v128
    %v165 = vunpack.c.l.b16 %v84
    %v166 = vunpack.c.h.b16 %v84
    %v167 = vunpack.c.l.b16 %v85
    %v168 = vunpack.c.l.b16 %v86
    %v169 = vunpack.c.h.b16 %v86
    %v170 = vunpack.c.l.b16 %v87
    %v171 = vunpack.c.l.b16 %v88
    %v172 = vunpack.c.h.b16 %v88
    %v173 = vunpack.c.l.b16 %v89
    %v174 = vunpack.c.l.b16 %v90
    %v175 = vunpack.c.h.b16 %v90
    %v176 = vunpack.c.l.b16 %v91
    %v177 = vunpack.c.l.b16 %v92
    %v178 = vunpack.c.h.b16 %v92
    %v179 = vunpack.c.l.b16 %v93
    %v180 = vunpack.c.l.b16 %v94
    %v181 = vunpack.c.h.b16 %v94
    %v182 = vunpack.c.l.b16 %v95
    %v183 = vunpack.c.l.b16 %v96
    %v184 = vunpack.c.h.b16 %v96
    %v185 = vunpack.c.l.b16 %v97
    %v186 = vunpack.c.l.b16 %v98
    %v187 = vunpack.c.h.b16 %v98
    %v188 = vunpack.c.l.b16 %v99
    %v189 = vunpack.c.l.b16 %v100
    %v190 = vunpack.c.h.b16 %v100
    %v191 = vunpack.c.l.b16 %v101
    %v192 = vunpack.c.l.b16 %v102
    %v193 = vunpack.c.h.b16 %v102
    %v194 = vunpack.c.l.b16 %v103
    %v195 = vunpack.c.l.b16 %v104
    %v196 = vunpack.c.h.b16 %v104
    %v197 = vunpack.c.l.b16 %v105
    %v198 = vunpack.c.l.b16 %v106
    %v199 = vunpack.c.h.b16 %v106
    %v200 = vunpack.c.l.b16 %v107
    %v201 = vunpack.c.l.b16 %v108
    %v202 = vunpack.c.h.b16 %v108
    %v203 = vunpack.c.l.b16 %v109
    %v204 = vunpack.c.l.b16 %v110
    %v205 = vunpack.c.h.b16 %v110
    %v206 = vunpack.c.l.b16 %v111
    %v207 = vunpack.c.l.b16 %v112
    %v208 = vunpack.c.h.b16 %v112
    %v209 = vunpack.c.l.b16 %v113
    %v210 = vunpack.c.l.b16 %v114
    %v211 = vunpack.c.h.b16 %v114
    %v212 = vunpack.c.l.b16 %v115
    %v213 = vpack.c.b16 %v168, %v165
    %v214 = vpack.c.b16 %v169, %v166
    %v215 = vpack.c.b16 %v170, %v167
    %v216 = vpack.c.b16 %v174, %v171
    %v217 = vpack.c.b16 %v175, %v172
    %v218 = vpack.c.b16 %v176, %v173
    %v219 = vpack.c.b16 %v180, %v177
    %v220 = vpack.c.b16 %v181, %v178
    %v221 = vpack.c.b16 %v182, %v179
    %v222 = vpack.c.b16 %v186, %v183
    %v223 = vpack.c.b16 %v187, %v184
    %v224 = vpack.c.b16 %v188, %v185
    %v225 = vpack.c.b16 %v192, %v189
    %v226 = vpack.c.b16 %v193, %v190
    %v227 = vpack.c.b16 %v194, %v191
    %v228 = vpack.c.b16 %v198, %v195
    %v229 = vpack.c.b16 %v199, %v196
    %v230 = vpack.c.b16 %v200, %v197
    %v231 = vpack.c.b16 %v204, %v201
    %v232 = vpack.c.b16 %v205, %v202
    %v233 = vpack.c.b16 %v206, %v203
    %v234 = vpack.c.b16 %v210, %v207
    %v235 = vpack.c.b16 %v211, %v208
    %v236 = vpack.c.b16 %v212, %v209
    %261 = vmatprep.subr.bf16.mxu0 %v214
    %262 = vmatpush1.bf16.msra.mxu0 %v213
    %263 = vmatprep.subr.bf16.mxu0 %v217
    %264 = vmatpush1.bf16.msra.mxu0 %v216
    %265 = vmatprep.subr.bf16.mxu0 %v220
    %266 = vmatpush1.bf16.msra.mxu0 %v219
    %267 = vmatprep.subr.bf16.mxu0 %v223
    %268 = vmatpush1.bf16.msra.mxu0 %v222
    %269 = vmatprep.subr.bf16.mxu0 %v226
    %270 = vmatpush1.bf16.msra.mxu0 %v225
    %271 = vmatprep.subr.bf16.mxu0 %v229
    %272 = vmatpush1.bf16.msra.mxu0 %v228
    %273 = vmatprep.subr.bf16.mxu0 %v232
    %274 = vmatpush1.bf16.msra.mxu0 %v231
    %275 = vmatprep.subr.bf16.mxu0 %v235
    %276 = vmatpush1.bf16.msra.mxu0 %v234
    %277 = vmatprep.subr.bf16.mxu0 0
    %278 = vmatpush1.bf16.msra.mxu0 0
    %279 = vmatprep.subr.bf16.mxu0 0
    %280 = vmatpush1.bf16.msra.mxu0 0
    %281 = vmatprep.subr.bf16.mxu0 0
    %282 = vmatpush1.bf16.msra.mxu0 0
    %283 = vmatprep.subr.bf16.mxu0 0
    %284 = vmatpush1.bf16.msra.mxu0 0
    %285 = vmatprep.subr.bf16.mxu0 0
    %286 = vmatpush1.bf16.msra.mxu0 0
    %287 = vmatprep.subr.bf16.mxu0 0
    %288 = vmatpush1.bf16.msra.mxu0 0
    %289 = vmatprep.subr.bf16.mxu0 0
    %290 = vmatpush1.bf16.msra.mxu0 0
    %291 = vmatprep.subr.bf16.mxu0 0
    %292 = vmatpush1.bf16.msra.mxu0 0
    %293 = vmatprep.mubr.bf16.mxu0 0
    %294 = vmatmul.mubr.bf16.gmra.mrb[0].mxu0 %v82
    %v295 = vpop.f32.mrb[0].mxu0
    %v296 = vadd.f32 %v121, %v295
    %v297 = vpop.f32.mrb[0].mxu0
    %v298 = vadd.f32 %v125, %v297
    %v299 = vpop.f32.mrb[0].mxu0
    %v300 = vadd.f32 %v121, %v299
    %v301 = vpop.f32.mrb[0].mxu0
    %v302 = vadd.f32 %v125, %v301
    %303 = vmatprep.mubr.bf16.mxu0 0
    %304 = vmatmul.mubr.bf16.gmra.mrb[0].mxu0 %v83
    %v305 = vpop.f32.mrb[0].mxu0
    %v306 = vadd.f32 %v121, %v305
    %v307 = vpop.f32.mrb[0].mxu0
    %v308 = vadd.f32 %v125, %v307
    %v309 = vpop.f32.mrb[0].mxu0
    %v310 = vadd.f32 %v121, %v309
    %v311 = vpop.f32.mrb[0].mxu0
    %v312 = vadd.f32 %v125, %v311
    %313 = vdwg.mxu0
    %314 = vmatprep.subr.bf16.mxu0 0
    %315 = vmatpush1.bf16.msra.mxu0 %v215
    %316 = vmatprep.subr.bf16.mxu0 0
    %317 = vmatpush1.bf16.msra.mxu0 %v218
    %318 = vmatprep.subr.bf16.mxu0 0
    %319 = vmatpush1.bf16.msra.mxu0 %v221
    %320 = vmatprep.subr.bf16.mxu0 0
    %321 = vmatpush1.bf16.msra.mxu0 %v224
    %322 = vmatprep.subr.bf16.mxu0 0
    %323 = vmatpush1.bf16.msra.mxu0 %v227
    %324 = vmatprep.subr.bf16.mxu0 0
    %325 = vmatpush1.bf16.msra.mxu0 %v230
    %326 = vmatprep.subr.bf16.mxu0 0
    %327 = vmatpush1.bf16.msra.mxu0 %v233
    %328 = vmatprep.subr.bf16.mxu0 0
    %329 = vmatpush1.bf16.msra.mxu0 %v236
    %330 = vmatprep.subr.bf16.mxu0 0
    %331 = vmatpush1.bf16.msra.mxu0 0
    %332 = vmatprep.subr.bf16.mxu0 0
    %333 = vmatpush1.bf16.msra.mxu0 0
    %334 = vmatprep.subr.bf16.mxu0 0
    %335 = vmatpush1.bf16.msra.mxu0 0
    %336 = vmatprep.subr.bf16.mxu0 0
    %337 = vmatpush1.bf16.msra.mxu0 0
    %338 = vmatprep.subr.bf16.mxu0 0
    %339 = vmatpush1.bf16.msra.mxu0 0
    %340 = vmatprep.subr.bf16.mxu0 0
    %341 = vmatpush1.bf16.msra.mxu0 0
    %342 = vmatprep.subr.bf16.mxu0 0
    %343 = vmatpush1.bf16.msra.mxu0 0
    %344 = vmatprep.subr.bf16.mxu0 0
    %345 = vmatpush1.bf16.msra.mxu0 0
    %346 = vmatprep.mubr.bf16.mxu0 0
    %347 = vmatmul.mubr.bf16.gmra.mrb[0].mxu0 %v82
    %v348 = vpop.f32.mrb[0].mxu0
    %v349 = vadd.f32 %v129, %v348
    %v350 = vpop.f32.mrb[0].mxu0
    %v351 = vpop.f32.mrb[0].mxu0
    %v352 = vadd.f32 %v129, %v351
    %v353 = vpop.f32.mrb[0].mxu0
    %354 = vmatprep.mubr.bf16.mxu0 0
    %355 = vmatmul.mubr.bf16.gmra.mrb[0].mxu0 %v83
    %v356 = vpop.f32.mrb[0].mxu0
    %v357 = vadd.f32 %v129, %v356
    %v358 = vpop.f32.mrb[0].mxu0
    %v359 = vpop.f32.mrb[0].mxu0
    %v360 = vadd.f32 %v129, %v359
    %v361 = vpop.f32.mrb[0].mxu0
    %362 = vdwg.mxu0
    %v363 = vpack.c.bf16 %v300, %v296
    %v364 = vpack.c.bf16 %v302, %v298
    %v365 = vpack.c.bf16 %v352, %v349
    %v366 = vpack.c.bf16 %v310, %v306
    %v367 = vpack.c.bf16 %v312, %v308
    %v368 = vpack.c.bf16 %v360, %v357
    %v375 = vunpack.c.l.b16 %v363
    %v376 = vunpack.c.l.b16 %v364
    %v377 = vunpack.c.l.b16 %v365
    %v378 = vunpack.c.h.b16 %v363
    %v379 = vunpack.c.h.b16 %v364
    %v380 = vunpack.c.h.b16 %v365
    %v381 = vunpack.c.l.b16 %v366
    %v382 = vunpack.c.l.b16 %v367
    %v383 = vunpack.c.l.b16 %v368
    %v384 = vunpack.c.h.b16 %v366
    %v385 = vunpack.c.h.b16 %v367
    %v386 = vunpack.c.h.b16 %v368
    %v387 = vpack.c.b16 %v376, %v375
    %v388 = vpack.c.b16 %v377, %v377
    %v389 = vpack.c.b16 %v379, %v378
    %v390 = vpack.c.b16 %v380, %v380
    %v391 = vpack.c.b16 %v382, %v381
    %v392 = vpack.c.b16 %v383, %v383
    %v393 = vpack.c.b16 %v385, %v384
    %v394 = vpack.c.b16 %v386, %v386
    %403 = vst [vmem:[%s3] sm:$0xff] %v387
    %404 = vst [vmem:[%s3 + $0x8] sm:$0xf] %v388
    %405 = vst [vmem:[%s3 + $0xc] sm:$0xff] %v389
    %406 = vst [vmem:[%s3 + $0x14] sm:$0xf] %v390
    %407 = vst [vmem:[%s3 + $0x18] sm:$0xff] %v391
    %408 = vst [vmem:[%s3 + $0x20] sm:$0xf] %v392
    %409 = vst [vmem:[%s3 + $0x24] sm:$0xff] %v393
    %410 = vst [vmem:[%s3 + $0x2c] sm:$0xf] %v394
    // Predicated region
    $region18: #{image_encoder_forward.15} parent=1 // pred_check
      _
    $region19: #{image_encoder_forward.15} parent=1 // pred_check_branch
      %412 = sbr.rel (0) target = $region21
    $region20: #{image_encoder_forward.15} parent=1 // pred_region
      _
    $region21: #{image_encoder_forward.15} parent=1 // pred_fallthru
      _
    // Predicated region
    $region22: #{image_encoder_forward.15} parent=1 // pred_check
      _
    $region23: #{image_encoder_forward.15} parent=1 // pred_check_branch
      %414 = sbr.rel (0) target = $region25
    $region24: #{image_encoder_forward.15} parent=1 // pred_region
      _
    $region25: #{image_encoder_forward.15} parent=1 // pred_fallthru
      _
    %415 = vsyncpa [#allocation3], 1

// kernel: image_encoder_forward.13
$region0: #{image_encoder_forward.13}
  #allocation0 [shape = 'u32[]', space=smem, size = 0x4, offset = 0x4, fixed_abs, tag = 'smem constant byte address 0x4 - core index']
  #allocation1 [shape = 'u32[144,128]{1,0:T(1,128)}', space=vmem, size = 0x12000, scoped, tag = 'internal scratch']
  %s0 = inlined_call_operand.vmem [shape: bf16[8,768], index: 0, kind: input, shape index: {}]
  %s1 = inlined_call_operand.vmem [shape: bf16[768,128], index: 1, kind: input, shape index: {}]
  %s2 = inlined_call_operand.vmem [shape: f32[1,128], index: 2, kind: input, shape index: {}]
  %s3 = inlined_call_operand.vmem [shape: bf16[8,128], index: 3, kind: output, shape index: {}]
  %s4 = sld [smem:[#allocation0]]
  $region22: #{image_encoder_forward.13} parent=0
    _
  %s6 = ssub.s32 1, %s4
  %s7 = scalar_select 0, %s6, %s4
  // Predicated region
  $region2: #{image_encoder_forward.13} parent=0 // pred_check
    _
  $region3: #{image_encoder_forward.13} parent=0 // pred_check_branch
    %9 = sbr.rel (0) target = $region5
  $region4: #{image_encoder_forward.13} parent=0 // pred_region
    _
  $region5: #{image_encoder_forward.13} parent=0 // pred_fallthru
    _
  // Predicated region
  $region6: #{image_encoder_forward.13} parent=0 // pred_check
    _
  $region7: #{image_encoder_forward.13} parent=0 // pred_check_branch
    %11 = sbr.rel (0) target = $region9
  $region8: #{image_encoder_forward.13} parent=0 // pred_region
    _
  $region9: #{image_encoder_forward.13} parent=0 // pred_fallthru
    _
  // Predicated region
  $region10: #{image_encoder_forward.13} parent=0 // pred_check
    _
  $region11: #{image_encoder_forward.13} parent=0 // pred_check_branch
    %13 = sbr.rel (0) target = $region13
  $region12: #{image_encoder_forward.13} parent=0 // pred_region
    _
  $region13: #{image_encoder_forward.13} parent=0 // pred_fallthru
    _
  %v15 = vld [vmem:[%s0] sm:$0xff]
  %v16 = vld [vmem:[%s0 + $0x8] sm:$0xff]
  %v17 = vld [vmem:[%s0 + $0x10] sm:$0xff]
  %v18 = vld [vmem:[%s1] sm:$0xf]
  %v19 = vld [vmem:[%s1 + $0x4] sm:$0xf]
  %v20 = vld [vmem:[%s1 + $0x8] sm:$0xf]
  %v21 = vld [vmem:[%s1 + $0xc] sm:$0xf]
  %v22 = vld [vmem:[%s1 + $0x10] sm:$0xf]
  %v23 = vld [vmem:[%s1 + $0x14] sm:$0xf]
  %v24 = vld [vmem:[%s1 + $0x18] sm:$0xf]
  %v25 = vld [vmem:[%s1 + $0x1c] sm:$0xf]
  %v26 = vld [vmem:[%s1 + $0x20] sm:$0xf]
  %v27 = vld [vmem:[%s1 + $0x24] sm:$0xf]
  %v28 = vld [vmem:[%s1 + $0x28] sm:$0xf]
  %v29 = vld [vmem:[%s1 + $0x2c] sm:$0xf]
  %v30 = vld [vmem:[%s1 + $0x30] sm:$0xf]
  %v31 = vld [vmem:[%s1 + $0x34] sm:$0xf]
  %v32 = vld [vmem:[%s1 + $0x38] sm:$0xf]
  %v33 = vld [vmem:[%s1 + $0x3c] sm:$0xf]
  %v34 = vld [vmem:[%s1 + $0x40] sm:$0xf]
  %v35 = vld [vmem:[%s1 + $0x44] sm:$0xf]
  %v36 = vld [vmem:[%s1 + $0x48] sm:$0xf]
  %v37 = vld [vmem:[%s1 + $0x4c] sm:$0xf]
  %v38 = vld [vmem:[%s1 + $0x50] sm:$0xf]
  %v39 = vld [vmem:[%s1 + $0x54] sm:$0xf]
  %v40 = vld [vmem:[%s1 + $0x58] sm:$0xf]
  %v41 = vld [vmem:[%s1 + $0x5c] sm:$0xf]
  %v42 = vld [vmem:[%s1 + $0x60] sm:$0xf]
  %v43 = vld [vmem:[%s1 + $0x64] sm:$0xf]
  %v44 = vld [vmem:[%s1 + $0x68] sm:$0xf]
  %v45 = vld [vmem:[%s1 + $0x6c] sm:$0xf]
  %v46 = vld [vmem:[%s1 + $0x70] sm:$0xf]
  %v47 = vld [vmem:[%s1 + $0x74] sm:$0xf]
  %v48 = vld [vmem:[%s1 + $0x78] sm:$0xf]
  %v49 = vld [vmem:[%s1 + $0x7c] sm:$0xf]
  %v50 = vld [vmem:[%s1 + $0x80] sm:$0xf]
  %v51 = vld [vmem:[%s1 + $0x84] sm:$0xf]
  %v52 = vld [vmem:[%s1 + $0x88] sm:$0xf]
  %v53 = vld [vmem:[%s1 + $0x8c] sm:$0xf]
  %v54 = vld [vmem:[%s1 + $0x90] sm:$0xf]
  %v55 = vld [vmem:[%s1 + $0x94] sm:$0xf]
  %v56 = vld [vmem:[%s1 + $0x98] sm:$0xf]
  %v57 = vld [vmem:[%s1 + $0x9c] sm:$0xf]
  %v58 = vld [vmem:[%s1 + $0xa0] sm:$0xf]
  %v59 = vld [vmem:[%s1 + $0xa4] sm:$0xf]
  %v60 = vld [vmem:[%s1 + $0xa8] sm:$0xf]
  %v61 = vld [vmem:[%s1 + $0xac] sm:$0xf]
  %v62 = vld [vmem:[%s1 + $0xb0] sm:$0xf]
  %v63 = vld [vmem:[%s1 + $0xb4] sm:$0xf]
  %v64 = vld [vmem:[%s1 + $0xb8] sm:$0xf]
  %v65 = vld [vmem:[%s1 + $0xbc] sm:$0xf]
  %v66 = vld [vmem:[%s1 + $0xc0] sm:$0xf]
  %v67 = vld [vmem:[%s1 + $0xc4] sm:$0xf]
  %v68 = vld [vmem:[%s1 + $0xc8] sm:$0xf]
  %v69 = vld [vmem:[%s1 + $0xcc] sm:$0xf]
  %v70 = vld [vmem:[%s1 + $0xd0] sm:$0xf]
  %v71 = vld [vmem:[%s1 + $0xd4] sm:$0xf]
  %v72 = vld [vmem:[%s1 + $0xd8] sm:$0xf]
  %v73 = vld [vmem:[%s1 + $0xdc] sm:$0xf]
  %v74 = vld [vmem:[%s1 + $0xe0] sm:$0xf]
  %v75 = vld [vmem:[%s1 + $0xe4] sm:$0xf]
  %v76 = vld [vmem:[%s1 + $0xe8] sm:$0xf]
  %v77 = vld [vmem:[%s1 + $0xec] sm:$0xf]
  %v78 = vld [vmem:[%s1 + $0xf0] sm:$0xf]
  %v79 = vld [vmem:[%s1 + $0xf4] sm:$0xf]
  %v80 = vld [vmem:[%s1 + $0xf8] sm:$0xf]
  %v81 = vld [vmem:[%s1 + $0xfc] sm:$0xf]
  %v82 = vld [vmem:[%s1 + $0x100] sm:$0xf]
  %v83 = vld [vmem:[%s1 + $0x104] sm:$0xf]
  %v84 = vld [vmem:[%s1 + $0x108] sm:$0xf]
  %v85 = vld [vmem:[%s1 + $0x10c] sm:$0xf]
  %v86 = vld [vmem:[%s1 + $0x110] sm:$0xf]
  %v87 = vld [vmem:[%s1 + $0x114] sm:$0xf]
  %v88 = vld [vmem:[%s1 + $0x118] sm:$0xf]
  %v89 = vld [vmem:[%s1 + $0x11c] sm:$0xf]
  %v90 = vld [vmem:[%s1 + $0x120] sm:$0xf]
  %v91 = vld [vmem:[%s1 + $0x124] sm:$0xf]
  %v92 = vld [vmem:[%s1 + $0x128] sm:$0xf]
  %v93 = vld [vmem:[%s1 + $0x12c] sm:$0xf]
  %v94 = vld [vmem:[%s1 + $0x130] sm:$0xf]
  %v95 = vld [vmem:[%s1 + $0x134] sm:$0xf]
  %v96 = vld [vmem:[%s1 + $0x138] sm:$0xf]
  %v97 = vld [vmem:[%s1 + $0x13c] sm:$0xf]
  %v98 = vld [vmem:[%s1 + $0x140] sm:$0xf]
  %v99 = vld [vmem:[%s1 + $0x144] sm:$0xf]
  %v100 = vld [vmem:[%s1 + $0x148] sm:$0xf]
  %v101 = vld [vmem:[%s1 + $0x14c] sm:$0xf]
  %v102 = vld [vmem:[%s1 + $0x150] sm:$0xf]
  %v103 = vld [vmem:[%s1 + $0x154] sm:$0xf]
  %v104 = vld [vmem:[%s1 + $0x158] sm:$0xf]
  %v105 = vld [vmem:[%s1 + $0x15c] sm:$0xf]
  %v106 = vld [vmem:[%s1 + $0x160] sm:$0xf]
  %v107 = vld [vmem:[%s1 + $0x164] sm:$0xf]
  %v108 = vld [vmem:[%s1 + $0x168] sm:$0xf]
  %v109 = vld [vmem:[%s1 + $0x16c] sm:$0xf]
  %v110 = vld [vmem:[%s1 + $0x170] sm:$0xf]
  %v111 = vld [vmem:[%s1 + $0x174] sm:$0xf]
  %v112 = vld [vmem:[%s1 + $0x178] sm:$0xf]
  %v113 = vld [vmem:[%s1 + $0x17c] sm:$0xf]
  %v114 = vld [vmem:[%s2] sm:$0x1]
  %v116 = vlaneseq
  %v117 = vshrl.u32 %v116, 7
  %v118 = vsub.s32 0, %v117
  %v119 = vrot.slane %v114, %v118
  %v124 = vunpack.c.l.b16 %v15
  %v125 = vunpack.c.h.b16 %v15
  %v126 = vunpack.c.l.b16 %v16
  %v127 = vunpack.c.h.b16 %v16
  %v128 = vunpack.c.l.b16 %v17
  %v129 = vunpack.c.h.b16 %v17
  %v130 = vpack.c.b16 %v124, %v124
  %v131 = vpack.c.b16 %v125, %v125
  %v132 = vpack.c.b16 %v126, %v126
  %v133 = vpack.c.b16 %v127, %v127
  %v134 = vpack.c.b16 %v128, %v128
  %v135 = vpack.c.b16 %v129, %v129
  %v238 = vunpack.c.l.b16 %v18
  %v239 = vunpack.c.l.b16 %v19
  %v240 = vunpack.c.l.b16 %v20
  %v241 = vunpack.c.l.b16 %v21
  %v242 = vunpack.c.l.b16 %v22
  %v243 = vunpack.c.l.b16 %v23
  %v244 = vunpack.c.l.b16 %v24
  %v245 = vunpack.c.l.b16 %v25
  %v246 = vunpack.c.l.b16 %v26
  %v247 = vunpack.c.l.b16 %v27
  %v248 = vunpack.c.l.b16 %v28
  %v249 = vunpack.c.l.b16 %v29
  %v250 = vunpack.c.l.b16 %v30
  %v251 = vunpack.c.l.b16 %v31
  %v252 = vunpack.c.l.b16 %v32
  %v253 = vunpack.c.l.b16 %v33
  %v254 = vunpack.c.l.b16 %v34
  %v255 = vunpack.c.l.b16 %v35
  %v256 = vunpack.c.l.b16 %v36
  %v257 = vunpack.c.l.b16 %v37
  %v258 = vunpack.c.l.b16 %v38
  %v259 = vunpack.c.l.b16 %v39
  %v260 = vunpack.c.l.b16 %v40
  %v261 = vunpack.c.l.b16 %v41
  %v262 = vunpack.c.l.b16 %v42
  %v263 = vunpack.c.l.b16 %v43
  %v264 = vunpack.c.l.b16 %v44
  %v265 = vunpack.c.l.b16 %v45
  %v266 = vunpack.c.l.b16 %v46
  %v267 = vunpack.c.l.b16 %v47
  %v268 = vunpack.c.l.b16 %v48
  %v269 = vunpack.c.l.b16 %v49
  %v270 = vunpack.c.l.b16 %v50
  %v271 = vunpack.c.l.b16 %v51
  %v272 = vunpack.c.l.b16 %v52
  %v273 = vunpack.c.l.b16 %v53
  %v274 = vunpack.c.l.b16 %v54
  %v275 = vunpack.c.l.b16 %v55
  %v276 = vunpack.c.l.b16 %v56
  %v277 = vunpack.c.l.b16 %v57
  %v278 = vunpack.c.l.b16 %v58
  %v279 = vunpack.c.l.b16 %v59
  %v280 = vunpack.c.l.b16 %v60
  %v281 = vunpack.c.l.b16 %v61
  %v282 = vunpack.c.l.b16 %v62
  %v283 = vunpack.c.l.b16 %v63
  %v284 = vunpack.c.l.b16 %v64
  %v285 = vunpack.c.l.b16 %v65
  %v286 = vunpack.c.l.b16 %v66
  %v287 = vunpack.c.l.b16 %v67
  %v288 = vunpack.c.l.b16 %v68
  %v289 = vunpack.c.l.b16 %v69
  %v290 = vunpack.c.l.b16 %v70
  %v291 = vunpack.c.l.b16 %v71
  %v292 = vunpack.c.l.b16 %v72
  %v293 = vunpack.c.l.b16 %v73
  %v294 = vunpack.c.l.b16 %v74
  %v295 = vunpack.c.l.b16 %v75
  %v296 = vunpack.c.l.b16 %v76
  %v297 = vunpack.c.l.b16 %v77
  %v298 = vunpack.c.l.b16 %v78
  %v299 = vunpack.c.l.b16 %v79
  %v300 = vunpack.c.l.b16 %v80
  %v301 = vunpack.c.l.b16 %v81
  %v302 = vunpack.c.l.b16 %v82
  %v303 = vunpack.c.l.b16 %v83
  %v304 = vunpack.c.l.b16 %v84
  %v305 = vunpack.c.l.b16 %v85
  %v306 = vunpack.c.l.b16 %v86
  %v307 = vunpack.c.l.b16 %v87
  %v308 = vunpack.c.l.b16 %v88
  %v309 = vunpack.c.l.b16 %v89
  %v310 = vunpack.c.l.b16 %v90
  %v311 = vunpack.c.l.b16 %v91
  %v312 = vunpack.c.l.b16 %v92
  %v313 = vunpack.c.l.b16 %v93
  %v314 = vunpack.c.l.b16 %v94
  %v315 = vunpack.c.l.b16 %v95
  %v316 = vunpack.c.l.b16 %v96
  %v317 = vunpack.c.l.b16 %v97
  %v318 = vunpack.c.l.b16 %v98
  %v319 = vunpack.c.l.b16 %v99
  %v320 = vunpack.c.l.b16 %v100
  %v321 = vunpack.c.l.b16 %v101
  %v322 = vunpack.c.l.b16 %v102
  %v323 = vunpack.c.l.b16 %v103
  %v324 = vunpack.c.l.b16 %v104
  %v325 = vunpack.c.l.b16 %v105
  %v326 = vunpack.c.l.b16 %v106
  %v327 = vunpack.c.l.b16 %v107
  %v328 = vunpack.c.l.b16 %v108
  %v329 = vunpack.c.l.b16 %v109
  %v330 = vunpack.c.l.b16 %v110
  %v331 = vunpack.c.l.b16 %v111
  %v332 = vunpack.c.l.b16 %v112
  %v333 = vunpack.c.l.b16 %v113
  %v334 = vpack.c.b16 %v239, %v238
  %v335 = vpack.c.b16 %v241, %v240
  %v336 = vpack.c.b16 %v243, %v242
  %v337 = vpack.c.b16 %v245, %v244
  %v338 = vpack.c.b16 %v247, %v246
  %v339 = vpack.c.b16 %v249, %v248
  %v340 = vpack.c.b16 %v251, %v250
  %v341 = vpack.c.b16 %v253, %v252
  %v342 = vpack.c.b16 %v255, %v254
  %v343 = vpack.c.b16 %v257, %v256
  %v344 = vpack.c.b16 %v259, %v258
  %v345 = vpack.c.b16 %v261, %v260
  %v346 = vpack.c.b16 %v263, %v262
  %v347 = vpack.c.b16 %v265, %v264
  %v348 = vpack.c.b16 %v267, %v266
  %v349 = vpack.c.b16 %v269, %v268
  %v350 = vpack.c.b16 %v271, %v270
  %v351 = vpack.c.b16 %v273, %v272
  %v352 = vpack.c.b16 %v275, %v274
  %v353 = vpack.c.b16 %v277, %v276
  %v354 = vpack.c.b16 %v279, %v278
  %v355 = vpack.c.b16 %v281, %v280
  %v356 = vpack.c.b16 %v283, %v282
  %v357 = vpack.c.b16 %v285, %v284
  %v358 = vpack.c.b16 %v287, %v286
  %v359 = vpack.c.b16 %v289, %v288
  %v360 = vpack.c.b16 %v291, %v290
  %v361 = vpack.c.b16 %v293, %v292
  %v362 = vpack.c.b16 %v295, %v294
  %v363 = vpack.c.b16 %v297, %v296
  %v364 = vpack.c.b16 %v299, %v298
  %v365 = vpack.c.b16 %v301, %v300
  %v366 = vpack.c.b16 %v303, %v302
  %v367 = vpack.c.b16 %v305, %v304
  %v368 = vpack.c.b16 %v307, %v306
  %v369 = vpack.c.b16 %v309, %v308
  %v370 = vpack.c.b16 %v311, %v310
  %v371 = vpack.c.b16 %v313, %v312
  %v372 = vpack.c.b16 %v315, %v314
  %v373 = vpack.c.b16 %v317, %v316
  %v374 = vpack.c.b16 %v319, %v318
  %v375 = vpack.c.b16 %v321, %v320
  %v376 = vpack.c.b16 %v323, %v322
  %v377 = vpack.c.b16 %v325, %v324
  %v378 = vpack.c.b16 %v327, %v326
  %v379 = vpack.c.b16 %v329, %v328
  %v380 = vpack.c.b16 %v331, %v330
  %v381 = vpack.c.b16 %v333, %v332
  %430 = vmatprep.subr.bf16.mxu0 0
  %431 = vmatpush1.bf16.msra.mxu0 %v334
  %432 = vmatprep.subr.bf16.mxu0 0
  %433 = vmatpush1.bf16.msra.mxu0 %v335
  %434 = vmatprep.subr.bf16.mxu0 0
  %435 = vmatpush1.bf16.msra.mxu0 %v336
  %436 = vmatprep.subr.bf16.mxu0 0
  %437 = vmatpush1.bf16.msra.mxu0 %v337
  %438 = vmatprep.subr.bf16.mxu0 0
  %439 = vmatpush1.bf16.msra.mxu0 %v338
  %440 = vmatprep.subr.bf16.mxu0 0
  %441 = vmatpush1.bf16.msra.mxu0 %v339
  %442 = vmatprep.subr.bf16.mxu0 0
  %443 = vmatpush1.bf16.msra.mxu0 %v340
  %444 = vmatprep.subr.bf16.mxu0 0
  %445 = vmatpush1.bf16.msra.mxu0 %v341
  %446 = vmatprep.subr.bf16.mxu0 0
  %447 = vmatpush1.bf16.msra.mxu0 %v342
  %448 = vmatprep.subr.bf16.mxu0 0
  %449 = vmatpush1.bf16.msra.mxu0 %v343
  %450 = vmatprep.subr.bf16.mxu0 0
  %451 = vmatpush1.bf16.msra.mxu0 %v344
  %452 = vmatprep.subr.bf16.mxu0 0
  %453 = vmatpush1.bf16.msra.mxu0 %v345
  %454 = vmatprep.subr.bf16.mxu0 0
  %455 = vmatpush1.bf16.msra.mxu0 %v346
  %456 = vmatprep.subr.bf16.mxu0 0
  %457 = vmatpush1.bf16.msra.mxu0 %v347
  %458 = vmatprep.subr.bf16.mxu0 0
  %459 = vmatpush1.bf16.msra.mxu0 %v348
  %460 = vmatprep.subr.bf16.mxu0 0
  %461 = vmatpush1.bf16.msra.mxu0 %v349
  %462 = vmatprep.mubr.bf16.mxu0 %v131
  %463 = vmatmul.mubr.bf16.gmra.mrb[0].mxu0 %v130
  %v464 = vpop.f32.mrb[0].mxu0
  %v465 = vadd.f32 %v119, %v464
  %v466 = vpop.f32.mrb[0].mxu0
  %v467 = vpop.f32.mrb[0].mxu0
  %v468 = vpop.f32.mrb[0].mxu0
  %469 = vdwg.mxu0
  %470 = vmatprep.subr.bf16.mxu0 0
  %471 = vmatpush1.bf16.msra.mxu0 %v350
  %472 = vmatprep.subr.bf16.mxu0 0
  %473 = vmatpush1.bf16.msra.mxu0 %v351
  %474 = vmatprep.subr.bf16.mxu0 0
  %475 = vmatpush1.bf16.msra.mxu0 %v352
  %476 = vmatprep.subr.bf16.mxu0 0
  %477 = vmatpush1.bf16.msra.mxu0 %v353
  %478 = vmatprep.subr.bf16.mxu0 0
  %479 = vmatpush1.bf16.msra.mxu0 %v354
  %480 = vmatprep.subr.bf16.mxu0 0
  %481 = vmatpush1.bf16.msra.mxu0 %v355
  %482 = vmatprep.subr.bf16.mxu0 0
  %483 = vmatpush1.bf16.msra.mxu0 %v356
  %484 = vmatprep.subr.bf16.mxu0 0
  %485 = vmatpush1.bf16.msra.mxu0 %v357
  %486 = vmatprep.subr.bf16.mxu0 0
  %487 = vmatpush1.bf16.msra.mxu0 %v358
  %488 = vmatprep.subr.bf16.mxu0 0
  %489 = vmatpush1.bf16.msra.mxu0 %v359
  %490 = vmatprep.subr.bf16.mxu0 0
  %491 = vmatpush1.bf16.msra.mxu0 %v360
  %492 = vmatprep.subr.bf16.mxu0 0
  %493 = vmatpush1.bf16.msra.mxu0 %v361
  %494 = vmatprep.subr.bf16.mxu0 0
  %495 = vmatpush1.bf16.msra.mxu0 %v362
  %496 = vmatprep.subr.bf16.mxu0 0
  %497 = vmatpush1.bf16.msra.mxu0 %v363
  %498 = vmatprep.subr.bf16.mxu0 0
  %499 = vmatpush1.bf16.msra.mxu0 %v364
  %500 = vmatprep.subr.bf16.mxu0 0
  %501 = vmatpush1.bf16.msra.mxu0 %v365
  %502 = vmatprep.mubr.bf16.mxu0 %v133
  %503 = vmatmul.mubr.bf16.gmra.mrb[0].mxu0 %v132
  %v504 = vpop.f32.mrb[0].mxu0
  %v505 = vadd.f32 %v465, %v504
  %v506 = vpop.f32.mrb[0].mxu0
  %v507 = vpop.f32.mrb[0].mxu0
  %v508 = vpop.f32.mrb[0].mxu0
  %509 = vdwg.mxu0
  %510 = vmatprep.subr.bf16.mxu0 0
  %511 = vmatpush1.bf16.msra.mxu0 %v366
  %512 = vmatprep.subr.bf16.mxu0 0
  %513 = vmatpush1.bf16.msra.mxu0 %v367
  %514 = vmatprep.subr.bf16.mxu0 0
  %515 = vmatpush1.bf16.msra.mxu0 %v368
  %516 = vmatprep.subr.bf16.mxu0 0
  %517 = vmatpush1.bf16.msra.mxu0 %v369
  %518 = vmatprep.subr.bf16.mxu0 0
  %519 = vmatpush1.bf16.msra.mxu0 %v370
  %520 = vmatprep.subr.bf16.mxu0 0
  %521 = vmatpush1.bf16.msra.mxu0 %v371
  %522 = vmatprep.subr.bf16.mxu0 0
  %523 = vmatpush1.bf16.msra.mxu0 %v372
  %524 = vmatprep.subr.bf16.mxu0 0
  %525 = vmatpush1.bf16.msra.mxu0 %v373
  %526 = vmatprep.subr.bf16.mxu0 0
  %527 = vmatpush1.bf16.msra.mxu0 %v374
  %528 = vmatprep.subr.bf16.mxu0 0
  %529 = vmatpush1.bf16.msra.mxu0 %v375
  %530 = vmatprep.subr.bf16.mxu0 0
  %531 = vmatpush1.bf16.msra.mxu0 %v376
  %532 = vmatprep.subr.bf16.mxu0 0
  %533 = vmatpush1.bf16.msra.mxu0 %v377
  %534 = vmatprep.subr.bf16.mxu0 0
  %535 = vmatpush1.bf16.msra.mxu0 %v378
  %536 = vmatprep.subr.bf16.mxu0 0
  %537 = vmatpush1.bf16.msra.mxu0 %v379
  %538 = vmatprep.subr.bf16.mxu0 0
  %539 = vmatpush1.bf16.msra.mxu0 %v380
  %540 = vmatprep.subr.bf16.mxu0 0
  %541 = vmatpush1.bf16.msra.mxu0 %v381
  %542 = vmatprep.mubr.bf16.mxu0 %v135
  %543 = vmatmul.mubr.bf16.gmra.mrb[0].mxu0 %v134
  %v544 = vpop.f32.mrb[0].mxu0
  %v545 = vadd.f32 %v505, %v544
  %v546 = vpop.f32.mrb[0].mxu0
  %v547 = vpop.f32.mrb[0].mxu0
  %v548 = vpop.f32.mrb[0].mxu0
  %549 = vdwg.mxu0
  %v550 = vpack.c.bf16 %v545, %v545
  %551 = vst [vmem:[%s3] sm:$0xf] %v550
  // Predicated region
  $region14: #{image_encoder_forward.13} parent=0 // pred_check
    _
  $region15: #{image_encoder_forward.13} parent=0 // pred_check_branch
    %553 = sbr.rel (0) target = $region17
  $region16: #{image_encoder_forward.13} parent=0 // pred_region
    _
  $region17: #{image_encoder_forward.13} parent=0 // pred_fallthru
    _
  // Predicated region
  $region18: #{image_encoder_forward.13} parent=0 // pred_check
    _
  $region19: #{image_encoder_forward.13} parent=0 // pred_check_branch
    %555 = sbr.rel (0) target = $region21
  $region20: #{image_encoder_forward.13} parent=0 // pred_region
    _
  $region21: #{image_encoder_forward.13} parent=0 // pred_fallthru
    _

// kernel: image_encoder_forward.16
$region0: #{image_encoder_forward.16}
  #allocation0 [shape = 'u32[]', space=smem, size = 0x4, offset = 0x4, fixed_abs, tag = 'smem constant byte address 0x4 - core index']
  #allocation1 [shape = 'u32[144,128]{1,0:T(1,128)}', space=vmem, size = 0x12000, scoped, tag = 'internal scratch']
  %s0 = inlined_call_operand.vmem [shape: bf16[2,16,384], index: 0, kind: input, shape index: {}]
  %s1 = inlined_call_operand.vmem [shape: bf16[2,16,128], index: 1, kind: output, shape index: {}]
  %s2 = sld [smem:[#allocation0]]
  $region37: #{image_encoder_forward.16} parent=0
    _
  %s4 = ssub.s32 1, %s2
  %s5 = scalar_select 0, %s4, %s2
  loop: start=0, step=1, limit=4
  $region2: #{image_encoder_forward.16} parent=0 // loop_pre_header
    _
  $region3: #{image_encoder_forward.16} parent=0 // loop_header
    %s7 = sphi 0, %s11
    %p8 = scmp.ge.s32.totalorder %s7, 4
    %s17 = sphi 0, %s19
    %s20 = sphi 0, %s17
    %s21 = sphi 0, %s20
    %s37 = sphi 0, %s21
    %s43 = sphi 0, %s45
    %s46 = sphi 0, %s43
    %s47 = sphi 0, %s46
    %s63 = sphi 0, %s47
  $region4: #{image_encoder_forward.16} parent=0 // loop_header_branch
    %10 = sbr.rel (%p8) target = $region8
  $region5: #{image_encoder_forward.16} parent=0 // loop_body
    %s12 = ssub.s32 %s7, 1
    %s13 = ssub.s32 %s7, 2
    %s14 = sadd.s32 %s7, 1
    %s15 = ssub.s32 %s7, %s14
    %p16 = scmp.eq.s32.totalorder %s15, 0
    %s18 = sadd.s32 %s17, 1
    %s19 = scalar_select %p16, %s17, %s18
    %p22 = pneg %p16
    %p23 = scmp.eq.s32.totalorder %s7, 1
    %p24 = por %p22, %p23
    %p25 = scmp.ne.s32.totalorder %s17, %s20
    %p26 = scmp.eq.s32.totalorder %s7, 0
    %p27 = por %p25, %p26
    %p28 = scmp.ne.s32.totalorder %s17, %s20
    %p29 = scmp.eq.s32.totalorder %s12, 1
    %p30 = por %p28, %p29
    %p31 = scmp.ne.s32.totalorder %s20, %s21
    %p32 = scmp.eq.s32.totalorder %s12, 0
    %p33 = por %p31, %p32
    %p34 = scmp.ne.s32.totalorder %s20, %s21
    %p35 = scmp.eq.s32.totalorder %s13, 1
    %p36 = por %p34, %p35
    %p38 = scmp.ne.s32.totalorder %s21, %s37
    %p39 = scmp.eq.s32.totalorder %s13, 0
    %p40 = por %p38, %p39
    %s41 = ssub.s32 %s7, %s14
    %p42 = scmp.eq.s32.totalorder %s41, 0
    %s44 = sadd.s32 %s43, 1
    %s45 = scalar_select %p42, %s43, %s44
    %p48 = pneg %p42
    %p49 = scmp.eq.s32.totalorder %s7, 1
    %p50 = por %p48, %p49
    %p51 = scmp.ne.s32.totalorder %s43, %s46
    %p52 = scmp.eq.s32.totalorder %s7, 0
    %p53 = por %p51, %p52
    %p54 = scmp.ne.s32.totalorder %s43, %s46
    %p55 = scmp.eq.s32.totalorder %s12, 1
    %p56 = por %p54, %p55
    %p57 = scmp.ne.s32.totalorder %s46, %s47
    %p58 = scmp.eq.s32.totalorder %s12, 0
    %p59 = por %p57, %p58
    %p60 = scmp.ne.s32.totalorder %s46, %s47
    %p61 = scmp.eq.s32.totalorder %s13, 1
    %p62 = por %p60, %p61
    %p64 = scmp.ne.s32.totalorder %s47, %s63
    %p65 = scmp.eq.s32.totalorder %s13, 0
    %p66 = por %p64, %p65
    %p67 = scmp.le.s32.totalorder 1, %s7
    %p68 = scmp.lt.s32.totalorder %s7, 3
    %p69 = pnand %p67, %p68
    %p70 = pneg %p69
    // Predicated region
    $region9: #{image_encoder_forward.16} parent=5 // pred_check
      _
    $region10: #{image_encoder_forward.16} parent=5 // pred_check_branch
      %72 = sbr.rel (%p69) target = $region12
    $region11: #{image_encoder_forward.16} parent=5 // pred_region
      %s73 = ssub.s32 %s7, 1
    $region12: #{image_encoder_forward.16} parent=5 // pred_fallthru
      _
    %p74 = scmp.lt.s32.totalorder %s7, 2
    // Predicated region
    $region13: #{image_encoder_forward.16} parent=5 // pred_check
      %p75 = pneg %p74
    $region14: #{image_encoder_forward.16} parent=5 // pred_check_branch
      %77 = sbr.rel (%p75) target = $region16
    $region15: #{image_encoder_forward.16} parent=5 // pred_region
      // Predicated region
      $region17: #{image_encoder_forward.16} parent=15 // pred_check
        %p78 = pneg %p27
      $region18: #{image_encoder_forward.16} parent=15 // pred_check_branch
        %80 = sbr.rel (%p78) target = $region20
      $region19: #{image_encoder_forward.16} parent=15 // pred_region
        %p81 = scmp.lt.s32.totalorder %s7, 1
        %s82 = scalar_select %p81, %s7, 1
        %s83 = smul.addr %s82, 6
        %s84 = smul.addr %s83, 4
        %s85 = scalar_lea.vmem %s0, %s84
      $region20: #{image_encoder_forward.16} parent=15 // pred_fallthru
        _
    $region16: #{image_encoder_forward.16} parent=5 // pred_fallthru
      _
    %p86 = scmp.le.s32.totalorder 1, %s7
    %p87 = scmp.lt.s32.totalorder %s7, 3
    %p88 = pnand %p86, %p87
    %p89 = pneg %p88
    // Predicated region
    $region21: #{image_encoder_forward.16} parent=5 // pred_check
      _
    $region22: #{image_encoder_forward.16} parent=5 // pred_check_branch
      %91 = sbr.rel (%p88) target = $region24
    $region23: #{image_encoder_forward.16} parent=5 // pred_region
      %s92 = ssub.s32 %s7, 1
      %p93 = scmp.lt.s32.totalorder %s12, 1
      %s94 = scalar_select %p93, %s12, 1
      %s95 = smul.addr %s94, 6
      %s96 = smul.addr %s95, 4
      %s97 = scalar_lea.vmem %s0, %s96
      %p98 = pneg %p33
      %p99 = pneg %p30
      %p100 = pneg %p59
      %p101 = pneg %p56
      %p102 = scmp.lt.s32.totalorder %s12, 1
      %s103 = scalar_select %p102, %s12, 1
      %s104 = smul.addr %s103, 2
      %s105 = smul.addr %s104, 4
      %s106 = scalar_lea.vmem %s1, %s105
      %p107 = scmp.lt.s32.totalorder %s12, 1
      %s108 = scalar_select %p107, %s12, 1
      %s109 = smul.addr %s108, 6
      %s110 = smul.addr %s109, 4
      %s111 = scalar_lea.vmem %s0, %s110
      %p112 = scmp.lt.s32.totalorder %s12, 1
      %s113 = scalar_select %p112, %s12, 1
      %s114 = smul.addr %s113, 2
      %s115 = smul.addr %s114, 4
      %s116 = scalar_lea.vmem %s1, %s115
      %v118 = vlaneseq
      %v119 = vand.u32 %v118, 127
      %vm120 = vcmp.lt.s32.totalorder %v119, 5
      %v121 = vld [vmem:[%s111] sm:$0xf]
      %v122 = vld [vmem:[%s111 + $0xc] sm:$0xf]
      %v123 = vld [vmem:[%s111 + $0x4] sm:$0xf]
      %v124 = vld [vmem:[%s111 + $0x10] sm:$0xf]
      %v125 = vld [vmem:[%s111 + $0x8] sm:$0xf]
      %v126 = vld [vmem:[%s111 + $0x14] sm:$0xf]
      %v129 = vunpack.c.l.b16 %v121
      %v130 = vunpack.c.l.b16 %v122
      %v131 = vpack.c.b16 %v130, %v129
      %v134 = vunpack.c.l.b16 %v123
      %v135 = vunpack.c.l.b16 %v124
      %v136 = vpack.c.b16 %v135, %v134
      %vm137 = vcmask 261120
      %v139 = vsel %vm137, %v131, 0
      %v142 = vsel %vm137, %v136, 0
      %144 = vmatprep.subr.bf16.mxu0 0
      %145 = vmatpush1.bf16.xpose.msra.mxu0 %v142
      %146 = vmatprep.subr.bf16.mxu0 0
      %147 = vmatpush1.bf16.xpose.msra.mxu0 0
      %148 = vmatprep.subr.bf16.mxu0 0
      %149 = vmatpush1.bf16.xpose.msra.mxu0 0
      %150 = vmatprep.subr.bf16.mxu0 0
      %151 = vmatpush1.bf16.xpose.msra.mxu0 0
      %152 = vmatprep.subr.bf16.mxu0 0
      %153 = vmatpush1.bf16.xpose.msra.mxu0 0
      %154 = vmatprep.subr.bf16.mxu0 0
      %155 = vmatpush1.bf16.xpose.msra.mxu0 0
      %156 = vmatprep.subr.bf16.mxu0 0
      %157 = vmatpush1.bf16.xpose.msra.mxu0 0
      %158 = vmatprep.subr.bf16.mxu0 0
      %159 = vmatpush1.bf16.xpose.msra.mxu0 0
      %160 = vmatprep.subr.bf16.mxu0 0
      %161 = vmatpush1.bf16.xpose.msra.mxu0 0
      %162 = vmatprep.subr.bf16.mxu0 0
      %163 = vmatpush1.bf16.xpose.msra.mxu0 0
      %164 = vmatprep.subr.bf16.mxu0 0
      %165 = vmatpush1.bf16.xpose.msra.mxu0 0
      %166 = vmatprep.subr.bf16.mxu0 0
      %167 = vmatpush1.bf16.xpose.msra.mxu0 0
      %168 = vmatprep.subr.bf16.mxu0 0
      %169 = vmatpush1.bf16.xpose.msra.mxu0 0
      %170 = vmatprep.subr.bf16.mxu0 0
      %171 = vmatpush1.bf16.xpose.msra.mxu0 0
      %172 = vmatprep.subr.bf16.mxu0 0
      %173 = vmatpush1.bf16.xpose.msra.mxu0 0
      %174 = vmatprep.subr.bf16.mxu0 0
      %175 = vmatpush1.bf16.xpose.msra.mxu0 0
      %176 = vmatprep.mubr.bf16.mxu0 0
      %177 = vmatmul.mubr.bf16.gmra.mrb[0].mxu0 %v139
      %v178 = vpop.f32.mrb[0].mxu0
      %v179 = vadd.f32 0.0, %v178
      %v180 = vpop.f32.mrb[0].mxu0
      %v181 = vpop.f32.mrb[0].mxu0
      %v182 = vadd.f32 0.0, %v181
      %v183 = vpop.f32.mrb[0].mxu0
      %184 = vdwg.mxu0
      %v185 = vsel %vm120, 1, 0
      %vm186 = vcmp.eq.s32.totalorder %v185, 1
      %v187 = vsel %vm186, %v179, -1e+30
      %v188 = vsel %vm186, %v182, -1e+30
      %vm189 = vcmask 130048
      %v190 = vsel %vm189, %v187, -inf
      %191 = vmax.xlane.f32.xlu0 %v190
      %v192 = vpop.xlane.xlu0 %191
      %v193 = vsel %vm189, %v188, -inf
      %194 = vmax.xlane.f32.xlu0 %v193
      %v195 = vpop.xlane.xlu0 %194
      %v196 = vsub.f32 %v187, %v192
      %v197 = vsub.f32 %v188, %v195
      %v198 = vmul.f32 %v196, 1.442695
      %v199 = vpow.pop %v198
      %v200 = vmul.f32 %v197, 1.442695
      %v201 = vpow.pop %v200
      %v202 = vsel %vm189, %v199, 0.0
      %203 = vadd.xlane.f32.xlu0 %v202
      %v204 = vpop.xlane.xlu0 %203
      %v205 = vsel %vm189, %v201, 0.0
      %206 = vadd.xlane.f32.xlu0 %v205
      %v207 = vpop.xlane.xlu0 %206
      %v208 = vrcp.pop %v204
      %v209 = vrcp.pop %v207
      %v210 = vmul.f32 %v199, %v208
      %v211 = vmul.f32 %v201, %v209
      %v212 = vpack.c.bf16 %v211, %v210
      %v215 = vunpack.c.l.b16 %v125
      %v216 = vunpack.c.l.b16 %v126
      %v217 = vpack.c.b16 %v216, %v215
      %v220 = vsel %vm189, %v212, 0
      %222 = vmatprep.subr.bf16.mxu0 0
      %223 = vmatpush1.bf16.msra.mxu0 %v217
      %224 = vmatprep.subr.bf16.mxu0 0
      %225 = vmatpush1.bf16.msra.mxu0 0
      %226 = vmatprep.subr.bf16.mxu0 0
      %227 = vmatpush1.bf16.msra.mxu0 0
      %228 = vmatprep.subr.bf16.mxu0 0
      %229 = vmatpush1.bf16.msra.mxu0 0
      %230 = vmatprep.subr.bf16.mxu0 0
      %231 = vmatpush1.bf16.msra.mxu0 0
      %232 = vmatprep.subr.bf16.mxu0 0
      %233 = vmatpush1.bf16.msra.mxu0 0
      %234 = vmatprep.subr.bf16.mxu0 0
      %235 = vmatpush1.bf16.msra.mxu0 0
      %236 = vmatprep.subr.bf16.mxu0 0
      %237 = vmatpush1.bf16.msra.mxu0 0
      %238 = vmatprep.subr.bf16.mxu0 0
      %239 = vmatpush1.bf16.msra.mxu0 0
      %240 = vmatprep.subr.bf16.mxu0 0
      %241 = vmatpush1.bf16.msra.mxu0 0
      %242 = vmatprep.subr.bf16.mxu0 0
      %243 = vmatpush1.bf16.msra.mxu0 0
      %244 = vmatprep.subr.bf16.mxu0 0
      %245 = vmatpush1.bf16.msra.mxu0 0
      %246 = vmatprep.subr.bf16.mxu0 0
      %247 = vmatpush1.bf16.msra.mxu0 0
      %248 = vmatprep.subr.bf16.mxu0 0
      %249 = vmatpush1.bf16.msra.mxu0 0
      %250 = vmatprep.subr.bf16.mxu0 0
      %251 = vmatpush1.bf16.msra.mxu0 0
      %252 = vmatprep.subr.bf16.mxu0 0
      %253 = vmatpush1.bf16.msra.mxu0 0
      %254 = vmatprep.mubr.bf16.mxu0 0
      %255 = vmatmul.mubr.bf16.gmra.mrb[0].mxu0 %v220
      %v256 = vpop.f32.mrb[0].mxu0
      %v257 = vadd.f32 0.0, %v256
      %v258 = vpop.f32.mrb[0].mxu0
      %v259 = vpop.f32.mrb[0].mxu0
      %v260 = vadd.f32 0.0, %v259
      %v261 = vpop.f32.mrb[0].mxu0
      %262 = vdwg.mxu0
      %v263 = vpack.c.bf16 %v260, %v257
      %v265 = vunpack.c.l.b16 %v263
      %v266 = vunpack.c.h.b16 %v263
      %v267 = vpack.c.b16 %v265, %v265
      %v268 = vpack.c.b16 %v266, %v266
      %vm271 = vcmask 257024
      %272 = vst.msk [vmem:[%s116] sm:$0xf] %vm271, %v267
      %273 = vst.msk [vmem:[%s116 + $0x4] sm:$0xf] %vm271, %v268
      %v274 = vld [vmem:[%s111] sm:$0xf]
      %v275 = vld [vmem:[%s111 + $0xc] sm:$0xf]
      %v276 = vld [vmem:[%s111 + $0x4] sm:$0xf]
      %v277 = vld [vmem:[%s111 + $0x10] sm:$0xf]
      %v278 = vld [vmem:[%s111 + $0x8] sm:$0xf]
      %v279 = vld [vmem:[%s111 + $0x14] sm:$0xf]
      %v282 = vunpack.c.l.b16 %v274
      %v283 = vunpack.c.l.b16 %v275
      %v284 = vpack.c.b16 %v283, %v282
      %285 = vrot.lane.b32.xlu0 %v284, 96
      %v286 = vpop.permute.xlu0 %285
      %v289 = vunpack.c.l.b16 %v276
      %v290 = vunpack.c.l.b16 %v277
      %v291 = vpack.c.b16 %v290, %v289
      %292 = vrot.lane.b32.xlu0 %v291, 96
      %v293 = vpop.permute.xlu0 %292
      %v295 = vsel %vm137, %v286, 0
      %v298 = vsel %vm137, %v293, 0
      %300 = vmatprep.subr.bf16.mxu0 0
      %301 = vmatpush1.bf16.xpose.msra.mxu0 %v298
      %302 = vmatprep.subr.bf16.mxu0 0
      %303 = vmatpush1.bf16.xpose.msra.mxu0 0
      %304 = vmatprep.subr.bf16.mxu0 0
      %305 = vmatpush1.bf16.xpose.msra.mxu0 0
      %306 = vmatprep.subr.bf16.mxu0 0
      %307 = vmatpush1.bf16.xpose.msra.mxu0 0
      %308 = vmatprep.subr.bf16.mxu0 0
      %309 = vmatpush1.bf16.xpose.msra.mxu0 0
      %310 = vmatprep.subr.bf16.mxu0 0
      %311 = vmatpush1.bf16.xpose.msra.mxu0 0
      %312 = vmatprep.subr.bf16.mxu0 0
      %313 = vmatpush1.bf16.xpose.msra.mxu0 0
      %314 = vmatprep.subr.bf16.mxu0 0
      %315 = vmatpush1.bf16.xpose.msra.mxu0 0
      %316 = vmatprep.subr.bf16.mxu0 0
      %317 = vmatpush1.bf16.xpose.msra.mxu0 0
      %318 = vmatprep.subr.bf16.mxu0 0
      %319 = vmatpush1.bf16.xpose.msra.mxu0 0
      %320 = vmatprep.subr.bf16.mxu0 0
      %321 = vmatpush1.bf16.xpose.msra.mxu0 0
      %322 = vmatprep.subr.bf16.mxu0 0
      %323 = vmatpush1.bf16.xpose.msra.mxu0 0
      %324 = vmatprep.subr.bf16.mxu0 0
      %325 = vmatpush1.bf16.xpose.msra.mxu0 0
      %326 = vmatprep.subr.bf16.mxu0 0
      %327 = vmatpush1.bf16.xpose.msra.mxu0 0
      %328 = vmatprep.subr.bf16.mxu0 0
      %329 = vmatpush1.bf16.xpose.msra.mxu0 0
      %330 = vmatprep.subr.bf16.mxu0 0
      %331 = vmatpush1.bf16.xpose.msra.mxu0 0
      %332 = vmatprep.mubr.bf16.mxu0 0
      %333 = vmatmul.mubr.bf16.gmra.mrb[0].mxu0 %v295
      %v334 = vpop.f32.mrb[0].mxu0
      %v335 = vadd.f32 0.0, %v334
      %v336 = vpop.f32.mrb[0].mxu0
      %v337 = vpop.f32.mrb[0].mxu0
      %v338 = vadd.f32 0.0, %v337
      %v339 = vpop.f32.mrb[0].mxu0
      %340 = vdwg.mxu0
      %v341 = vsel %vm186, %v335, -1e+30
      %v342 = vsel %vm186, %v338, -1e+30
      %v343 = vsel %vm189, %v341, -inf
      %344 = vmax.xlane.f32.xlu0 %v343
      %v345 = vpop.xlane.xlu0 %344
      %v346 = vsel %vm189, %v342, -inf
      %347 = vmax.xlane.f32.xlu0 %v346
      %v348 = vpop.xlane.xlu0 %347
      %v349 = vsub.f32 %v341, %v345
      %v350 = vsub.f32 %v342, %v348
      %v351 = vmul.f32 %v349, 1.442695
      %v352 = vpow.pop %v351
      %v353 = vmul.f32 %v350, 1.442695
      %v354 = vpow.pop %v353
      %v355 = vsel %vm189, %v352, 0.0
      %356 = vadd.xlane.f32.xlu0 %v355
      %v357 = vpop.xlane.xlu0 %356
      %v358 = vsel %vm189, %v354, 0.0
      %359 = vadd.xlane.f32.xlu0 %v358
      %v360 = vpop.xlane.xlu0 %359
      %v361 = vrcp.pop %v357
      %v362 = vrcp.pop %v360
      %v363 = vmul.f32 %v352, %v361
      %v364 = vmul.f32 %v354, %v362
      %v365 = vpack.c.bf16 %v364, %v363
      %v368 = vunpack.c.l.b16 %v278
      %v369 = vunpack.c.l.b16 %v279
      %v370 = vpack.c.b16 %v369, %v368
      %371 = vrot.lane.b32.xlu0 %v370, 96
      %v372 = vpop.permute.xlu0 %371
      %v375 = vsel %vm189, %v365, 0
      %377 = vmatprep.subr.bf16.mxu0 0
      %378 = vmatpush1.bf16.msra.mxu0 %v372
      %379 = vmatprep.subr.bf16.mxu0 0
      %380 = vmatpush1.bf16.msra.mxu0 0
      %381 = vmatprep.subr.bf16.mxu0 0
      %382 = vmatpush1.bf16.msra.mxu0 0
      %383 = vmatprep.subr.bf16.mxu0 0
      %384 = vmatpush1.bf16.msra.mxu0 0
      %385 = vmatprep.subr.bf16.mxu0 0
      %386 = vmatpush1.bf16.msra.mxu0 0
      %387 = vmatprep.subr.bf16.mxu0 0
      %388 = vmatpush1.bf16.msra.mxu0 0
      %389 = vmatprep.subr.bf16.mxu0 0
      %390 = vmatpush1.bf16.msra.mxu0 0
      %391 = vmatprep.subr.bf16.mxu0 0
      %392 = vmatpush1.bf16.msra.mxu0 0
      %393 = vmatprep.subr.bf16.mxu0 0
      %394 = vmatpush1.bf16.msra.mxu0 0
      %395 = vmatprep.subr.bf16.mxu0 0
      %396 = vmatpush1.bf16.msra.mxu0 0
      %397 = vmatprep.subr.bf16.mxu0 0
      %398 = vmatpush1.bf16.msra.mxu0 0
      %399 = vmatprep.subr.bf16.mxu0 0
      %400 = vmatpush1.bf16.msra.mxu0 0
      %401 = vmatprep.subr.bf16.mxu0 0
      %402 = vmatpush1.bf16.msra.mxu0 0
      %403 = vmatprep.subr.bf16.mxu0 0
      %404 = vmatpush1.bf16.msra.mxu0 0
      %405 = vmatprep.subr.bf16.mxu0 0
      %406 = vmatpush1.bf16.msra.mxu0 0
      %407 = vmatprep.subr.bf16.mxu0 0
      %408 = vmatpush1.bf16.msra.mxu0 0
      %409 = vmatprep.mubr.bf16.mxu0 0
      %410 = vmatmul.mubr.bf16.gmra.mrb[0].mxu0 %v375
      %v411 = vpop.f32.mrb[0].mxu0
      %v412 = vadd.f32 0.0, %v411
      %v413 = vpop.f32.mrb[0].mxu0
      %v414 = vpop.f32.mrb[0].mxu0
      %v415 = vadd.f32 0.0, %v414
      %v416 = vpop.f32.mrb[0].mxu0
      %417 = vdwg.mxu0
      %v418 = vpack.c.bf16 %v415, %v412
      %v420 = vunpack.c.l.b16 %v418
      %v421 = vunpack.c.h.b16 %v418
      %v422 = vpack.c.b16 %v420, %v420
      %v423 = vpack.c.b16 %v421, %v421
      %424 = vrot.lane.b32.xlu0 %v422, 32
      %v425 = vpop.permute.xlu0 %424
      %426 = vrot.lane.b32.xlu0 %v423, 32
      %v427 = vpop.permute.xlu0 %426
      %vm430 = vcmask 519424
      %431 = vst.msk [vmem:[%s116] sm:$0xf] %vm430, %v425
      %432 = vst.msk [vmem:[%s116 + $0x4] sm:$0xf] %vm430, %v427
      %v433 = vld [vmem:[%s111] sm:$0xf]
      %v434 = vld [vmem:[%s111 + $0xc] sm:$0xf]
      %v435 = vld [vmem:[%s111 + $0x4] sm:$0xf]
      %v436 = vld [vmem:[%s111 + $0x10] sm:$0xf]
      %v437 = vld [vmem:[%s111 + $0x8] sm:$0xf]
      %v438 = vld [vmem:[%s111 + $0x14] sm:$0xf]
      %v441 = vunpack.c.l.b16 %v433
      %v442 = vunpack.c.l.b16 %v434
      %v443 = vpack.c.b16 %v442, %v441
      %444 = vrot.lane.b32.xlu0 %v443, 64
      %v445 = vpop.permute.xlu0 %444
      %v448 = vunpack.c.l.b16 %v435
      %v449 = vunpack.c.l.b16 %v436
      %v450 = vpack.c.b16 %v449, %v448
      %451 = vrot.lane.b32.xlu0 %v450, 64
      %v452 = vpop.permute.xlu0 %451
      %v454 = vsel %vm137, %v445, 0
      %v457 = vsel %vm137, %v452, 0
      %459 = vmatprep.subr.bf16.mxu0 0
      %460 = vmatpush1.bf16.xpose.msra.mxu0 %v457
      %461 = vmatprep.subr.bf16.mxu0 0
      %462 = vmatpush1.bf16.xpose.msra.mxu0 0
      %463 = vmatprep.subr.bf16.mxu0 0
      %464 = vmatpush1.bf16.xpose.msra.mxu0 0
      %465 = vmatprep.subr.bf16.mxu0 0
      %466 = vmatpush1.bf16.xpose.msra.mxu0 0
      %467 = vmatprep.subr.bf16.mxu0 0
      %468 = vmatpush1.bf16.xpose.msra.mxu0 0
      %469 = vmatprep.subr.bf16.mxu0 0
      %470 = vmatpush1.bf16.xpose.msra.mxu0 0
      %471 = vmatprep.subr.bf16.mxu0 0
      %472 = vmatpush1.bf16.xpose.msra.mxu0 0
      %473 = vmatprep.subr.bf16.mxu0 0
      %474 = vmatpush1.bf16.xpose.msra.mxu0 0
      %475 = vmatprep.subr.bf16.mxu0 0
      %476 = vmatpush1.bf16.xpose.msra.mxu0 0
      %477 = vmatprep.subr.bf16.mxu0 0
      %478 = vmatpush1.bf16.xpose.msra.mxu0 0
      %479 = vmatprep.subr.bf16.mxu0 0
      %480 = vmatpush1.bf16.xpose.msra.mxu0 0
      %481 = vmatprep.subr.bf16.mxu0 0
      %482 = vmatpush1.bf16.xpose.msra.mxu0 0
      %483 = vmatprep.subr.bf16.mxu0 0
      %484 = vmatpush1.bf16.xpose.msra.mxu0 0
      %485 = vmatprep.subr.bf16.mxu0 0
      %486 = vmatpush1.bf16.xpose.msra.mxu0 0
      %487 = vmatprep.subr.bf16.mxu0 0
      %488 = vmatpush1.bf16.xpose.msra.mxu0 0
      %489 = vmatprep.subr.bf16.mxu0 0
      %490 = vmatpush1.bf16.xpose.msra.mxu0 0
      %491 = vmatprep.mubr.bf16.mxu0 0
      %492 = vmatmul.mubr.bf16.gmra.mrb[0].mxu0 %v454
      %v493 = vpop.f32.mrb[0].mxu0
      %v494 = vadd.f32 0.0, %v493
      %v495 = vpop.f32.mrb[0].mxu0
      %v496 = vpop.f32.mrb[0].mxu0
      %v497 = vadd.f32 0.0, %v496
      %v498 = vpop.f32.mrb[0].mxu0
      %499 = vdwg.mxu0
      %v500 = vsel %vm186, %v494, -1e+30
      %v501 = vsel %vm186, %v497, -1e+30
      %v502 = vsel %vm189, %v500, -inf
      %503 = vmax.xlane.f32.xlu0 %v502
      %v504 = vpop.xlane.xlu0 %503
      %v505 = vsel %vm189, %v501, -inf
      %506 = vmax.xlane.f32.xlu0 %v505
      %v507 = vpop.xlane.xlu0 %506
      %v508 = vsub.f32 %v500, %v504
      %v509 = vsub.f32 %v501, %v507
      %v510 = vmul.f32 %v508, 1.442695
      %v511 = vpow.pop %v510
      %v512 = vmul.f32 %v509, 1.442695
      %v513 = vpow.pop %v512
      %v514 = vsel %vm189, %v511, 0.0
      %515 = vadd.xlane.f32.xlu0 %v514
      %v516 = vpop.xlane.xlu0 %515
      %v517 = vsel %vm189, %v513, 0.0
      %518 = vadd.xlane.f32.xlu0 %v517
      %v519 = vpop.xlane.xlu0 %518
      %v520 = vrcp.pop %v516
      %v521 = vrcp.pop %v519
      %v522 = vmul.f32 %v511, %v520
      %v523 = vmul.f32 %v513, %v521
      %v524 = vpack.c.bf16 %v523, %v522
      %v527 = vunpack.c.l.b16 %v437
      %v528 = vunpack.c.l.b16 %v438
      %v529 = vpack.c.b16 %v528, %v527
      %530 = vrot.lane.b32.xlu0 %v529, 64
      %v531 = vpop.permute.xlu0 %530
      %v534 = vsel %vm189, %v524, 0
      %536 = vmatprep.subr.bf16.mxu0 0
      %537 = vmatpush1.bf16.msra.mxu0 %v531
      %538 = vmatprep.subr.bf16.mxu0 0
      %539 = vmatpush1.bf16.msra.mxu0 0
      %540 = vmatprep.subr.bf16.mxu0 0
      %541 = vmatpush1.bf16.msra.mxu0 0
      %542 = vmatprep.subr.bf16.mxu0 0
      %543 = vmatpush1.bf16.msra.mxu0 0
      %544 = vmatprep.subr.bf16.mxu0 0
      %545 = vmatpush1.bf16.msra.mxu0 0
      %546 = vmatprep.subr.bf16.mxu0 0
      %547 = vmatpush1.bf16.msra.mxu0 0
      %548 = vmatprep.subr.bf16.mxu0 0
      %549 = vmatpush1.bf16.msra.mxu0 0
      %550 = vmatprep.subr.bf16.mxu0 0
      %551 = vmatpush1.bf16.msra.mxu0 0
      %552 = vmatprep.subr.bf16.mxu0 0
      %553 = vmatpush1.bf16.msra.mxu0 0
      %554 = vmatprep.subr.bf16.mxu0 0
      %555 = vmatpush1.bf16.msra.mxu0 0
      %556 = vmatprep.subr.bf16.mxu0 0
      %557 = vmatpush1.bf16.msra.mxu0 0
      %558 = vmatprep.subr.bf16.mxu0 0
      %559 = vmatpush1.bf16.msra.mxu0 0
      %560 = vmatprep.subr.bf16.mxu0 0
      %561 = vmatpush1.bf16.msra.mxu0 0
      %562 = vmatprep.subr.bf16.mxu0 0
      %563 = vmatpush1.bf16.msra.mxu0 0
      %564 = vmatprep.subr.bf16.mxu0 0
      %565 = vmatpush1.bf16.msra.mxu0 0
      %566 = vmatprep.subr.bf16.mxu0 0
      %567 = vmatpush1.bf16.msra.mxu0 0
      %568 = vmatprep.mubr.bf16.mxu0 0
      %569 = vmatmul.mubr.bf16.gmra.mrb[0].mxu0 %v534
      %v570 = vpop.f32.mrb[0].mxu0
      %v571 = vadd.f32 0.0, %v570
      %v572 = vpop.f32.mrb[0].mxu0
      %v573 = vpop.f32.mrb[0].mxu0
      %v574 = vadd.f32 0.0, %v573
      %v575 = vpop.f32.mrb[0].mxu0
      %576 = vdwg.mxu0
      %v577 = vpack.c.bf16 %v574, %v571
      %v579 = vunpack.c.l.b16 %v577
      %v580 = vunpack.c.h.b16 %v577
      %v581 = vpack.c.b16 %v579, %v579
      %v582 = vpack.c.b16 %v580, %v580
      %583 = vrot.lane.b32.xlu0 %v581, 64
      %v584 = vpop.permute.xlu0 %583
      %585 = vrot.lane.b32.xlu0 %v582, 64
      %v586 = vpop.permute.xlu0 %585
      %vm589 = vcmask 781824
      %590 = vst.msk [vmem:[%s116] sm:$0xf] %vm589, %v584
      %591 = vst.msk [vmem:[%s116 + $0x4] sm:$0xf] %vm589, %v586
      %v592 = vld [vmem:[%s111] sm:$0xf]
      %v593 = vld [vmem:[%s111 + $0xc] sm:$0xf]
      %v594 = vld [vmem:[%s111 + $0x4] sm:$0xf]
      %v595 = vld [vmem:[%s111 + $0x10] sm:$0xf]
      %v596 = vld [vmem:[%s111 + $0x8] sm:$0xf]
      %v597 = vld [vmem:[%s111 + $0x14] sm:$0xf]
      %v600 = vunpack.c.l.b16 %v592
      %v601 = vunpack.c.l.b16 %v593
      %v602 = vpack.c.b16 %v601, %v600
      %603 = vrot.lane.b32.xlu0 %v602, 32
      %v604 = vpop.permute.xlu0 %603
      %v607 = vunpack.c.l.b16 %v594
      %v608 = vunpack.c.l.b16 %v595
      %v609 = vpack.c.b16 %v608, %v607
      %610 = vrot.lane.b32.xlu0 %v609, 32
      %v611 = vpop.permute.xlu0 %610
      %v613 = vsel %vm137, %v604, 0
      %v616 = vsel %vm137, %v611, 0
      %618 = vmatprep.subr.bf16.mxu0 0
      %619 = vmatpush1.bf16.xpose.msra.mxu0 %v616
      %620 = vmatprep.subr.bf16.mxu0 0
      %621 = vmatpush1.bf16.xpose.msra.mxu0 0
      %622 = vmatprep.subr.bf16.mxu0 0
      %623 = vmatpush1.bf16.xpose.msra.mxu0 0
      %624 = vmatprep.subr.bf16.mxu0 0
      %625 = vmatpush1.bf16.xpose.msra.mxu0 0
      %626 = vmatprep.subr.bf16.mxu0 0
      %627 = vmatpush1.bf16.xpose.msra.mxu0 0
      %628 = vmatprep.subr.bf16.mxu0 0
      %629 = vmatpush1.bf16.xpose.msra.mxu0 0
      %630 = vmatprep.subr.bf16.mxu0 0
      %631 = vmatpush1.bf16.xpose.msra.mxu0 0
      %632 = vmatprep.subr.bf16.mxu0 0
      %633 = vmatpush1.bf16.xpose.msra.mxu0 0
      %634 = vmatprep.subr.bf16.mxu0 0
      %635 = vmatpush1.bf16.xpose.msra.mxu0 0
      %636 = vmatprep.subr.bf16.mxu0 0
      %637 = vmatpush1.bf16.xpose.msra.mxu0 0
      %638 = vmatprep.subr.bf16.mxu0 0
      %639 = vmatpush1.bf16.xpose.msra.mxu0 0
      %640 = vmatprep.subr.bf16.mxu0 0
      %641 = vmatpush1.bf16.xpose.msra.mxu0 0
      %642 = vmatprep.subr.bf16.mxu0 0
      %643 = vmatpush1.bf16.xpose.msra.mxu0 0
      %644 = vmatprep.subr.bf16.mxu0 0
      %645 = vmatpush1.bf16.xpose.msra.mxu0 0
      %646 = vmatprep.subr.bf16.mxu0 0
      %647 = vmatpush1.bf16.xpose.msra.mxu0 0
      %648 = vmatprep.subr.bf16.mxu0 0
      %649 = vmatpush1.bf16.xpose.msra.mxu0 0
      %650 = vmatprep.mubr.bf16.mxu0 0
      %651 = vmatmul.mubr.bf16.gmra.mrb[0].mxu0 %v613
      %v652 = vpop.f32.mrb[0].mxu0
      %v653 = vadd.f32 0.0, %v652
      %v654 = vpop.f32.mrb[0].mxu0
      %v655 = vpop.f32.mrb[0].mxu0
      %v656 = vadd.f32 0.0, %v655
      %v657 = vpop.f32.mrb[0].mxu0
      %658 = vdwg.mxu0
      %v659 = vsel %vm186, %v653, -1e+30
      %v660 = vsel %vm186, %v656, -1e+30
      %v661 = vsel %vm189, %v659, -inf
      %662 = vmax.xlane.f32.xlu0 %v661
      %v663 = vpop.xlane.xlu0 %662
      %v664 = vsel %vm189, %v660, -inf
      %665 = vmax.xlane.f32.xlu0 %v664
      %v666 = vpop.xlane.xlu0 %665
      %v667 = vsub.f32 %v659, %v663
      %v668 = vsub.f32 %v660, %v666
      %v669 = vmul.f32 %v667, 1.442695
      %v670 = vpow.pop %v669
      %v671 = vmul.f32 %v668, 1.442695
      %v672 = vpow.pop %v671
      %v673 = vsel %vm189, %v670, 0.0
      %674 = vadd.xlane.f32.xlu0 %v673
      %v675 = vpop.xlane.xlu0 %674
      %v676 = vsel %vm189, %v672, 0.0
      %677 = vadd.xlane.f32.xlu0 %v676
      %v678 = vpop.xlane.xlu0 %677
      %v679 = vrcp.pop %v675
      %v680 = vrcp.pop %v678
      %v681 = vmul.f32 %v670, %v679
      %v682 = vmul.f32 %v672, %v680
      %v683 = vpack.c.bf16 %v682, %v681
      %v686 = vunpack.c.l.b16 %v596
      %v687 = vunpack.c.l.b16 %v597
      %v688 = vpack.c.b16 %v687, %v686
      %689 = vrot.lane.b32.xlu0 %v688, 32
      %v690 = vpop.permute.xlu0 %689
      %v693 = vsel %vm189, %v683, 0
      %695 = vmatprep.subr.bf16.mxu0 0
      %696 = vmatpush1.bf16.msra.mxu0 %v690
      %697 = vmatprep.subr.bf16.mxu0 0
      %698 = vmatpush1.bf16.msra.mxu0 0
      %699 = vmatprep.subr.bf16.mxu0 0
      %700 = vmatpush1.bf16.msra.mxu0 0
      %701 = vmatprep.subr.bf16.mxu0 0
      %702 = vmatpush1.bf16.msra.mxu0 0
      %703 = vmatprep.subr.bf16.mxu0 0
      %704 = vmatpush1.bf16.msra.mxu0 0
      %705 = vmatprep.subr.bf16.mxu0 0
      %706 = vmatpush1.bf16.msra.mxu0 0
      %707 = vmatprep.subr.bf16.mxu0 0
      %708 = vmatpush1.bf16.msra.mxu0 0
      %709 = vmatprep.subr.bf16.mxu0 0
      %710 = vmatpush1.bf16.msra.mxu0 0
      %711 = vmatprep.subr.bf16.mxu0 0
      %712 = vmatpush1.bf16.msra.mxu0 0
      %713 = vmatprep.subr.bf16.mxu0 0
      %714 = vmatpush1.bf16.msra.mxu0 0
      %715 = vmatprep.subr.bf16.mxu0 0
      %716 = vmatpush1.bf16.msra.mxu0 0
      %717 = vmatprep.subr.bf16.mxu0 0
      %718 = vmatpush1.bf16.msra.mxu0 0
      %719 = vmatprep.subr.bf16.mxu0 0
      %720 = vmatpush1.bf16.msra.mxu0 0
      %721 = vmatprep.subr.bf16.mxu0 0
      %722 = vmatpush1.bf16.msra.mxu0 0
      %723 = vmatprep.subr.bf16.mxu0 0
      %724 = vmatpush1.bf16.msra.mxu0 0
      %725 = vmatprep.subr.bf16.mxu0 0
      %726 = vmatpush1.bf16.msra.mxu0 0
      %727 = vmatprep.mubr.bf16.mxu0 0
      %728 = vmatmul.mubr.bf16.gmra.mrb[0].mxu0 %v693
      %v729 = vpop.f32.mrb[0].mxu0
      %v730 = vadd.f32 0.0, %v729
      %v731 = vpop.f32.mrb[0].mxu0
      %v732 = vpop.f32.mrb[0].mxu0
      %v733 = vadd.f32 0.0, %v732
      %v734 = vpop.f32.mrb[0].mxu0
      %735 = vdwg.mxu0
      %v736 = vpack.c.bf16 %v733, %v730
      %v738 = vunpack.c.l.b16 %v736
      %v739 = vunpack.c.h.b16 %v736
      %v740 = vpack.c.b16 %v738, %v738
      %v741 = vpack.c.b16 %v739, %v739
      %742 = vrot.lane.b32.xlu0 %v740, 96
      %v743 = vpop.permute.xlu0 %742
      %744 = vrot.lane.b32.xlu0 %v741, 96
      %v745 = vpop.permute.xlu0 %744
      %vm748 = vcmask 1044224
      %749 = vst.msk [vmem:[%s116] sm:$0xf] %vm748, %v743
      %750 = vst.msk [vmem:[%s116 + $0x4] sm:$0xf] %vm748, %v745
      %p751 = scmp.lt.s32.totalorder %s12, 1
      %s752 = scalar_select %p751, %s12, 1
      %s753 = smul.addr %s752, 2
      %s754 = smul.addr %s753, 4
      %s755 = scalar_lea.vmem %s1, %s754
      // Predicated region
      $region25: #{image_encoder_forward.16} parent=23 // pred_check
        %p756 = pneg %p56
      $region26: #{image_encoder_forward.16} parent=23 // pred_check_branch
        %758 = sbr.rel (%p756) target = $region28
      $region27: #{image_encoder_forward.16} parent=23 // pred_region
        _
      $region28: #{image_encoder_forward.16} parent=23 // pred_fallthru
        _
    $region24: #{image_encoder_forward.16} parent=5 // pred_fallthru
      _
    %p759 = scmp.le.s32.totalorder 2, %s7
    // Predicated region
    $region29: #{image_encoder_forward.16} parent=5 // pred_check
      %p760 = pneg %p759
    $region30: #{image_encoder_forward.16} parent=5 // pred_check_branch
      %762 = sbr.rel (%p760) target = $region32
    $region31: #{image_encoder_forward.16} parent=5 // pred_region
      %s763 = ssub.s32 %s7, 2
      // Predicated region
      $region33: #{image_encoder_forward.16} parent=31 // pred_check
        %p764 = pneg %p62
      $region34: #{image_encoder_forward.16} parent=31 // pred_check_branch
        %766 = sbr.rel (%p764) target = $region36
      $region35: #{image_encoder_forward.16} parent=31 // pred_region
        %p767 = scmp.lt.s32.totalorder %s13, 1
        %s768 = scalar_select %p767, %s13, 1
        %s769 = smul.addr %s768, 2
        %s770 = smul.addr %s769, 4
        %s771 = scalar_lea.vmem %s1, %s770
      $region36: #{image_encoder_forward.16} parent=31 // pred_fallthru
        _
    $region32: #{image_encoder_forward.16} parent=5 // pred_fallthru
      _
  $region6: #{image_encoder_forward.16} parent=0 // loop_footer
    %s11 = sadd.s32 1, %s7
  $region7: #{image_encoder_forward.16} parent=0 // loop_footer_branch
    %6 = sbr.rel target = $region3
  $region8: #{image_encoder_forward.16} parent=0 // loop_exit
    _

// kernel: image_encoder_forward.17
$region0: #{image_encoder_forward.17}
  #allocation0 [shape = 'u32[]', space=smem, size = 0x4, offset = 0x4, fixed_abs, tag = 'smem constant byte address 0x4 - core index']
  #allocation1 [shape = 'u32[144,128]{1,0:T(1,128)}', space=vmem, size = 0x12000, scoped, tag = 'internal scratch']
  %s0 = inlined_call_operand.vmem [shape: bf16[32,128], index: 0, kind: input, shape index: {}]
  %s1 = inlined_call_operand.vmem [shape: bf16[128,128], index: 1, kind: input, shape index: {}]
  %s2 = inlined_call_operand.vmem [shape: f32[1,128], index: 2, kind: input, shape index: {}]
  %s3 = inlined_call_operand.vmem [shape: bf16[32,128], index: 3, kind: input, shape index: {}, may-alias: {3,4}]
  %s4 = inlined_call_operand.vmem [shape: bf16[32,128], index: 4, kind: output, shape index: {}, may-alias: {3,4}]
  %s5 = sld [smem:[#allocation0]]
  $region26: #{image_encoder_forward.17} parent=0
    _
  %s7 = ssub.s32 1, %s5
  %s8 = scalar_select 0, %s7, %s5
  // Predicated region
  $region2: #{image_encoder_forward.17} parent=0 // pred_check
    _
  $region3: #{image_encoder_forward.17} parent=0 // pred_check_branch
    %10 = sbr.rel (0) target = $region5
  $region4: #{image_encoder_forward.17} parent=0 // pred_region
    _
  $region5: #{image_encoder_forward.17} parent=0 // pred_fallthru
    _
  // Predicated region
  $region6: #{image_encoder_forward.17} parent=0 // pred_check
    _
  $region7: #{image_encoder_forward.17} parent=0 // pred_check_branch
    %12 = sbr.rel (0) target = $region9
  $region8: #{image_encoder_forward.17} parent=0 // pred_region
    _
  $region9: #{image_encoder_forward.17} parent=0 // pred_fallthru
    _
  // Predicated region
  $region10: #{image_encoder_forward.17} parent=0 // pred_check
    _
  $region11: #{image_encoder_forward.17} parent=0 // pred_check_branch
    %14 = sbr.rel (0) target = $region13
  $region12: #{image_encoder_forward.17} parent=0 // pred_region
    _
  $region13: #{image_encoder_forward.17} parent=0 // pred_fallthru
    _
  // Predicated region
  $region14: #{image_encoder_forward.17} parent=0 // pred_check
    _
  $region15: #{image_encoder_forward.17} parent=0 // pred_check_branch
    %16 = sbr.rel (0) target = $region17
  $region16: #{image_encoder_forward.17} parent=0 // pred_region
    _
  $region17: #{image_encoder_forward.17} parent=0 // pred_fallthru
    _
  %v18 = vld [vmem:[%s0] sm:$0xf]
  %v19 = vld [vmem:[%s0 + $0x4] sm:$0xf]
  %v20 = vld [vmem:[%s0 + $0x8] sm:$0xf]
  %v21 = vld [vmem:[%s0 + $0xc] sm:$0xf]
  %v22 = vld [vmem:[%s1] sm:$0xf]
  %v23 = vld [vmem:[%s1 + $0x4] sm:$0xf]
  %v24 = vld [vmem:[%s1 + $0x8] sm:$0xf]
  %v25 = vld [vmem:[%s1 + $0xc] sm:$0xf]
  %v26 = vld [vmem:[%s1 + $0x10] sm:$0xf]
  %v27 = vld [vmem:[%s1 + $0x14] sm:$0xf]
  %v28 = vld [vmem:[%s1 + $0x18] sm:$0xf]
  %v29 = vld [vmem:[%s1 + $0x1c] sm:$0xf]
  %v30 = vld [vmem:[%s1 + $0x20] sm:$0xf]
  %v31 = vld [vmem:[%s1 + $0x24] sm:$0xf]
  %v32 = vld [vmem:[%s1 + $0x28] sm:$0xf]
  %v33 = vld [vmem:[%s1 + $0x2c] sm:$0xf]
  %v34 = vld [vmem:[%s1 + $0x30] sm:$0xf]
  %v35 = vld [vmem:[%s1 + $0x34] sm:$0xf]
  %v36 = vld [vmem:[%s1 + $0x38] sm:$0xf]
  %v37 = vld [vmem:[%s1 + $0x3c] sm:$0xf]
  %v38 = vld [vmem:[%s2] sm:$0x1]
  %v40 = vlaneseq
  %v41 = vshrl.u32 %v40, 7
  %v42 = vsub.s32 0, %v41
  %v43 = vrot.slane %v38, %v42
  %v49 = vunpack.c.l.b16 %v18
  %v50 = vunpack.c.l.b16 %v19
  %v51 = vunpack.c.l.b16 %v20
  %v52 = vunpack.c.l.b16 %v21
  %v53 = vpack.c.b16 %v50, %v49
  %v54 = vpack.c.b16 %v52, %v51
  %v73 = vunpack.c.l.b16 %v22
  %v74 = vunpack.c.l.b16 %v23
  %v75 = vunpack.c.l.b16 %v24
  %v76 = vunpack.c.l.b16 %v25
  %v77 = vunpack.c.l.b16 %v26
  %v78 = vunpack.c.l.b16 %v27
  %v79 = vunpack.c.l.b16 %v28
  %v80 = vunpack.c.l.b16 %v29
  %v81 = vunpack.c.l.b16 %v30
  %v82 = vunpack.c.l.b16 %v31
  %v83 = vunpack.c.l.b16 %v32
  %v84 = vunpack.c.l.b16 %v33
  %v85 = vunpack.c.l.b16 %v34
  %v86 = vunpack.c.l.b16 %v35
  %v87 = vunpack.c.l.b16 %v36
  %v88 = vunpack.c.l.b16 %v37
  %v89 = vpack.c.b16 %v74, %v73
  %v90 = vpack.c.b16 %v76, %v75
  %v91 = vpack.c.b16 %v78, %v77
  %v92 = vpack.c.b16 %v80, %v79
  %v93 = vpack.c.b16 %v82, %v81
  %v94 = vpack.c.b16 %v84, %v83
  %v95 = vpack.c.b16 %v86, %v85
  %v96 = vpack.c.b16 %v88, %v87
  %105 = vmatprep.subr.bf16.mxu0 0
  %106 = vmatpush1.bf16.msra.mxu0 %v89
  %107 = vmatprep.subr.bf16.mxu0 0
  %108 = vmatpush1.bf16.msra.mxu0 %v90
  %109 = vmatprep.subr.bf16.mxu0 0
  %110 = vmatpush1.bf16.msra.mxu0 %v91
  %111 = vmatprep.subr.bf16.mxu0 0
  %112 = vmatpush1.bf16.msra.mxu0 %v92
  %113 = vmatprep.subr.bf16.mxu0 0
  %114 = vmatpush1.bf16.msra.mxu0 %v93
  %115 = vmatprep.subr.bf16.mxu0 0
  %116 = vmatpush1.bf16.msra.mxu0 %v94
  %117 = vmatprep.subr.bf16.mxu0 0
  %118 = vmatpush1.bf16.msra.mxu0 %v95
  %119 = vmatprep.subr.bf16.mxu0 0
  %120 = vmatpush1.bf16.msra.mxu0 %v96
  %121 = vmatprep.subr.bf16.mxu0 0
  %122 = vmatpush1.bf16.msra.mxu0 0
  %123 = vmatprep.subr.bf16.mxu0 0
  %124 = vmatpush1.bf16.msra.mxu0 0
  %125 = vmatprep.subr.bf16.mxu0 0
  %126 = vmatpush1.bf16.msra.mxu0 0
  %127 = vmatprep.subr.bf16.mxu0 0
  %128 = vmatpush1.bf16.msra.mxu0 0
  %129 = vmatprep.subr.bf16.mxu0 0
  %130 = vmatpush1.bf16.msra.mxu0 0
  %131 = vmatprep.subr.bf16.mxu0 0
  %132 = vmatpush1.bf16.msra.mxu0 0
  %133 = vmatprep.subr.bf16.mxu0 0
  %134 = vmatpush1.bf16.msra.mxu0 0
  %135 = vmatprep.subr.bf16.mxu0 0
  %136 = vmatpush1.bf16.msra.mxu0 0
  %137 = vmatprep.mubr.bf16.mxu0 0
  %138 = vmatmul.mubr.bf16.gmra.mrb[0].mxu0 %v53
  %v139 = vpop.f32.mrb[0].mxu0
  %v140 = vadd.f32 %v43, %v139
  %v141 = vpop.f32.mrb[0].mxu0
  %v142 = vpop.f32.mrb[0].mxu0
  %v143 = vadd.f32 %v43, %v142
  %v144 = vpop.f32.mrb[0].mxu0
  %145 = vmatprep.mubr.bf16.mxu0 0
  %146 = vmatmul.mubr.bf16.gmra.mrb[0].mxu0 %v54
  %v147 = vpop.f32.mrb[0].mxu0
  %v148 = vadd.f32 %v43, %v147
  %v149 = vpop.f32.mrb[0].mxu0
  %v150 = vpop.f32.mrb[0].mxu0
  %v151 = vadd.f32 %v43, %v150
  %v152 = vpop.f32.mrb[0].mxu0
  %153 = vdwg.mxu0
  %v154 = vld [vmem:[%s3] sm:$0xf]
  %v155 = vld [vmem:[%s3 + $0x4] sm:$0xf]
  %v156 = vld [vmem:[%s3 + $0x8] sm:$0xf]
  %v157 = vld [vmem:[%s3 + $0xc] sm:$0xf]
  %v158 = vunpack.c.l.bf16 %v154
  %v159 = vunpack.c.l.bf16 %v155
  %v160 = vunpack.c.l.bf16 %v156
  %v161 = vunpack.c.l.bf16 %v157
  %v162 = vadd.f32 %v140, %v158
  %v163 = vadd.f32 %v143, %v159
  %v164 = vadd.f32 %v148, %v160
  %v165 = vadd.f32 %v151, %v161
  %v166 = vpack.c.bf16 %v163, %v162
  %v167 = vpack.c.bf16 %v165, %v164
  %v170 = vunpack.c.l.b16 %v166
  %v171 = vunpack.c.h.b16 %v166
  %v172 = vunpack.c.l.b16 %v167
  %v173 = vunpack.c.h.b16 %v167
  %v174 = vpack.c.b16 %v170, %v170
  %v175 = vpack.c.b16 %v171, %v171
  %v176 = vpack.c.b16 %v172, %v172
  %v177 = vpack.c.b16 %v173, %v173
  %182 = vst [vmem:[%s4] sm:$0xf] %v174
  %183 = vst [vmem:[%s4 + $0x4] sm:$0xf] %v175
  %184 = vst [vmem:[%s4 + $0x8] sm:$0xf] %v176
  %185 = vst [vmem:[%s4 + $0xc] sm:$0xf] %v177
  // Predicated region
  $region18: #{image_encoder_forward.17} parent=0 // pred_check
    _
  $region19: #{image_encoder_forward.17} parent=0 // pred_check_branch
    %187 = sbr.rel (0) target = $region21
  $region20: #{image_encoder_forward.17} parent=0 // pred_region
    _
  $region21: #{image_encoder_forward.17} parent=0 // pred_fallthru
    _
  // Predicated region
  $region22: #{image_encoder_forward.17} parent=0 // pred_check
    _
  $region23: #{image_encoder_forward.17} parent=0 // pred_check_branch
    %189 = sbr.rel (0) target = $region25
  $region24: #{image_encoder_forward.17} parent=0 // pred_region
    _
  $region25: #{image_encoder_forward.17} parent=0 // pred_fallthru
    _

// kernel: image_encoder_forward.19
$region0: #{image_encoder_forward.19}
  #allocation0 [shape = 'u32[]', space=smem, size = 0x4, offset = 0x4, fixed_abs, tag = 'smem constant byte address 0x4 - core index']
  #allocation1 [shape = 'u32[144,128]{1,0:T(1,128)}', space=vmem, size = 0x12000, scoped, tag = 'internal scratch']
  %s0 = inlined_call_operand.vmem [shape: bf16[32,512], index: 0, kind: input, shape index: {}]
  %s1 = inlined_call_operand.vmem [shape: bf16[512,128], index: 1, kind: input, shape index: {}]
  %s2 = inlined_call_operand.vmem [shape: f32[1,128], index: 2, kind: input, shape index: {}]
  %s3 = inlined_call_operand.vmem [shape: bf16[32,128], index: 3, kind: input, shape index: {}, may-alias: {3,4}]
  %s4 = inlined_call_operand.vmem [shape: bf16[32,128], index: 4, kind: output, shape index: {}, may-alias: {3,4}]
  %s5 = sld [smem:[#allocation0]]
  $region26: #{image_encoder_forward.19} parent=0
    _
  %s7 = ssub.s32 1, %s5
  %s8 = scalar_select 0, %s7, %s5
  // Predicated region
  $region2: #{image_encoder_forward.19} parent=0 // pred_check
    _
  $region3: #{image_encoder_forward.19} parent=0 // pred_check_branch
    %10 = sbr.rel (0) target = $region5
  $region4: #{image_encoder_forward.19} parent=0 // pred_region
    _
  $region5: #{image_encoder_forward.19} parent=0 // pred_fallthru
    _
  // Predicated region
  $region6: #{image_encoder_forward.19} parent=0 // pred_check
    _
  $region7: #{image_encoder_forward.19} parent=0 // pred_check_branch
    %12 = sbr.rel (0) target = $region9
  $region8: #{image_encoder_forward.19} parent=0 // pred_region
    _
  $region9: #{image_encoder_forward.19} parent=0 // pred_fallthru
    _
  // Predicated region
  $region10: #{image_encoder_forward.19} parent=0 // pred_check
    _
  $region11: #{image_encoder_forward.19} parent=0 // pred_check_branch
    %14 = sbr.rel (0) target = $region13
  $region12: #{image_encoder_forward.19} parent=0 // pred_region
    _
  $region13: #{image_encoder_forward.19} parent=0 // pred_fallthru
    _
  // Predicated region
  $region14: #{image_encoder_forward.19} parent=0 // pred_check
    _
  $region15: #{image_encoder_forward.19} parent=0 // pred_check_branch
    %16 = sbr.rel (0) target = $region17
  $region16: #{image_encoder_forward.19} parent=0 // pred_region
    _
  $region17: #{image_encoder_forward.19} parent=0 // pred_fallthru
    _
  %v18 = vld [vmem:[%s0] sm:$0xff]
  %v19 = vld [vmem:[%s0 + $0x8] sm:$0xff]
  %v20 = vld [vmem:[%s0 + $0x10] sm:$0xff]
  %v21 = vld [vmem:[%s0 + $0x18] sm:$0xff]
  %v22 = vld [vmem:[%s0 + $0x20] sm:$0xff]
  %v23 = vld [vmem:[%s0 + $0x28] sm:$0xff]
  %v24 = vld [vmem:[%s0 + $0x30] sm:$0xff]
  %v25 = vld [vmem:[%s0 + $0x38] sm:$0xff]
  %v26 = vld [vmem:[%s1] sm:$0xf]
  %v27 = vld [vmem:[%s1 + $0x4] sm:$0xf]
  %v28 = vld [vmem:[%s1 + $0x8] sm:$0xf]
  %v29 = vld [vmem:[%s1 + $0xc] sm:$0xf]
  %v30 = vld [vmem:[%s1 + $0x10] sm:$0xf]
  %v31 = vld [vmem:[%s1 + $0x14] sm:$0xf]
  %v32 = vld [vmem:[%s1 + $0x18] sm:$0xf]
  %v33 = vld [vmem:[%s1 + $0x1c] sm:$0xf]
  %v34 = vld [vmem:[%s1 + $0x20] sm:$0xf]
  %v35 = vld [vmem:[%s1 + $0x24] sm:$0xf]
  %v36 = vld [vmem:[%s1 + $0x28] sm:$0xf]
  %v37 = vld [vmem:[%s1 + $0x2c] sm:$0xf]
  %v38 = vld [vmem:[%s1 + $0x30] sm:$0xf]
  %v39 = vld [vmem:[%s1 + $0x34] sm:$0xf]
  %v40 = vld [vmem:[%s1 + $0x38] sm:$0xf]
  %v41 = vld [vmem:[%s1 + $0x3c] sm:$0xf]
  %v42 = vld [vmem:[%s1 + $0x40] sm:$0xf]
  %v43 = vld [vmem:[%s1 + $0x44] sm:$0xf]
  %v44 = vld [vmem:[%s1 + $0x48] sm:$0xf]
  %v45 = vld [vmem:[%s1 + $0x4c] sm:$0xf]
  %v46 = vld [vmem:[%s1 + $0x50] sm:$0xf]
  %v47 = vld [vmem:[%s1 + $0x54] sm:$0xf]
  %v48 = vld [vmem:[%s1 + $0x58] sm:$0xf]
  %v49 = vld [vmem:[%s1 + $0x5c] sm:$0xf]
  %v50 = vld [vmem:[%s1 + $0x60] sm:$0xf]
  %v51 = vld [vmem:[%s1 + $0x64] sm:$0xf]
  %v52 = vld [vmem:[%s1 + $0x68] sm:$0xf]
  %v53 = vld [vmem:[%s1 + $0x6c] sm:$0xf]
  %v54 = vld [vmem:[%s1 + $0x70] sm:$0xf]
  %v55 = vld [vmem:[%s1 + $0x74] sm:$0xf]
  %v56 = vld [vmem:[%s1 + $0x78] sm:$0xf]
  %v57 = vld [vmem:[%s1 + $0x7c] sm:$0xf]
  %v58 = vld [vmem:[%s1 + $0x80] sm:$0xf]
  %v59 = vld [vmem:[%s1 + $0x84] sm:$0xf]
  %v60 = vld [vmem:[%s1 + $0x88] sm:$0xf]
  %v61 = vld [vmem:[%s1 + $0x8c] sm:$0xf]
  %v62 = vld [vmem:[%s1 + $0x90] sm:$0xf]
  %v63 = vld [vmem:[%s1 + $0x94] sm:$0xf]
  %v64 = vld [vmem:[%s1 + $0x98] sm:$0xf]
  %v65 = vld [vmem:[%s1 + $0x9c] sm:$0xf]
  %v66 = vld [vmem:[%s1 + $0xa0] sm:$0xf]
  %v67 = vld [vmem:[%s1 + $0xa4] sm:$0xf]
  %v68 = vld [vmem:[%s1 + $0xa8] sm:$0xf]
  %v69 = vld [vmem:[%s1 + $0xac] sm:$0xf]
  %v70 = vld [vmem:[%s1 + $0xb0] sm:$0xf]
  %v71 = vld [vmem:[%s1 + $0xb4] sm:$0xf]
  %v72 = vld [vmem:[%s1 + $0xb8] sm:$0xf]
  %v73 = vld [vmem:[%s1 + $0xbc] sm:$0xf]
  %v74 = vld [vmem:[%s1 + $0xc0] sm:$0xf]
  %v75 = vld [vmem:[%s1 + $0xc4] sm:$0xf]
  %v76 = vld [vmem:[%s1 + $0xc8] sm:$0xf]
  %v77 = vld [vmem:[%s1 + $0xcc] sm:$0xf]
  %v78 = vld [vmem:[%s1 + $0xd0] sm:$0xf]
  %v79 = vld [vmem:[%s1 + $0xd4] sm:$0xf]
  %v80 = vld [vmem:[%s1 + $0xd8] sm:$0xf]
  %v81 = vld [vmem:[%s1 + $0xdc] sm:$0xf]
  %v82 = vld [vmem:[%s1 + $0xe0] sm:$0xf]
  %v83 = vld [vmem:[%s1 + $0xe4] sm:$0xf]
  %v84 = vld [vmem:[%s1 + $0xe8] sm:$0xf]
  %v85 = vld [vmem:[%s1 + $0xec] sm:$0xf]
  %v86 = vld [vmem:[%s1 + $0xf0] sm:$0xf]
  %v87 = vld [vmem:[%s1 + $0xf4] sm:$0xf]
  %v88 = vld [vmem:[%s1 + $0xf8] sm:$0xf]
  %v89 = vld [vmem:[%s1 + $0xfc] sm:$0xf]
  %v90 = vld [vmem:[%s2] sm:$0x1]
  %v92 = vlaneseq
  %v93 = vshrl.u32 %v92, 7
  %v94 = vsub.s32 0, %v93
  %v95 = vrot.slane %v90, %v94
  %v105 = vunpack.c.l.b16 %v18
  %v106 = vunpack.c.h.b16 %v18
  %v107 = vunpack.c.l.b16 %v19
  %v108 = vunpack.c.h.b16 %v19
  %v109 = vunpack.c.l.b16 %v20
  %v110 = vunpack.c.h.b16 %v20
  %v111 = vunpack.c.l.b16 %v21
  %v112 = vunpack.c.h.b16 %v21
  %v113 = vunpack.c.l.b16 %v22
  %v114 = vunpack.c.h.b16 %v22
  %v115 = vunpack.c.l.b16 %v23
  %v116 = vunpack.c.h.b16 %v23
  %v117 = vunpack.c.l.b16 %v24
  %v118 = vunpack.c.h.b16 %v24
  %v119 = vunpack.c.l.b16 %v25
  %v120 = vunpack.c.h.b16 %v25
  %v121 = vpack.c.b16 %v109, %v105
  %v122 = vpack.c.b16 %v110, %v106
  %v123 = vpack.c.b16 %v111, %v107
  %v124 = vpack.c.b16 %v112, %v108
  %v125 = vpack.c.b16 %v117, %v113
  %v126 = vpack.c.b16 %v118, %v114
  %v127 = vpack.c.b16 %v119, %v115
  %v128 = vpack.c.b16 %v120, %v116
  %v201 = vunpack.c.l.b16 %v26
  %v202 = vunpack.c.l.b16 %v27
  %v203 = vunpack.c.l.b16 %v28
  %v204 = vunpack.c.l.b16 %v29
  %v205 = vunpack.c.l.b16 %v30
  %v206 = vunpack.c.l.b16 %v31
  %v207 = vunpack.c.l.b16 %v32
  %v208 = vunpack.c.l.b16 %v33
  %v209 = vunpack.c.l.b16 %v34
  %v210 = vunpack.c.l.b16 %v35
  %v211 = vunpack.c.l.b16 %v36
  %v212 = vunpack.c.l.b16 %v37
  %v213 = vunpack.c.l.b16 %v38
  %v214 = vunpack.c.l.b16 %v39
  %v215 = vunpack.c.l.b16 %v40
  %v216 = vunpack.c.l.b16 %v41
  %v217 = vunpack.c.l.b16 %v42
  %v218 = vunpack.c.l.b16 %v43
  %v219 = vunpack.c.l.b16 %v44
  %v220 = vunpack.c.l.b16 %v45
  %v221 = vunpack.c.l.b16 %v46
  %v222 = vunpack.c.l.b16 %v47
  %v223 = vunpack.c.l.b16 %v48
  %v224 = vunpack.c.l.b16 %v49
  %v225 = vunpack.c.l.b16 %v50
  %v226 = vunpack.c.l.b16 %v51
  %v227 = vunpack.c.l.b16 %v52
  %v228 = vunpack.c.l.b16 %v53
  %v229 = vunpack.c.l.b16 %v54
  %v230 = vunpack.c.l.b16 %v55
  %v231 = vunpack.c.l.b16 %v56
  %v232 = vunpack.c.l.b16 %v57
  %v233 = vunpack.c.l.b16 %v58
  %v234 = vunpack.c.l.b16 %v59
  %v235 = vunpack.c.l.b16 %v60
  %v236 = vunpack.c.l.b16 %v61
  %v237 = vunpack.c.l.b16 %v62
  %v238 = vunpack.c.l.b16 %v63
  %v239 = vunpack.c.l.b16 %v64
  %v240 = vunpack.c.l.b16 %v65
  %v241 = vunpack.c.l.b16 %v66
  %v242 = vunpack.c.l.b16 %v67
  %v243 = vunpack.c.l.b16 %v68
  %v244 = vunpack.c.l.b16 %v69
  %v245 = vunpack.c.l.b16 %v70
  %v246 = vunpack.c.l.b16 %v71
  %v247 = vunpack.c.l.b16 %v72
  %v248 = vunpack.c.l.b16 %v73
  %v249 = vunpack.c.l.b16 %v74
  %v250 = vunpack.c.l.b16 %v75
  %v251 = vunpack.c.l.b16 %v76
  %v252 = vunpack.c.l.b16 %v77
  %v253 = vunpack.c.l.b16 %v78
  %v254 = vunpack.c.l.b16 %v79
  %v255 = vunpack.c.l.b16 %v80
  %v256 = vunpack.c.l.b16 %v81
  %v257 = vunpack.c.l.b16 %v82
  %v258 = vunpack.c.l.b16 %v83
  %v259 = vunpack.c.l.b16 %v84
  %v260 = vunpack.c.l.b16 %v85
  %v261 = vunpack.c.l.b16 %v86
  %v262 = vunpack.c.l.b16 %v87
  %v263 = vunpack.c.l.b16 %v88
  %v264 = vunpack.c.l.b16 %v89
  %v265 = vpack.c.b16 %v202, %v201
  %v266 = vpack.c.b16 %v204, %v203
  %v267 = vpack.c.b16 %v206, %v205
  %v268 = vpack.c.b16 %v208, %v207
  %v269 = vpack.c.b16 %v210, %v209
  %v270 = vpack.c.b16 %v212, %v211
  %v271 = vpack.c.b16 %v214, %v213
  %v272 = vpack.c.b16 %v216, %v215
  %v273 = vpack.c.b16 %v218, %v217
  %v274 = vpack.c.b16 %v220, %v219
  %v275 = vpack.c.b16 %v222, %v221
  %v276 = vpack.c.b16 %v224, %v223
  %v277 = vpack.c.b16 %v226, %v225
  %v278 = vpack.c.b16 %v228, %v227
  %v279 = vpack.c.b16 %v230, %v229
  %v280 = vpack.c.b16 %v232, %v231
  %v281 = vpack.c.b16 %v234, %v233
  %v282 = vpack.c.b16 %v236, %v235
  %v283 = vpack.c.b16 %v238, %v237
  %v284 = vpack.c.b16 %v240, %v239
  %v285 = vpack.c.b16 %v242, %v241
  %v286 = vpack.c.b16 %v244, %v243
  %v287 = vpack.c.b16 %v246, %v245
  %v288 = vpack.c.b16 %v248, %v247
  %v289 = vpack.c.b16 %v250, %v249
  %v290 = vpack.c.b16 %v252, %v251
  %v291 = vpack.c.b16 %v254, %v253
  %v292 = vpack.c.b16 %v256, %v255
  %v293 = vpack.c.b16 %v258, %v257
  %v294 = vpack.c.b16 %v260, %v259
  %v295 = vpack.c.b16 %v262, %v261
  %v296 = vpack.c.b16 %v264, %v263
  %329 = vmatprep.subr.bf16.mxu0 0
  %330 = vmatpush1.bf16.msra.mxu0 %v265
  %331 = vmatprep.subr.bf16.mxu0 0
  %332 = vmatpush1.bf16.msra.mxu0 %v266
  %333 = vmatprep.subr.bf16.mxu0 0
  %334 = vmatpush1.bf16.msra.mxu0 %v267
  %335 = vmatprep.subr.bf16.mxu0 0
  %336 = vmatpush1.bf16.msra.mxu0 %v268
  %337 = vmatprep.subr.bf16.mxu0 0
  %338 = vmatpush1.bf16.msra.mxu0 %v269
  %339 = vmatprep.subr.bf16.mxu0 0
  %340 = vmatpush1.bf16.msra.mxu0 %v270
  %341 = vmatprep.subr.bf16.mxu0 0
  %342 = vmatpush1.bf16.msra.mxu0 %v271
  %343 = vmatprep.subr.bf16.mxu0 0
  %344 = vmatpush1.bf16.msra.mxu0 %v272
  %345 = vmatprep.subr.bf16.mxu0 0
  %346 = vmatpush1.bf16.msra.mxu0 %v273
  %347 = vmatprep.subr.bf16.mxu0 0
  %348 = vmatpush1.bf16.msra.mxu0 %v274
  %349 = vmatprep.subr.bf16.mxu0 0
  %350 = vmatpush1.bf16.msra.mxu0 %v275
  %351 = vmatprep.subr.bf16.mxu0 0
  %352 = vmatpush1.bf16.msra.mxu0 %v276
  %353 = vmatprep.subr.bf16.mxu0 0
  %354 = vmatpush1.bf16.msra.mxu0 %v277
  %355 = vmatprep.subr.bf16.mxu0 0
  %356 = vmatpush1.bf16.msra.mxu0 %v278
  %357 = vmatprep.subr.bf16.mxu0 0
  %358 = vmatpush1.bf16.msra.mxu0 %v279
  %359 = vmatprep.subr.bf16.mxu0 0
  %360 = vmatpush1.bf16.msra.mxu0 %v280
  %361 = vmatprep.mubr.bf16.mxu0 %v122
  %362 = vmatmul.mubr.bf16.gmra.mrb[0].mxu0 %v121
  %v363 = vpop.f32.mrb[0].mxu0
  %v364 = vadd.f32 %v95, %v363
  %v365 = vpop.f32.mrb[0].mxu0
  %v366 = vpop.f32.mrb[0].mxu0
  %v367 = vadd.f32 %v95, %v366
  %v368 = vpop.f32.mrb[0].mxu0
  %369 = vmatprep.mubr.bf16.mxu0 %v126
  %370 = vmatmul.mubr.bf16.gmra.mrb[0].mxu0 %v125
  %v371 = vpop.f32.mrb[0].mxu0
  %v372 = vadd.f32 %v95, %v371
  %v373 = vpop.f32.mrb[0].mxu0
  %v374 = vpop.f32.mrb[0].mxu0
  %v375 = vadd.f32 %v95, %v374
  %v376 = vpop.f32.mrb[0].mxu0
  %377 = vdwg.mxu0
  %378 = vmatprep.subr.bf16.mxu0 0
  %379 = vmatpush1.bf16.msra.mxu0 %v281
  %380 = vmatprep.subr.bf16.mxu0 0
  %381 = vmatpush1.bf16.msra.mxu0 %v282
  %382 = vmatprep.subr.bf16.mxu0 0
  %383 = vmatpush1.bf16.msra.mxu0 %v283
  %384 = vmatprep.subr.bf16.mxu0 0
  %385 = vmatpush1.bf16.msra.mxu0 %v284
  %386 = vmatprep.subr.bf16.mxu0 0
  %387 = vmatpush1.bf16.msra.mxu0 %v285
  %388 = vmatprep.subr.bf16.mxu0 0
  %389 = vmatpush1.bf16.msra.mxu0 %v286
  %390 = vmatprep.subr.bf16.mxu0 0
  %391 = vmatpush1.bf16.msra.mxu0 %v287
  %392 = vmatprep.subr.bf16.mxu0 0
  %393 = vmatpush1.bf16.msra.mxu0 %v288
  %394 = vmatprep.subr.bf16.mxu0 0
  %395 = vmatpush1.bf16.msra.mxu0 %v289
  %396 = vmatprep.subr.bf16.mxu0 0
  %397 = vmatpush1.bf16.msra.mxu0 %v290
  %398 = vmatprep.subr.bf16.mxu0 0
  %399 = vmatpush1.bf16.msra.mxu0 %v291
  %400 = vmatprep.subr.bf16.mxu0 0
  %401 = vmatpush1.bf16.msra.mxu0 %v292
  %402 = vmatprep.subr.bf16.mxu0 0
  %403 = vmatpush1.bf16.msra.mxu0 %v293
  %404 = vmatprep.subr.bf16.mxu0 0
  %405 = vmatpush1.bf16.msra.mxu0 %v294
  %406 = vmatprep.subr.bf16.mxu0 0
  %407 = vmatpush1.bf16.msra.mxu0 %v295
  %408 = vmatprep.subr.bf16.mxu0 0
  %409 = vmatpush1.bf16.msra.mxu0 %v296
  %410 = vmatprep.mubr.bf16.mxu0 %v124
  %411 = vmatmul.mubr.bf16.gmra.mrb[0].mxu0 %v123
  %v412 = vpop.f32.mrb[0].mxu0
  %v413 = vadd.f32 %v364, %v412
  %v414 = vpop.f32.mrb[0].mxu0
  %v415 = vpop.f32.mrb[0].mxu0
  %v416 = vadd.f32 %v367, %v415
  %v417 = vpop.f32.mrb[0].mxu0
  %418 = vmatprep.mubr.bf16.mxu0 %v128
  %419 = vmatmul.mubr.bf16.gmra.mrb[0].mxu0 %v127
  %v420 = vpop.f32.mrb[0].mxu0
  %v421 = vadd.f32 %v372, %v420
  %v422 = vpop.f32.mrb[0].mxu0
  %v423 = vpop.f32.mrb[0].mxu0
  %v424 = vadd.f32 %v375, %v423
  %v425 = vpop.f32.mrb[0].mxu0
  %426 = vdwg.mxu0
  %v427 = vld [vmem:[%s3] sm:$0xf]
  %v428 = vld [vmem:[%s3 + $0x4] sm:$0xf]
  %v429 = vld [vmem:[%s3 + $0x8] sm:$0xf]
  %v430 = vld [vmem:[%s3 + $0xc] sm:$0xf]
  %v431 = vunpack.c.l.bf16 %v427
  %v432 = vunpack.c.l.bf16 %v428
  %v433 = vunpack.c.l.bf16 %v429
  %v434 = vunpack.c.l.bf16 %v430
  %v435 = vadd.f32 %v413, %v431
  %v436 = vadd.f32 %v416, %v432
  %v437 = vadd.f32 %v421, %v433
  %v438 = vadd.f32 %v424, %v434
  %v439 = vpack.c.bf16 %v436, %v435
  %v440 = vpack.c.bf16 %v438, %v437
  %v443 = vunpack.c.l.b16 %v439
  %v444 = vunpack.c.h.b16 %v439
  %v445 = vunpack.c.l.b16 %v440
  %v446 = vunpack.c.h.b16 %v440
  %v447 = vpack.c.b16 %v443, %v443
  %v448 = vpack.c.b16 %v444, %v444
  %v449 = vpack.c.b16 %v445, %v445
  %v450 = vpack.c.b16 %v446, %v446
  %455 = vst [vmem:[%s4] sm:$0xf] %v447
  %456 = vst [vmem:[%s4 + $0x4] sm:$0xf] %v448
  %457 = vst [vmem:[%s4 + $0x8] sm:$0xf] %v449
  %458 = vst [vmem:[%s4 + $0xc] sm:$0xf] %v450
  // Predicated region
  $region18: #{image_encoder_forward.19} parent=0 // pred_check
    _
  $region19: #{image_encoder_forward.19} parent=0 // pred_check_branch
    %460 = sbr.rel (0) target = $region21
  $region20: #{image_encoder_forward.19} parent=0 // pred_region
    _
  $region21: #{image_encoder_forward.19} parent=0 // pred_fallthru
    _
  // Predicated region
  $region22: #{image_encoder_forward.19} parent=0 // pred_check
    _
  $region23: #{image_encoder_forward.19} parent=0 // pred_check_branch
    %462 = sbr.rel (0) target = $region25
  $region24: #{image_encoder_forward.19} parent=0 // pred_region
    _
  $region25: #{image_encoder_forward.19} parent=0 // pred_fallthru
    _

// kernel: image_encoder_forward.18
$region0: #{image_encoder_forward.18}
  #allocation0 [shape = 'u32[]', space=smem, size = 0x4, offset = 0x4, fixed_abs, tag = 'smem constant byte address 0x4 - core index']
  #allocation1 [shape = 'u32[144,128]{1,0:T(1,128)}', space=vmem, size = 0x12000, scoped, tag = 'internal scratch']
  %s0 = inlined_call_operand.vmem [shape: bf16[32,128], index: 0, kind: input, shape index: {}]
  %s1 = inlined_call_operand.vmem [shape: bf16[128,512], index: 1, kind: input, shape index: {}]
  %s2 = inlined_call_operand.vmem [shape: f32[1,512], index: 2, kind: input, shape index: {}]
  %s3 = inlined_call_operand.vmem [shape: bf16[32,512], index: 3, kind: output, shape index: {}]
  %s4 = sld [smem:[#allocation0]]
  $region22: #{image_encoder_forward.18} parent=0
    _
  %s6 = ssub.s32 1, %s4
  %s7 = scalar_select 0, %s6, %s4
  // Predicated region
  $region2: #{image_encoder_forward.18} parent=0 // pred_check
    _
  $region3: #{image_encoder_forward.18} parent=0 // pred_check_branch
    %9 = sbr.rel (0) target = $region5
  $region4: #{image_encoder_forward.18} parent=0 // pred_region
    _
  $region5: #{image_encoder_forward.18} parent=0 // pred_fallthru
    _
  // Predicated region
  $region6: #{image_encoder_forward.18} parent=0 // pred_check
    _
  $region7: #{image_encoder_forward.18} parent=0 // pred_check_branch
    %11 = sbr.rel (0) target = $region9
  $region8: #{image_encoder_forward.18} parent=0 // pred_region
    _
  $region9: #{image_encoder_forward.18} parent=0 // pred_fallthru
    _
  // Predicated region
  $region10: #{image_encoder_forward.18} parent=0 // pred_check
    _
  $region11: #{image_encoder_forward.18} parent=0 // pred_check_branch
    %13 = sbr.rel (0) target = $region13
  $region12: #{image_encoder_forward.18} parent=0 // pred_region
    _
  $region13: #{image_encoder_forward.18} parent=0 // pred_fallthru
    _
  %v15 = vld [vmem:[%s0] sm:$0xf]
  %v16 = vld [vmem:[%s0 + $0x4] sm:$0xf]
  %v17 = vld [vmem:[%s0 + $0x8] sm:$0xf]
  %v18 = vld [vmem:[%s0 + $0xc] sm:$0xf]
  %v19 = vunpack.c.l.bf16 %v15
  %v20 = vunpack.c.l.bf16 %v16
  %v21 = vunpack.c.l.bf16 %v17
  %v22 = vunpack.c.l.bf16 %v18
  %23 = vadd.xlane.f32.xlu0 %v19
  %v24 = vpop.xlane.xlu0 %23
  %25 = vadd.xlane.f32.xlu0 %v20
  %v26 = vpop.xlane.xlu0 %25
  %27 = vadd.xlane.f32.xlu0 %v21
  %v28 = vpop.xlane.xlu0 %27
  %29 = vadd.xlane.f32.xlu0 %v22
  %v30 = vpop.xlane.xlu0 %29
  %v31 = vrcp.pop 128.0
  %v32 = vmul.f32 %v24, %v31
  %v33 = vmul.f32 %v26, %v31
  %v34 = vmul.f32 %v28, %v31
  %v35 = vmul.f32 %v30, %v31
  %v36 = vsub.f32 %v19, %v32
  %v37 = vsub.f32 %v20, %v33
  %v38 = vsub.f32 %v21, %v34
  %v39 = vsub.f32 %v22, %v35
  %v40 = vmul.f32 %v36, %v36
  %v41 = vmul.f32 %v37, %v37
  %v42 = vmul.f32 %v38, %v38
  %v43 = vmul.f32 %v39, %v39
  %44 = vadd.xlane.f32.xlu0 %v40
  %v45 = vpop.xlane.xlu0 %44
  %46 = vadd.xlane.f32.xlu0 %v41
  %v47 = vpop.xlane.xlu0 %46
  %48 = vadd.xlane.f32.xlu0 %v42
  %v49 = vpop.xlane.xlu0 %48
  %50 = vadd.xlane.f32.xlu0 %v43
  %v51 = vpop.xlane.xlu0 %50
  %v52 = vmul.f32 %v45, %v31
  %v53 = vmul.f32 %v47, %v31
  %v54 = vmul.f32 %v49, %v31
  %v55 = vmul.f32 %v51, %v31
  %v56 = vadd.f32 %v52, 1e-05
  %v57 = vadd.f32 %v53, 1e-05
  %v58 = vadd.f32 %v54, 1e-05
  %v59 = vadd.f32 %v55, 1e-05
  %v60 = vrsqrt.pop %v56
  %v61 = vrsqrt.pop %v57
  %v62 = vrsqrt.pop %v58
  %v63 = vrsqrt.pop %v59
  %v64 = vmul.f32 %v36, %v60
  %v65 = vmul.f32 %v37, %v61
  %v66 = vmul.f32 %v38, %v62
  %v67 = vmul.f32 %v39, %v63
  %v68 = vpack.c.bf16 %v65, %v64
  %v69 = vpack.c.bf16 %v67, %v66
  %v70 = vld [vmem:[%s1] sm:$0xff]
  %v71 = vld [vmem:[%s1 + $0x8] sm:$0xff]
  %v72 = vld [vmem:[%s1 + $0x10] sm:$0xff]
  %v73 = vld [vmem:[%s1 + $0x18] sm:$0xff]
  %v74 = vld [vmem:[%s1 + $0x20] sm:$0xff]
  %v75 = vld [vmem:[%s1 + $0x28] sm:$0xff]
  %v76 = vld [vmem:[%s1 + $0x30] sm:$0xff]
  %v77 = vld [vmem:[%s1 + $0x38] sm:$0xff]
  %v78 = vld [vmem:[%s1 + $0x40] sm:$0xff]
  %v79 = vld [vmem:[%s1 + $0x48] sm:$0xff]
  %v80 = vld [vmem:[%s1 + $0x50] sm:$0xff]
  %v81 = vld [vmem:[%s1 + $0x58] sm:$0xff]
  %v82 = vld [vmem:[%s1 + $0x60] sm:$0xff]
  %v83 = vld [vmem:[%s1 + $0x68] sm:$0xff]
  %v84 = vld [vmem:[%s1 + $0x70] sm:$0xff]
  %v85 = vld [vmem:[%s1 + $0x78] sm:$0xff]
  %v86 = vld [vmem:[%s1 + $0x80] sm:$0xff]
  %v87 = vld [vmem:[%s1 + $0x88] sm:$0xff]
  %v88 = vld [vmem:[%s1 + $0x90] sm:$0xff]
  %v89 = vld [vmem:[%s1 + $0x98] sm:$0xff]
  %v90 = vld [vmem:[%s1 + $0xa0] sm:$0xff]
  %v91 = vld [vmem:[%s1 + $0xa8] sm:$0xff]
  %v92 = vld [vmem:[%s1 + $0xb0] sm:$0xff]
  %v93 = vld [vmem:[%s1 + $0xb8] sm:$0xff]
  %v94 = vld [vmem:[%s1 + $0xc0] sm:$0xff]
  %v95 = vld [vmem:[%s1 + $0xc8] sm:$0xff]
  %v96 = vld [vmem:[%s1 + $0xd0] sm:$0xff]
  %v97 = vld [vmem:[%s1 + $0xd8] sm:$0xff]
  %v98 = vld [vmem:[%s1 + $0xe0] sm:$0xff]
  %v99 = vld [vmem:[%s1 + $0xe8] sm:$0xff]
  %v100 = vld [vmem:[%s1 + $0xf0] sm:$0xff]
  %v101 = vld [vmem:[%s1 + $0xf8] sm:$0xff]
  %v102 = vld [vmem:[%s2] sm:$0xf]
  %v104 = vlaneseq
  %v105 = vshrl.u32 %v104, 7
  %v106 = vsub.s32 0, %v105
  %v107 = vrot.slane %v102, %v106
  %v108 = vlaneseq
  %v109 = vshrl.u32 %v108, 7
  %v110 = vsub.s32 1, %v109
  %v111 = vrot.slane %v102, %v110
  %v112 = vlaneseq
  %v113 = vshrl.u32 %v112, 7
  %v114 = vsub.s32 2, %v113
  %v115 = vrot.slane %v102, %v114
  %v116 = vlaneseq
  %v117 = vshrl.u32 %v116, 7
  %v118 = vsub.s32 3, %v117
  %v119 = vrot.slane %v102, %v118
  %v156 = vunpack.c.l.b16 %v70
  %v157 = vunpack.c.h.b16 %v70
  %v158 = vunpack.c.l.b16 %v71
  %v159 = vunpack.c.h.b16 %v71
  %v160 = vunpack.c.l.b16 %v72
  %v161 = vunpack.c.h.b16 %v72
  %v162 = vunpack.c.l.b16 %v73
  %v163 = vunpack.c.h.b16 %v73
  %v164 = vunpack.c.l.b16 %v74
  %v165 = vunpack.c.h.b16 %v74
  %v166 = vunpack.c.l.b16 %v75
  %v167 = vunpack.c.h.b16 %v75
  %v168 = vunpack.c.l.b16 %v76
  %v169 = vunpack.c.h.b16 %v76
  %v170 = vunpack.c.l.b16 %v77
  %v171 = vunpack.c.h.b16 %v77
  %v172 = vunpack.c.l.b16 %v78
  %v173 = vunpack.c.h.b16 %v78
  %v174 = vunpack.c.l.b16 %v79
  %v175 = vunpack.c.h.b16 %v79
  %v176 = vunpack.c.l.b16 %v80
  %v177 = vunpack.c.h.b16 %v80
  %v178 = vunpack.c.l.b16 %v81
  %v179 = vunpack.c.h.b16 %v81
  %v180 = vunpack.c.l.b16 %v82
  %v181 = vunpack.c.h.b16 %v82
  %v182 = vunpack.c.l.b16 %v83
  %v183 = vunpack.c.h.b16 %v83
  %v184 = vunpack.c.l.b16 %v84
  %v185 = vunpack.c.h.b16 %v84
  %v186 = vunpack.c.l.b16 %v85
  %v187 = vunpack.c.h.b16 %v85
  %v188 = vunpack.c.l.b16 %v86
  %v189 = vunpack.c.h.b16 %v86
  %v190 = vunpack.c.l.b16 %v87
  %v191 = vunpack.c.h.b16 %v87
  %v192 = vunpack.c.l.b16 %v88
  %v193 = vunpack.c.h.b16 %v88
  %v194 = vunpack.c.l.b16 %v89
  %v195 = vunpack.c.h.b16 %v89
  %v196 = vunpack.c.l.b16 %v90
  %v197 = vunpack.c.h.b16 %v90
  %v198 = vunpack.c.l.b16 %v91
  %v199 = vunpack.c.h.b16 %v91
  %v200 = vunpack.c.l.b16 %v92
  %v201 = vunpack.c.h.b16 %v92
  %v202 = vunpack.c.l.b16 %v93
  %v203 = vunpack.c.h.b16 %v93
  %v204 = vunpack.c.l.b16 %v94
  %v205 = vunpack.c.h.b16 %v94
  %v206 = vunpack.c.l.b16 %v95
  %v207 = vunpack.c.h.b16 %v95
  %v208 = vunpack.c.l.b16 %v96
  %v209 = vunpack.c.h.b16 %v96
  %v210 = vunpack.c.l.b16 %v97
  %v211 = vunpack.c.h.b16 %v97
  %v212 = vunpack.c.l.b16 %v98
  %v213 = vunpack.c.h.b16 %v98
  %v214 = vunpack.c.l.b16 %v99
  %v215 = vunpack.c.h.b16 %v99
  %v216 = vunpack.c.l.b16 %v100
  %v217 = vunpack.c.h.b16 %v100
  %v218 = vunpack.c.l.b16 %v101
  %v219 = vunpack.c.h.b16 %v101
  %v220 = vpack.c.b16 %v160, %v156
  %v221 = vpack.c.b16 %v161, %v157
  %v222 = vpack.c.b16 %v162, %v158
  %v223 = vpack.c.b16 %v163, %v159
  %v224 = vpack.c.b16 %v168, %v164
  %v225 = vpack.c.b16 %v169, %v165
  %v226 = vpack.c.b16 %v170, %v166
  %v227 = vpack.c.b16 %v171, %v167
  %v228 = vpack.c.b16 %v176, %v172
  %v229 = vpack.c.b16 %v177, %v173
  %v230 = vpack.c.b16 %v178, %v174
  %v231 = vpack.c.b16 %v179, %v175
  %v232 = vpack.c.b16 %v184, %v180
  %v233 = vpack.c.b16 %v185, %v181
  %v234 = vpack.c.b16 %v186, %v182
  %v235 = vpack.c.b16 %v187, %v183
  %v236 = vpack.c.b16 %v192, %v188
  %v237 = vpack.c.b16 %v193, %v189
  %v238 = vpack.c.b16 %v194, %v190
  %v239 = vpack.c.b16 %v195, %v191
  %v240 = vpack.c.b16 %v200, %v196
  %v241 = vpack.c.b16 %v201, %v197
  %v242 = vpack.c.b16 %v202, %v198
  %v243 = vpack.c.b16 %v203, %v199
  %v244 = vpack.c.b16 %v208, %v204
  %v245 = vpack.c.b16 %v209, %v205
  %v246 = vpack.c.b16 %v210, %v206
  %v247 = vpack.c.b16 %v211, %v207
  %v248 = vpack.c.b16 %v216, %v212
  %v249 = vpack.c.b16 %v217, %v213
  %v250 = vpack.c.b16 %v218, %v214
  %v251 = vpack.c.b16 %v219, %v215
  %284 = vmatprep.subr.bf16.mxu0 %v221
  %285 = vmatpush1.bf16.msra.mxu0 %v220
  %286 = vmatprep.subr.bf16.mxu0 %v225
  %287 = vmatpush1.bf16.msra.mxu0 %v224
  %288 = vmatprep.subr.bf16.mxu0 %v229
  %289 = vmatpush1.bf16.msra.mxu0 %v228
  %290 = vmatprep.subr.bf16.mxu0 %v233
  %291 = vmatpush1.bf16.msra.mxu0 %v232
  %292 = vmatprep.subr.bf16.mxu0 %v237
  %293 = vmatpush1.bf16.msra.mxu0 %v236
  %294 = vmatprep.subr.bf16.mxu0 %v241
  %295 = vmatpush1.bf16.msra.mxu0 %v240
  %296 = vmatprep.subr.bf16.mxu0 %v245
  %297 = vmatpush1.bf16.msra.mxu0 %v244
  %298 = vmatprep.subr.bf16.mxu0 %v249
  %299 = vmatpush1.bf16.msra.mxu0 %v248
  %300 = vmatprep.subr.bf16.mxu0 0
  %301 = vmatpush1.bf16.msra.mxu0 0
  %302 = vmatprep.subr.bf16.mxu0 0
  %303 = vmatpush1.bf16.msra.mxu0 0
  %304 = vmatprep.subr.bf16.mxu0 0
  %305 = vmatpush1.bf16.msra.mxu0 0
  %306 = vmatprep.subr.bf16.mxu0 0
  %307 = vmatpush1.bf16.msra.mxu0 0
  %308 = vmatprep.subr.bf16.mxu0 0
  %309 = vmatpush1.bf16.msra.mxu0 0
  %310 = vmatprep.subr.bf16.mxu0 0
  %311 = vmatpush1.bf16.msra.mxu0 0
  %312 = vmatprep.subr.bf16.mxu0 0
  %313 = vmatpush1.bf16.msra.mxu0 0
  %314 = vmatprep.subr.bf16.mxu0 0
  %315 = vmatpush1.bf16.msra.mxu0 0
  %316 = vmatprep.mubr.bf16.mxu0 0
  %317 = vmatmul.mubr.bf16.gmra.mrb[0].mxu0 %v68
  %v318 = vpop.f32.mrb[0].mxu0
  %v319 = vadd.f32 %v107, %v318
  %v320 = vpop.f32.mrb[0].mxu0
  %v321 = vadd.f32 %v111, %v320
  %v322 = vpop.f32.mrb[0].mxu0
  %v323 = vadd.f32 %v107, %v322
  %v324 = vpop.f32.mrb[0].mxu0
  %v325 = vadd.f32 %v111, %v324
  %326 = vmatprep.mubr.bf16.mxu0 0
  %327 = vmatmul.mubr.bf16.gmra.mrb[0].mxu0 %v69
  %v328 = vpop.f32.mrb[0].mxu0
  %v329 = vadd.f32 %v107, %v328
  %v330 = vpop.f32.mrb[0].mxu0
  %v331 = vadd.f32 %v111, %v330
  %v332 = vpop.f32.mrb[0].mxu0
  %v333 = vadd.f32 %v107, %v332
  %v334 = vpop.f32.mrb[0].mxu0
  %v335 = vadd.f32 %v111, %v334
  %336 = vdwg.mxu0
  %337 = vmatprep.subr.bf16.mxu0 %v223
  %338 = vmatpush1.bf16.msra.mxu0 %v222
  %339 = vmatprep.subr.bf16.mxu0 %v227
  %340 = vmatpush1.bf16.msra.mxu0 %v226
  %341 = vmatprep.subr.bf16.mxu0 %v231
  %342 = vmatpush1.bf16.msra.mxu0 %v230
  %343 = vmatprep.subr.bf16.mxu0 %v235
  %344 = vmatpush1.bf16.msra.mxu0 %v234
  %345 = vmatprep.subr.bf16.mxu0 %v239
  %346 = vmatpush1.bf16.msra.mxu0 %v238
  %347 = vmatprep.subr.bf16.mxu0 %v243
  %348 = vmatpush1.bf16.msra.mxu0 %v242
  %349 = vmatprep.subr.bf16.mxu0 %v247
  %350 = vmatpush1.bf16.msra.mxu0 %v246
  %351 = vmatprep.subr.bf16.mxu0 %v251
  %352 = vmatpush1.bf16.msra.mxu0 %v250
  %353 = vmatprep.subr.bf16.mxu0 0
  %354 = vmatpush1.bf16.msra.mxu0 0
  %355 = vmatprep.subr.bf16.mxu0 0
  %356 = vmatpush1.bf16.msra.mxu0 0
  %357 = vmatprep.subr.bf16.mxu0 0
  %358 = vmatpush1.bf16.msra.mxu0 0
  %359 = vmatprep.subr.bf16.mxu0 0
  %360 = vmatpush1.bf16.msra.mxu0 0
  %361 = vmatprep.subr.bf16.mxu0 0
  %362 = vmatpush1.bf16.msra.mxu0 0
  %363 = vmatprep.subr.bf16.mxu0 0
  %364 = vmatpush1.bf16.msra.mxu0 0
  %365 = vmatprep.subr.bf16.mxu0 0
  %366 = vmatpush1.bf16.msra.mxu0 0
  %367 = vmatprep.subr.bf16.mxu0 0
  %368 = vmatpush1.bf16.msra.mxu0 0
  %369 = vmatprep.mubr.bf16.mxu0 0
  %370 = vmatmul.mubr.bf16.gmra.mrb[0].mxu0 %v68
  %v371 = vpop.f32.mrb[0].mxu0
  %v372 = vadd.f32 %v115, %v371
  %v373 = vpop.f32.mrb[0].mxu0
  %v374 = vadd.f32 %v119, %v373
  %v375 = vpop.f32.mrb[0].mxu0
  %v376 = vadd.f32 %v115, %v375
  %v377 = vpop.f32.mrb[0].mxu0
  %v378 = vadd.f32 %v119, %v377
  %379 = vmatprep.mubr.bf16.mxu0 0
  %380 = vmatmul.mubr.bf16.gmra.mrb[0].mxu0 %v69
  %v381 = vpop.f32.mrb[0].mxu0
  %v382 = vadd.f32 %v115, %v381
  %v383 = vpop.f32.mrb[0].mxu0
  %v384 = vadd.f32 %v119, %v383
  %v385 = vpop.f32.mrb[0].mxu0
  %v386 = vadd.f32 %v115, %v385
  %v387 = vpop.f32.mrb[0].mxu0
  %v388 = vadd.f32 %v119, %v387
  %389 = vdwg.mxu0
  %v390 = vmul.f32 %v319, %v319
  %v391 = vmul.f32 %v321, %v321
  %v392 = vmul.f32 %v372, %v372
  %v393 = vmul.f32 %v374, %v374
  %v394 = vmul.f32 %v323, %v323
  %v395 = vmul.f32 %v325, %v325
  %v396 = vmul.f32 %v376, %v376
  %v397 = vmul.f32 %v378, %v378
  %v398 = vmul.f32 %v329, %v329
  %v399 = vmul.f32 %v331, %v331
  %v400 = vmul.f32 %v382, %v382
  %v401 = vmul.f32 %v384, %v384
  %v402 = vmul.f32 %v333, %v333
  %v403 = vmul.f32 %v335, %v335
  %v404 = vmul.f32 %v386, %v386
  %v405 = vmul.f32 %v388, %v388
  %v406 = vmul.f32 %v319, %v390
  %v407 = vmul.f32 %v321, %v391
  %v408 = vmul.f32 %v372, %v392
  %v409 = vmul.f32 %v374, %v393
  %v410 = vmul.f32 %v323, %v394
  %v411 = vmul.f32 %v325, %v395
  %v412 = vmul.f32 %v376, %v396
  %v413 = vmul.f32 %v378, %v397
  %v414 = vmul.f32 %v329, %v398
  %v415 = vmul.f32 %v331, %v399
  %v416 = vmul.f32 %v382, %v400
  %v417 = vmul.f32 %v384, %v401
  %v418 = vmul.f32 %v333, %v402
  %v419 = vmul.f32 %v335, %v403
  %v420 = vmul.f32 %v386, %v404
  %v421 = vmul.f32 %v388, %v405
  %v422 = vmul.f32 %v406, 0.044715
  %v423 = vmul.f32 %v407, 0.044715
  %v424 = vmul.f32 %v408, 0.044715
  %v425 = vmul.f32 %v409, 0.044715
  %v426 = vmul.f32 %v410, 0.044715
  %v427 = vmul.f32 %v411, 0.044715
  %v428 = vmul.f32 %v412, 0.044715
  %v429 = vmul.f32 %v413, 0.044715
  %v430 = vmul.f32 %v414, 0.044715
  %v431 = vmul.f32 %v415, 0.044715
  %v432 = vmul.f32 %v416, 0.044715
  %v433 = vmul.f32 %v417, 0.044715
  %v434 = vmul.f32 %v418, 0.044715
  %v435 = vmul.f32 %v419, 0.044715
  %v436 = vmul.f32 %v420, 0.044715
  %v437 = vmul.f32 %v421, 0.044715
  %v438 = vadd.f32 %v319, %v422
  %v439 = vadd.f32 %v321, %v423
  %v440 = vadd.f32 %v372, %v424
  %v441 = vadd.f32 %v374, %v425
  %v442 = vadd.f32 %v323, %v426
  %v443 = vadd.f32 %v325, %v427
  %v444 = vadd.f32 %v376, %v428
  %v445 = vadd.f32 %v378, %v429
  %v446 = vadd.f32 %v329, %v430
  %v447 = vadd.f32 %v331, %v431
  %v448 = vadd.f32 %v382, %v432
  %v449 = vadd.f32 %v384, %v433
  %v450 = vadd.f32 %v333, %v434
  %v451 = vadd.f32 %v335, %v435
  %v452 = vadd.f32 %v386, %v436
  %v453 = vadd.f32 %v388, %v437
  %v454 = vmul.f32 %v438, 0.7978846
  %v455 = vmul.f32 %v439, 0.7978846
  %v456 = vmul.f32 %v440, 0.7978846
  %v457 = vmul.f32 %v441, 0.7978846
  %v458 = vmul.f32 %v442, 0.7978846
  %v459 = vmul.f32 %v443, 0.7978846
  %v460 = vmul.f32 %v444, 0.7978846
  %v461 = vmul.f32 %v445, 0.7978846
  %v462 = vmul.f32 %v446, 0.7978846
  %v463 = vmul.f32 %v447, 0.7978846
  %v464 = vmul.f32 %v448, 0.7978846
  %v465 = vmul.f32 %v449, 0.7978846
  %v466 = vmul.f32 %v450, 0.7978846
  %v467 = vmul.f32 %v451, 0.7978846
  %v468 = vmul.f32 %v452, 0.7978846
  %v469 = vmul.f32 %v453, 0.7978846
  %v470 = vtanh.pop %v454
  %v471 = vtanh.pop %v455
  %v472 = vtanh.pop %v456
  %v473 = vtanh.pop %v457
  %v474 = vtanh.pop %v458
  %v475 = vtanh.pop %v459
  %v476 = vtanh.pop %v460
  %v477 = vtanh.pop %v461
  %v478 = vtanh.pop %v462
  %v479 = vtanh.pop %v463
  %v480 = vtanh.pop %v464
  %v481 = vtanh.pop %v465
  %v482 = vtanh.pop %v466
  %v483 = vtanh.pop %v467
  %v484 = vtanh.pop %v468
  %v485 = vtanh.pop %v469
  %v486 = vadd.f32 %v470, 1.0
  %v487 = vadd.f32 %v471, 1.0
  %v488 = vadd.f32 %v472, 1.0
  %v489 = vadd.f32 %v473, 1.0
  %v490 = vadd.f32 %v474, 1.0
  %v491 = vadd.f32 %v475, 1.0
  %v492 = vadd.f32 %v476, 1.0
  %v493 = vadd.f32 %v477, 1.0
  %v494 = vadd.f32 %v478, 1.0
  %v495 = vadd.f32 %v479, 1.0
  %v496 = vadd.f32 %v480, 1.0
  %v497 = vadd.f32 %v481, 1.0
  %v498 = vadd.f32 %v482, 1.0
  %v499 = vadd.f32 %v483, 1.0
  %v500 = vadd.f32 %v484, 1.0
  %v501 = vadd.f32 %v485, 1.0
  %v502 = vmul.f32 %v486, 0.5
  %v503 = vmul.f32 %v487, 0.5
  %v504 = vmul.f32 %v488, 0.5
  %v505 = vmul.f32 %v489, 0.5
  %v506 = vmul.f32 %v490, 0.5
  %v507 = vmul.f32 %v491, 0.5
  %v508 = vmul.f32 %v492, 0.5
  %v509 = vmul.f32 %v493, 0.5
  %v510 = vmul.f32 %v494, 0.5
  %v511 = vmul.f32 %v495, 0.5
  %v512 = vmul.f32 %v496, 0.5
  %v513 = vmul.f32 %v497, 0.5
  %v514 = vmul.f32 %v498, 0.5
  %v515 = vmul.f32 %v499, 0.5
  %v516 = vmul.f32 %v500, 0.5
  %v517 = vmul.f32 %v501, 0.5
  %v518 = vmul.f32 %v319, %v502
  %v519 = vmul.f32 %v321, %v503
  %v520 = vmul.f32 %v372, %v504
  %v521 = vmul.f32 %v374, %v505
  %v522 = vmul.f32 %v323, %v506
  %v523 = vmul.f32 %v325, %v507
  %v524 = vmul.f32 %v376, %v508
  %v525 = vmul.f32 %v378, %v509
  %v526 = vmul.f32 %v329, %v510
  %v527 = vmul.f32 %v331, %v511
  %v528 = vmul.f32 %v382, %v512
  %v529 = vmul.f32 %v384, %v513
  %v530 = vmul.f32 %v333, %v514
  %v531 = vmul.f32 %v335, %v515
  %v532 = vmul.f32 %v386, %v516
  %v533 = vmul.f32 %v388, %v517
  %v534 = vpack.c.bf16 %v522, %v518
  %v535 = vpack.c.bf16 %v523, %v519
  %v536 = vpack.c.bf16 %v524, %v520
  %v537 = vpack.c.bf16 %v525, %v521
  %v538 = vpack.c.bf16 %v530, %v526
  %v539 = vpack.c.bf16 %v531, %v527
  %v540 = vpack.c.bf16 %v532, %v528
  %v541 = vpack.c.bf16 %v533, %v529
  %v550 = vunpack.c.l.b16 %v534
  %v551 = vunpack.c.l.b16 %v535
  %v552 = vunpack.c.l.b16 %v536
  %v553 = vunpack.c.l.b16 %v537
  %v554 = vunpack.c.h.b16 %v534
  %v555 = vunpack.c.h.b16 %v535
  %v556 = vunpack.c.h.b16 %v536
  %v557 = vunpack.c.h.b16 %v537
  %v558 = vunpack.c.l.b16 %v538
  %v559 = vunpack.c.l.b16 %v539
  %v560 = vunpack.c.l.b16 %v540
  %v561 = vunpack.c.l.b16 %v541
  %v562 = vunpack.c.h.b16 %v538
  %v563 = vunpack.c.h.b16 %v539
  %v564 = vunpack.c.h.b16 %v540
  %v565 = vunpack.c.h.b16 %v541
  %v566 = vpack.c.b16 %v551, %v550
  %v567 = vpack.c.b16 %v553, %v552
  %v568 = vpack.c.b16 %v555, %v554
  %v569 = vpack.c.b16 %v557, %v556
  %v570 = vpack.c.b16 %v559, %v558
  %v571 = vpack.c.b16 %v561, %v560
  %v572 = vpack.c.b16 %v563, %v562
  %v573 = vpack.c.b16 %v565, %v564
  %582 = vst [vmem:[%s3] sm:$0xff] %v566
  %583 = vst [vmem:[%s3 + $0x8] sm:$0xff] %v567
  %584 = vst [vmem:[%s3 + $0x10] sm:$0xff] %v568
  %585 = vst [vmem:[%s3 + $0x18] sm:$0xff] %v569
  %586 = vst [vmem:[%s3 + $0x20] sm:$0xff] %v570
  %587 = vst [vmem:[%s3 + $0x28] sm:$0xff] %v571
  %588 = vst [vmem:[%s3 + $0x30] sm:$0xff] %v572
  %589 = vst [vmem:[%s3 + $0x38] sm:$0xff] %v573
  // Predicated region
  $region14: #{image_encoder_forward.18} parent=0 // pred_check
    _
  $region15: #{image_encoder_forward.18} parent=0 // pred_check_branch
    %591 = sbr.rel (0) target = $region17
  $region16: #{image_encoder_forward.18} parent=0 // pred_region
    _
  $region17: #{image_encoder_forward.18} parent=0 // pred_fallthru
    _
  // Predicated region
  $region18: #{image_encoder_forward.18} parent=0 // pred_check
    _
  $region19: #{image_encoder_forward.18} parent=0 // pred_check_branch
    %593 = sbr.rel (0) target = $region21
  $region20: #{image_encoder_forward.18} parent=0 // pred_region
    _
  $region21: #{image_encoder_forward.18} parent=0 // pred_fallthru
    _

// kernel: image_encoder_forward.25
$region0: #{image_encoder_forward.25}
  #allocation0 [shape = 'u32[]', space=smem, size = 0x4, offset = 0x4, fixed_abs, tag = 'smem constant byte address 0x4 - core index']
  #allocation1 [shape = 'u32[144,128]{1,0:T(1,128)}', space=vmem, size = 0x12000, scoped, tag = 'internal scratch']
  %s0 = inlined_call_operand.vmem [shape: bf16[2,128], index: 0, kind: input, shape index: {}]
  %s1 = inlined_call_operand.vmem [shape: bf16[128,512], index: 1, kind: input, shape index: {}]
  %s2 = inlined_call_operand.vmem [shape: f32[1,512], index: 2, kind: input, shape index: {}]
  %s3 = inlined_call_operand.vmem [shape: bf16[512,1024], index: 3, kind: input, shape index: {}]
  %s4 = inlined_call_operand.vmem [shape: f32[1,1024], index: 4, kind: input, shape index: {}]
  %s5 = inlined_call_operand.hbm [shape: bf16[1024,512], index: 5, kind: input, shape index: {}]
  %s6 = inlined_call_operand.vmem [shape: f32[1,512], index: 6, kind: input, shape index: {}]
  %s7 = inlined_call_operand.hbm [shape: f32[2,512], index: 7, kind: output, shape index: {}]
  %s8 = sld [smem:[#allocation0]]
  $region42: #{image_encoder_forward.25} parent=0
    _
  %s10 = ssub.s32 1, %s8
  %s11 = scalar_select 0, %s10, %s8
  $region1: #{image_encoder_forward.25} parent=0
    #allocation2 [shape = 'u8[1048576]{0}', space=vmem, size = 0x100000, scoped, tag = 'input window, operand 5, single buffered']
    #allocation3 [shape = 's32[1]{0}', space=sflag, size = 0x4, scoped, tag = 'scoped memory for image_encoder_forward.25']
    #allocation4 [shape = 's32[1]{0}', space=sflag, size = 0x4, scoped, tag = 'scoped memory for image_encoder_forward.25']
    #allocation5 [shape = 'u8[4096]{0}', space=vmem, size = 0x1000, scoped, tag = 'output window, operand 0, single buffered']
    %12 = vsyncpa [#allocation3], 0
    %13 = vsyncpa [#allocation4], 0
    // Predicated region
    $region2: #{image_encoder_forward.25} parent=1 // pred_check
      _
    $region3: #{image_encoder_forward.25} parent=1 // pred_check_branch
      %15 = sbr.rel (0) target = $region5
    $region4: #{image_encoder_forward.25} parent=1 // pred_region
      _
    $region5: #{image_encoder_forward.25} parent=1 // pred_fallthru
      _
    // Predicated region
    $region6: #{image_encoder_forward.25} parent=1 // pred_check
      _
    $region7: #{image_encoder_forward.25} parent=1 // pred_check_branch
      %17 = sbr.rel (0) target = $region9
    $region8: #{image_encoder_forward.25} parent=1 // pred_region
      _
    $region9: #{image_encoder_forward.25} parent=1 // pred_fallthru
      _
    // Predicated region
    $region10: #{image_encoder_forward.25} parent=1 // pred_check
      _
    $region11: #{image_encoder_forward.25} parent=1 // pred_check_branch
      %19 = sbr.rel (0) target = $region13
    $region12: #{image_encoder_forward.25} parent=1 // pred_region
      _
    $region13: #{image_encoder_forward.25} parent=1 // pred_fallthru
      _
    // Predicated region
    $region14: #{image_encoder_forward.25} parent=1 // pred_check
      _
    $region15: #{image_encoder_forward.25} parent=1 // pred_check_branch
      %21 = sbr.rel (0) target = $region17
    $region16: #{image_encoder_forward.25} parent=1 // pred_region
      _
    $region17: #{image_encoder_forward.25} parent=1 // pred_fallthru
      _
    // Predicated region
    $region18: #{image_encoder_forward.25} parent=1 // pred_check
      _
    $region19: #{image_encoder_forward.25} parent=1 // pred_check_branch
      %23 = sbr.rel (0) target = $region21
    $region20: #{image_encoder_forward.25} parent=1 // pred_region
      _
    $region21: #{image_encoder_forward.25} parent=1 // pred_fallthru
      _
    // Predicated region
    $region22: #{image_encoder_forward.25} parent=1 // pred_check
      _
    $region23: #{image_encoder_forward.25} parent=1 // pred_check_branch
      %25 = sbr.rel (0) target = $region25
    $region24: #{image_encoder_forward.25} parent=1 // pred_region
      %s27 = ssub.s32 32768, 32768
      %28 = vsyncadd [#allocation3], %s27
      %s29 = sshll.u32 [#allocation2], 4
      %s30 = int_to_ptr.vmem [resolvable:$true] %s29
      %35 = dma.hbm_to_vmem [thread:$0]  %s5, 32768, %s30, [#allocation3], 256, 256, 16
    $region25: #{image_encoder_forward.25} parent=1 // pred_fallthru
      _
    // Predicated region
    $region26: #{image_encoder_forward.25} parent=1 // pred_check
      _
    $region27: #{image_encoder_forward.25} parent=1 // pred_check_branch
      %37 = sbr.rel (0) target = $region29
    $region28: #{image_encoder_forward.25} parent=1 // pred_region
      _
    $region29: #{image_encoder_forward.25} parent=1 // pred_fallthru
      _
    // Predicated region
    $region30: #{image_encoder_forward.25} parent=1 // pred_check
      _
    $region31: #{image_encoder_forward.25} parent=1 // pred_check_branch
      %39 = sbr.rel (0) target = $region33
    $region32: #{image_encoder_forward.25} parent=1 // pred_region
      %40 = dma.done [#allocation3], 32768
    $region33: #{image_encoder_forward.25} parent=1 // pred_fallthru
      _
    %v42 = vld [vmem:[%s0] sm:$0x1]
    %v43 = vunpack.c.l.bf16 %v42
    %vm44 = vcmask 1041408
    %v45 = vsel %vm44, %v43, 0.0
    %46 = vadd.xlane.f32.xlu0 %v45
    %v47 = vpop.xlane.xlu0 %46
    %v48 = vrcp.pop 128.0
    %v49 = vmul.f32 %v47, %v48
    %v50 = vsub.f32 %v43, %v49
    %v51 = vmul.f32 %v50, %v50
    %v52 = vsel %vm44, %v51, 0.0
    %53 = vadd.xlane.f32.xlu0 %v52
    %v54 = vpop.xlane.xlu0 %53
    %v55 = vmul.f32 %v54, %v48
    %v56 = vadd.f32 %v55, 1e-05
    %v57 = vrsqrt.pop %v56
    %v58 = vmul.f32 %v50, %v57
    %v59 = vpack.c.bf16 %v58, %v58
    %v60 = vld [vmem:[%s1] sm:$0xff]
    %v61 = vld [vmem:[%s1 + $0x8] sm:$0xff]
    %v62 = vld [vmem:[%s1 + $0x10] sm:$0xff]
    %v63 = vld [vmem:[%s1 + $0x18] sm:$0xff]
    %v64 = vld [vmem:[%s1 + $0x20] sm:$0xff]
    %v65 = vld [vmem:[%s1 + $0x28] sm:$0xff]
    %v66 = vld [vmem:[%s1 + $0x30] sm:$0xff]
    %v67 = vld [vmem:[%s1 + $0x38] sm:$0xff]
    %v68 = vld [vmem:[%s1 + $0x40] sm:$0xff]
    %v69 = vld [vmem:[%s1 + $0x48] sm:$0xff]
    %v70 = vld [vmem:[%s1 + $0x50] sm:$0xff]
    %v71 = vld [vmem:[%s1 + $0x58] sm:$0xff]
    %v72 = vld [vmem:[%s1 + $0x60] sm:$0xff]
    %v73 = vld [vmem:[%s1 + $0x68] sm:$0xff]
    %v74 = vld [vmem:[%s1 + $0x70] sm:$0xff]
    %v75 = vld [vmem:[%s1 + $0x78] sm:$0xff]
    %v76 = vld [vmem:[%s1 + $0x80] sm:$0xff]
    %v77 = vld [vmem:[%s1 + $0x88] sm:$0xff]
    %v78 = vld [vmem:[%s1 + $0x90] sm:$0xff]
    %v79 = vld [vmem:[%s1 + $0x98] sm:$0xff]
    %v80 = vld [vmem:[%s1 + $0xa0] sm:$0xff]
    %v81 = vld [vmem:[%s1 + $0xa8] sm:$0xff]
    %v82 = vld [vmem:[%s1 + $0xb0] sm:$0xff]
    %v83 = vld [vmem:[%s1 + $0xb8] sm:$0xff]
    %v84 = vld [vmem:[%s1 + $0xc0] sm:$0xff]
    %v85 = vld [vmem:[%s1 + $0xc8] sm:$0xff]
    %v86 = vld [vmem:[%s1 + $0xd0] sm:$0xff]
    %v87 = vld [vmem:[%s1 + $0xd8] sm:$0xff]
    %v88 = vld [vmem:[%s1 + $0xe0] sm:$0xff]
    %v89 = vld [vmem:[%s1 + $0xe8] sm:$0xff]
    %v90 = vld [vmem:[%s1 + $0xf0] sm:$0xff]
    %v91 = vld [vmem:[%s1 + $0xf8] sm:$0xff]
    %v92 = vld [vmem:[%s2] sm:$0xf]
    %v94 = vlaneseq
    %v95 = vshrl.u32 %v94, 7
    %v96 = vsub.s32 0, %v95
    %v97 = vrot.slane %v92, %v96
    %v98 = vlaneseq
    %v99 = vshrl.u32 %v98, 7
    %v100 = vsub.s32 1, %v99
    %v101 = vrot.slane %v92, %v100
    %v102 = vlaneseq
    %v103 = vshrl.u32 %v102, 7
    %v104 = vsub.s32 2, %v103
    %v105 = vrot.slane %v92, %v104
    %v106 = vlaneseq
    %v107 = vshrl.u32 %v106, 7
    %v108 = vsub.s32 3, %v107
    %v109 = vrot.slane %v92, %v108
    %v146 = vunpack.c.l.b16 %v60
    %v147 = vunpack.c.h.b16 %v60
    %v148 = vunpack.c.l.b16 %v61
    %v149 = vunpack.c.h.b16 %v61
    %v150 = vunpack.c.l.b16 %v62
    %v151 = vunpack.c.h.b16 %v62
    %v152 = vunpack.c.l.b16 %v63
    %v153 = vunpack.c.h.b16 %v63
    %v154 = vunpack.c.l.b16 %v64
    %v155 = vunpack.c.h.b16 %v64
    %v156 = vunpack.c.l.b16 %v65
    %v157 = vunpack.c.h.b16 %v65
    %v158 = vunpack.c.l.b16 %v66
    %v159 = vunpack.c.h.b16 %v66
    %v160 = vunpack.c.l.b16 %v67
    %v161 = vunpack.c.h.b16 %v67
    %v162 = vunpack.c.l.b16 %v68
    %v163 = vunpack.c.h.b16 %v68
    %v164 = vunpack.c.l.b16 %v69
    %v165 = vunpack.c.h.b16 %v69
    %v166 = vunpack.c.l.b16 %v70
    %v167 = vunpack.c.h.b16 %v70
    %v168 = vunpack.c.l.b16 %v71
    %v169 = vunpack.c.h.b16 %v71
    %v170 = vunpack.c.l.b16 %v72
    %v171 = vunpack.c.h.b16 %v72
    %v172 = vunpack.c.l.b16 %v73
    %v173 = vunpack.c.h.b16 %v73
    %v174 = vunpack.c.l.b16 %v74
    %v175 = vunpack.c.h.b16 %v74
    %v176 = vunpack.c.l.b16 %v75
    %v177 = vunpack.c.h.b16 %v75
    %v178 = vunpack.c.l.b16 %v76
    %v179 = vunpack.c.h.b16 %v76
    %v180 = vunpack.c.l.b16 %v77
    %v181 = vunpack.c.h.b16 %v77
    %v182 = vunpack.c.l.b16 %v78
    %v183 = vunpack.c.h.b16 %v78
    %v184 = vunpack.c.l.b16 %v79
    %v185 = vunpack.c.h.b16 %v79
    %v186 = vunpack.c.l.b16 %v80
    %v187 = vunpack.c.h.b16 %v80
    %v188 = vunpack.c.l.b16 %v81
    %v189 = vunpack.c.h.b16 %v81
    %v190 = vunpack.c.l.b16 %v82
    %v191 = vunpack.c.h.b16 %v82
    %v192 = vunpack.c.l.b16 %v83
    %v193 = vunpack.c.h.b16 %v83
    %v194 = vunpack.c.l.b16 %v84
    %v195 = vunpack.c.h.b16 %v84
    %v196 = vunpack.c.l.b16 %v85
    %v197 = vunpack.c.h.b16 %v85
    %v198 = vunpack.c.l.b16 %v86
    %v199 = vunpack.c.h.b16 %v86
    %v200 = vunpack.c.l.b16 %v87
    %v201 = vunpack.c.h.b16 %v87
    %v202 = vunpack.c.l.b16 %v88
    %v203 = vunpack.c.h.b16 %v88
    %v204 = vunpack.c.l.b16 %v89
    %v205 = vunpack.c.h.b16 %v89
    %v206 = vunpack.c.l.b16 %v90
    %v207 = vunpack.c.h.b16 %v90
    %v208 = vunpack.c.l.b16 %v91
    %v209 = vunpack.c.h.b16 %v91
    %v210 = vpack.c.b16 %v150, %v146
    %v211 = vpack.c.b16 %v151, %v147
    %v212 = vpack.c.b16 %v152, %v148
    %v213 = vpack.c.b16 %v153, %v149
    %v214 = vpack.c.b16 %v158, %v154
    %v215 = vpack.c.b16 %v159, %v155
    %v216 = vpack.c.b16 %v160, %v156
    %v217 = vpack.c.b16 %v161, %v157
    %v218 = vpack.c.b16 %v166, %v162
    %v219 = vpack.c.b16 %v167, %v163
    %v220 = vpack.c.b16 %v168, %v164
    %v221 = vpack.c.b16 %v169, %v165
    %v222 = vpack.c.b16 %v174, %v170
    %v223 = vpack.c.b16 %v175, %v171
    %v224 = vpack.c.b16 %v176, %v172
    %v225 = vpack.c.b16 %v177, %v173
    %v226 = vpack.c.b16 %v182, %v178
    %v227 = vpack.c.b16 %v183, %v179
    %v228 = vpack.c.b16 %v184, %v180
    %v229 = vpack.c.b16 %v185, %v181
    %v230 = vpack.c.b16 %v190, %v186
    %v231 = vpack.c.b16 %v191, %v187
    %v232 = vpack.c.b16 %v192, %v188
    %v233 = vpack.c.b16 %v193, %v189
    %v234 = vpack.c.b16 %v198, %v194
    %v235 = vpack.c.b16 %v199, %v195
    %v236 = vpack.c.b16 %v200, %v196
    %v237 = vpack.c.b16 %v201, %v197
    %v238 = vpack.c.b16 %v206, %v202
    %v239 = vpack.c.b16 %v207, %v203
    %v240 = vpack.c.b16 %v208, %v204
    %v241 = vpack.c.b16 %v209, %v205
    %274 = vmatprep.subr.bf16.mxu0 %v211
    %275 = vmatpush1.bf16.msra.mxu0 %v210
    %276 = vmatprep.subr.bf16.mxu0 %v215
    %277 = vmatpush1.bf16.msra.mxu0 %v214
    %278 = vmatprep.subr.bf16.mxu0 %v219
    %279 = vmatpush1.bf16.msra.mxu0 %v218
    %280 = vmatprep.subr.bf16.mxu0 %v223
    %281 = vmatpush1.bf16.msra.mxu0 %v222
    %282 = vmatprep.subr.bf16.mxu0 %v227
    %283 = vmatpush1.bf16.msra.mxu0 %v226
    %284 = vmatprep.subr.bf16.mxu0 %v231
    %285 = vmatpush1.bf16.msra.mxu0 %v230
    %286 = vmatprep.subr.bf16.mxu0 %v235
    %287 = vmatpush1.bf16.msra.mxu0 %v234
    %288 = vmatprep.subr.bf16.mxu0 %v239
    %289 = vmatpush1.bf16.msra.mxu0 %v238
    %290 = vmatprep.subr.bf16.mxu0 0
    %291 = vmatpush1.bf16.msra.mxu0 0
    %292 = vmatprep.subr.bf16.mxu0 0
    %293 = vmatpush1.bf16.msra.mxu0 0
    %294 = vmatprep.subr.bf16.mxu0 0
    %295 = vmatpush1.bf16.msra.mxu0 0
    %296 = vmatprep.subr.bf16.mxu0 0
    %297 = vmatpush1.bf16.msra.mxu0 0
    %298 = vmatprep.subr.bf16.mxu0 0
    %299 = vmatpush1.bf16.msra.mxu0 0
    %300 = vmatprep.subr.bf16.mxu0 0
    %301 = vmatpush1.bf16.msra.mxu0 0
    %302 = vmatprep.subr.bf16.mxu0 0
    %303 = vmatpush1.bf16.msra.mxu0 0
    %304 = vmatprep.subr.bf16.mxu0 0
    %305 = vmatpush1.bf16.msra.mxu0 0
    %306 = vmatprep.mubr.bf16.mxu0 0
    %307 = vmatmul.mubr.bf16.gmra.mrb[0].mxu0 %v59
    %v308 = vpop.f32.mrb[0].mxu0
    %v309 = vadd.f32 %v97, %v308
    %v310 = vpop.f32.mrb[0].mxu0
    %v311 = vadd.f32 %v101, %v310
    %v312 = vpop.f32.mrb[0].mxu0
    %v313 = vpop.f32.mrb[0].mxu0
    %314 = vdwg.mxu0
    %315 = vmatprep.subr.bf16.mxu0 %v213
    %316 = vmatpush1.bf16.msra.mxu0 %v212
    %317 = vmatprep.subr.bf16.mxu0 %v217
    %318 = vmatpush1.bf16.msra.mxu0 %v216
    %319 = vmatprep.subr.bf16.mxu0 %v221
    %320 = vmatpush1.bf16.msra.mxu0 %v220
    %321 = vmatprep.subr.bf16.mxu0 %v225
    %322 = vmatpush1.bf16.msra.mxu0 %v224
    %323 = vmatprep.subr.bf16.mxu0 %v229
    %324 = vmatpush1.bf16.msra.mxu0 %v228
    %325 = vmatprep.subr.bf16.mxu0 %v233
    %326 = vmatpush1.bf16.msra.mxu0 %v232
    %327 = vmatprep.subr.bf16.mxu0 %v237
    %328 = vmatpush1.bf16.msra.mxu0 %v236
    %329 = vmatprep.subr.bf16.mxu0 %v241
    %330 = vmatpush1.bf16.msra.mxu0 %v240
    %331 = vmatprep.subr.bf16.mxu0 0
    %332 = vmatpush1.bf16.msra.mxu0 0
    %333 = vmatprep.subr.bf16.mxu0 0
    %334 = vmatpush1.bf16.msra.mxu0 0
    %335 = vmatprep.subr.bf16.mxu0 0
    %336 = vmatpush1.bf16.msra.mxu0 0
    %337 = vmatprep.subr.bf16.mxu0 0
    %338 = vmatpush1.bf16.msra.mxu0 0
    %339 = vmatprep.subr.bf16.mxu0 0
    %340 = vmatpush1.bf16.msra.mxu0 0
    %341 = vmatprep.subr.bf16.mxu0 0
    %342 = vmatpush1.bf16.msra.mxu0 0
    %343 = vmatprep.subr.bf16.mxu0 0
    %344 = vmatpush1.bf16.msra.mxu0 0
    %345 = vmatprep.subr.bf16.mxu0 0
    %346 = vmatpush1.bf16.msra.mxu0 0
    %347 = vmatprep.mubr.bf16.mxu0 0
    %348 = vmatmul.mubr.bf16.gmra.mrb[0].mxu0 %v59
    %v349 = vpop.f32.mrb[0].mxu0
    %v350 = vadd.f32 %v105, %v349
    %v351 = vpop.f32.mrb[0].mxu0
    %v352 = vadd.f32 %v109, %v351
    %v353 = vpop.f32.mrb[0].mxu0
    %v354 = vpop.f32.mrb[0].mxu0
    %355 = vdwg.mxu0
    %v356 = vpack.c.bf16 %v309, %v309
    %v357 = vpack.c.bf16 %v311, %v311
    %v358 = vpack.c.bf16 %v350, %v350
    %v359 = vpack.c.bf16 %v352, %v352
    %v360 = vld [vmem:[%s3] sm:$0xff]
    %v361 = vld [vmem:[%s3 + $0x8] sm:$0xff]
    %v362 = vld [vmem:[%s3 + $0x10] sm:$0xff]
    %v363 = vld [vmem:[%s3 + $0x18] sm:$0xff]
    %v364 = vld [vmem:[%s3 + $0x20] sm:$0xff]
    %v365 = vld [vmem:[%s3 + $0x28] sm:$0xff]
    %v366 = vld [vmem:[%s3 + $0x30] sm:$0xff]
    %v367 = vld [vmem:[%s3 + $0x38] sm:$0xff]
    %v368 = vld [vmem:[%s3 + $0x40] sm:$0xff]
    %v369 = vld [vmem:[%s3 + $0x48] sm:$0xff]
    %v370 = vld [vmem:[%s3 + $0x50] sm:$0xff]
    %v371 = vld [vmem:[%s3 + $0x58] sm:$0xff]
    %v372 = vld [vmem:[%s3 + $0x60] sm:$0xff]
    %v373 = vld [vmem:[%s3 + $0x68] sm:$0xff]
    %v374 = vld [vmem:[%s3 + $0x70] sm:$0xff]
    %v375 = vld [vmem:[%s3 + $0x78] sm:$0xff]
    %v376 = vld [vmem:[%s3 + $0x80] sm:$0xff]
    %v377 = vld [vmem:[%s3 + $0x88] sm:$0xff]
    %v378 = vld [vmem:[%s3 + $0x90] sm:$0xff]
    %v379 = vld [vmem:[%s3 + $0x98] sm:$0xff]
    %v380 = vld [vmem:[%s3 + $0xa0] sm:$0xff]
    %v381 = vld [vmem:[%s3 + $0xa8] sm:$0xff]
    %v382 = vld [vmem:[%s3 + $0xb0] sm:$0xff]
    %v383 = vld [vmem:[%s3 + $0xb8] sm:$0xff]
    %v384 = vld [vmem:[%s3 + $0xc0] sm:$0xff]
    %v385 = vld [vmem:[%s3 + $0xc8] sm:$0xff]
    %v386 = vld [vmem:[%s3 + $0xd0] sm:$0xff]
    %v387 = vld [vmem:[%s3 + $0xd8] sm:$0xff]
    %v388 = vld [vmem:[%s3 + $0xe0] sm:$0xff]
    %v389 = vld [vmem:[%s3 + $0xe8] sm:$0xff]
    %v390 = vld [vmem:[%s3 + $0xf0] sm:$0xff]
    %v391 = vld [vmem:[%s3 + $0xf8] sm:$0xff]
    %v392 = vld [vmem:[%s3 + $0x100] sm:$0xff]
    %v393 = vld [vmem:[%s3 + $0x108] sm:$0xff]
    %v394 = vld [vmem:[%s3 + $0x110] sm:$0xff]
    %v395 = vld [vmem:[%s3 + $0x118] sm:$0xff]
    %v396 = vld [vmem:[%s3 + $0x120] sm:$0xff]
    %v397 = vld [vmem:[%s3 + $0x128] sm:$0xff]
    %v398 = vld [vmem:[%s3 + $0x130] sm:$0xff]
    %v399 = vld [vmem:[%s3 + $0x138] sm:$0xff]
    %v400 = vld [vmem:[%s3 + $0x140] sm:$0xff]
    %v401 = vld [vmem:[%s3 + $0x148] sm:$0xff]
    %v402 = vld [vmem:[%s3 + $0x150] sm:$0xff]
    %v403 = vld [vmem:[%s3 + $0x158] sm:$0xff]
    %v404 = vld [vmem:[%s3 + $0x160] sm:$0xff]
    %v405 = vld [vmem:[%s3 + $0x168] sm:$0xff]
    %v406 = vld [vmem:[%s3 + $0x170] sm:$0xff]
    %v407 = vld [vmem:[%s3 + $0x178] sm:$0xff]
    %v408 = vld [vmem:[%s3 + $0x180] sm:$0xff]
    %v409 = vld [vmem:[%s3 + $0x188] sm:$0xff]
    %v410 = vld [vmem:[%s3 + $0x190] sm:$0xff]
    %v411 = vld [vmem:[%s3 + $0x198] sm:$0xff]
    %v412 = vld [vmem:[%s3 + $0x1a0] sm:$0xff]
    %v413 = vld [vmem:[%s3 + $0x1a8] sm:$0xff]
    %v414 = vld [vmem:[%s3 + $0x1b0] sm:$0xff]
    %v415 = vld [vmem:[%s3 + $0x1b8] sm:$0xff]
    %v416 = vld [vmem:[%s3 + $0x1c0] sm:$0xff]
    %v417 = vld [vmem:[%s3 + $0x1c8] sm:$0xff]
    %v418 = vld [vmem:[%s3 + $0x1d0] sm:$0xff]
    %v419 = vld [vmem:[%s3 + $0x1d8] sm:$0xff]
    %v420 = vld [vmem:[%s3 + $0x1e0] sm:$0xff]
    %v421 = vld [vmem:[%s3 + $0x1e8] sm:$0xff]
    %v422 = vld [vmem:[%s3 + $0x1f0] sm:$0xff]
    %v423 = vld [vmem:[%s3 + $0x1f8] sm:$0xff]
    %v424 = vld [vmem:[%s3 + $0x200] sm:$0xff]
    %v425 = vld [vmem:[%s3 + $0x208] sm:$0xff]
    %v426 = vld [vmem:[%s3 + $0x210] sm:$0xff]
    %v427 = vld [vmem:[%s3 + $0x218] sm:$0xff]
    %v428 = vld [vmem:[%s3 + $0x220] sm:$0xff]
    %v429 = vld [vmem:[%s3 + $0x228] sm:$0xff]
    %v430 = vld [vmem:[%s3 + $0x230] sm:$0xff]
    %v431 = vld [vmem:[%s3 + $0x238] sm:$0xff]
    %v432 = vld [vmem:[%s3 + $0x240] sm:$0xff]
    %v433 = vld [vmem:[%s3 + $0x248] sm:$0xff]
    %v434 = vld [vmem:[%s3 + $0x250] sm:$0xff]
    %v435 = vld [vmem:[%s3 + $0x258] sm:$0xff]
    %v436 = vld [vmem:[%s3 + $0x260] sm:$0xff]
    %v437 = vld [vmem:[%s3 + $0x268] sm:$0xff]
    %v438 = vld [vmem:[%s3 + $0x270] sm:$0xff]
    %v439 = vld [vmem:[%s3 + $0x278] sm:$0xff]
    %v440 = vld [vmem:[%s3 + $0x280] sm:$0xff]
    %v441 = vld [vmem:[%s3 + $0x288] sm:$0xff]
    %v442 = vld [vmem:[%s3 + $0x290] sm:$0xff]
    %v443 = vld [vmem:[%s3 + $0x298] sm:$0xff]
    %v444 = vld [vmem:[%s3 + $0x2a0] sm:$0xff]
    %v445 = vld [vmem:[%s3 + $0x2a8] sm:$0xff]
    %v446 = vld [vmem:[%s3 + $0x2b0] sm:$0xff]
    %v447 = vld [vmem:[%s3 + $0x2b8] sm:$0xff]
    %v448 = vld [vmem:[%s3 + $0x2c0] sm:$0xff]
    %v449 = vld [vmem:[%s3 + $0x2c8] sm:$0xff]
    %v450 = vld [vmem:[%s3 + $0x2d0] sm:$0xff]
    %v451 = vld [vmem:[%s3 + $0x2d8] sm:$0xff]
    %v452 = vld [vmem:[%s3 + $0x2e0] sm:$0xff]
    %v453 = vld [vmem:[%s3 + $0x2e8] sm:$0xff]
    %v454 = vld [vmem:[%s3 + $0x2f0] sm:$0xff]
    %v455 = vld [vmem:[%s3 + $0x2f8] sm:$0xff]
    %v456 = vld [vmem:[%s3 + $0x300] sm:$0xff]
    %v457 = vld [vmem:[%s3 + $0x308] sm:$0xff]
    %v458 = vld [vmem:[%s3 + $0x310] sm:$0xff]
    %v459 = vld [vmem:[%s3 + $0x318] sm:$0xff]
    %v460 = vld [vmem:[%s3 + $0x320] sm:$0xff]
    %v461 = vld [vmem:[%s3 + $0x328] sm:$0xff]
    %v462 = vld [vmem:[%s3 + $0x330] sm:$0xff]
    %v463 = vld [vmem:[%s3 + $0x338] sm:$0xff]
    %v464 = vld [vmem:[%s3 + $0x340] sm:$0xff]
    %v465 = vld [vmem:[%s3 + $0x348] sm:$0xff]
    %v466 = vld [vmem:[%s3 + $0x350] sm:$0xff]
    %v467 = vld [vmem:[%s3 + $0x358] sm:$0xff]
    %v468 = vld [vmem:[%s3 + $0x360] sm:$0xff]
    %v469 = vld [vmem:[%s3 + $0x368] sm:$0xff]
    %v470 = vld [vmem:[%s3 + $0x370] sm:$0xff]
    %v471 = vld [vmem:[%s3 + $0x378] sm:$0xff]
    %v472 = vld [vmem:[%s3 + $0x380] sm:$0xff]
    %v473 = vld [vmem:[%s3 + $0x388] sm:$0xff]
    %v474 = vld [vmem:[%s3 + $0x390] sm:$0xff]
    %v475 = vld [vmem:[%s3 + $0x398] sm:$0xff]
    %v476 = vld [vmem:[%s3 + $0x3a0] sm:$0xff]
    %v477 = vld [vmem:[%s3 + $0x3a8] sm:$0xff]
    %v478 = vld [vmem:[%s3 + $0x3b0] sm:$0xff]
    %v479 = vld [vmem:[%s3 + $0x3b8] sm:$0xff]
    %v480 = vld [vmem:[%s3 + $0x3c0] sm:$0xff]
    %v481 = vld [vmem:[%s3 + $0x3c8] sm:$0xff]
    %v482 = vld [vmem:[%s3 + $0x3d0] sm:$0xff]
    %v483 = vld [vmem:[%s3 + $0x3d8] sm:$0xff]
    %v484 = vld [vmem:[%s3 + $0x3e0] sm:$0xff]
    %v485 = vld [vmem:[%s3 + $0x3e8] sm:$0xff]
    %v486 = vld [vmem:[%s3 + $0x3f0] sm:$0xff]
    %v487 = vld [vmem:[%s3 + $0x3f8] sm:$0xff]
    %v488 = vld [vmem:[%s3 + $0x400] sm:$0xff]
    %v489 = vld [vmem:[%s3 + $0x408] sm:$0xff]
    %v490 = vld [vmem:[%s3 + $0x410] sm:$0xff]
    %v491 = vld [vmem:[%s3 + $0x418] sm:$0xff]
    %v492 = vld [vmem:[%s3 + $0x420] sm:$0xff]
    %v493 = vld [vmem:[%s3 + $0x428] sm:$0xff]
    %v494 = vld [vmem:[%s3 + $0x430] sm:$0xff]
    %v495 = vld [vmem:[%s3 + $0x438] sm:$0xff]
    %v496 = vld [vmem:[%s3 + $0x440] sm:$0xff]
    %v497 = vld [vmem:[%s3 + $0x448] sm:$0xff]
    %v498 = vld [vmem:[%s3 + $0x450] sm:$0xff]
    %v499 = vld [vmem:[%s3 + $0x458] sm:$0xff]
    %v500 = vld [vmem:[%s3 + $0x460] sm:$0xff]
    %v501 = vld [vmem:[%s3 + $0x468] sm:$0xff]
    %v502 = vld [vmem:[%s3 + $0x470] sm:$0xff]
    %v503 = vld [vmem:[%s3 + $0x478] sm:$0xff]
    %v504 = vld [vmem:[%s3 + $0x480] sm:$0xff]
    %v505 = vld [vmem:[%s3 + $0x488] sm:$0xff]
    %v506 = vld [vmem:[%s3 + $0x490] sm:$0xff]
    %v507 = vld [vmem:[%s3 + $0x498] sm:$0xff]
    %v508 = vld [vmem:[%s3 + $0x4a0] sm:$0xff]
    %v509 = vld [vmem:[%s3 + $0x4a8] sm:$0xff]
    %v510 = vld [vmem:[%s3 + $0x4b0] sm:$0xff]
    %v511 = vld [vmem:[%s3 + $0x4b8] sm:$0xff]
    %v512 = vld [vmem:[%s3 + $0x4c0] sm:$0xff]
    %v513 = vld [vmem:[%s3 + $0x4c8] sm:$0xff]
    %v514 = vld [vmem:[%s3 + $0x4d0] sm:$0xff]
    %v515 = vld [vmem:[%s3 + $0x4d8] sm:$0xff]
    %v516 = vld [vmem:[%s3 + $0x4e0] sm:$0xff]
    %v517 = vld [vmem:[%s3 + $0x4e8] sm:$0xff]
    %v518 = vld [vmem:[%s3 + $0x4f0] sm:$0xff]
    %v519 = vld [vmem:[%s3 + $0x4f8] sm:$0xff]
    %v520 = vld [vmem:[%s3 + $0x500] sm:$0xff]
    %v521 = vld [vmem:[%s3 + $0x508] sm:$0xff]
    %v522 = vld [vmem:[%s3 + $0x510] sm:$0xff]
    %v523 = vld [vmem:[%s3 + $0x518] sm:$0xff]
    %v524 = vld [vmem:[%s3 + $0x520] sm:$0xff]
    %v525 = vld [vmem:[%s3 + $0x528] sm:$0xff]
    %v526 = vld [vmem:[%s3 + $0x530] sm:$0xff]
    %v527 = vld [vmem:[%s3 + $0x538] sm:$0xff]
    %v528 = vld [vmem:[%s3 + $0x540] sm:$0xff]
    %v529 = vld [vmem:[%s3 + $0x548] sm:$0xff]
    %v530 = vld [vmem:[%s3 + $0x550] sm:$0xff]
    %v531 = vld [vmem:[%s3 + $0x558] sm:$0xff]
    %v532 = vld [vmem:[%s3 + $0x560] sm:$0xff]
    %v533 = vld [vmem:[%s3 + $0x568] sm:$0xff]
    %v534 = vld [vmem:[%s3 + $0x570] sm:$0xff]
    %v535 = vld [vmem:[%s3 + $0x578] sm:$0xff]
    %v536 = vld [vmem:[%s3 + $0x580] sm:$0xff]
    %v537 = vld [vmem:[%s3 + $0x588] sm:$0xff]
    %v538 = vld [vmem:[%s3 + $0x590] sm:$0xff]
    %v539 = vld [vmem:[%s3 + $0x598] sm:$0xff]
    %v540 = vld [vmem:[%s3 + $0x5a0] sm:$0xff]
    %v541 = vld [vmem:[%s3 + $0x5a8] sm:$0xff]
    %v542 = vld [vmem:[%s3 + $0x5b0] sm:$0xff]
    %v543 = vld [vmem:[%s3 + $0x5b8] sm:$0xff]
    %v544 = vld [vmem:[%s3 + $0x5c0] sm:$0xff]
    %v545 = vld [vmem:[%s3 + $0x5c8] sm:$0xff]
    %v546 = vld [vmem:[%s3 + $0x5d0] sm:$0xff]
    %v547 = vld [vmem:[%s3 + $0x5d8] sm:$0xff]
    %v548 = vld [vmem:[%s3 + $0x5e0] sm:$0xff]
    %v549 = vld [vmem:[%s3 + $0x5e8] sm:$0xff]
    %v550 = vld [vmem:[%s3 + $0x5f0] sm:$0xff]
    %v551 = vld [vmem:[%s3 + $0x5f8] sm:$0xff]
    %v552 = vld [vmem:[%s3 + $0x600] sm:$0xff]
    %v553 = vld [vmem:[%s3 + $0x608] sm:$0xff]
    %v554 = vld [vmem:[%s3 + $0x610] sm:$0xff]
    %v555 = vld [vmem:[%s3 + $0x618] sm:$0xff]
    %v556 = vld [vmem:[%s3 + $0x620] sm:$0xff]
    %v557 = vld [vmem:[%s3 + $0x628] sm:$0xff]
    %v558 = vld [vmem:[%s3 + $0x630] sm:$0xff]
    %v559 = vld [vmem:[%s3 + $0x638] sm:$0xff]
    %v560 = vld [vmem:[%s3 + $0x640] sm:$0xff]
    %v561 = vld [vmem:[%s3 + $0x648] sm:$0xff]
    %v562 = vld [vmem:[%s3 + $0x650] sm:$0xff]
    %v563 = vld [vmem:[%s3 + $0x658] sm:$0xff]
    %v564 = vld [vmem:[%s3 + $0x660] sm:$0xff]
    %v565 = vld [vmem:[%s3 + $0x668] sm:$0xff]
    %v566 = vld [vmem:[%s3 + $0x670] sm:$0xff]
    %v567 = vld [vmem:[%s3 + $0x678] sm:$0xff]
    %v568 = vld [vmem:[%s3 + $0x680] sm:$0xff]
    %v569 = vld [vmem:[%s3 + $0x688] sm:$0xff]
    %v570 = vld [vmem:[%s3 + $0x690] sm:$0xff]
    %v571 = vld [vmem:[%s3 + $0x698] sm:$0xff]
    %v572 = vld [vmem:[%s3 + $0x6a0] sm:$0xff]
    %v573 = vld [vmem:[%s3 + $0x6a8] sm:$0xff]
    %v574 = vld [vmem:[%s3 + $0x6b0] sm:$0xff]
    %v575 = vld [vmem:[%s3 + $0x6b8] sm:$0xff]
    %v576 = vld [vmem:[%s3 + $0x6c0] sm:$0xff]
    %v577 = vld [vmem:[%s3 + $0x6c8] sm:$0xff]
    %v578 = vld [vmem:[%s3 + $0x6d0] sm:$0xff]
    %v579 = vld [vmem:[%s3 + $0x6d8] sm:$0xff]
    %v580 = vld [vmem:[%s3 + $0x6e0] sm:$0xff]
    %v581 = vld [vmem:[%s3 + $0x6e8] sm:$0xff]
    %v582 = vld [vmem:[%s3 + $0x6f0] sm:$0xff]
    %v583 = vld [vmem:[%s3 + $0x6f8] sm:$0xff]
    %v584 = vld [vmem:[%s3 + $0x700] sm:$0xff]
    %v585 = vld [vmem:[%s3 + $0x708] sm:$0xff]
    %v586 = vld [vmem:[%s3 + $0x710] sm:$0xff]
    %v587 = vld [vmem:[%s3 + $0x718] sm:$0xff]
    %v588 = vld [vmem:[%s3 + $0x720] sm:$0xff]
    %v589 = vld [vmem:[%s3 + $0x728] sm:$0xff]
    %v590 = vld [vmem:[%s3 + $0x730] sm:$0xff]
    %v591 = vld [vmem:[%s3 + $0x738] sm:$0xff]
    %v592 = vld [vmem:[%s3 + $0x740] sm:$0xff]
    %v593 = vld [vmem:[%s3 + $0x748] sm:$0xff]
    %v594 = vld [vmem:[%s3 + $0x750] sm:$0xff]
    %v595 = vld [vmem:[%s3 + $0x758] sm:$0xff]
    %v596 = vld [vmem:[%s3 + $0x760] sm:$0xff]
    %v597 = vld [vmem:[%s3 + $0x768] sm:$0xff]
    %v598 = vld [vmem:[%s3 + $0x770] sm:$0xff]
    %v599 = vld [vmem:[%s3 + $0x778] sm:$0xff]
    %v600 = vld [vmem:[%s3 + $0x780] sm:$0xff]
    %v601 = vld [vmem:[%s3 + $0x788] sm:$0xff]
    %v602 = vld [vmem:[%s3 + $0x790] sm:$0xff]
    %v603 = vld [vmem:[%s3 + $0x798] sm:$0xff]
    %v604 = vld [vmem:[%s3 + $0x7a0] sm:$0xff]
    %v605 = vld [vmem:[%s3 + $0x7a8] sm:$0xff]
    %v606 = vld [vmem:[%s3 + $0x7b0] sm:$0xff]
    %v607 = vld [vmem:[%s3 + $0x7b8] sm:$0xff]
    %v608 = vld [vmem:[%s3 + $0x7c0] sm:$0xff]
    %v609 = vld [vmem:[%s3 + $0x7c8] sm:$0xff]
    %v610 = vld [vmem:[%s3 + $0x7d0] sm:$0xff]
    %v611 = vld [vmem:[%s3 + $0x7d8] sm:$0xff]
    %v612 = vld [vmem:[%s3 + $0x7e0] sm:$0xff]
    %v613 = vld [vmem:[%s3 + $0x7e8] sm:$0xff]
    %v614 = vld [vmem:[%s3 + $0x7f0] sm:$0xff]
    %v615 = vld [vmem:[%s3 + $0x7f8] sm:$0xff]
    %v616 = vld [vmem:[%s4] sm:$0xff]
    %v618 = vlaneseq
    %v619 = vshrl.u32 %v618, 7
    %v620 = vsub.s32 0, %v619
    %v621 = vrot.slane %v616, %v620
    %v622 = vlaneseq
    %v623 = vshrl.u32 %v622, 7
    %v624 = vsub.s32 1, %v623
    %v625 = vrot.slane %v616, %v624
    %v626 = vlaneseq
    %v627 = vshrl.u32 %v626, 7
    %v628 = vsub.s32 2, %v627
    %v629 = vrot.slane %v616, %v628
    %v630 = vlaneseq
    %v631 = vshrl.u32 %v630, 7
    %v632 = vsub.s32 3, %v631
    %v633 = vrot.slane %v616, %v632
    %v634 = vlaneseq
    %v635 = vshrl.u32 %v634, 7
    %v636 = vsub.s32 4, %v635
    %v637 = vrot.slane %v616, %v636
    %v638 = vlaneseq
    %v639 = vshrl.u32 %v638, 7
    %v640 = vsub.s32 5, %v639
    %v641 = vrot.slane %v616, %v640
    %v642 = vlaneseq
    %v643 = vshrl.u32 %v642, 7
    %v644 = vsub.s32 6, %v643
    %v645 = vrot.slane %v616, %v644
    %v646 = vlaneseq
    %v647 = vshrl.u32 %v646, 7
    %v648 = vsub.s32 7, %v647
    %v649 = vrot.slane %v616, %v648
    %v914 = vunpack.c.l.b16 %v360
    %v915 = vunpack.c.h.b16 %v360
    %v916 = vunpack.c.l.b16 %v361
    %v917 = vunpack.c.h.b16 %v361
    %v918 = vunpack.c.l.b16 %v362
    %v919 = vunpack.c.h.b16 %v362
    %v920 = vunpack.c.l.b16 %v363
    %v921 = vunpack.c.h.b16 %v363
    %v922 = vunpack.c.l.b16 %v364
    %v923 = vunpack.c.h.b16 %v364
    %v924 = vunpack.c.l.b16 %v365
    %v925 = vunpack.c.h.b16 %v365
    %v926 = vunpack.c.l.b16 %v366
    %v927 = vunpack.c.h.b16 %v366
    %v928 = vunpack.c.l.b16 %v367
    %v929 = vunpack.c.h.b16 %v367
    %v930 = vunpack.c.l.b16 %v368
    %v931 = vunpack.c.h.b16 %v368
    %v932 = vunpack.c.l.b16 %v369
    %v933 = vunpack.c.h.b16 %v369
    %v934 = vunpack.c.l.b16 %v370
    %v935 = vunpack.c.h.b16 %v370
    %v936 = vunpack.c.l.b16 %v371
    %v937 = vunpack.c.h.b16 %v371
    %v938 = vunpack.c.l.b16 %v372
    %v939 = vunpack.c.h.b16 %v372
    %v940 = vunpack.c.l.b16 %v373
    %v941 = vunpack.c.h.b16 %v373
    %v942 = vunpack.c.l.b16 %v374
    %v943 = vunpack.c.h.b16 %v374
    %v944 = vunpack.c.l.b16 %v375
    %v945 = vunpack.c.h.b16 %v375
    %v946 = vunpack.c.l.b16 %v376
    %v947 = vunpack.c.h.b16 %v376
    %v948 = vunpack.c.l.b16 %v377
    %v949 = vunpack.c.h.b16 %v377
    %v950 = vunpack.c.l.b16 %v378
    %v951 = vunpack.c.h.b16 %v378
    %v952 = vunpack.c.l.b16 %v379
    %v953 = vunpack.c.h.b16 %v379
    %v954 = vunpack.c.l.b16 %v380
    %v955 = vunpack.c.h.b16 %v380
    %v956 = vunpack.c.l.b16 %v381
    %v957 = vunpack.c.h.b16 %v381
    %v958 = vunpack.c.l.b16 %v382
    %v959 = vunpack.c.h.b16 %v382
    %v960 = vunpack.c.l.b16 %v383
    %v961 = vunpack.c.h.b16 %v383
    %v962 = vunpack.c.l.b16 %v384
    %v963 = vunpack.c.h.b16 %v384
    %v964 = vunpack.c.l.b16 %v385
    %v965 = vunpack.c.h.b16 %v385
    %v966 = vunpack.c.l.b16 %v386
    %v967 = vunpack.c.h.b16 %v386
    %v968 = vunpack.c.l.b16 %v387
    %v969 = vunpack.c.h.b16 %v387
    %v970 = vunpack.c.l.b16 %v388
    %v971 = vunpack.c.h.b16 %v388
    %v972 = vunpack.c.l.b16 %v389
    %v973 = vunpack.c.h.b16 %v389
    %v974 = vunpack.c.l.b16 %v390
    %v975 = vunpack.c.h.b16 %v390
    %v976 = vunpack.c.l.b16 %v391
    %v977 = vunpack.c.h.b16 %v391
    %v978 = vunpack.c.l.b16 %v392
    %v979 = vunpack.c.h.b16 %v392
    %v980 = vunpack.c.l.b16 %v393
    %v981 = vunpack.c.h.b16 %v393
    %v982 = vunpack.c.l.b16 %v394
    %v983 = vunpack.c.h.b16 %v394
    %v984 = vunpack.c.l.b16 %v395
    %v985 = vunpack.c.h.b16 %v395
    %v986 = vunpack.c.l.b16 %v396
    %v987 = vunpack.c.h.b16 %v396
    %v988 = vunpack.c.l.b16 %v397
    %v989 = vunpack.c.h.b16 %v397
    %v990 = vunpack.c.l.b16 %v398
    %v991 = vunpack.c.h.b16 %v398
    %v992 = vunpack.c.l.b16 %v399
    %v993 = vunpack.c.h.b16 %v399
    %v994 = vunpack.c.l.b16 %v400
    %v995 = vunpack.c.h.b16 %v400
    %v996 = vunpack.c.l.b16 %v401
    %v997 = vunpack.c.h.b16 %v401
    %v998 = vunpack.c.l.b16 %v402
    %v999 = vunpack.c.h.b16 %v402
    %v1000 = vunpack.c.l.b16 %v403
    %v1001 = vunpack.c.h.b16 %v403
    %v1002 = vunpack.c.l.b16 %v404
    %v1003 = vunpack.c.h.b16 %v404
    %v1004 = vunpack.c.l.b16 %v405
    %v1005 = vunpack.c.h.b16 %v405
    %v1006 = vunpack.c.l.b16 %v406
    %v1007 = vunpack.c.h.b16 %v406
    %v1008 = vunpack.c.l.b16 %v407
    %v1009 = vunpack.c.h.b16 %v407
    %v1010 = vunpack.c.l.b16 %v408
    %v1011 = vunpack.c.h.b16 %v408
    %v1012 = vunpack.c.l.b16 %v409
    %v1013 = vunpack.c.h.b16 %v409
    %v1014 = vunpack.c.l.b16 %v410
    %v1015 = vunpack.c.h.b16 %v410
    %v1016 = vunpack.c.l.b16 %v411
    %v1017 = vunpack.c.h.b16 %v411
    %v1018 = vunpack.c.l.b16 %v412
    %v1019 = vunpack.c.h.b16 %v412
    %v1020 = vunpack.c.l.b16 %v413
    %v1021 = vunpack.c.h.b16 %v413
    %v1022 = vunpack.c.l.b16 %v414
    %v1023 = vunpack.c.h.b16 %v414
    %v1024 = vunpack.c.l.b16 %v415
    %v1025 = vunpack.c.h.b16 %v415
    %v1026 = vunpack.c.l.b16 %v416
    %v1027 = vunpack.c.h.b16 %v416
    %v1028 = vunpack.c.l.b16 %v417
    %v1029 = vunpack.c.h.b16 %v417
    %v1030 = vunpack.c.l.b16 %v418
    %v1031 = vunpack.c.h.b16 %v418
    %v1032 = vunpack.c.l.b16 %v419
    %v1033 = vunpack.c.h.b16 %v419
    %v1034 = vunpack.c.l.b16 %v420
    %v1035 = vunpack.c.h.b16 %v420
    %v1036 = vunpack.c.l.b16 %v421
    %v1037 = vunpack.c.h.b16 %v421
    %v1038 = vunpack.c.l.b16 %v422
    %v1039 = vunpack.c.h.b16 %v422
    %v1040 = vunpack.c.l.b16 %v423
    %v1041 = vunpack.c.h.b16 %v423
    %v1042 = vunpack.c.l.b16 %v424
    %v1043 = vunpack.c.h.b16 %v424
    %v1044 = vunpack.c.l.b16 %v425
    %v1045 = vunpack.c.h.b16 %v425
    %v1046 = vunpack.c.l.b16 %v426
    %v1047 = vunpack.c.h.b16 %v426
    %v1048 = vunpack.c.l.b16 %v427
    %v1049 = vunpack.c.h.b16 %v427
    %v1050 = vunpack.c.l.b16 %v428
    %v1051 = vunpack.c.h.b16 %v428
    %v1052 = vunpack.c.l.b16 %v429
    %v1053 = vunpack.c.h.b16 %v429
    %v1054 = vunpack.c.l.b16 %v430
    %v1055 = vunpack.c.h.b16 %v430
    %v1056 = vunpack.c.l.b16 %v431
    %v1057 = vunpack.c.h.b16 %v431
    %v1058 = vunpack.c.l.b16 %v432
    %v1059 = vunpack.c.h.b16 %v432
    %v1060 = vunpack.c.l.b16 %v433
    %v1061 = vunpack.c.h.b16 %v433
    %v1062 = vunpack.c.l.b16 %v434
    %v1063 = vunpack.c.h.b16 %v434
    %v1064 = vunpack.c.l.b16 %v435
    %v1065 = vunpack.c.h.b16 %v435
    %v1066 = vunpack.c.l.b16 %v436
    %v1067 = vunpack.c.h.b16 %v436
    %v1068 = vunpack.c.l.b16 %v437
    %v1069 = vunpack.c.h.b16 %v437
    %v1070 = vunpack.c.l.b16 %v438
    %v1071 = vunpack.c.h.b16 %v438
    %v1072 = vunpack.c.l.b16 %v439
    %v1073 = vunpack.c.h.b16 %v439
    %v1074 = vunpack.c.l.b16 %v440
    %v1075 = vunpack.c.h.b16 %v440
    %v1076 = vunpack.c.l.b16 %v441
    %v1077 = vunpack.c.h.b16 %v441
    %v1078 = vunpack.c.l.b16 %v442
    %v1079 = vunpack.c.h.b16 %v442
    %v1080 = vunpack.c.l.b16 %v443
    %v1081 = vunpack.c.h.b16 %v443
    %v1082 = vunpack.c.l.b16 %v444
    %v1083 = vunpack.c.h.b16 %v444
    %v1084 = vunpack.c.l.b16 %v445
    %v1085 = vunpack.c.h.b16 %v445
    %v1086 = vunpack.c.l.b16 %v446
    %v1087 = vunpack.c.h.b16 %v446
    %v1088 = vunpack.c.l.b16 %v447
    %v1089 = vunpack.c.h.b16 %v447
    %v1090 = vunpack.c.l.b16 %v448
    %v1091 = vunpack.c.h.b16 %v448
    %v1092 = vunpack.c.l.b16 %v449
    %v1093 = vunpack.c.h.b16 %v449
    %v1094 = vunpack.c.l.b16 %v450
    %v1095 = vunpack.c.h.b16 %v450
    %v1096 = vunpack.c.l.b16 %v451
    %v1097 = vunpack.c.h.b16 %v451
    %v1098 = vunpack.c.l.b16 %v452
    %v1099 = vunpack.c.h.b16 %v452
    %v1100 = vunpack.c.l.b16 %v453
    %v1101 = vunpack.c.h.b16 %v453
    %v1102 = vunpack.c.l.b16 %v454
    %v1103 = vunpack.c.h.b16 %v454
    %v1104 = vunpack.c.l.b16 %v455
    %v1105 = vunpack.c.h.b16 %v455
    %v1106 = vunpack.c.l.b16 %v456
    %v1107 = vunpack.c.h.b16 %v456
    %v1108 = vunpack.c.l.b16 %v457
    %v1109 = vunpack.c.h.b16 %v457
    %v1110 = vunpack.c.l.b16 %v458
    %v1111 = vunpack.c.h.b16 %v458
    %v1112 = vunpack.c.l.b16 %v459
    %v1113 = vunpack.c.h.b16 %v459
    %v1114 = vunpack.c.l.b16 %v460
    %v1115 = vunpack.c.h.b16 %v460
    %v1116 = vunpack.c.l.b16 %v461
    %v1117 = vunpack.c.h.b16 %v461
    %v1118 = vunpack.c.l.b16 %v462
    %v1119 = vunpack.c.h.b16 %v462
    %v1120 = vunpack.c.l.b16 %v463
    %v1121 = vunpack.c.h.b16 %v463
    %v1122 = vunpack.c.l.b16 %v464
    %v1123 = vunpack.c.h.b16 %v464
    %v1124 = vunpack.c.l.b16 %v465
    %v1125 = vunpack.c.h.b16 %v465
    %v1126 = vunpack.c.l.b16 %v466
    %v1127 = vunpack.c.h.b16 %v466
    %v1128 = vunpack.c.l.b16 %v467
    %v1129 = vunpack.c.h.b16 %v467
    %v1130 = vunpack.c.l.b16 %v468
    %v1131 = vunpack.c.h.b16 %v468
    %v1132 = vunpack.c.l.b16 %v469
    %v1133 = vunpack.c.h.b16 %v469
    %v1134 = vunpack.c.l.b16 %v470
    %v1135 = vunpack.c.h.b16 %v470
    %v1136 = vunpack.c.l.b16 %v471
    %v1137 = vunpack.c.h.b16 %v471
    %v1138 = vunpack.c.l.b16 %v472
    %v1139 = vunpack.c.h.b16 %v472
    %v1140 = vunpack.c.l.b16 %v473
    %v1141 = vunpack.c.h.b16 %v473
    %v1142 = vunpack.c.l.b16 %v474
    %v1143 = vunpack.c.h.b16 %v474
    %v1144 = vunpack.c.l.b16 %v475
    %v1145 = vunpack.c.h.b16 %v475
    %v1146 = vunpack.c.l.b16 %v476
    %v1147 = vunpack.c.h.b16 %v476
    %v1148 = vunpack.c.l.b16 %v477
    %v1149 = vunpack.c.h.b16 %v477
    %v1150 = vunpack.c.l.b16 %v478
    %v1151 = vunpack.c.h.b16 %v478
    %v1152 = vunpack.c.l.b16 %v479
    %v1153 = vunpack.c.h.b16 %v479
    %v1154 = vunpack.c.l.b16 %v480
    %v1155 = vunpack.c.h.b16 %v480
    %v1156 = vunpack.c.l.b16 %v481
    %v1157 = vunpack.c.h.b16 %v481
    %v1158 = vunpack.c.l.b16 %v482
    %v1159 = vunpack.c.h.b16 %v482
    %v1160 = vunpack.c.l.b16 %v483
    %v1161 = vunpack.c.h.b16 %v483
    %v1162 = vunpack.c.l.b16 %v484
    %v1163 = vunpack.c.h.b16 %v484
    %v1164 = vunpack.c.l.b16 %v485
    %v1165 = vunpack.c.h.b16 %v485
    %v1166 = vunpack.c.l.b16 %v486
    %v1167 = vunpack.c.h.b16 %v486
    %v1168 = vunpack.c.l.b16 %v487
    %v1169 = vunpack.c.h.b16 %v487
    %v1170 = vunpack.c.l.b16 %v488
    %v1171 = vunpack.c.h.b16 %v488
    %v1172 = vunpack.c.l.b16 %v489
    %v1173 = vunpack.c.h.b16 %v489
    %v1174 = vunpack.c.l.b16 %v490
    %v1175 = vunpack.c.h.b16 %v490
    %v1176 = vunpack.c.l.b16 %v491
    %v1177 = vunpack.c.h.b16 %v491
    %v1178 = vunpack.c.l.b16 %v492
    %v1179 = vunpack.c.h.b16 %v492
    %v1180 = vunpack.c.l.b16 %v493
    %v1181 = vunpack.c.h.b16 %v493
    %v1182 = vunpack.c.l.b16 %v494
    %v1183 = vunpack.c.h.b16 %v494
    %v1184 = vunpack.c.l.b16 %v495
    %v1185 = vunpack.c.h.b16 %v495
    %v1186 = vunpack.c.l.b16 %v496
    %v1187 = vunpack.c.h.b16 %v496
    %v1188 = vunpack.c.l.b16 %v497
    %v1189 = vunpack.c.h.b16 %v497
    %v1190 = vunpack.c.l.b16 %v498
    %v1191 = vunpack.c.h.b16 %v498
    %v1192 = vunpack.c.l.b16 %v499
    %v1193 = vunpack.c.h.b16 %v499
    %v1194 = vunpack.c.l.b16 %v500
    %v1195 = vunpack.c.h.b16 %v500
    %v1196 = vunpack.c.l.b16 %v501
    %v1197 = vunpack.c.h.b16 %v501
    %v1198 = vunpack.c.l.b16 %v502
    %v1199 = vunpack.c.h.b16 %v502
    %v1200 = vunpack.c.l.b16 %v503
    %v1201 = vunpack.c.h.b16 %v503
    %v1202 = vunpack.c.l.b16 %v504
    %v1203 = vunpack.c.h.b16 %v504
    %v1204 = vunpack.c.l.b16 %v505
    %v1205 = vunpack.c.h.b16 %v505
    %v1206 = vunpack.c.l.b16 %v506
    %v1207 = vunpack.c.h.b16 %v506
    %v1208 = vunpack.c.l.b16 %v507
    %v1209 = vunpack.c.h.b16 %v507
    %v1210 = vunpack.c.l.b16 %v508
    %v1211 = vunpack.c.h.b16 %v508
    %v1212 = vunpack.c.l.b16 %v509
    %v1213 = vunpack.c.h.b16 %v509
    %v1214 = vunpack.c.l.b16 %v510
    %v1215 = vunpack.c.h.b16 %v510
    %v1216 = vunpack.c.l.b16 %v511
    %v1217 = vunpack.c.h.b16 %v511
    %v1218 = vunpack.c.l.b16 %v512
    %v1219 = vunpack.c.h.b16 %v512
    %v1220 = vunpack.c.l.b16 %v513
    %v1221 = vunpack.c.h.b16 %v513
    %v1222 = vunpack.c.l.b16 %v514
    %v1223 = vunpack.c.h.b16 %v514
    %v1224 = vunpack.c.l.b16 %v515
    %v1225 = vunpack.c.h.b16 %v515
    %v1226 = vunpack.c.l.b16 %v516
    %v1227 = vunpack.c.h.b16 %v516
    %v1228 = vunpack.c.l.b16 %v517
    %v1229 = vunpack.c.h.b16 %v517
    %v1230 = vunpack.c.l.b16 %v518
    %v1231 = vunpack.c.h.b16 %v518
    %v1232 = vunpack.c.l.b16 %v519
    %v1233 = vunpack.c.h.b16 %v519
    %v1234 = vunpack.c.l.b16 %v520
    %v1235 = vunpack.c.h.b16 %v520
    %v1236 = vunpack.c.l.b16 %v521
    %v1237 = vunpack.c.h.b16 %v521
    %v1238 = vunpack.c.l.b16 %v522
    %v1239 = vunpack.c.h.b16 %v522
    %v1240 = vunpack.c.l.b16 %v523
    %v1241 = vunpack.c.h.b16 %v523
    %v1242 = vunpack.c.l.b16 %v524
    %v1243 = vunpack.c.h.b16 %v524
    %v1244 = vunpack.c.l.b16 %v525
    %v1245 = vunpack.c.h.b16 %v525
    %v1246 = vunpack.c.l.b16 %v526
    %v1247 = vunpack.c.h.b16 %v526
    %v1248 = vunpack.c.l.b16 %v527
    %v1249 = vunpack.c.h.b16 %v527
    %v1250 = vunpack.c.l.b16 %v528
    %v1251 = vunpack.c.h.b16 %v528
    %v1252 = vunpack.c.l.b16 %v529
    %v1253 = vunpack.c.h.b16 %v529
    %v1254 = vunpack.c.l.b16 %v530
    %v1255 = vunpack.c.h.b16 %v530
    %v1256 = vunpack.c.l.b16 %v531
    %v1257 = vunpack.c.h.b16 %v531
    %v1258 = vunpack.c.l.b16 %v532
    %v1259 = vunpack.c.h.b16 %v532
    %v1260 = vunpack.c.l.b16 %v533
    %v1261 = vunpack.c.h.b16 %v533
    %v1262 = vunpack.c.l.b16 %v534
    %v1263 = vunpack.c.h.b16 %v534
    %v1264 = vunpack.c.l.b16 %v535
    %v1265 = vunpack.c.h.b16 %v535
    %v1266 = vunpack.c.l.b16 %v536
    %v1267 = vunpack.c.h.b16 %v536
    %v1268 = vunpack.c.l.b16 %v537
    %v1269 = vunpack.c.h.b16 %v537
    %v1270 = vunpack.c.l.b16 %v538
    %v1271 = vunpack.c.h.b16 %v538
    %v1272 = vunpack.c.l.b16 %v539
    %v1273 = vunpack.c.h.b16 %v539
    %v1274 = vunpack.c.l.b16 %v540
    %v1275 = vunpack.c.h.b16 %v540
    %v1276 = vunpack.c.l.b16 %v541
    %v1277 = vunpack.c.h.b16 %v541
    %v1278 = vunpack.c.l.b16 %v542
    %v1279 = vunpack.c.h.b16 %v542
    %v1280 = vunpack.c.l.b16 %v543
    %v1281 = vunpack.c.h.b16 %v543
    %v1282 = vunpack.c.l.b16 %v544
    %v1283 = vunpack.c.h.b16 %v544
    %v1284 = vunpack.c.l.b16 %v545
    %v1285 = vunpack.c.h.b16 %v545
    %v1286 = vunpack.c.l.b16 %v546
    %v1287 = vunpack.c.h.b16 %v546
    %v1288 = vunpack.c.l.b16 %v547
    %v1289 = vunpack.c.h.b16 %v547
    %v1290 = vunpack.c.l.b16 %v548
    %v1291 = vunpack.c.h.b16 %v548
    %v1292 = vunpack.c.l.b16 %v549
    %v1293 = vunpack.c.h.b16 %v549
    %v1294 = vunpack.c.l.b16 %v550
    %v1295 = vunpack.c.h.b16 %v550
    %v1296 = vunpack.c.l.b16 %v551
    %v1297 = vunpack.c.h.b16 %v551
    %v1298 = vunpack.c.l.b16 %v552
    %v1299 = vunpack.c.h.b16 %v552
    %v1300 = vunpack.c.l.b16 %v553
    %v1301 = vunpack.c.h.b16 %v553
    %v1302 = vunpack.c.l.b16 %v554
    %v1303 = vunpack.c.h.b16 %v554
    %v1304 = vunpack.c.l.b16 %v555
    %v1305 = vunpack.c.h.b16 %v555
    %v1306 = vunpack.c.l.b16 %v556
    %v1307 = vunpack.c.h.b16 %v556
    %v1308 = vunpack.c.l.b16 %v557
    %v1309 = vunpack.c.h.b16 %v557
    %v1310 = vunpack.c.l.b16 %v558
    %v1311 = vunpack.c.h.b16 %v558
    %v1312 = vunpack.c.l.b16 %v559
    %v1313 = vunpack.c.h.b16 %v559
    %v1314 = vunpack.c.l.b16 %v560
    %v1315 = vunpack.c.h.b16 %v560
    %v1316 = vunpack.c.l.b16 %v561
    %v1317 = vunpack.c.h.b16 %v561
    %v1318 = vunpack.c.l.b16 %v562
    %v1319 = vunpack.c.h.b16 %v562
    %v1320 = vunpack.c.l.b16 %v563
    %v1321 = vunpack.c.h.b16 %v563
    %v1322 = vunpack.c.l.b16 %v564
    %v1323 = vunpack.c.h.b16 %v564
    %v1324 = vunpack.c.l.b16 %v565
    %v1325 = vunpack.c.h.b16 %v565
    %v1326 = vunpack.c.l.b16 %v566
    %v1327 = vunpack.c.h.b16 %v566
    %v1328 = vunpack.c.l.b16 %v567
    %v1329 = vunpack.c.h.b16 %v567
    %v1330 = vunpack.c.l.b16 %v568
    %v1331 = vunpack.c.h.b16 %v568
    %v1332 = vunpack.c.l.b16 %v569
    %v1333 = vunpack.c.h.b16 %v569
    %v1334 = vunpack.c.l.b16 %v570
    %v1335 = vunpack.c.h.b16 %v570
    %v1336 = vunpack.c.l.b16 %v571
    %v1337 = vunpack.c.h.b16 %v571
    %v1338 = vunpack.c.l.b16 %v572
    %v1339 = vunpack.c.h.b16 %v572
    %v1340 = vunpack.c.l.b16 %v573
    %v1341 = vunpack.c.h.b16 %v573
    %v1342 = vunpack.c.l.b16 %v574
    %v1343 = vunpack.c.h.b16 %v574
    %v1344 = vunpack.c.l.b16 %v575
    %v1345 = vunpack.c.h.b16 %v575
    %v1346 = vunpack.c.l.b16 %v576
    %v1347 = vunpack.c.h.b16 %v576
    %v1348 = vunpack.c.l.b16 %v577
    %v1349 = vunpack.c.h.b16 %v577
    %v1350 = vunpack.c.l.b16 %v578
    %v1351 = vunpack.c.h.b16 %v578
    %v1352 = vunpack.c.l.b16 %v579
    %v1353 = vunpack.c.h.b16 %v579
    %v1354 = vunpack.c.l.b16 %v580
    %v1355 = vunpack.c.h.b16 %v580
    %v1356 = vunpack.c.l.b16 %v581
    %v1357 = vunpack.c.h.b16 %v581
    %v1358 = vunpack.c.l.b16 %v582
    %v1359 = vunpack.c.h.b16 %v582
    %v1360 = vunpack.c.l.b16 %v583
    %v1361 = vunpack.c.h.b16 %v583
    %v1362 = vunpack.c.l.b16 %v584
    %v1363 = vunpack.c.h.b16 %v584
    %v1364 = vunpack.c.l.b16 %v585
    %v1365 = vunpack.c.h.b16 %v585
    %v1366 = vunpack.c.l.b16 %v586
    %v1367 = vunpack.c.h.b16 %v586
    %v1368 = vunpack.c.l.b16 %v587
    %v1369 = vunpack.c.h.b16 %v587
    %v1370 = vunpack.c.l.b16 %v588
    %v1371 = vunpack.c.h.b16 %v588
    %v1372 = vunpack.c.l.b16 %v589
    %v1373 = vunpack.c.h.b16 %v589
    %v1374 = vunpack.c.l.b16 %v590
    %v1375 = vunpack.c.h.b16 %v590
    %v1376 = vunpack.c.l.b16 %v591
    %v1377 = vunpack.c.h.b16 %v591
    %v1378 = vunpack.c.l.b16 %v592
    %v1379 = vunpack.c.h.b16 %v592
    %v1380 = vunpack.c.l.b16 %v593
    %v1381 = vunpack.c.h.b16 %v593
    %v1382 = vunpack.c.l.b16 %v594
    %v1383 = vunpack.c.h.b16 %v594
    %v1384 = vunpack.c.l.b16 %v595
    %v1385 = vunpack.c.h.b16 %v595
    %v1386 = vunpack.c.l.b16 %v596
    %v1387 = vunpack.c.h.b16 %v596
    %v1388 = vunpack.c.l.b16 %v597
    %v1389 = vunpack.c.h.b16 %v597
    %v1390 = vunpack.c.l.b16 %v598
    %v1391 = vunpack.c.h.b16 %v598
    %v1392 = vunpack.c.l.b16 %v599
    %v1393 = vunpack.c.h.b16 %v599
    %v1394 = vunpack.c.l.b16 %v600
    %v1395 = vunpack.c.h.b16 %v600
    %v1396 = vunpack.c.l.b16 %v601
    %v1397 = vunpack.c.h.b16 %v601
    %v1398 = vunpack.c.l.b16 %v602
    %v1399 = vunpack.c.h.b16 %v602
    %v1400 = vunpack.c.l.b16 %v603
    %v1401 = vunpack.c.h.b16 %v603
    %v1402 = vunpack.c.l.b16 %v604
    %v1403 = vunpack.c.h.b16 %v604
    %v1404 = vunpack.c.l.b16 %v605
    %v1405 = vunpack.c.h.b16 %v605
    %v1406 = vunpack.c.l.b16 %v606
    %v1407 = vunpack.c.h.b16 %v606
    %v1408 = vunpack.c.l.b16 %v607
    %v1409 = vunpack.c.h.b16 %v607
    %v1410 = vunpack.c.l.b16 %v608
    %v1411 = vunpack.c.h.b16 %v608
    %v1412 = vunpack.c.l.b16 %v609
    %v1413 = vunpack.c.h.b16 %v609
    %v1414 = vunpack.c.l.b16 %v610
    %v1415 = vunpack.c.h.b16 %v610
    %v1416 = vunpack.c.l.b16 %v611
    %v1417 = vunpack.c.h.b16 %v611
    %v1418 = vunpack.c.l.b16 %v612
    %v1419 = vunpack.c.h.b16 %v612
    %v1420 = vunpack.c.l.b16 %v613
    %v1421 = vunpack.c.h.b16 %v613
    %v1422 = vunpack.c.l.b16 %v614
    %v1423 = vunpack.c.h.b16 %v614
    %v1424 = vunpack.c.l.b16 %v615
    %v1425 = vunpack.c.h.b16 %v615
    %v1426 = vpack.c.b16 %v922, %v914
    %v1427 = vpack.c.b16 %v923, %v915
    %v1428 = vpack.c.b16 %v924, %v916
    %v1429 = vpack.c.b16 %v925, %v917
    %v1430 = vpack.c.b16 %v926, %v918
    %v1431 = vpack.c.b16 %v927, %v919
    %v1432 = vpack.c.b16 %v928, %v920
    %v1433 = vpack.c.b16 %v929, %v921
    %v1434 = vpack.c.b16 %v938, %v930
    %v1435 = vpack.c.b16 %v939, %v931
    %v1436 = vpack.c.b16 %v940, %v932
    %v1437 = vpack.c.b16 %v941, %v933
    %v1438 = vpack.c.b16 %v942, %v934
    %v1439 = vpack.c.b16 %v943, %v935
    %v1440 = vpack.c.b16 %v944, %v936
    %v1441 = vpack.c.b16 %v945, %v937
    %v1442 = vpack.c.b16 %v954, %v946
    %v1443 = vpack.c.b16 %v955, %v947
    %v1444 = vpack.c.b16 %v956, %v948
    %v1445 = vpack.c.b16 %v957, %v949
    %v1446 = vpack.c.b16 %v958, %v950
    %v1447 = vpack.c.b16 %v959, %v951
    %v1448 = vpack.c.b16 %v960, %v952
    %v1449 = vpack.c.b16 %v961, %v953
    %v1450 = vpack.c.b16 %v970, %v962
    %v1451 = vpack.c.b16 %v971, %v963
    %v1452 = vpack.c.b16 %v972, %v964
    %v1453 = vpack.c.b16 %v973, %v965
    %v1454 = vpack.c.b16 %v974, %v966
    %v1455 = vpack.c.b16 %v975, %v967
    %v1456 = vpack.c.b16 %v976, %v968
    %v1457 = vpack.c.b16 %v977, %v969
    %v1458 = vpack.c.b16 %v986, %v978
    %v1459 = vpack.c.b16 %v987, %v979
    %v1460 = vpack.c.b16 %v988, %v980
    %v1461 = vpack.c.b16 %v989, %v981
    %v1462 = vpack.c.b16 %v990, %v982
    %v1463 = vpack.c.b16 %v991, %v983
    %v1464 = vpack.c.b16 %v992, %v984
    %v1465 = vpack.c.b16 %v993, %v985
    %v1466 = vpack.c.b16 %v1002, %v994
    %v1467 = vpack.c.b16 %v1003, %v995
    %v1468 = vpack.c.b16 %v1004, %v996
    %v1469 = vpack.c.b16 %v1005, %v997
    %v1470 = vpack.c.b16 %v1006, %v998
    %v1471 = vpack.c.b16 %v1007, %v999
    %v1472 = vpack.c.b16 %v1008, %v1000
    %v1473 = vpack.c.b16 %v1009, %v1001
    %v1474 = vpack.c.b16 %v1018, %v1010
    %v1475 = vpack.c.b16 %v1019, %v1011
    %v1476 = vpack.c.b16 %v1020, %v1012
    %v1477 = vpack.c.b16 %v1021, %v1013
    %v1478 = vpack.c.b16 %v1022, %v1014
    %v1479 = vpack.c.b16 %v1023, %v1015
    %v1480 = vpack.c.b16 %v1024, %v1016
    %v1481 = vpack.c.b16 %v1025, %v1017
    %v1482 = vpack.c.b16 %v1034, %v1026
    %v1483 = vpack.c.b16 %v1035, %v1027
    %v1484 = vpack.c.b16 %v1036, %v1028
    %v1485 = vpack.c.b16 %v1037, %v1029
    %v1486 = vpack.c.b16 %v1038, %v1030
    %v1487 = vpack.c.b16 %v1039, %v1031
    %v1488 = vpack.c.b16 %v1040, %v1032
    %v1489 = vpack.c.b16 %v1041, %v1033
    %v1490 = vpack.c.b16 %v1050, %v1042
    %v1491 = vpack.c.b16 %v1051, %v1043
    %v1492 = vpack.c.b16 %v1052, %v1044
    %v1493 = vpack.c.b16 %v1053, %v1045
    %v1494 = vpack.c.b16 %v1054, %v1046
    %v1495 = vpack.c.b16 %v1055, %v1047
    %v1496 = vpack.c.b16 %v1056, %v1048
    %v1497 = vpack.c.b16 %v1057, %v1049
    %v1498 = vpack.c.b16 %v1066, %v1058
    %v1499 = vpack.c.b16 %v1067, %v1059
    %v1500 = vpack.c.b16 %v1068, %v1060
    %v1501 = vpack.c.b16 %v1069, %v1061
    %v1502 = vpack.c.b16 %v1070, %v1062
    %v1503 = vpack.c.b16 %v1071, %v1063
    %v1504 = vpack.c.b16 %v1072, %v1064
    %v1505 = vpack.c.b16 %v1073, %v1065
    %v1506 = vpack.c.b16 %v1082, %v1074
    %v1507 = vpack.c.b16 %v1083, %v1075
    %v1508 = vpack.c.b16 %v1084, %v1076
    %v1509 = vpack.c.b16 %v1085, %v1077
    %v1510 = vpack.c.b16 %v1086, %v1078
    %v1511 = vpack.c.b16 %v1087, %v1079
    %v1512 = vpack.c.b16 %v1088, %v1080
    %v1513 = vpack.c.b16 %v1089, %v1081
    %v1514 = vpack.c.b16 %v1098, %v1090
    %v1515 = vpack.c.b16 %v1099, %v1091
    %v1516 = vpack.c.b16 %v1100, %v1092
    %v1517 = vpack.c.b16 %v1101, %v1093
    %v1518 = vpack.c.b16 %v1102, %v1094
    %v1519 = vpack.c.b16 %v1103, %v1095
    %v1520 = vpack.c.b16 %v1104, %v1096
    %v1521 = vpack.c.b16 %v1105, %v1097
    %v1522 = vpack.c.b16 %v1114, %v1106
    %v1523 = vpack.c.b16 %v1115, %v1107
    %v1524 = vpack.c.b16 %v1116, %v1108
    %v1525 = vpack.c.b16 %v1117, %v1109
    %v1526 = vpack.c.b16 %v1118, %v1110
    %v1527 = vpack.c.b16 %v1119, %v1111
    %v1528 = vpack.c.b16 %v1120, %v1112
    %v1529 = vpack.c.b16 %v1121, %v1113
    %v1530 = vpack.c.b16 %v1130, %v1122
    %v1531 = vpack.c.b16 %v1131, %v1123
    %v1532 = vpack.c.b16 %v1132, %v1124
    %v1533 = vpack.c.b16 %v1133, %v1125
    %v1534 = vpack.c.b16 %v1134, %v1126
    %v1535 = vpack.c.b16 %v1135, %v1127
    %v1536 = vpack.c.b16 %v1136, %v1128
    %v1537 = vpack.c.b16 %v1137, %v1129
    %v1538 = vpack.c.b16 %v1146, %v1138
    %v1539 = vpack.c.b16 %v1147, %v1139
    %v1540 = vpack.c.b16 %v1148, %v1140
    %v1541 = vpack.c.b16 %v1149, %v1141
    %v1542 = vpack.c.b16 %v1150, %v1142
    %v1543 = vpack.c.b16 %v1151, %v1143
    %v1544 = vpack.c.b16 %v1152, %v1144
    %v1545 = vpack.c.b16 %v1153, %v1145
    %v1546 = vpack.c.b16 %v1162, %v1154
    %v1547 = vpack.c.b16 %v1163, %v1155
    %v1548 = vpack.c.b16 %v1164, %v1156
    %v1549 = vpack.c.b16 %v1165, %v1157
    %v1550 = vpack.c.b16 %v1166, %v1158
    %v1551 = vpack.c.b16 %v1167, %v1159
    %v1552 = vpack.c.b16 %v1168, %v1160
    %v1553 = vpack.c.b16 %v1169, %v1161
    %v1554 = vpack.c.b16 %v1178, %v1170
    %v1555 = vpack.c.b16 %v1179, %v1171
    %v1556 = vpack.c.b16 %v1180, %v1172
    %v1557 = vpack.c.b16 %v1181, %v1173
    %v1558 = vpack.c.b16 %v1182, %v1174
    %v1559 = vpack.c.b16 %v1183, %v1175
    %v1560 = vpack.c.b16 %v1184, %v1176
    %v1561 = vpack.c.b16 %v1185, %v1177
    %v1562 = vpack.c.b16 %v1194, %v1186
    %v1563 = vpack.c.b16 %v1195, %v1187
    %v1564 = vpack.c.b16 %v1196, %v1188
    %v1565 = vpack.c.b16 %v1197, %v1189
    %v1566 = vpack.c.b16 %v1198, %v1190
    %v1567 = vpack.c.b16 %v1199, %v1191
    %v1568 = vpack.c.b16 %v1200, %v1192
    %v1569 = vpack.c.b16 %v1201, %v1193
    %v1570 = vpack.c.b16 %v1210, %v1202
    %v1571 = vpack.c.b16 %v1211, %v1203
    %v1572 = vpack.c.b16 %v1212, %v1204
    %v1573 = vpack.c.b16 %v1213, %v1205
    %v1574 = vpack.c.b16 %v1214, %v1206
    %v1575 = vpack.c.b16 %v1215, %v1207
    %v1576 = vpack.c.b16 %v1216, %v1208
    %v1577 = vpack.c.b16 %v1217, %v1209
    %v1578 = vpack.c.b16 %v1226, %v1218
    %v1579 = vpack.c.b16 %v1227, %v1219
    %v1580 = vpack.c.b16 %v1228, %v1220
    %v1581 = vpack.c.b16 %v1229, %v1221
    %v1582 = vpack.c.b16 %v1230, %v1222
    %v1583 = vpack.c.b16 %v1231, %v1223
    %v1584 = vpack.c.b16 %v1232, %v1224
    %v1585 = vpack.c.b16 %v1233, %v1225
    %v1586 = vpack.c.b16 %v1242, %v1234
    %v1587 = vpack.c.b16 %v1243, %v1235
    %v1588 = vpack.c.b16 %v1244, %v1236
    %v1589 = vpack.c.b16 %v1245, %v1237
    %v1590 = vpack.c.b16 %v1246, %v1238
    %v1591 = vpack.c.b16 %v1247, %v1239
    %v1592 = vpack.c.b16 %v1248, %v1240
    %v1593 = vpack.c.b16 %v1249, %v1241
    %v1594 = vpack.c.b16 %v1258, %v1250
    %v1595 = vpack.c.b16 %v1259, %v1251
    %v1596 = vpack.c.b16 %v1260, %v1252
    %v1597 = vpack.c.b16 %v1261, %v1253
    %v1598 = vpack.c.b16 %v1262, %v1254
    %v1599 = vpack.c.b16 %v1263, %v1255
    %v1600 = vpack.c.b16 %v1264, %v1256
    %v1601 = vpack.c.b16 %v1265, %v1257
    %v1602 = vpack.c.b16 %v1274, %v1266
    %v1603 = vpack.c.b16 %v1275, %v1267
    %v1604 = vpack.c.b16 %v1276, %v1268
    %v1605 = vpack.c.b16 %v1277, %v1269
    %v1606 = vpack.c.b16 %v1278, %v1270
    %v1607 = vpack.c.b16 %v1279, %v1271
    %v1608 = vpack.c.b16 %v1280, %v1272
    %v1609 = vpack.c.b16 %v1281, %v1273
    %v1610 = vpack.c.b16 %v1290, %v1282
    %v1611 = vpack.c.b16 %v1291, %v1283
    %v1612 = vpack.c.b16 %v1292, %v1284
    %v1613 = vpack.c.b16 %v1293, %v1285
    %v1614 = vpack.c.b16 %v1294, %v1286
    %v1615 = vpack.c.b16 %v1295, %v1287
    %v1616 = vpack.c.b16 %v1296, %v1288
    %v1617 = vpack.c.b16 %v1297, %v1289
    %v1618 = vpack.c.b16 %v1306, %v1298
    %v1619 = vpack.c.b16 %v1307, %v1299
    %v1620 = vpack.c.b16 %v1308, %v1300
    %v1621 = vpack.c.b16 %v1309, %v1301
    %v1622 = vpack.c.b16 %v1310, %v1302
    %v1623 = vpack.c.b16 %v1311, %v1303
    %v1624 = vpack.c.b16 %v1312, %v1304
    %v1625 = vpack.c.b16 %v1313, %v1305
    %v1626 = vpack.c.b16 %v1322, %v1314
    %v1627 = vpack.c.b16 %v1323, %v1315
    %v1628 = vpack.c.b16 %v1324, %v1316
    %v1629 = vpack.c.b16 %v1325, %v1317
    %v1630 = vpack.c.b16 %v1326, %v1318
    %v1631 = vpack.c.b16 %v1327, %v1319
    %v1632 = vpack.c.b16 %v1328, %v1320
    %v1633 = vpack.c.b16 %v1329, %v1321
    %v1634 = vpack.c.b16 %v1338, %v1330
    %v1635 = vpack.c.b16 %v1339, %v1331
    %v1636 = vpack.c.b16 %v1340, %v1332
    %v1637 = vpack.c.b16 %v1341, %v1333
    %v1638 = vpack.c.b16 %v1342, %v1334
    %v1639 = vpack.c.b16 %v1343, %v1335
    %v1640 = vpack.c.b16 %v1344, %v1336
    %v1641 = vpack.c.b16 %v1345, %v1337
    %v1642 = vpack.c.b16 %v1354, %v1346
    %v1643 = vpack.c.b16 %v1355, %v1347
    %v1644 = vpack.c.b16 %v1356, %v1348
    %v1645 = vpack.c.b16 %v1357, %v1349
    %v1646 = vpack.c.b16 %v1358, %v1350
    %v1647 = vpack.c.b16 %v1359, %v1351
    %v1648 = vpack.c.b16 %v1360, %v1352
    %v1649 = vpack.c.b16 %v1361, %v1353
    %v1650 = vpack.c.b16 %v1370, %v1362
    %v1651 = vpack.c.b16 %v1371, %v1363
    %v1652 = vpack.c.b16 %v1372, %v1364
    %v1653 = vpack.c.b16 %v1373, %v1365
    %v1654 = vpack.c.b16 %v1374, %v1366
    %v1655 = vpack.c.b16 %v1375, %v1367
    %v1656 = vpack.c.b16 %v1376, %v1368
    %v1657 = vpack.c.b16 %v1377, %v1369
    %v1658 = vpack.c.b16 %v1386, %v1378
    %v1659 = vpack.c.b16 %v1387, %v1379
    %v1660 = vpack.c.b16 %v1388, %v1380
    %v1661 = vpack.c.b16 %v1389, %v1381
    %v1662 = vpack.c.b16 %v1390, %v1382
    %v1663 = vpack.c.b16 %v1391, %v1383
    %v1664 = vpack.c.b16 %v1392, %v1384
    %v1665 = vpack.c.b16 %v1393, %v1385
    %v1666 = vpack.c.b16 %v1402, %v1394
    %v1667 = vpack.c.b16 %v1403, %v1395
    %v1668 = vpack.c.b16 %v1404, %v1396
    %v1669 = vpack.c.b16 %v1405, %v1397
    %v1670 = vpack.c.b16 %v1406, %v1398
    %v1671 = vpack.c.b16 %v1407, %v1399
    %v1672 = vpack.c.b16 %v1408, %v1400
    %v1673 = vpack.c.b16 %v1409, %v1401
    %v1674 = vpack.c.b16 %v1418, %v1410
    %v1675 = vpack.c.b16 %v1419, %v1411
    %v1676 = vpack.c.b16 %v1420, %v1412
    %v1677 = vpack.c.b16 %v1421, %v1413
    %v1678 = vpack.c.b16 %v1422, %v1414
    %v1679 = vpack.c.b16 %v1423, %v1415
    %v1680 = vpack.c.b16 %v1424, %v1416
    %v1681 = vpack.c.b16 %v1425, %v1417
    %1938 = vmatprep.subr.bf16.mxu0 %v1427
    %1939 = vmatpush1.bf16.msra.mxu0 %v1426
    %1940 = vmatprep.subr.bf16.mxu0 %v1435
    %1941 = vmatpush1.bf16.msra.mxu0 %v1434
    %1942 = vmatprep.subr.bf16.mxu0 %v1443
    %1943 = vmatpush1.bf16.msra.mxu0 %v1442
    %1944 = vmatprep.subr.bf16.mxu0 %v1451
    %1945 = vmatpush1.bf16.msra.mxu0 %v1450
    %1946 = vmatprep.subr.bf16.mxu0 %v1459
    %1947 = vmatpush1.bf16.msra.mxu0 %v1458
    %1948 = vmatprep.subr.bf16.mxu0 %v1467
    %1949 = vmatpush1.bf16.msra.mxu0 %v1466
    %1950 = vmatprep.subr.bf16.mxu0 %v1475
    %1951 = vmatpush1.bf16.msra.mxu0 %v1474
    %1952 = vmatprep.subr.bf16.mxu0 %v1483
    %1953 = vmatpush1.bf16.msra.mxu0 %v1482
    %1954 = vmatprep.subr.bf16.mxu0 %v1491
    %1955 = vmatpush1.bf16.msra.mxu0 %v1490
    %1956 = vmatprep.subr.bf16.mxu0 %v1499
    %1957 = vmatpush1.bf16.msra.mxu0 %v1498
    %1958 = vmatprep.subr.bf16.mxu0 %v1507
    %1959 = vmatpush1.bf16.msra.mxu0 %v1506
    %1960 = vmatprep.subr.bf16.mxu0 %v1515
    %1961 = vmatpush1.bf16.msra.mxu0 %v1514
    %1962 = vmatprep.subr.bf16.mxu0 %v1523
    %1963 = vmatpush1.bf16.msra.mxu0 %v1522
    %1964 = vmatprep.subr.bf16.mxu0 %v1531
    %1965 = vmatpush1.bf16.msra.mxu0 %v1530
    %1966 = vmatprep.subr.bf16.mxu0 %v1539
    %1967 = vmatpush1.bf16.msra.mxu0 %v1538
    %1968 = vmatprep.subr.bf16.mxu0 %v1547
    %1969 = vmatpush1.bf16.msra.mxu0 %v1546
    %1970 = vmatprep.mubr.bf16.mxu0 %v357
    %1971 = vmatmul.mubr.bf16.gmra.mrb[0].mxu0 %v356
    %v1972 = vpop.f32.mrb[0].mxu0
    %v1973 = vadd.f32 %v621, %v1972
    %v1974 = vpop.f32.mrb[0].mxu0
    %v1975 = vadd.f32 %v625, %v1974
    %v1976 = vpop.f32.mrb[0].mxu0
    %v1977 = vpop.f32.mrb[0].mxu0
    %1978 = vdwg.mxu0
    %1979 = vmatprep.subr.bf16.mxu0 %v1555
    %1980 = vmatpush1.bf16.msra.mxu0 %v1554
    %1981 = vmatprep.subr.bf16.mxu0 %v1563
    %1982 = vmatpush1.bf16.msra.mxu0 %v1562
    %1983 = vmatprep.subr.bf16.mxu0 %v1571
    %1984 = vmatpush1.bf16.msra.mxu0 %v1570
    %1985 = vmatprep.subr.bf16.mxu0 %v1579
    %1986 = vmatpush1.bf16.msra.mxu0 %v1578
    %1987 = vmatprep.subr.bf16.mxu0 %v1587
    %1988 = vmatpush1.bf16.msra.mxu0 %v1586
    %1989 = vmatprep.subr.bf16.mxu0 %v1595
    %1990 = vmatpush1.bf16.msra.mxu0 %v1594
    %1991 = vmatprep.subr.bf16.mxu0 %v1603
    %1992 = vmatpush1.bf16.msra.mxu0 %v1602
    %1993 = vmatprep.subr.bf16.mxu0 %v1611
    %1994 = vmatpush1.bf16.msra.mxu0 %v1610
    %1995 = vmatprep.subr.bf16.mxu0 %v1619
    %1996 = vmatpush1.bf16.msra.mxu0 %v1618
    %1997 = vmatprep.subr.bf16.mxu0 %v1627
    %1998 = vmatpush1.bf16.msra.mxu0 %v1626
    %1999 = vmatprep.subr.bf16.mxu0 %v1635
    %2000 = vmatpush1.bf16.msra.mxu0 %v1634
    %2001 = vmatprep.subr.bf16.mxu0 %v1643
    %2002 = vmatpush1.bf16.msra.mxu0 %v1642
    %2003 = vmatprep.subr.bf16.mxu0 %v1651
    %2004 = vmatpush1.bf16.msra.mxu0 %v1650
    %2005 = vmatprep.subr.bf16.mxu0 %v1659
    %2006 = vmatpush1.bf16.msra.mxu0 %v1658
    %2007 = vmatprep.subr.bf16.mxu0 %v1667
    %2008 = vmatpush1.bf16.msra.mxu0 %v1666
    %2009 = vmatprep.subr.bf16.mxu0 %v1675
    %2010 = vmatpush1.bf16.msra.mxu0 %v1674
    %2011 = vmatprep.mubr.bf16.mxu0 %v359
    %2012 = vmatmul.mubr.bf16.gmra.mrb[0].mxu0 %v358
    %v2013 = vpop.f32.mrb[0].mxu0
    %v2014 = vadd.f32 %v1973, %v2013
    %v2015 = vpop.f32.mrb[0].mxu0
    %v2016 = vadd.f32 %v1975, %v2015
    %v2017 = vpop.f32.mrb[0].mxu0
    %v2018 = vpop.f32.mrb[0].mxu0
    %2019 = vdwg.mxu0
    %2020 = vmatprep.subr.bf16.mxu0 %v1429
    %2021 = vmatpush1.bf16.msra.mxu0 %v1428
    %2022 = vmatprep.subr.bf16.mxu0 %v1437
    %2023 = vmatpush1.bf16.msra.mxu0 %v1436
    %2024 = vmatprep.subr.bf16.mxu0 %v1445
    %2025 = vmatpush1.bf16.msra.mxu0 %v1444
    %2026 = vmatprep.subr.bf16.mxu0 %v1453
    %2027 = vmatpush1.bf16.msra.mxu0 %v1452
    %2028 = vmatprep.subr.bf16.mxu0 %v1461
    %2029 = vmatpush1.bf16.msra.mxu0 %v1460
    %2030 = vmatprep.subr.bf16.mxu0 %v1469
    %2031 = vmatpush1.bf16.msra.mxu0 %v1468
    %2032 = vmatprep.subr.bf16.mxu0 %v1477
    %2033 = vmatpush1.bf16.msra.mxu0 %v1476
    %2034 = vmatprep.subr.bf16.mxu0 %v1485
    %2035 = vmatpush1.bf16.msra.mxu0 %v1484
    %2036 = vmatprep.subr.bf16.mxu0 %v1493
    %2037 = vmatpush1.bf16.msra.mxu0 %v1492
    %2038 = vmatprep.subr.bf16.mxu0 %v1501
    %2039 = vmatpush1.bf16.msra.mxu0 %v1500
    %2040 = vmatprep.subr.bf16.mxu0 %v1509
    %2041 = vmatpush1.bf16.msra.mxu0 %v1508
    %2042 = vmatprep.subr.bf16.mxu0 %v1517
    %2043 = vmatpush1.bf16.msra.mxu0 %v1516
    %2044 = vmatprep.subr.bf16.mxu0 %v1525
    %2045 = vmatpush1.bf16.msra.mxu0 %v1524
    %2046 = vmatprep.subr.bf16.mxu0 %v1533
    %2047 = vmatpush1.bf16.msra.mxu0 %v1532
    %2048 = vmatprep.subr.bf16.mxu0 %v1541
    %2049 = vmatpush1.bf16.msra.mxu0 %v1540
    %2050 = vmatprep.subr.bf16.mxu0 %v1549
    %2051 = vmatpush1.bf16.msra.mxu0 %v1548
    %2052 = vmatprep.mubr.bf16.mxu0 %v357
    %2053 = vmatmul.mubr.bf16.gmra.mrb[0].mxu0 %v356
    %v2054 = vpop.f32.mrb[0].mxu0
    %v2055 = vadd.f32 %v629, %v2054
    %v2056 = vpop.f32.mrb[0].mxu0
    %v2057 = vadd.f32 %v633, %v2056
    %v2058 = vpop.f32.mrb[0].mxu0
    %v2059 = vpop.f32.mrb[0].mxu0
    %2060 = vdwg.mxu0
    %2061 = vmatprep.subr.bf16.mxu0 %v1557
    %2062 = vmatpush1.bf16.msra.mxu0 %v1556
    %2063 = vmatprep.subr.bf16.mxu0 %v1565
    %2064 = vmatpush1.bf16.msra.mxu0 %v1564
    %2065 = vmatprep.subr.bf16.mxu0 %v1573
    %2066 = vmatpush1.bf16.msra.mxu0 %v1572
    %2067 = vmatprep.subr.bf16.mxu0 %v1581
    %2068 = vmatpush1.bf16.msra.mxu0 %v1580
    %2069 = vmatprep.subr.bf16.mxu0 %v1589
    %2070 = vmatpush1.bf16.msra.mxu0 %v1588
    %2071 = vmatprep.subr.bf16.mxu0 %v1597
    %2072 = vmatpush1.bf16.msra.mxu0 %v1596
    %2073 = vmatprep.subr.bf16.mxu0 %v1605
    %2074 = vmatpush1.bf16.msra.mxu0 %v1604
    %2075 = vmatprep.subr.bf16.mxu0 %v1613
    %2076 = vmatpush1.bf16.msra.mxu0 %v1612
    %2077 = vmatprep.subr.bf16.mxu0 %v1621
    %2078 = vmatpush1.bf16.msra.mxu0 %v1620
    %2079 = vmatprep.subr.bf16.mxu0 %v1629
    %2080 = vmatpush1.bf16.msra.mxu0 %v1628
    %2081 = vmatprep.subr.bf16.mxu0 %v1637
    %2082 = vmatpush1.bf16.msra.mxu0 %v1636
    %2083 = vmatprep.subr.bf16.mxu0 %v1645
    %2084 = vmatpush1.bf16.msra.mxu0 %v1644
    %2085 = vmatprep.subr.bf16.mxu0 %v1653
    %2086 = vmatpush1.bf16.msra.mxu0 %v1652
    %2087 = vmatprep.subr.bf16.mxu0 %v1661
    %2088 = vmatpush1.bf16.msra.mxu0 %v1660
    %2089 = vmatprep.subr.bf16.mxu0 %v1669
    %2090 = vmatpush1.bf16.msra.mxu0 %v1668
    %2091 = vmatprep.subr.bf16.mxu0 %v1677
    %2092 = vmatpush1.bf16.msra.mxu0 %v1676
    %2093 = vmatprep.mubr.bf16.mxu0 %v359
    %2094 = vmatmul.mubr.bf16.gmra.mrb[0].mxu0 %v358
    %v2095 = vpop.f32.mrb[0].mxu0
    %v2096 = vadd.f32 %v2055, %v2095
    %v2097 = vpop.f32.mrb[0].mxu0
    %v2098 = vadd.f32 %v2057, %v2097
    %v2099 = vpop.f32.mrb[0].mxu0
    %v2100 = vpop.f32.mrb[0].mxu0
    %2101 = vdwg.mxu0
    %2102 = vmatprep.subr.bf16.mxu0 %v1431
    %2103 = vmatpush1.bf16.msra.mxu0 %v1430
    %2104 = vmatprep.subr.bf16.mxu0 %v1439
    %2105 = vmatpush1.bf16.msra.mxu0 %v1438
    %2106 = vmatprep.subr.bf16.mxu0 %v1447
    %2107 = vmatpush1.bf16.msra.mxu0 %v1446
    %2108 = vmatprep.subr.bf16.mxu0 %v1455
    %2109 = vmatpush1.bf16.msra.mxu0 %v1454
    %2110 = vmatprep.subr.bf16.mxu0 %v1463
    %2111 = vmatpush1.bf16.msra.mxu0 %v1462
    %2112 = vmatprep.subr.bf16.mxu0 %v1471
    %2113 = vmatpush1.bf16.msra.mxu0 %v1470
    %2114 = vmatprep.subr.bf16.mxu0 %v1479
    %2115 = vmatpush1.bf16.msra.mxu0 %v1478
    %2116 = vmatprep.subr.bf16.mxu0 %v1487
    %2117 = vmatpush1.bf16.msra.mxu0 %v1486
    %2118 = vmatprep.subr.bf16.mxu0 %v1495
    %2119 = vmatpush1.bf16.msra.mxu0 %v1494
    %2120 = vmatprep.subr.bf16.mxu0 %v1503
    %2121 = vmatpush1.bf16.msra.mxu0 %v1502
    %2122 = vmatprep.subr.bf16.mxu0 %v1511
    %2123 = vmatpush1.bf16.msra.mxu0 %v1510
    %2124 = vmatprep.subr.bf16.mxu0 %v1519
    %2125 = vmatpush1.bf16.msra.mxu0 %v1518
    %2126 = vmatprep.subr.bf16.mxu0 %v1527
    %2127 = vmatpush1.bf16.msra.mxu0 %v1526
    %2128 = vmatprep.subr.bf16.mxu0 %v1535
    %2129 = vmatpush1.bf16.msra.mxu0 %v1534
    %2130 = vmatprep.subr.bf16.mxu0 %v1543
    %2131 = vmatpush1.bf16.msra.mxu0 %v1542
    %2132 = vmatprep.subr.bf16.mxu0 %v1551
    %2133 = vmatpush1.bf16.msra.mxu0 %v1550
    %2134 = vmatprep.mubr.bf16.mxu0 %v357
    %2135 = vmatmul.mubr.bf16.gmra.mrb[0].mxu0 %v356
    %v2136 = vpop.f32.mrb[0].mxu0
    %v2137 = vadd.f32 %v637, %v2136
    %v2138 = vpop.f32.mrb[0].mxu0
    %v2139 = vadd.f32 %v641, %v2138
    %v2140 = vpop.f32.mrb[0].mxu0
    %v2141 = vpop.f32.mrb[0].mxu0
    %2142 = vdwg.mxu0
    %2143 = vmatprep.subr.bf16.mxu0 %v1559
    %2144 = vmatpush1.bf16.msra.mxu0 %v1558
    %2145 = vmatprep.subr.bf16.mxu0 %v1567
    %2146 = vmatpush1.bf16.msra.mxu0 %v1566
    %2147 = vmatprep.subr.bf16.mxu0 %v1575
    %2148 = vmatpush1.bf16.msra.mxu0 %v1574
    %2149 = vmatprep.subr.bf16.mxu0 %v1583
    %2150 = vmatpush1.bf16.msra.mxu0 %v1582
    %2151 = vmatprep.subr.bf16.mxu0 %v1591
    %2152 = vmatpush1.bf16.msra.mxu0 %v1590
    %2153 = vmatprep.subr.bf16.mxu0 %v1599
    %2154 = vmatpush1.bf16.msra.mxu0 %v1598
    %2155 = vmatprep.subr.bf16.mxu0 %v1607
    %2156 = vmatpush1.bf16.msra.mxu0 %v1606
    %2157 = vmatprep.subr.bf16.mxu0 %v1615
    %2158 = vmatpush1.bf16.msra.mxu0 %v1614
    %2159 = vmatprep.subr.bf16.mxu0 %v1623
    %2160 = vmatpush1.bf16.msra.mxu0 %v1622
    %2161 = vmatprep.subr.bf16.mxu0 %v1631
    %2162 = vmatpush1.bf16.msra.mxu0 %v1630
    %2163 = vmatprep.subr.bf16.mxu0 %v1639
    %2164 = vmatpush1.bf16.msra.mxu0 %v1638
    %2165 = vmatprep.subr.bf16.mxu0 %v1647
    %2166 = vmatpush1.bf16.msra.mxu0 %v1646
    %2167 = vmatprep.subr.bf16.mxu0 %v1655
    %2168 = vmatpush1.bf16.msra.mxu0 %v1654
    %2169 = vmatprep.subr.bf16.mxu0 %v1663
    %2170 = vmatpush1.bf16.msra.mxu0 %v1662
    %2171 = vmatprep.subr.bf16.mxu0 %v1671
    %2172 = vmatpush1.bf16.msra.mxu0 %v1670
    %2173 = vmatprep.subr.bf16.mxu0 %v1679
    %2174 = vmatpush1.bf16.msra.mxu0 %v1678
    %2175 = vmatprep.mubr.bf16.mxu0 %v359
    %2176 = vmatmul.mubr.bf16.gmra.mrb[0].mxu0 %v358
    %v2177 = vpop.f32.mrb[0].mxu0
    %v2178 = vadd.f32 %v2137, %v2177
    %v2179 = vpop.f32.mrb[0].mxu0
    %v2180 = vadd.f32 %v2139, %v2179
    %v2181 = vpop.f32.mrb[0].mxu0
    %v2182 = vpop.f32.mrb[0].mxu0
    %2183 = vdwg.mxu0
    %2184 = vmatprep.subr.bf16.mxu0 %v1433
    %2185 = vmatpush1.bf16.msra.mxu0 %v1432
    %2186 = vmatprep.subr.bf16.mxu0 %v1441
    %2187 = vmatpush1.bf16.msra.mxu0 %v1440
    %2188 = vmatprep.subr.bf16.mxu0 %v1449
    %2189 = vmatpush1.bf16.msra.mxu0 %v1448
    %2190 = vmatprep.subr.bf16.mxu0 %v1457
    %2191 = vmatpush1.bf16.msra.mxu0 %v1456
    %2192 = vmatprep.subr.bf16.mxu0 %v1465
    %2193 = vmatpush1.bf16.msra.mxu0 %v1464
    %2194 = vmatprep.subr.bf16.mxu0 %v1473
    %2195 = vmatpush1.bf16.msra.mxu0 %v1472
    %2196 = vmatprep.subr.bf16.mxu0 %v1481
    %2197 = vmatpush1.bf16.msra.mxu0 %v1480
    %2198 = vmatprep.subr.bf16.mxu0 %v1489
    %2199 = vmatpush1.bf16.msra.mxu0 %v1488
    %2200 = vmatprep.subr.bf16.mxu0 %v1497
    %2201 = vmatpush1.bf16.msra.mxu0 %v1496
    %2202 = vmatprep.subr.bf16.mxu0 %v1505
    %2203 = vmatpush1.bf16.msra.mxu0 %v1504
    %2204 = vmatprep.subr.bf16.mxu0 %v1513
    %2205 = vmatpush1.bf16.msra.mxu0 %v1512
    %2206 = vmatprep.subr.bf16.mxu0 %v1521
    %2207 = vmatpush1.bf16.msra.mxu0 %v1520
    %2208 = vmatprep.subr.bf16.mxu0 %v1529
    %2209 = vmatpush1.bf16.msra.mxu0 %v1528
    %2210 = vmatprep.subr.bf16.mxu0 %v1537
    %2211 = vmatpush1.bf16.msra.mxu0 %v1536
    %2212 = vmatprep.subr.bf16.mxu0 %v1545
    %2213 = vmatpush1.bf16.msra.mxu0 %v1544
    %2214 = vmatprep.subr.bf16.mxu0 %v1553
    %2215 = vmatpush1.bf16.msra.mxu0 %v1552
    %2216 = vmatprep.mubr.bf16.mxu0 %v357
    %2217 = vmatmul.mubr.bf16.gmra.mrb[0].mxu0 %v356
    %v2218 = vpop.f32.mrb[0].mxu0
    %v2219 = vadd.f32 %v645, %v2218
    %v2220 = vpop.f32.mrb[0].mxu0
    %v2221 = vadd.f32 %v649, %v2220
    %v2222 = vpop.f32.mrb[0].mxu0
    %v2223 = vpop.f32.mrb[0].mxu0
    %2224 = vdwg.mxu0
    %2225 = vmatprep.subr.bf16.mxu0 %v1561
    %2226 = vmatpush1.bf16.msra.mxu0 %v1560
    %2227 = vmatprep.subr.bf16.mxu0 %v1569
    %2228 = vmatpush1.bf16.msra.mxu0 %v1568
    %2229 = vmatprep.subr.bf16.mxu0 %v1577
    %2230 = vmatpush1.bf16.msra.mxu0 %v1576
    %2231 = vmatprep.subr.bf16.mxu0 %v1585
    %2232 = vmatpush1.bf16.msra.mxu0 %v1584
    %2233 = vmatprep.subr.bf16.mxu0 %v1593
    %2234 = vmatpush1.bf16.msra.mxu0 %v1592
    %2235 = vmatprep.subr.bf16.mxu0 %v1601
    %2236 = vmatpush1.bf16.msra.mxu0 %v1600
    %2237 = vmatprep.subr.bf16.mxu0 %v1609
    %2238 = vmatpush1.bf16.msra.mxu0 %v1608
    %2239 = vmatprep.subr.bf16.mxu0 %v1617
    %2240 = vmatpush1.bf16.msra.mxu0 %v1616
    %2241 = vmatprep.subr.bf16.mxu0 %v1625
    %2242 = vmatpush1.bf16.msra.mxu0 %v1624
    %2243 = vmatprep.subr.bf16.mxu0 %v1633
    %2244 = vmatpush1.bf16.msra.mxu0 %v1632
    %2245 = vmatprep.subr.bf16.mxu0 %v1641
    %2246 = vmatpush1.bf16.msra.mxu0 %v1640
    %2247 = vmatprep.subr.bf16.mxu0 %v1649
    %2248 = vmatpush1.bf16.msra.mxu0 %v1648
    %2249 = vmatprep.subr.bf16.mxu0 %v1657
    %2250 = vmatpush1.bf16.msra.mxu0 %v1656
    %2251 = vmatprep.subr.bf16.mxu0 %v1665
    %2252 = vmatpush1.bf16.msra.mxu0 %v1664
    %2253 = vmatprep.subr.bf16.mxu0 %v1673
    %2254 = vmatpush1.bf16.msra.mxu0 %v1672
    %2255 = vmatprep.subr.bf16.mxu0 %v1681
    %2256 = vmatpush1.bf16.msra.mxu0 %v1680
    %2257 = vmatprep.mubr.bf16.mxu0 %v359
    %2258 = vmatmul.mubr.bf16.gmra.mrb[0].mxu0 %v358
    %v2259 = vpop.f32.mrb[0].mxu0
    %v2260 = vadd.f32 %v2219, %v2259
    %v2261 = vpop.f32.mrb[0].mxu0
    %v2262 = vadd.f32 %v2221, %v2261
    %v2263 = vpop.f32.mrb[0].mxu0
    %v2264 = vpop.f32.mrb[0].mxu0
    %2265 = vdwg.mxu0
    %v2266 = vmax.f32 %v2014, 0.0
    %v2267 = vmax.f32 %v2016, 0.0
    %v2268 = vmax.f32 %v2096, 0.0
    %v2269 = vmax.f32 %v2098, 0.0
    %v2270 = vmax.f32 %v2178, 0.0
    %v2271 = vmax.f32 %v2180, 0.0
    %v2272 = vmax.f32 %v2260, 0.0
    %v2273 = vmax.f32 %v2262, 0.0
    %v2274 = vpack.c.bf16 %v2266, %v2266
    %v2275 = vpack.c.bf16 %v2267, %v2267
    %v2276 = vpack.c.bf16 %v2268, %v2268
    %v2277 = vpack.c.bf16 %v2269, %v2269
    %v2278 = vpack.c.bf16 %v2270, %v2270
    %v2279 = vpack.c.bf16 %v2271, %v2271
    %v2280 = vpack.c.bf16 %v2272, %v2272
    %v2281 = vpack.c.bf16 %v2273, %v2273
    %v2282 = vld [vmem:[#allocation2] sm:$0xff]
    %v2283 = vld [vmem:[#allocation2 + $0x8] sm:$0xff]
    %v2284 = vld [vmem:[#allocation2 + $0x10] sm:$0xff]
    %v2285 = vld [vmem:[#allocation2 + $0x18] sm:$0xff]
    %v2286 = vld [vmem:[#allocation2 + $0x20] sm:$0xff]
    %v2287 = vld [vmem:[#allocation2 + $0x28] sm:$0xff]
    %v2288 = vld [vmem:[#allocation2 + $0x30] sm:$0xff]
    %v2289 = vld [vmem:[#allocation2 + $0x38] sm:$0xff]
    %v2290 = vld [vmem:[#allocation2 + $0x40] sm:$0xff]
    %v2291 = vld [vmem:[#allocation2 + $0x48] sm:$0xff]
    %v2292 = vld [vmem:[#allocation2 + $0x50] sm:$0xff]
    %v2293 = vld [vmem:[#allocation2 + $0x58] sm:$0xff]
    %v2294 = vld [vmem:[#allocation2 + $0x60] sm:$0xff]
    %v2295 = vld [vmem:[#allocation2 + $0x68] sm:$0xff]
    %v2296 = vld [vmem:[#allocation2 + $0x70] sm:$0xff]
    %v2297 = vld [vmem:[#allocation2 + $0x78] sm:$0xff]
    %v2298 = vld [vmem:[#allocation2 + $0x80] sm:$0xff]
    %v2299 = vld [vmem:[#allocation2 + $0x88] sm:$0xff]
    %v2300 = vld [vmem:[#allocation2 + $0x90] sm:$0xff]
    %v2301 = vld [vmem:[#allocation2 + $0x98] sm:$0xff]
    %v2302 = vld [vmem:[#allocation2 + $0xa0] sm:$0xff]
    %v2303 = vld [vmem:[#allocation2 + $0xa8] sm:$0xff]
    %v2304 = vld [vmem:[#allocation2 + $0xb0] sm:$0xff]
    %v2305 = vld [vmem:[#allocation2 + $0xb8] sm:$0xff]
    %v2306 = vld [vmem:[#allocation2 + $0xc0] sm:$0xff]
    %v2307 = vld [vmem:[#allocation2 + $0xc8] sm:$0xff]
    %v2308 = vld [vmem:[#allocation2 + $0xd0] sm:$0xff]
    %v2309 = vld [vmem:[#allocation2 + $0xd8] sm:$0xff]
    %v2310 = vld [vmem:[#allocation2 + $0xe0] sm:$0xff]
    %v2311 = vld [vmem:[#allocation2 + $0xe8] sm:$0xff]
    %v2312 = vld [vmem:[#allocation2 + $0xf0] sm:$0xff]
    %v2313 = vld [vmem:[#allocation2 + $0xf8] sm:$0xff]
    %v2314 = vld [vmem:[#allocation2 + $0x100] sm:$0xff]
    %v2315 = vld [vmem:[#allocation2 + $0x108] sm:$0xff]
    %v2316 = vld [vmem:[#allocation2 + $0x110] sm:$0xff]
    %v2317 = vld [vmem:[#allocation2 + $0x118] sm:$0xff]
    %v2318 = vld [vmem:[#allocation2 + $0x120] sm:$0xff]
    %v2319 = vld [vmem:[#allocation2 + $0x128] sm:$0xff]
    %v2320 = vld [vmem:[#allocation2 + $0x130] sm:$0xff]
    %v2321 = vld [vmem:[#allocation2 + $0x138] sm:$0xff]
    %v2322 = vld [vmem:[#allocation2 + $0x140] sm:$0xff]
    %v2323 = vld [vmem:[#allocation2 + $0x148] sm:$0xff]
    %v2324 = vld [vmem:[#allocation2 + $0x150] sm:$0xff]
    %v2325 = vld [vmem:[#allocation2 + $0x158] sm:$0xff]
    %v2326 = vld [vmem:[#allocation2 + $0x160] sm:$0xff]
    %v2327 = vld [vmem:[#allocation2 + $0x168] sm:$0xff]
    %v2328 = vld [vmem:[#allocation2 + $0x170] sm:$0xff]
    %v2329 = vld [vmem:[#allocation2 + $0x178] sm:$0xff]
    %v2330 = vld [vmem:[#allocation2 + $0x180] sm:$0xff]
    %v2331 = vld [vmem:[#allocation2 + $0x188] sm:$0xff]
    %v2332 = vld [vmem:[#allocation2 + $0x190] sm:$0xff]
    %v2333 = vld [vmem:[#allocation2 + $0x198] sm:$0xff]
    %v2334 = vld [vmem:[#allocation2 + $0x1a0] sm:$0xff]
    %v2335 = vld [vmem:[#allocation2 + $0x1a8] sm:$0xff]
    %v2336 = vld [vmem:[#allocation2 + $0x1b0] sm:$0xff]
    %v2337 = vld [vmem:[#allocation2 + $0x1b8] sm:$0xff]
    %v2338 = vld [vmem:[#allocation2 + $0x1c0] sm:$0xff]
    %v2339 = vld [vmem:[#allocation2 + $0x1c8] sm:$0xff]
    %v2340 = vld [vmem:[#allocation2 + $0x1d0] sm:$0xff]
    %v2341 = vld [vmem:[#allocation2 + $0x1d8] sm:$0xff]
    %v2342 = vld [vmem:[#allocation2 + $0x1e0] sm:$0xff]
    %v2343 = vld [vmem:[#allocation2 + $0x1e8] sm:$0xff]
    %v2344 = vld [vmem:[#allocation2 + $0x1f0] sm:$0xff]
    %v2345 = vld [vmem:[#allocation2 + $0x1f8] sm:$0xff]
    %v2346 = vld [vmem:[#allocation2 + $0x200] sm:$0xff]
    %v2347 = vld [vmem:[#allocation2 + $0x208] sm:$0xff]
    %v2348 = vld [vmem:[#allocation2 + $0x210] sm:$0xff]
    %v2349 = vld [vmem:[#allocation2 + $0x218] sm:$0xff]
    %v2350 = vld [vmem:[#allocation2 + $0x220] sm:$0xff]
    %v2351 = vld [vmem:[#allocation2 + $0x228] sm:$0xff]
    %v2352 = vld [vmem:[#allocation2 + $0x230] sm:$0xff]
    %v2353 = vld [vmem:[#allocation2 + $0x238] sm:$0xff]
    %v2354 = vld [vmem:[#allocation2 + $0x240] sm:$0xff]
    %v2355 = vld [vmem:[#allocation2 + $0x248] sm:$0xff]
    %v2356 = vld [vmem:[#allocation2 + $0x250] sm:$0xff]
    %v2357 = vld [vmem:[#allocation2 + $0x258] sm:$0xff]
    %v2358 = vld [vmem:[#allocation2 + $0x260] sm:$0xff]
    %v2359 = vld [vmem:[#allocation2 + $0x268] sm:$0xff]
    %v2360 = vld [vmem:[#allocation2 + $0x270] sm:$0xff]
    %v2361 = vld [vmem:[#allocation2 + $0x278] sm:$0xff]
    %v2362 = vld [vmem:[#allocation2 + $0x280] sm:$0xff]
    %v2363 = vld [vmem:[#allocation2 + $0x288] sm:$0xff]
    %v2364 = vld [vmem:[#allocation2 + $0x290] sm:$0xff]
    %v2365 = vld [vmem:[#allocation2 + $0x298] sm:$0xff]
    %v2366 = vld [vmem:[#allocation2 + $0x2a0] sm:$0xff]
    %v2367 = vld [vmem:[#allocation2 + $0x2a8] sm:$0xff]
    %v2368 = vld [vmem:[#allocation2 + $0x2b0] sm:$0xff]
    %v2369 = vld [vmem:[#allocation2 + $0x2b8] sm:$0xff]
    %v2370 = vld [vmem:[#allocation2 + $0x2c0] sm:$0xff]
    %v2371 = vld [vmem:[#allocation2 + $0x2c8] sm:$0xff]
    %v2372 = vld [vmem:[#allocation2 + $0x2d0] sm:$0xff]
    %v2373 = vld [vmem:[#allocation2 + $0x2d8] sm:$0xff]
    %v2374 = vld [vmem:[#allocation2 + $0x2e0] sm:$0xff]
    %v2375 = vld [vmem:[#allocation2 + $0x2e8] sm:$0xff]
    %v2376 = vld [vmem:[#allocation2 + $0x2f0] sm:$0xff]
    %v2377 = vld [vmem:[#allocation2 + $0x2f8] sm:$0xff]
    %v2378 = vld [vmem:[#allocation2 + $0x300] sm:$0xff]
    %v2379 = vld [vmem:[#allocation2 + $0x308] sm:$0xff]
    %v2380 = vld [vmem:[#allocation2 + $0x310] sm:$0xff]
    %v2381 = vld [vmem:[#allocation2 + $0x318] sm:$0xff]
    %v2382 = vld [vmem:[#allocation2 + $0x320] sm:$0xff]
    %v2383 = vld [vmem:[#allocation2 + $0x328] sm:$0xff]
    %v2384 = vld [vmem:[#allocation2 + $0x330] sm:$0xff]
    %v2385 = vld [vmem:[#allocation2 + $0x338] sm:$0xff]
    %v2386 = vld [vmem:[#allocation2 + $0x340] sm:$0xff]
    %v2387 = vld [vmem:[#allocation2 + $0x348] sm:$0xff]
    %v2388 = vld [vmem:[#allocation2 + $0x350] sm:$0xff]
    %v2389 = vld [vmem:[#allocation2 + $0x358] sm:$0xff]
    %v2390 = vld [vmem:[#allocation2 + $0x360] sm:$0xff]
    %v2391 = vld [vmem:[#allocation2 + $0x368] sm:$0xff]
    %v2392 = vld [vmem:[#allocation2 + $0x370] sm:$0xff]
    %v2393 = vld [vmem:[#allocation2 + $0x378] sm:$0xff]
    %v2394 = vld [vmem:[#allocation2 + $0x380] sm:$0xff]
    %v2395 = vld [vmem:[#allocation2 + $0x388] sm:$0xff]
    %v2396 = vld [vmem:[#allocation2 + $0x390] sm:$0xff]
    %v2397 = vld [vmem:[#allocation2 + $0x398] sm:$0xff]
    %v2398 = vld [vmem:[#allocation2 + $0x3a0] sm:$0xff]
    %v2399 = vld [vmem:[#allocation2 + $0x3a8] sm:$0xff]
    %v2400 = vld [vmem:[#allocation2 + $0x3b0] sm:$0xff]
    %v2401 = vld [vmem:[#allocation2 + $0x3b8] sm:$0xff]
    %v2402 = vld [vmem:[#allocation2 + $0x3c0] sm:$0xff]
    %v2403 = vld [vmem:[#allocation2 + $0x3c8] sm:$0xff]
    %v2404 = vld [vmem:[#allocation2 + $0x3d0] sm:$0xff]
    %v2405 = vld [vmem:[#allocation2 + $0x3d8] sm:$0xff]
    %v2406 = vld [vmem:[#allocation2 + $0x3e0] sm:$0xff]
    %v2407 = vld [vmem:[#allocation2 + $0x3e8] sm:$0xff]
    %v2408 = vld [vmem:[#allocation2 + $0x3f0] sm:$0xff]
    %v2409 = vld [vmem:[#allocation2 + $0x3f8] sm:$0xff]
    %v2410 = vld [vmem:[#allocation2 + $0x400] sm:$0xff]
    %v2411 = vld [vmem:[#allocation2 + $0x408] sm:$0xff]
    %v2412 = vld [vmem:[#allocation2 + $0x410] sm:$0xff]
    %v2413 = vld [vmem:[#allocation2 + $0x418] sm:$0xff]
    %v2414 = vld [vmem:[#allocation2 + $0x420] sm:$0xff]
    %v2415 = vld [vmem:[#allocation2 + $0x428] sm:$0xff]
    %v2416 = vld [vmem:[#allocation2 + $0x430] sm:$0xff]
    %v2417 = vld [vmem:[#allocation2 + $0x438] sm:$0xff]
    %v2418 = vld [vmem:[#allocation2 + $0x440] sm:$0xff]
    %v2419 = vld [vmem:[#allocation2 + $0x448] sm:$0xff]
    %v2420 = vld [vmem:[#allocation2 + $0x450] sm:$0xff]
    %v2421 = vld [vmem:[#allocation2 + $0x458] sm:$0xff]
    %v2422 = vld [vmem:[#allocation2 + $0x460] sm:$0xff]
    %v2423 = vld [vmem:[#allocation2 + $0x468] sm:$0xff]
    %v2424 = vld [vmem:[#allocation2 + $0x470] sm:$0xff]
    %v2425 = vld [vmem:[#allocation2 + $0x478] sm:$0xff]
    %v2426 = vld [vmem:[#allocation2 + $0x480] sm:$0xff]
    %v2427 = vld [vmem:[#allocation2 + $0x488] sm:$0xff]
    %v2428 = vld [vmem:[#allocation2 + $0x490] sm:$0xff]
    %v2429 = vld [vmem:[#allocation2 + $0x498] sm:$0xff]
    %v2430 = vld [vmem:[#allocation2 + $0x4a0] sm:$0xff]
    %v2431 = vld [vmem:[#allocation2 + $0x4a8] sm:$0xff]
    %v2432 = vld [vmem:[#allocation2 + $0x4b0] sm:$0xff]
    %v2433 = vld [vmem:[#allocation2 + $0x4b8] sm:$0xff]
    %v2434 = vld [vmem:[#allocation2 + $0x4c0] sm:$0xff]
    %v2435 = vld [vmem:[#allocation2 + $0x4c8] sm:$0xff]
    %v2436 = vld [vmem:[#allocation2 + $0x4d0] sm:$0xff]
    %v2437 = vld [vmem:[#allocation2 + $0x4d8] sm:$0xff]
    %v2438 = vld [vmem:[#allocation2 + $0x4e0] sm:$0xff]
    %v2439 = vld [vmem:[#allocation2 + $0x4e8] sm:$0xff]
    %v2440 = vld [vmem:[#allocation2 + $0x4f0] sm:$0xff]
    %v2441 = vld [vmem:[#allocation2 + $0x4f8] sm:$0xff]
    %v2442 = vld [vmem:[#allocation2 + $0x500] sm:$0xff]
    %v2443 = vld [vmem:[#allocation2 + $0x508] sm:$0xff]
    %v2444 = vld [vmem:[#allocation2 + $0x510] sm:$0xff]
    %v2445 = vld [vmem:[#allocation2 + $0x518] sm:$0xff]
    %v2446 = vld [vmem:[#allocation2 + $0x520] sm:$0xff]
    %v2447 = vld [vmem:[#allocation2 + $0x528] sm:$0xff]
    %v2448 = vld [vmem:[#allocation2 + $0x530] sm:$0xff]
    %v2449 = vld [vmem:[#allocation2 + $0x538] sm:$0xff]
    %v2450 = vld [vmem:[#allocation2 + $0x540] sm:$0xff]
    %v2451 = vld [vmem:[#allocation2 + $0x548] sm:$0xff]
    %v2452 = vld [vmem:[#allocation2 + $0x550] sm:$0xff]
    %v2453 = vld [vmem:[#allocation2 + $0x558] sm:$0xff]
    %v2454 = vld [vmem:[#allocation2 + $0x560] sm:$0xff]
    %v2455 = vld [vmem:[#allocation2 + $0x568] sm:$0xff]
    %v2456 = vld [vmem:[#allocation2 + $0x570] sm:$0xff]
    %v2457 = vld [vmem:[#allocation2 + $0x578] sm:$0xff]
    %v2458 = vld [vmem:[#allocation2 + $0x580] sm:$0xff]
    %v2459 = vld [vmem:[#allocation2 + $0x588] sm:$0xff]
    %v2460 = vld [vmem:[#allocation2 + $0x590] sm:$0xff]
    %v2461 = vld [vmem:[#allocation2 + $0x598] sm:$0xff]
    %v2462 = vld [vmem:[#allocation2 + $0x5a0] sm:$0xff]
    %v2463 = vld [vmem:[#allocation2 + $0x5a8] sm:$0xff]
    %v2464 = vld [vmem:[#allocation2 + $0x5b0] sm:$0xff]
    %v2465 = vld [vmem:[#allocation2 + $0x5b8] sm:$0xff]
    %v2466 = vld [vmem:[#allocation2 + $0x5c0] sm:$0xff]
    %v2467 = vld [vmem:[#allocation2 + $0x5c8] sm:$0xff]
    %v2468 = vld [vmem:[#allocation2 + $0x5d0] sm:$0xff]
    %v2469 = vld [vmem:[#allocation2 + $0x5d8] sm:$0xff]
    %v2470 = vld [vmem:[#allocation2 + $0x5e0] sm:$0xff]
    %v2471 = vld [vmem:[#allocation2 + $0x5e8] sm:$0xff]
    %v2472 = vld [vmem:[#allocation2 + $0x5f0] sm:$0xff]
    %v2473 = vld [vmem:[#allocation2 + $0x5f8] sm:$0xff]
    %v2474 = vld [vmem:[#allocation2 + $0x600] sm:$0xff]
    %v2475 = vld [vmem:[#allocation2 + $0x608] sm:$0xff]
    %v2476 = vld [vmem:[#allocation2 + $0x610] sm:$0xff]
    %v2477 = vld [vmem:[#allocation2 + $0x618] sm:$0xff]
    %v2478 = vld [vmem:[#allocation2 + $0x620] sm:$0xff]
    %v2479 = vld [vmem:[#allocation2 + $0x628] sm:$0xff]
    %v2480 = vld [vmem:[#allocation2 + $0x630] sm:$0xff]
    %v2481 = vld [vmem:[#allocation2 + $0x638] sm:$0xff]
    %v2482 = vld [vmem:[#allocation2 + $0x640] sm:$0xff]
    %v2483 = vld [vmem:[#allocation2 + $0x648] sm:$0xff]
    %v2484 = vld [vmem:[#allocation2 + $0x650] sm:$0xff]
    %v2485 = vld [vmem:[#allocation2 + $0x658] sm:$0xff]
    %v2486 = vld [vmem:[#allocation2 + $0x660] sm:$0xff]
    %v2487 = vld [vmem:[#allocation2 + $0x668] sm:$0xff]
    %v2488 = vld [vmem:[#allocation2 + $0x670] sm:$0xff]
    %v2489 = vld [vmem:[#allocation2 + $0x678] sm:$0xff]
    %v2490 = vld [vmem:[#allocation2 + $0x680] sm:$0xff]
    %v2491 = vld [vmem:[#allocation2 + $0x688] sm:$0xff]
    %v2492 = vld [vmem:[#allocation2 + $0x690] sm:$0xff]
    %v2493 = vld [vmem:[#allocation2 + $0x698] sm:$0xff]
    %v2494 = vld [vmem:[#allocation2 + $0x6a0] sm:$0xff]
    %v2495 = vld [vmem:[#allocation2 + $0x6a8] sm:$0xff]
    %v2496 = vld [vmem:[#allocation2 + $0x6b0] sm:$0xff]
    %v2497 = vld [vmem:[#allocation2 + $0x6b8] sm:$0xff]
    %v2498 = vld [vmem:[#allocation2 + $0x6c0] sm:$0xff]
    %v2499 = vld [vmem:[#allocation2 + $0x6c8] sm:$0xff]
    %v2500 = vld [vmem:[#allocation2 + $0x6d0] sm:$0xff]
    %v2501 = vld [vmem:[#allocation2 + $0x6d8] sm:$0xff]
    %v2502 = vld [vmem:[#allocation2 + $0x6e0] sm:$0xff]
    %v2503 = vld [vmem:[#allocation2 + $0x6e8] sm:$0xff]
    %v2504 = vld [vmem:[#allocation2 + $0x6f0] sm:$0xff]
    %v2505 = vld [vmem:[#allocation2 + $0x6f8] sm:$0xff]
    %v2506 = vld [vmem:[#allocation2 + $0x700] sm:$0xff]
    %v2507 = vld [vmem:[#allocation2 + $0x708] sm:$0xff]
    %v2508 = vld [vmem:[#allocation2 + $0x710] sm:$0xff]
    %v2509 = vld [vmem:[#allocation2 + $0x718] sm:$0xff]
    %v2510 = vld [vmem:[#allocation2 + $0x720] sm:$0xff]
    %v2511 = vld [vmem:[#allocation2 + $0x728] sm:$0xff]
    %v2512 = vld [vmem:[#allocation2 + $0x730] sm:$0xff]
    %v2513 = vld [vmem:[#allocation2 + $0x738] sm:$0xff]
    %v2514 = vld [vmem:[#allocation2 + $0x740] sm:$0xff]
    %v2515 = vld [vmem:[#allocation2 + $0x748] sm:$0xff]
    %v2516 = vld [vmem:[#allocation2 + $0x750] sm:$0xff]
    %v2517 = vld [vmem:[#allocation2 + $0x758] sm:$0xff]
    %v2518 = vld [vmem:[#allocation2 + $0x760] sm:$0xff]
    %v2519 = vld [vmem:[#allocation2 + $0x768] sm:$0xff]
    %v2520 = vld [vmem:[#allocation2 + $0x770] sm:$0xff]
    %v2521 = vld [vmem:[#allocation2 + $0x778] sm:$0xff]
    %v2522 = vld [vmem:[#allocation2 + $0x780] sm:$0xff]
    %v2523 = vld [vmem:[#allocation2 + $0x788] sm:$0xff]
    %v2524 = vld [vmem:[#allocation2 + $0x790] sm:$0xff]
    %v2525 = vld [vmem:[#allocation2 + $0x798] sm:$0xff]
    %v2526 = vld [vmem:[#allocation2 + $0x7a0] sm:$0xff]
    %v2527 = vld [vmem:[#allocation2 + $0x7a8] sm:$0xff]
    %v2528 = vld [vmem:[#allocation2 + $0x7b0] sm:$0xff]
    %v2529 = vld [vmem:[#allocation2 + $0x7b8] sm:$0xff]
    %v2530 = vld [vmem:[#allocation2 + $0x7c0] sm:$0xff]
    %v2531 = vld [vmem:[#allocation2 + $0x7c8] sm:$0xff]
    %v2532 = vld [vmem:[#allocation2 + $0x7d0] sm:$0xff]
    %v2533 = vld [vmem:[#allocation2 + $0x7d8] sm:$0xff]
    %v2534 = vld [vmem:[#allocation2 + $0x7e0] sm:$0xff]
    %v2535 = vld [vmem:[#allocation2 + $0x7e8] sm:$0xff]
    %v2536 = vld [vmem:[#allocation2 + $0x7f0] sm:$0xff]
    %v2537 = vld [vmem:[#allocation2 + $0x7f8] sm:$0xff]
    %v2538 = vld [vmem:[%s6] sm:$0xf]
    %v2540 = vlaneseq
    %v2541 = vshrl.u32 %v2540, 7
    %v2542 = vsub.s32 0, %v2541
    %v2543 = vrot.slane %v2538, %v2542
    %v2544 = vlaneseq
    %v2545 = vshrl.u32 %v2544, 7
    %v2546 = vsub.s32 1, %v2545
    %v2547 = vrot.slane %v2538, %v2546
    %v2548 = vlaneseq
    %v2549 = vshrl.u32 %v2548, 7
    %v2550 = vsub.s32 2, %v2549
    %v2551 = vrot.slane %v2538, %v2550
    %v2552 = vlaneseq
    %v2553 = vshrl.u32 %v2552, 7
    %v2554 = vsub.s32 3, %v2553
    %v2555 = vrot.slane %v2538, %v2554
    %v2816 = vunpack.c.l.b16 %v2282
    %v2817 = vunpack.c.h.b16 %v2282
    %v2818 = vunpack.c.l.b16 %v2283
    %v2819 = vunpack.c.h.b16 %v2283
    %v2820 = vunpack.c.l.b16 %v2284
    %v2821 = vunpack.c.h.b16 %v2284
    %v2822 = vunpack.c.l.b16 %v2285
    %v2823 = vunpack.c.h.b16 %v2285
    %v2824 = vunpack.c.l.b16 %v2286
    %v2825 = vunpack.c.h.b16 %v2286
    %v2826 = vunpack.c.l.b16 %v2287
    %v2827 = vunpack.c.h.b16 %v2287
    %v2828 = vunpack.c.l.b16 %v2288
    %v2829 = vunpack.c.h.b16 %v2288
    %v2830 = vunpack.c.l.b16 %v2289
    %v2831 = vunpack.c.h.b16 %v2289
    %v2832 = vunpack.c.l.b16 %v2290
    %v2833 = vunpack.c.h.b16 %v2290
    %v2834 = vunpack.c.l.b16 %v2291
    %v2835 = vunpack.c.h.b16 %v2291
    %v2836 = vunpack.c.l.b16 %v2292
    %v2837 = vunpack.c.h.b16 %v2292
    %v2838 = vunpack.c.l.b16 %v2293
    %v2839 = vunpack.c.h.b16 %v2293
    %v2840 = vunpack.c.l.b16 %v2294
    %v2841 = vunpack.c.h.b16 %v2294
    %v2842 = vunpack.c.l.b16 %v2295
    %v2843 = vunpack.c.h.b16 %v2295
    %v2844 = vunpack.c.l.b16 %v2296
    %v2845 = vunpack.c.h.b16 %v2296
    %v2846 = vunpack.c.l.b16 %v2297
    %v2847 = vunpack.c.h.b16 %v2297
    %v2848 = vunpack.c.l.b16 %v2298
    %v2849 = vunpack.c.h.b16 %v2298
    %v2850 = vunpack.c.l.b16 %v2299
    %v2851 = vunpack.c.h.b16 %v2299
    %v2852 = vunpack.c.l.b16 %v2300
    %v2853 = vunpack.c.h.b16 %v2300
    %v2854 = vunpack.c.l.b16 %v2301
    %v2855 = vunpack.c.h.b16 %v2301
    %v2856 = vunpack.c.l.b16 %v2302
    %v2857 = vunpack.c.h.b16 %v2302
    %v2858 = vunpack.c.l.b16 %v2303
    %v2859 = vunpack.c.h.b16 %v2303
    %v2860 = vunpack.c.l.b16 %v2304
    %v2861 = vunpack.c.h.b16 %v2304
    %v2862 = vunpack.c.l.b16 %v2305
    %v2863 = vunpack.c.h.b16 %v2305
    %v2864 = vunpack.c.l.b16 %v2306
    %v2865 = vunpack.c.h.b16 %v2306
    %v2866 = vunpack.c.l.b16 %v2307
    %v2867 = vunpack.c.h.b16 %v2307
    %v2868 = vunpack.c.l.b16 %v2308
    %v2869 = vunpack.c.h.b16 %v2308
    %v2870 = vunpack.c.l.b16 %v2309
    %v2871 = vunpack.c.h.b16 %v2309
    %v2872 = vunpack.c.l.b16 %v2310
    %v2873 = vunpack.c.h.b16 %v2310
    %v2874 = vunpack.c.l.b16 %v2311
    %v2875 = vunpack.c.h.b16 %v2311
    %v2876 = vunpack.c.l.b16 %v2312
    %v2877 = vunpack.c.h.b16 %v2312
    %v2878 = vunpack.c.l.b16 %v2313
    %v2879 = vunpack.c.h.b16 %v2313
    %v2880 = vunpack.c.l.b16 %v2314
    %v2881 = vunpack.c.h.b16 %v2314
    %v2882 = vunpack.c.l.b16 %v2315
    %v2883 = vunpack.c.h.b16 %v2315
    %v2884 = vunpack.c.l.b16 %v2316
    %v2885 = vunpack.c.h.b16 %v2316
    %v2886 = vunpack.c.l.b16 %v2317
    %v2887 = vunpack.c.h.b16 %v2317
    %v2888 = vunpack.c.l.b16 %v2318
    %v2889 = vunpack.c.h.b16 %v2318
    %v2890 = vunpack.c.l.b16 %v2319
    %v2891 = vunpack.c.h.b16 %v2319
    %v2892 = vunpack.c.l.b16 %v2320
    %v2893 = vunpack.c.h.b16 %v2320
    %v2894 = vunpack.c.l.b16 %v2321
    %v2895 = vunpack.c.h.b16 %v2321
    %v2896 = vunpack.c.l.b16 %v2322
    %v2897 = vunpack.c.h.b16 %v2322
    %v2898 = vunpack.c.l.b16 %v2323
    %v2899 = vunpack.c.h.b16 %v2323
    %v2900 = vunpack.c.l.b16 %v2324
    %v2901 = vunpack.c.h.b16 %v2324
    %v2902 = vunpack.c.l.b16 %v2325
    %v2903 = vunpack.c.h.b16 %v2325
    %v2904 = vunpack.c.l.b16 %v2326
    %v2905 = vunpack.c.h.b16 %v2326
    %v2906 = vunpack.c.l.b16 %v2327
    %v2907 = vunpack.c.h.b16 %v2327
    %v2908 = vunpack.c.l.b16 %v2328
    %v2909 = vunpack.c.h.b16 %v2328
    %v2910 = vunpack.c.l.b16 %v2329
    %v2911 = vunpack.c.h.b16 %v2329
    %v2912 = vunpack.c.l.b16 %v2330
    %v2913 = vunpack.c.h.b16 %v2330
    %v2914 = vunpack.c.l.b16 %v2331
    %v2915 = vunpack.c.h.b16 %v2331
    %v2916 = vunpack.c.l.b16 %v2332
    %v2917 = vunpack.c.h.b16 %v2332
    %v2918 = vunpack.c.l.b16 %v2333
    %v2919 = vunpack.c.h.b16 %v2333
    %v2920 = vunpack.c.l.b16 %v2334
    %v2921 = vunpack.c.h.b16 %v2334
    %v2922 = vunpack.c.l.b16 %v2335
    %v2923 = vunpack.c.h.b16 %v2335
    %v2924 = vunpack.c.l.b16 %v2336
    %v2925 = vunpack.c.h.b16 %v2336
    %v2926 = vunpack.c.l.b16 %v2337
    %v2927 = vunpack.c.h.b16 %v2337
    %v2928 = vunpack.c.l.b16 %v2338
    %v2929 = vunpack.c.h.b16 %v2338
    %v2930 = vunpack.c.l.b16 %v2339
    %v2931 = vunpack.c.h.b16 %v2339
    %v2932 = vunpack.c.l.b16 %v2340
    %v2933 = vunpack.c.h.b16 %v2340
    %v2934 = vunpack.c.l.b16 %v2341
    %v2935 = vunpack.c.h.b16 %v2341
    %v2936 = vunpack.c.l.b16 %v2342
    %v2937 = vunpack.c.h.b16 %v2342
    %v2938 = vunpack.c.l.b16 %v2343
    %v2939 = vunpack.c.h.b16 %v2343
    %v2940 = vunpack.c.l.b16 %v2344
    %v2941 = vunpack.c.h.b16 %v2344
    %v2942 = vunpack.c.l.b16 %v2345
    %v2943 = vunpack.c.h.b16 %v2345
    %v2944 = vunpack.c.l.b16 %v2346
    %v2945 = vunpack.c.h.b16 %v2346
    %v2946 = vunpack.c.l.b16 %v2347
    %v2947 = vunpack.c.h.b16 %v2347
    %v2948 = vunpack.c.l.b16 %v2348
    %v2949 = vunpack.c.h.b16 %v2348
    %v2950 = vunpack.c.l.b16 %v2349
    %v2951 = vunpack.c.h.b16 %v2349
    %v2952 = vunpack.c.l.b16 %v2350
    %v2953 = vunpack.c.h.b16 %v2350
    %v2954 = vunpack.c.l.b16 %v2351
    %v2955 = vunpack.c.h.b16 %v2351
    %v2956 = vunpack.c.l.b16 %v2352
    %v2957 = vunpack.c.h.b16 %v2352
    %v2958 = vunpack.c.l.b16 %v2353
    %v2959 = vunpack.c.h.b16 %v2353
    %v2960 = vunpack.c.l.b16 %v2354
    %v2961 = vunpack.c.h.b16 %v2354
    %v2962 = vunpack.c.l.b16 %v2355
    %v2963 = vunpack.c.h.b16 %v2355
    %v2964 = vunpack.c.l.b16 %v2356
    %v2965 = vunpack.c.h.b16 %v2356
    %v2966 = vunpack.c.l.b16 %v2357
    %v2967 = vunpack.c.h.b16 %v2357
    %v2968 = vunpack.c.l.b16 %v2358
    %v2969 = vunpack.c.h.b16 %v2358
    %v2970 = vunpack.c.l.b16 %v2359
    %v2971 = vunpack.c.h.b16 %v2359
    %v2972 = vunpack.c.l.b16 %v2360
    %v2973 = vunpack.c.h.b16 %v2360
    %v2974 = vunpack.c.l.b16 %v2361
    %v2975 = vunpack.c.h.b16 %v2361
    %v2976 = vunpack.c.l.b16 %v2362
    %v2977 = vunpack.c.h.b16 %v2362
    %v2978 = vunpack.c.l.b16 %v2363
    %v2979 = vunpack.c.h.b16 %v2363
    %v2980 = vunpack.c.l.b16 %v2364
    %v2981 = vunpack.c.h.b16 %v2364
    %v2982 = vunpack.c.l.b16 %v2365
    %v2983 = vunpack.c.h.b16 %v2365
    %v2984 = vunpack.c.l.b16 %v2366
    %v2985 = vunpack.c.h.b16 %v2366
    %v2986 = vunpack.c.l.b16 %v2367
    %v2987 = vunpack.c.h.b16 %v2367
    %v2988 = vunpack.c.l.b16 %v2368
    %v2989 = vunpack.c.h.b16 %v2368
    %v2990 = vunpack.c.l.b16 %v2369
    %v2991 = vunpack.c.h.b16 %v2369
    %v2992 = vunpack.c.l.b16 %v2370
    %v2993 = vunpack.c.h.b16 %v2370
    %v2994 = vunpack.c.l.b16 %v2371
    %v2995 = vunpack.c.h.b16 %v2371
    %v2996 = vunpack.c.l.b16 %v2372
    %v2997 = vunpack.c.h.b16 %v2372
    %v2998 = vunpack.c.l.b16 %v2373
    %v2999 = vunpack.c.h.b16 %v2373
    %v3000 = vunpack.c.l.b16 %v2374
    %v3001 = vunpack.c.h.b16 %v2374
    %v3002 = vunpack.c.l.b16 %v2375
    %v3003 = vunpack.c.h.b16 %v2375
    %v3004 = vunpack.c.l.b16 %v2376
    %v3005 = vunpack.c.h.b16 %v2376
    %v3006 = vunpack.c.l.b16 %v2377
    %v3007 = vunpack.c.h.b16 %v2377
    %v3008 = vunpack.c.l.b16 %v2378
    %v3009 = vunpack.c.h.b16 %v2378
    %v3010 = vunpack.c.l.b16 %v2379
    %v3011 = vunpack.c.h.b16 %v2379
    %v3012 = vunpack.c.l.b16 %v2380
    %v3013 = vunpack.c.h.b16 %v2380
    %v3014 = vunpack.c.l.b16 %v2381
    %v3015 = vunpack.c.h.b16 %v2381
    %v3016 = vunpack.c.l.b16 %v2382
    %v3017 = vunpack.c.h.b16 %v2382
    %v3018 = vunpack.c.l.b16 %v2383
    %v3019 = vunpack.c.h.b16 %v2383
    %v3020 = vunpack.c.l.b16 %v2384
    %v3021 = vunpack.c.h.b16 %v2384
    %v3022 = vunpack.c.l.b16 %v2385
    %v3023 = vunpack.c.h.b16 %v2385
    %v3024 = vunpack.c.l.b16 %v2386
    %v3025 = vunpack.c.h.b16 %v2386
    %v3026 = vunpack.c.l.b16 %v2387
    %v3027 = vunpack.c.h.b16 %v2387
    %v3028 = vunpack.c.l.b16 %v2388
    %v3029 = vunpack.c.h.b16 %v2388
    %v3030 = vunpack.c.l.b16 %v2389
    %v3031 = vunpack.c.h.b16 %v2389
    %v3032 = vunpack.c.l.b16 %v2390
    %v3033 = vunpack.c.h.b16 %v2390
    %v3034 = vunpack.c.l.b16 %v2391
    %v3035 = vunpack.c.h.b16 %v2391
    %v3036 = vunpack.c.l.b16 %v2392
    %v3037 = vunpack.c.h.b16 %v2392
    %v3038 = vunpack.c.l.b16 %v2393
    %v3039 = vunpack.c.h.b16 %v2393
    %v3040 = vunpack.c.l.b16 %v2394
    %v3041 = vunpack.c.h.b16 %v2394
    %v3042 = vunpack.c.l.b16 %v2395
    %v3043 = vunpack.c.h.b16 %v2395
    %v3044 = vunpack.c.l.b16 %v2396
    %v3045 = vunpack.c.h.b16 %v2396
    %v3046 = vunpack.c.l.b16 %v2397
    %v3047 = vunpack.c.h.b16 %v2397
    %v3048 = vunpack.c.l.b16 %v2398
    %v3049 = vunpack.c.h.b16 %v2398
    %v3050 = vunpack.c.l.b16 %v2399
    %v3051 = vunpack.c.h.b16 %v2399
    %v3052 = vunpack.c.l.b16 %v2400
    %v3053 = vunpack.c.h.b16 %v2400
    %v3054 = vunpack.c.l.b16 %v2401
    %v3055 = vunpack.c.h.b16 %v2401
    %v3056 = vunpack.c.l.b16 %v2402
    %v3057 = vunpack.c.h.b16 %v2402
    %v3058 = vunpack.c.l.b16 %v2403
    %v3059 = vunpack.c.h.b16 %v2403
    %v3060 = vunpack.c.l.b16 %v2404
    %v3061 = vunpack.c.h.b16 %v2404
    %v3062 = vunpack.c.l.b16 %v2405
    %v3063 = vunpack.c.h.b16 %v2405
    %v3064 = vunpack.c.l.b16 %v2406
    %v3065 = vunpack.c.h.b16 %v2406
    %v3066 = vunpack.c.l.b16 %v2407
    %v3067 = vunpack.c.h.b16 %v2407
    %v3068 = vunpack.c.l.b16 %v2408
    %v3069 = vunpack.c.h.b16 %v2408
    %v3070 = vunpack.c.l.b16 %v2409
    %v3071 = vunpack.c.h.b16 %v2409
    %v3072 = vunpack.c.l.b16 %v2410
    %v3073 = vunpack.c.h.b16 %v2410
    %v3074 = vunpack.c.l.b16 %v2411
    %v3075 = vunpack.c.h.b16 %v2411
    %v3076 = vunpack.c.l.b16 %v2412
    %v3077 = vunpack.c.h.b16 %v2412
    %v3078 = vunpack.c.l.b16 %v2413
    %v3079 = vunpack.c.h.b16 %v2413
    %v3080 = vunpack.c.l.b16 %v2414
    %v3081 = vunpack.c.h.b16 %v2414
    %v3082 = vunpack.c.l.b16 %v2415
    %v3083 = vunpack.c.h.b16 %v2415
    %v3084 = vunpack.c.l.b16 %v2416
    %v3085 = vunpack.c.h.b16 %v2416
    %v3086 = vunpack.c.l.b16 %v2417
    %v3087 = vunpack.c.h.b16 %v2417
    %v3088 = vunpack.c.l.b16 %v2418
    %v3089 = vunpack.c.h.b16 %v2418
    %v3090 = vunpack.c.l.b16 %v2419
    %v3091 = vunpack.c.h.b16 %v2419
    %v3092 = vunpack.c.l.b16 %v2420
    %v3093 = vunpack.c.h.b16 %v2420
    %v3094 = vunpack.c.l.b16 %v2421
    %v3095 = vunpack.c.h.b16 %v2421
    %v3096 = vunpack.c.l.b16 %v2422
    %v3097 = vunpack.c.h.b16 %v2422
    %v3098 = vunpack.c.l.b16 %v2423
    %v3099 = vunpack.c.h.b16 %v2423
    %v3100 = vunpack.c.l.b16 %v2424
    %v3101 = vunpack.c.h.b16 %v2424
    %v3102 = vunpack.c.l.b16 %v2425
    %v3103 = vunpack.c.h.b16 %v2425
    %v3104 = vunpack.c.l.b16 %v2426
    %v3105 = vunpack.c.h.b16 %v2426
    %v3106 = vunpack.c.l.b16 %v2427
    %v3107 = vunpack.c.h.b16 %v2427
    %v3108 = vunpack.c.l.b16 %v2428
    %v3109 = vunpack.c.h.b16 %v2428
    %v3110 = vunpack.c.l.b16 %v2429
    %v3111 = vunpack.c.h.b16 %v2429
    %v3112 = vunpack.c.l.b16 %v2430
    %v3113 = vunpack.c.h.b16 %v2430
    %v3114 = vunpack.c.l.b16 %v2431
    %v3115 = vunpack.c.h.b16 %v2431
    %v3116 = vunpack.c.l.b16 %v2432
    %v3117 = vunpack.c.h.b16 %v2432
    %v3118 = vunpack.c.l.b16 %v2433
    %v3119 = vunpack.c.h.b16 %v2433
    %v3120 = vunpack.c.l.b16 %v2434
    %v3121 = vunpack.c.h.b16 %v2434
    %v3122 = vunpack.c.l.b16 %v2435
    %v3123 = vunpack.c.h.b16 %v2435
    %v3124 = vunpack.c.l.b16 %v2436
    %v3125 = vunpack.c.h.b16 %v2436
    %v3126 = vunpack.c.l.b16 %v2437
    %v3127 = vunpack.c.h.b16 %v2437
    %v3128 = vunpack.c.l.b16 %v2438
    %v3129 = vunpack.c.h.b16 %v2438
    %v3130 = vunpack.c.l.b16 %v2439
    %v3131 = vunpack.c.h.b16 %v2439
    %v3132 = vunpack.c.l.b16 %v2440
    %v3133 = vunpack.c.h.b16 %v2440
    %v3134 = vunpack.c.l.b16 %v2441
    %v3135 = vunpack.c.h.b16 %v2441
    %v3136 = vunpack.c.l.b16 %v2442
    %v3137 = vunpack.c.h.b16 %v2442
    %v3138 = vunpack.c.l.b16 %v2443
    %v3139 = vunpack.c.h.b16 %v2443
    %v3140 = vunpack.c.l.b16 %v2444
    %v3141 = vunpack.c.h.b16 %v2444
    %v3142 = vunpack.c.l.b16 %v2445
    %v3143 = vunpack.c.h.b16 %v2445
    %v3144 = vunpack.c.l.b16 %v2446
    %v3145 = vunpack.c.h.b16 %v2446
    %v3146 = vunpack.c.l.b16 %v2447
    %v3147 = vunpack.c.h.b16 %v2447
    %v3148 = vunpack.c.l.b16 %v2448
    %v3149 = vunpack.c.h.b16 %v2448
    %v3150 = vunpack.c.l.b16 %v2449
    %v3151 = vunpack.c.h.b16 %v2449
    %v3152 = vunpack.c.l.b16 %v2450
    %v3153 = vunpack.c.h.b16 %v2450
    %v3154 = vunpack.c.l.b16 %v2451
    %v3155 = vunpack.c.h.b16 %v2451
    %v3156 = vunpack.c.l.b16 %v2452
    %v3157 = vunpack.c.h.b16 %v2452
    %v3158 = vunpack.c.l.b16 %v2453
    %v3159 = vunpack.c.h.b16 %v2453
    %v3160 = vunpack.c.l.b16 %v2454
    %v3161 = vunpack.c.h.b16 %v2454
    %v3162 = vunpack.c.l.b16 %v2455
    %v3163 = vunpack.c.h.b16 %v2455
    %v3164 = vunpack.c.l.b16 %v2456
    %v3165 = vunpack.c.h.b16 %v2456
    %v3166 = vunpack.c.l.b16 %v2457
    %v3167 = vunpack.c.h.b16 %v2457
    %v3168 = vunpack.c.l.b16 %v2458
    %v3169 = vunpack.c.h.b16 %v2458
    %v3170 = vunpack.c.l.b16 %v2459
    %v3171 = vunpack.c.h.b16 %v2459
    %v3172 = vunpack.c.l.b16 %v2460
    %v3173 = vunpack.c.h.b16 %v2460
    %v3174 = vunpack.c.l.b16 %v2461
    %v3175 = vunpack.c.h.b16 %v2461
    %v3176 = vunpack.c.l.b16 %v2462
    %v3177 = vunpack.c.h.b16 %v2462
    %v3178 = vunpack.c.l.b16 %v2463
    %v3179 = vunpack.c.h.b16 %v2463
    %v3180 = vunpack.c.l.b16 %v2464
    %v3181 = vunpack.c.h.b16 %v2464
    %v3182 = vunpack.c.l.b16 %v2465
    %v3183 = vunpack.c.h.b16 %v2465
    %v3184 = vunpack.c.l.b16 %v2466
    %v3185 = vunpack.c.h.b16 %v2466
    %v3186 = vunpack.c.l.b16 %v2467
    %v3187 = vunpack.c.h.b16 %v2467
    %v3188 = vunpack.c.l.b16 %v2468
    %v3189 = vunpack.c.h.b16 %v2468
    %v3190 = vunpack.c.l.b16 %v2469
    %v3191 = vunpack.c.h.b16 %v2469
    %v3192 = vunpack.c.l.b16 %v2470
    %v3193 = vunpack.c.h.b16 %v2470
    %v3194 = vunpack.c.l.b16 %v2471
    %v3195 = vunpack.c.h.b16 %v2471
    %v3196 = vunpack.c.l.b16 %v2472
    %v3197 = vunpack.c.h.b16 %v2472
    %v3198 = vunpack.c.l.b16 %v2473
    %v3199 = vunpack.c.h.b16 %v2473
    %v3200 = vunpack.c.l.b16 %v2474
    %v3201 = vunpack.c.h.b16 %v2474
    %v3202 = vunpack.c.l.b16 %v2475
    %v3203 = vunpack.c.h.b16 %v2475
    %v3204 = vunpack.c.l.b16 %v2476
    %v3205 = vunpack.c.h.b16 %v2476
    %v3206 = vunpack.c.l.b16 %v2477
    %v3207 = vunpack.c.h.b16 %v2477
    %v3208 = vunpack.c.l.b16 %v2478
    %v3209 = vunpack.c.h.b16 %v2478
    %v3210 = vunpack.c.l.b16 %v2479
    %v3211 = vunpack.c.h.b16 %v2479
    %v3212 = vunpack.c.l.b16 %v2480
    %v3213 = vunpack.c.h.b16 %v2480
    %v3214 = vunpack.c.l.b16 %v2481
    %v3215 = vunpack.c.h.b16 %v2481
    %v3216 = vunpack.c.l.b16 %v2482
    %v3217 = vunpack.c.h.b16 %v2482
    %v3218 = vunpack.c.l.b16 %v2483
    %v3219 = vunpack.c.h.b16 %v2483
    %v3220 = vunpack.c.l.b16 %v2484
    %v3221 = vunpack.c.h.b16 %v2484
    %v3222 = vunpack.c.l.b16 %v2485
    %v3223 = vunpack.c.h.b16 %v2485
    %v3224 = vunpack.c.l.b16 %v2486
    %v3225 = vunpack.c.h.b16 %v2486
    %v3226 = vunpack.c.l.b16 %v2487
    %v3227 = vunpack.c.h.b16 %v2487
    %v3228 = vunpack.c.l.b16 %v2488
    %v3229 = vunpack.c.h.b16 %v2488
    %v3230 = vunpack.c.l.b16 %v2489
    %v3231 = vunpack.c.h.b16 %v2489
    %v3232 = vunpack.c.l.b16 %v2490
    %v3233 = vunpack.c.h.b16 %v2490
    %v3234 = vunpack.c.l.b16 %v2491
    %v3235 = vunpack.c.h.b16 %v2491
    %v3236 = vunpack.c.l.b16 %v2492
    %v3237 = vunpack.c.h.b16 %v2492
    %v3238 = vunpack.c.l.b16 %v2493
    %v3239 = vunpack.c.h.b16 %v2493
    %v3240 = vunpack.c.l.b16 %v2494
    %v3241 = vunpack.c.h.b16 %v2494
    %v3242 = vunpack.c.l.b16 %v2495
    %v3243 = vunpack.c.h.b16 %v2495
    %v3244 = vunpack.c.l.b16 %v2496
    %v3245 = vunpack.c.h.b16 %v2496
    %v3246 = vunpack.c.l.b16 %v2497
    %v3247 = vunpack.c.h.b16 %v2497
    %v3248 = vunpack.c.l.b16 %v2498
    %v3249 = vunpack.c.h.b16 %v2498
    %v3250 = vunpack.c.l.b16 %v2499
    %v3251 = vunpack.c.h.b16 %v2499
    %v3252 = vunpack.c.l.b16 %v2500
    %v3253 = vunpack.c.h.b16 %v2500
    %v3254 = vunpack.c.l.b16 %v2501
    %v3255 = vunpack.c.h.b16 %v2501
    %v3256 = vunpack.c.l.b16 %v2502
    %v3257 = vunpack.c.h.b16 %v2502
    %v3258 = vunpack.c.l.b16 %v2503
    %v3259 = vunpack.c.h.b16 %v2503
    %v3260 = vunpack.c.l.b16 %v2504
    %v3261 = vunpack.c.h.b16 %v2504
    %v3262 = vunpack.c.l.b16 %v2505
    %v3263 = vunpack.c.h.b16 %v2505
    %v3264 = vunpack.c.l.b16 %v2506
    %v3265 = vunpack.c.h.b16 %v2506
    %v3266 = vunpack.c.l.b16 %v2507
    %v3267 = vunpack.c.h.b16 %v2507
    %v3268 = vunpack.c.l.b16 %v2508
    %v3269 = vunpack.c.h.b16 %v2508
    %v3270 = vunpack.c.l.b16 %v2509
    %v3271 = vunpack.c.h.b16 %v2509
    %v3272 = vunpack.c.l.b16 %v2510
    %v3273 = vunpack.c.h.b16 %v2510
    %v3274 = vunpack.c.l.b16 %v2511
    %v3275 = vunpack.c.h.b16 %v2511
    %v3276 = vunpack.c.l.b16 %v2512
    %v3277 = vunpack.c.h.b16 %v2512
    %v3278 = vunpack.c.l.b16 %v2513
    %v3279 = vunpack.c.h.b16 %v2513
    %v3280 = vunpack.c.l.b16 %v2514
    %v3281 = vunpack.c.h.b16 %v2514
    %v3282 = vunpack.c.l.b16 %v2515
    %v3283 = vunpack.c.h.b16 %v2515
    %v3284 = vunpack.c.l.b16 %v2516
    %v3285 = vunpack.c.h.b16 %v2516
    %v3286 = vunpack.c.l.b16 %v2517
    %v3287 = vunpack.c.h.b16 %v2517
    %v3288 = vunpack.c.l.b16 %v2518
    %v3289 = vunpack.c.h.b16 %v2518
    %v3290 = vunpack.c.l.b16 %v2519
    %v3291 = vunpack.c.h.b16 %v2519
    %v3292 = vunpack.c.l.b16 %v2520
    %v3293 = vunpack.c.h.b16 %v2520
    %v3294 = vunpack.c.l.b16 %v2521
    %v3295 = vunpack.c.h.b16 %v2521
    %v3296 = vunpack.c.l.b16 %v2522
    %v3297 = vunpack.c.h.b16 %v2522
    %v3298 = vunpack.c.l.b16 %v2523
    %v3299 = vunpack.c.h.b16 %v2523
    %v3300 = vunpack.c.l.b16 %v2524
    %v3301 = vunpack.c.h.b16 %v2524
    %v3302 = vunpack.c.l.b16 %v2525
    %v3303 = vunpack.c.h.b16 %v2525
    %v3304 = vunpack.c.l.b16 %v2526
    %v3305 = vunpack.c.h.b16 %v2526
    %v3306 = vunpack.c.l.b16 %v2527
    %v3307 = vunpack.c.h.b16 %v2527
    %v3308 = vunpack.c.l.b16 %v2528
    %v3309 = vunpack.c.h.b16 %v2528
    %v3310 = vunpack.c.l.b16 %v2529
    %v3311 = vunpack.c.h.b16 %v2529
    %v3312 = vunpack.c.l.b16 %v2530
    %v3313 = vunpack.c.h.b16 %v2530
    %v3314 = vunpack.c.l.b16 %v2531
    %v3315 = vunpack.c.h.b16 %v2531
    %v3316 = vunpack.c.l.b16 %v2532
    %v3317 = vunpack.c.h.b16 %v2532
    %v3318 = vunpack.c.l.b16 %v2533
    %v3319 = vunpack.c.h.b16 %v2533
    %v3320 = vunpack.c.l.b16 %v2534
    %v3321 = vunpack.c.h.b16 %v2534
    %v3322 = vunpack.c.l.b16 %v2535
    %v3323 = vunpack.c.h.b16 %v2535
    %v3324 = vunpack.c.l.b16 %v2536
    %v3325 = vunpack.c.h.b16 %v2536
    %v3326 = vunpack.c.l.b16 %v2537
    %v3327 = vunpack.c.h.b16 %v2537
    %v3328 = vpack.c.b16 %v2820, %v2816
    %v3329 = vpack.c.b16 %v2821, %v2817
    %v3330 = vpack.c.b16 %v2822, %v2818
    %v3331 = vpack.c.b16 %v2823, %v2819
    %v3332 = vpack.c.b16 %v2828, %v2824
    %v3333 = vpack.c.b16 %v2829, %v2825
    %v3334 = vpack.c.b16 %v2830, %v2826
    %v3335 = vpack.c.b16 %v2831, %v2827
    %v3336 = vpack.c.b16 %v2836, %v2832
    %v3337 = vpack.c.b16 %v2837, %v2833
    %v3338 = vpack.c.b16 %v2838, %v2834
    %v3339 = vpack.c.b16 %v2839, %v2835
    %v3340 = vpack.c.b16 %v2844, %v2840
    %v3341 = vpack.c.b16 %v2845, %v2841
    %v3342 = vpack.c.b16 %v2846, %v2842
    %v3343 = vpack.c.b16 %v2847, %v2843
    %v3344 = vpack.c.b16 %v2852, %v2848
    %v3345 = vpack.c.b16 %v2853, %v2849
    %v3346 = vpack.c.b16 %v2854, %v2850
    %v3347 = vpack.c.b16 %v2855, %v2851
    %v3348 = vpack.c.b16 %v2860, %v2856
    %v3349 = vpack.c.b16 %v2861, %v2857
    %v3350 = vpack.c.b16 %v2862, %v2858
    %v3351 = vpack.c.b16 %v2863, %v2859
    %v3352 = vpack.c.b16 %v2868, %v2864
    %v3353 = vpack.c.b16 %v2869, %v2865
    %v3354 = vpack.c.b16 %v2870, %v2866
    %v3355 = vpack.c.b16 %v2871, %v2867
    %v3356 = vpack.c.b16 %v2876, %v2872
    %v3357 = vpack.c.b16 %v2877, %v2873
    %v3358 = vpack.c.b16 %v2878, %v2874
    %v3359 = vpack.c.b16 %v2879, %v2875
    %v3360 = vpack.c.b16 %v2884, %v2880
    %v3361 = vpack.c.b16 %v2885, %v2881
    %v3362 = vpack.c.b16 %v2886, %v2882
    %v3363 = vpack.c.b16 %v2887, %v2883
    %v3364 = vpack.c.b16 %v2892, %v2888
    %v3365 = vpack.c.b16 %v2893, %v2889
    %v3366 = vpack.c.b16 %v2894, %v2890
    %v3367 = vpack.c.b16 %v2895, %v2891
    %v3368 = vpack.c.b16 %v2900, %v2896
    %v3369 = vpack.c.b16 %v2901, %v2897
    %v3370 = vpack.c.b16 %v2902, %v2898
    %v3371 = vpack.c.b16 %v2903, %v2899
    %v3372 = vpack.c.b16 %v2908, %v2904
    %v3373 = vpack.c.b16 %v2909, %v2905
    %v3374 = vpack.c.b16 %v2910, %v2906
    %v3375 = vpack.c.b16 %v2911, %v2907
    %v3376 = vpack.c.b16 %v2916, %v2912
    %v3377 = vpack.c.b16 %v2917, %v2913
    %v3378 = vpack.c.b16 %v2918, %v2914
    %v3379 = vpack.c.b16 %v2919, %v2915
    %v3380 = vpack.c.b16 %v2924, %v2920
    %v3381 = vpack.c.b16 %v2925, %v2921
    %v3382 = vpack.c.b16 %v2926, %v2922
    %v3383 = vpack.c.b16 %v2927, %v2923
    %v3384 = vpack.c.b16 %v2932, %v2928
    %v3385 = vpack.c.b16 %v2933, %v2929
    %v3386 = vpack.c.b16 %v2934, %v2930
    %v3387 = vpack.c.b16 %v2935, %v2931
    %v3388 = vpack.c.b16 %v2940, %v2936
    %v3389 = vpack.c.b16 %v2941, %v2937
    %v3390 = vpack.c.b16 %v2942, %v2938
    %v3391 = vpack.c.b16 %v2943, %v2939
    %v3392 = vpack.c.b16 %v2948, %v2944
    %v3393 = vpack.c.b16 %v2949, %v2945
    %v3394 = vpack.c.b16 %v2950, %v2946
    %v3395 = vpack.c.b16 %v2951, %v2947
    %v3396 = vpack.c.b16 %v2956, %v2952
    %v3397 = vpack.c.b16 %v2957, %v2953
    %v3398 = vpack.c.b16 %v2958, %v2954
    %v3399 = vpack.c.b16 %v2959, %v2955
    %v3400 = vpack.c.b16 %v2964, %v2960
    %v3401 = vpack.c.b16 %v2965, %v2961
    %v3402 = vpack.c.b16 %v2966, %v2962
    %v3403 = vpack.c.b16 %v2967, %v2963
    %v3404 = vpack.c.b16 %v2972, %v2968
    %v3405 = vpack.c.b16 %v2973, %v2969
    %v3406 = vpack.c.b16 %v2974, %v2970
    %v3407 = vpack.c.b16 %v2975, %v2971
    %v3408 = vpack.c.b16 %v2980, %v2976
    %v3409 = vpack.c.b16 %v2981, %v2977
    %v3410 = vpack.c.b16 %v2982, %v2978
    %v3411 = vpack.c.b16 %v2983, %v2979
    %v3412 = vpack.c.b16 %v2988, %v2984
    %v3413 = vpack.c.b16 %v2989, %v2985
    %v3414 = vpack.c.b16 %v2990, %v2986
    %v3415 = vpack.c.b16 %v2991, %v2987
    %v3416 = vpack.c.b16 %v2996, %v2992
    %v3417 = vpack.c.b16 %v2997, %v2993
    %v3418 = vpack.c.b16 %v2998, %v2994
    %v3419 = vpack.c.b16 %v2999, %v2995
    %v3420 = vpack.c.b16 %v3004, %v3000
    %v3421 = vpack.c.b16 %v3005, %v3001
    %v3422 = vpack.c.b16 %v3006, %v3002
    %v3423 = vpack.c.b16 %v3007, %v3003
    %v3424 = vpack.c.b16 %v3012, %v3008
    %v3425 = vpack.c.b16 %v3013, %v3009
    %v3426 = vpack.c.b16 %v3014, %v3010
    %v3427 = vpack.c.b16 %v3015, %v3011
    %v3428 = vpack.c.b16 %v3020, %v3016
    %v3429 = vpack.c.b16 %v3021, %v3017
    %v3430 = vpack.c.b16 %v3022, %v3018
    %v3431 = vpack.c.b16 %v3023, %v3019
    %v3432 = vpack.c.b16 %v3028, %v3024
    %v3433 = vpack.c.b16 %v3029, %v3025
    %v3434 = vpack.c.b16 %v3030, %v3026
    %v3435 = vpack.c.b16 %v3031, %v3027
    %v3436 = vpack.c.b16 %v3036, %v3032
    %v3437 = vpack.c.b16 %v3037, %v3033
    %v3438 = vpack.c.b16 %v3038, %v3034
    %v3439 = vpack.c.b16 %v3039, %v3035
    %v3440 = vpack.c.b16 %v3044, %v3040
    %v3441 = vpack.c.b16 %v3045, %v3041
    %v3442 = vpack.c.b16 %v3046, %v3042
    %v3443 = vpack.c.b16 %v3047, %v3043
    %v3444 = vpack.c.b16 %v3052, %v3048
    %v3445 = vpack.c.b16 %v3053, %v3049
    %v3446 = vpack.c.b16 %v3054, %v3050
    %v3447 = vpack.c.b16 %v3055, %v3051
    %v3448 = vpack.c.b16 %v3060, %v3056
    %v3449 = vpack.c.b16 %v3061, %v3057
    %v3450 = vpack.c.b16 %v3062, %v3058
    %v3451 = vpack.c.b16 %v3063, %v3059
    %v3452 = vpack.c.b16 %v3068, %v3064
    %v3453 = vpack.c.b16 %v3069, %v3065
    %v3454 = vpack.c.b16 %v3070, %v3066
    %v3455 = vpack.c.b16 %v3071, %v3067
    %v3456 = vpack.c.b16 %v3076, %v3072
    %v3457 = vpack.c.b16 %v3077, %v3073
    %v3458 = vpack.c.b16 %v3078, %v3074
    %v3459 = vpack.c.b16 %v3079, %v3075
    %v3460 = vpack.c.b16 %v3084, %v3080
    %v3461 = vpack.c.b16 %v3085, %v3081
    %v3462 = vpack.c.b16 %v3086, %v3082
    %v3463 = vpack.c.b16 %v3087, %v3083
    %v3464 = vpack.c.b16 %v3092, %v3088
    %v3465 = vpack.c.b16 %v3093, %v3089
    %v3466 = vpack.c.b16 %v3094, %v3090
    %v3467 = vpack.c.b16 %v3095, %v3091
    %v3468 = vpack.c.b16 %v3100, %v3096
    %v3469 = vpack.c.b16 %v3101, %v3097
    %v3470 = vpack.c.b16 %v3102, %v3098
    %v3471 = vpack.c.b16 %v3103, %v3099
    %v3472 = vpack.c.b16 %v3108, %v3104
    %v3473 = vpack.c.b16 %v3109, %v3105
    %v3474 = vpack.c.b16 %v3110, %v3106
    %v3475 = vpack.c.b16 %v3111, %v3107
    %v3476 = vpack.c.b16 %v3116, %v3112
    %v3477 = vpack.c.b16 %v3117, %v3113
    %v3478 = vpack.c.b16 %v3118, %v3114
    %v3479 = vpack.c.b16 %v3119, %v3115
    %v3480 = vpack.c.b16 %v3124, %v3120
    %v3481 = vpack.c.b16 %v3125, %v3121
    %v3482 = vpack.c.b16 %v3126, %v3122
    %v3483 = vpack.c.b16 %v3127, %v3123
    %v3484 = vpack.c.b16 %v3132, %v3128
    %v3485 = vpack.c.b16 %v3133, %v3129
    %v3486 = vpack.c.b16 %v3134, %v3130
    %v3487 = vpack.c.b16 %v3135, %v3131
    %v3488 = vpack.c.b16 %v3140, %v3136
    %v3489 = vpack.c.b16 %v3141, %v3137
    %v3490 = vpack.c.b16 %v3142, %v3138
    %v3491 = vpack.c.b16 %v3143, %v3139
    %v3492 = vpack.c.b16 %v3148, %v3144
    %v3493 = vpack.c.b16 %v3149, %v3145
    %v3494 = vpack.c.b16 %v3150, %v3146
    %v3495 = vpack.c.b16 %v3151, %v3147
    %v3496 = vpack.c.b16 %v3156, %v3152
    %v3497 = vpack.c.b16 %v3157, %v3153
    %v3498 = vpack.c.b16 %v3158, %v3154
    %v3499 = vpack.c.b16 %v3159, %v3155
    %v3500 = vpack.c.b16 %v3164, %v3160
    %v3501 = vpack.c.b16 %v3165, %v3161
    %v3502 = vpack.c.b16 %v3166, %v3162
    %v3503 = vpack.c.b16 %v3167, %v3163
    %v3504 = vpack.c.b16 %v3172, %v3168
    %v3505 = vpack.c.b16 %v3173, %v3169
    %v3506 = vpack.c.b16 %v3174, %v3170
    %v3507 = vpack.c.b16 %v3175, %v3171
    %v3508 = vpack.c.b16 %v3180, %v3176
    %v3509 = vpack.c.b16 %v3181, %v3177
    %v3510 = vpack.c.b16 %v3182, %v3178
    %v3511 = vpack.c.b16 %v3183, %v3179
    %v3512 = vpack.c.b16 %v3188, %v3184
    %v3513 = vpack.c.b16 %v3189, %v3185
    %v3514 = vpack.c.b16 %v3190, %v3186
    %v3515 = vpack.c.b16 %v3191, %v3187
    %v3516 = vpack.c.b16 %v3196, %v3192
    %v3517 = vpack.c.b16 %v3197, %v3193
    %v3518 = vpack.c.b16 %v3198, %v3194
    %v3519 = vpack.c.b16 %v3199, %v3195
    %v3520 = vpack.c.b16 %v3204, %v3200
    %v3521 = vpack.c.b16 %v3205, %v3201
    %v3522 = vpack.c.b16 %v3206, %v3202
    %v3523 = vpack.c.b16 %v3207, %v3203
    %v3524 = vpack.c.b16 %v3212, %v3208
    %v3525 = vpack.c.b16 %v3213, %v3209
    %v3526 = vpack.c.b16 %v3214, %v3210
    %v3527 = vpack.c.b16 %v3215, %v3211
    %v3528 = vpack.c.b16 %v3220, %v3216
    %v3529 = vpack.c.b16 %v3221, %v3217
    %v3530 = vpack.c.b16 %v3222, %v3218
    %v3531 = vpack.c.b16 %v3223, %v3219
    %v3532 = vpack.c.b16 %v3228, %v3224
    %v3533 = vpack.c.b16 %v3229, %v3225
    %v3534 = vpack.c.b16 %v3230, %v3226
    %v3535 = vpack.c.b16 %v3231, %v3227
    %v3536 = vpack.c.b16 %v3236, %v3232
    %v3537 = vpack.c.b16 %v3237, %v3233
    %v3538 = vpack.c.b16 %v3238, %v3234
    %v3539 = vpack.c.b16 %v3239, %v3235
    %v3540 = vpack.c.b16 %v3244, %v3240
    %v3541 = vpack.c.b16 %v3245, %v3241
    %v3542 = vpack.c.b16 %v3246, %v3242
    %v3543 = vpack.c.b16 %v3247, %v3243
    %v3544 = vpack.c.b16 %v3252, %v3248
    %v3545 = vpack.c.b16 %v3253, %v3249
    %v3546 = vpack.c.b16 %v3254, %v3250
    %v3547 = vpack.c.b16 %v3255, %v3251
    %v3548 = vpack.c.b16 %v3260, %v3256
    %v3549 = vpack.c.b16 %v3261, %v3257
    %v3550 = vpack.c.b16 %v3262, %v3258
    %v3551 = vpack.c.b16 %v3263, %v3259
    %v3552 = vpack.c.b16 %v3268, %v3264
    %v3553 = vpack.c.b16 %v3269, %v3265
    %v3554 = vpack.c.b16 %v3270, %v3266
    %v3555 = vpack.c.b16 %v3271, %v3267
    %v3556 = vpack.c.b16 %v3276, %v3272
    %v3557 = vpack.c.b16 %v3277, %v3273
    %v3558 = vpack.c.b16 %v3278, %v3274
    %v3559 = vpack.c.b16 %v3279, %v3275
    %v3560 = vpack.c.b16 %v3284, %v3280
    %v3561 = vpack.c.b16 %v3285, %v3281
    %v3562 = vpack.c.b16 %v3286, %v3282
    %v3563 = vpack.c.b16 %v3287, %v3283
    %v3564 = vpack.c.b16 %v3292, %v3288
    %v3565 = vpack.c.b16 %v3293, %v3289
    %v3566 = vpack.c.b16 %v3294, %v3290
    %v3567 = vpack.c.b16 %v3295, %v3291
    %v3568 = vpack.c.b16 %v3300, %v3296
    %v3569 = vpack.c.b16 %v3301, %v3297
    %v3570 = vpack.c.b16 %v3302, %v3298
    %v3571 = vpack.c.b16 %v3303, %v3299
    %v3572 = vpack.c.b16 %v3308, %v3304
    %v3573 = vpack.c.b16 %v3309, %v3305
    %v3574 = vpack.c.b16 %v3310, %v3306
    %v3575 = vpack.c.b16 %v3311, %v3307
    %v3576 = vpack.c.b16 %v3316, %v3312
    %v3577 = vpack.c.b16 %v3317, %v3313
    %v3578 = vpack.c.b16 %v3318, %v3314
    %v3579 = vpack.c.b16 %v3319, %v3315
    %v3580 = vpack.c.b16 %v3324, %v3320
    %v3581 = vpack.c.b16 %v3325, %v3321
    %v3582 = vpack.c.b16 %v3326, %v3322
    %v3583 = vpack.c.b16 %v3327, %v3323
    %3840 = vmatprep.subr.bf16.mxu0 %v3329
    %3841 = vmatpush1.bf16.msra.mxu0 %v3328
    %3842 = vmatprep.subr.bf16.mxu0 %v3333
    %3843 = vmatpush1.bf16.msra.mxu0 %v3332
    %3844 = vmatprep.subr.bf16.mxu0 %v3337
    %3845 = vmatpush1.bf16.msra.mxu0 %v3336
    %3846 = vmatprep.subr.bf16.mxu0 %v3341
    %3847 = vmatpush1.bf16.msra.mxu0 %v3340
    %3848 = vmatprep.subr.bf16.mxu0 %v3345
    %3849 = vmatpush1.bf16.msra.mxu0 %v3344
    %3850 = vmatprep.subr.bf16.mxu0 %v3349
    %3851 = vmatpush1.bf16.msra.mxu0 %v3348
    %3852 = vmatprep.subr.bf16.mxu0 %v3353
    %3853 = vmatpush1.bf16.msra.mxu0 %v3352
    %3854 = vmatprep.subr.bf16.mxu0 %v3357
    %3855 = vmatpush1.bf16.msra.mxu0 %v3356
    %3856 = vmatprep.subr.bf16.mxu0 %v3361
    %3857 = vmatpush1.bf16.msra.mxu0 %v3360
    %3858 = vmatprep.subr.bf16.mxu0 %v3365
    %3859 = vmatpush1.bf16.msra.mxu0 %v3364
    %3860 = vmatprep.subr.bf16.mxu0 %v3369
    %3861 = vmatpush1.bf16.msra.mxu0 %v3368
    %3862 = vmatprep.subr.bf16.mxu0 %v3373
    %3863 = vmatpush1.bf16.msra.mxu0 %v3372
    %3864 = vmatprep.subr.bf16.mxu0 %v3377
    %3865 = vmatpush1.bf16.msra.mxu0 %v3376
    %3866 = vmatprep.subr.bf16.mxu0 %v3381
    %3867 = vmatpush1.bf16.msra.mxu0 %v3380
    %3868 = vmatprep.subr.bf16.mxu0 %v3385
    %3869 = vmatpush1.bf16.msra.mxu0 %v3384
    %3870 = vmatprep.subr.bf16.mxu0 %v3389
    %3871 = vmatpush1.bf16.msra.mxu0 %v3388
    %3872 = vmatprep.mubr.bf16.mxu0 %v2275
    %3873 = vmatmul.mubr.bf16.gmra.mrb[0].mxu0 %v2274
    %v3874 = vpop.f32.mrb[0].mxu0
    %v3875 = vadd.f32 %v2543, %v3874
    %v3876 = vpop.f32.mrb[0].mxu0
    %v3877 = vadd.f32 %v2547, %v3876
    %v3878 = vpop.f32.mrb[0].mxu0
    %v3879 = vpop.f32.mrb[0].mxu0
    %3880 = vdwg.mxu0
    %3881 = vmatprep.subr.bf16.mxu0 %v3393
    %3882 = vmatpush1.bf16.msra.mxu0 %v3392
    %3883 = vmatprep.subr.bf16.mxu0 %v3397
    %3884 = vmatpush1.bf16.msra.mxu0 %v3396
    %3885 = vmatprep.subr.bf16.mxu0 %v3401
    %3886 = vmatpush1.bf16.msra.mxu0 %v3400
    %3887 = vmatprep.subr.bf16.mxu0 %v3405
    %3888 = vmatpush1.bf16.msra.mxu0 %v3404
    %3889 = vmatprep.subr.bf16.mxu0 %v3409
    %3890 = vmatpush1.bf16.msra.mxu0 %v3408
    %3891 = vmatprep.subr.bf16.mxu0 %v3413
    %3892 = vmatpush1.bf16.msra.mxu0 %v3412
    %3893 = vmatprep.subr.bf16.mxu0 %v3417
    %3894 = vmatpush1.bf16.msra.mxu0 %v3416
    %3895 = vmatprep.subr.bf16.mxu0 %v3421
    %3896 = vmatpush1.bf16.msra.mxu0 %v3420
    %3897 = vmatprep.subr.bf16.mxu0 %v3425
    %3898 = vmatpush1.bf16.msra.mxu0 %v3424
    %3899 = vmatprep.subr.bf16.mxu0 %v3429
    %3900 = vmatpush1.bf16.msra.mxu0 %v3428
    %3901 = vmatprep.subr.bf16.mxu0 %v3433
    %3902 = vmatpush1.bf16.msra.mxu0 %v3432
    %3903 = vmatprep.subr.bf16.mxu0 %v3437
    %3904 = vmatpush1.bf16.msra.mxu0 %v3436
    %3905 = vmatprep.subr.bf16.mxu0 %v3441
    %3906 = vmatpush1.bf16.msra.mxu0 %v3440
    %3907 = vmatprep.subr.bf16.mxu0 %v3445
    %3908 = vmatpush1.bf16.msra.mxu0 %v3444
    %3909 = vmatprep.subr.bf16.mxu0 %v3449
    %3910 = vmatpush1.bf16.msra.mxu0 %v3448
    %3911 = vmatprep.subr.bf16.mxu0 %v3453
    %3912 = vmatpush1.bf16.msra.mxu0 %v3452
    %3913 = vmatprep.mubr.bf16.mxu0 %v2277
    %3914 = vmatmul.mubr.bf16.gmra.mrb[0].mxu0 %v2276
    %v3915 = vpop.f32.mrb[0].mxu0
    %v3916 = vadd.f32 %v3875, %v3915
    %v3917 = vpop.f32.mrb[0].mxu0
    %v3918 = vadd.f32 %v3877, %v3917
    %v3919 = vpop.f32.mrb[0].mxu0
    %v3920 = vpop.f32.mrb[0].mxu0
    %3921 = vdwg.mxu0
    %3922 = vmatprep.subr.bf16.mxu0 %v3457
    %3923 = vmatpush1.bf16.msra.mxu0 %v3456
    %3924 = vmatprep.subr.bf16.mxu0 %v3461
    %3925 = vmatpush1.bf16.msra.mxu0 %v3460
    %3926 = vmatprep.subr.bf16.mxu0 %v3465
    %3927 = vmatpush1.bf16.msra.mxu0 %v3464
    %3928 = vmatprep.subr.bf16.mxu0 %v3469
    %3929 = vmatpush1.bf16.msra.mxu0 %v3468
    %3930 = vmatprep.subr.bf16.mxu0 %v3473
    %3931 = vmatpush1.bf16.msra.mxu0 %v3472
    %3932 = vmatprep.subr.bf16.mxu0 %v3477
    %3933 = vmatpush1.bf16.msra.mxu0 %v3476
    %3934 = vmatprep.subr.bf16.mxu0 %v3481
    %3935 = vmatpush1.bf16.msra.mxu0 %v3480
    %3936 = vmatprep.subr.bf16.mxu0 %v3485
    %3937 = vmatpush1.bf16.msra.mxu0 %v3484
    %3938 = vmatprep.subr.bf16.mxu0 %v3489
    %3939 = vmatpush1.bf16.msra.mxu0 %v3488
    %3940 = vmatprep.subr.bf16.mxu0 %v3493
    %3941 = vmatpush1.bf16.msra.mxu0 %v3492
    %3942 = vmatprep.subr.bf16.mxu0 %v3497
    %3943 = vmatpush1.bf16.msra.mxu0 %v3496
    %3944 = vmatprep.subr.bf16.mxu0 %v3501
    %3945 = vmatpush1.bf16.msra.mxu0 %v3500
    %3946 = vmatprep.subr.bf16.mxu0 %v3505
    %3947 = vmatpush1.bf16.msra.mxu0 %v3504
    %3948 = vmatprep.subr.bf16.mxu0 %v3509
    %3949 = vmatpush1.bf16.msra.mxu0 %v3508
    %3950 = vmatprep.subr.bf16.mxu0 %v3513
    %3951 = vmatpush1.bf16.msra.mxu0 %v3512
    %3952 = vmatprep.subr.bf16.mxu0 %v3517
    %3953 = vmatpush1.bf16.msra.mxu0 %v3516
    %3954 = vmatprep.mubr.bf16.mxu0 %v2279
    %3955 = vmatmul.mubr.bf16.gmra.mrb[0].mxu0 %v2278
    %v3956 = vpop.f32.mrb[0].mxu0
    %v3957 = vadd.f32 %v3916, %v3956
    %v3958 = vpop.f32.mrb[0].mxu0
    %v3959 = vadd.f32 %v3918, %v3958
    %v3960 = vpop.f32.mrb[0].mxu0
    %v3961 = vpop.f32.mrb[0].mxu0
    %3962 = vdwg.mxu0
    %3963 = vmatprep.subr.bf16.mxu0 %v3521
    %3964 = vmatpush1.bf16.msra.mxu0 %v3520
    %3965 = vmatprep.subr.bf16.mxu0 %v3525
    %3966 = vmatpush1.bf16.msra.mxu0 %v3524
    %3967 = vmatprep.subr.bf16.mxu0 %v3529
    %3968 = vmatpush1.bf16.msra.mxu0 %v3528
    %3969 = vmatprep.subr.bf16.mxu0 %v3533
    %3970 = vmatpush1.bf16.msra.mxu0 %v3532
    %3971 = vmatprep.subr.bf16.mxu0 %v3537
    %3972 = vmatpush1.bf16.msra.mxu0 %v3536
    %3973 = vmatprep.subr.bf16.mxu0 %v3541
    %3974 = vmatpush1.bf16.msra.mxu0 %v3540
    %3975 = vmatprep.subr.bf16.mxu0 %v3545
    %3976 = vmatpush1.bf16.msra.mxu0 %v3544
    %3977 = vmatprep.subr.bf16.mxu0 %v3549
    %3978 = vmatpush1.bf16.msra.mxu0 %v3548
    %3979 = vmatprep.subr.bf16.mxu0 %v3553
    %3980 = vmatpush1.bf16.msra.mxu0 %v3552
    %3981 = vmatprep.subr.bf16.mxu0 %v3557
    %3982 = vmatpush1.bf16.msra.mxu0 %v3556
    %3983 = vmatprep.subr.bf16.mxu0 %v3561
    %3984 = vmatpush1.bf16.msra.mxu0 %v3560
    %3985 = vmatprep.subr.bf16.mxu0 %v3565
    %3986 = vmatpush1.bf16.msra.mxu0 %v3564
    %3987 = vmatprep.subr.bf16.mxu0 %v3569
    %3988 = vmatpush1.bf16.msra.mxu0 %v3568
    %3989 = vmatprep.subr.bf16.mxu0 %v3573
    %3990 = vmatpush1.bf16.msra.mxu0 %v3572
    %3991 = vmatprep.subr.bf16.mxu0 %v3577
    %3992 = vmatpush1.bf16.msra.mxu0 %v3576
    %3993 = vmatprep.subr.bf16.mxu0 %v3581
    %3994 = vmatpush1.bf16.msra.mxu0 %v3580
    %3995 = vmatprep.mubr.bf16.mxu0 %v2281
    %3996 = vmatmul.mubr.bf16.gmra.mrb[0].mxu0 %v2280
    %v3997 = vpop.f32.mrb[0].mxu0
    %v3998 = vadd.f32 %v3957, %v3997
    %v3999 = vpop.f32.mrb[0].mxu0
    %v4000 = vadd.f32 %v3959, %v3999
    %v4001 = vpop.f32.mrb[0].mxu0
    %v4002 = vpop.f32.mrb[0].mxu0
    %4003 = vdwg.mxu0
    %4004 = vmatprep.subr.bf16.mxu0 %v3331
    %4005 = vmatpush1.bf16.msra.mxu0 %v3330
    %4006 = vmatprep.subr.bf16.mxu0 %v3335
    %4007 = vmatpush1.bf16.msra.mxu0 %v3334
    %4008 = vmatprep.subr.bf16.mxu0 %v3339
    %4009 = vmatpush1.bf16.msra.mxu0 %v3338
    %4010 = vmatprep.subr.bf16.mxu0 %v3343
    %4011 = vmatpush1.bf16.msra.mxu0 %v3342
    %4012 = vmatprep.subr.bf16.mxu0 %v3347
    %4013 = vmatpush1.bf16.msra.mxu0 %v3346
    %4014 = vmatprep.subr.bf16.mxu0 %v3351
    %4015 = vmatpush1.bf16.msra.mxu0 %v3350
    %4016 = vmatprep.subr.bf16.mxu0 %v3355
    %4017 = vmatpush1.bf16.msra.mxu0 %v3354
    %4018 = vmatprep.subr.bf16.mxu0 %v3359
    %4019 = vmatpush1.bf16.msra.mxu0 %v3358
    %4020 = vmatprep.subr.bf16.mxu0 %v3363
    %4021 = vmatpush1.bf16.msra.mxu0 %v3362
    %4022 = vmatprep.subr.bf16.mxu0 %v3367
    %4023 = vmatpush1.bf16.msra.mxu0 %v3366
    %4024 = vmatprep.subr.bf16.mxu0 %v3371
    %4025 = vmatpush1.bf16.msra.mxu0 %v3370
    %4026 = vmatprep.subr.bf16.mxu0 %v3375
    %4027 = vmatpush1.bf16.msra.mxu0 %v3374
    %4028 = vmatprep.subr.bf16.mxu0 %v3379
    %4029 = vmatpush1.bf16.msra.mxu0 %v3378
    %4030 = vmatprep.subr.bf16.mxu0 %v3383
    %4031 = vmatpush1.bf16.msra.mxu0 %v3382
    %4032 = vmatprep.subr.bf16.mxu0 %v3387
    %4033 = vmatpush1.bf16.msra.mxu0 %v3386
    %4034 = vmatprep.subr.bf16.mxu0 %v3391
    %4035 = vmatpush1.bf16.msra.mxu0 %v3390
    %4036 = vmatprep.mubr.bf16.mxu0 %v2275
    %4037 = vmatmul.mubr.bf16.gmra.mrb[0].mxu0 %v2274
    %v4038 = vpop.f32.mrb[0].mxu0
    %v4039 = vadd.f32 %v2551, %v4038
    %v4040 = vpop.f32.mrb[0].mxu0
    %v4041 = vadd.f32 %v2555, %v4040
    %v4042 = vpop.f32.mrb[0].mxu0
    %v4043 = vpop.f32.mrb[0].mxu0
    %4044 = vdwg.mxu0
    %4045 = vmatprep.subr.bf16.mxu0 %v3395
    %4046 = vmatpush1.bf16.msra.mxu0 %v3394
    %4047 = vmatprep.subr.bf16.mxu0 %v3399
    %4048 = vmatpush1.bf16.msra.mxu0 %v3398
    %4049 = vmatprep.subr.bf16.mxu0 %v3403
    %4050 = vmatpush1.bf16.msra.mxu0 %v3402
    %4051 = vmatprep.subr.bf16.mxu0 %v3407
    %4052 = vmatpush1.bf16.msra.mxu0 %v3406
    %4053 = vmatprep.subr.bf16.mxu0 %v3411
    %4054 = vmatpush1.bf16.msra.mxu0 %v3410
    %4055 = vmatprep.subr.bf16.mxu0 %v3415
    %4056 = vmatpush1.bf16.msra.mxu0 %v3414
    %4057 = vmatprep.subr.bf16.mxu0 %v3419
    %4058 = vmatpush1.bf16.msra.mxu0 %v3418
    %4059 = vmatprep.subr.bf16.mxu0 %v3423
    %4060 = vmatpush1.bf16.msra.mxu0 %v3422
    %4061 = vmatprep.subr.bf16.mxu0 %v3427
    %4062 = vmatpush1.bf16.msra.mxu0 %v3426
    %4063 = vmatprep.subr.bf16.mxu0 %v3431
    %4064 = vmatpush1.bf16.msra.mxu0 %v3430
    %4065 = vmatprep.subr.bf16.mxu0 %v3435
    %4066 = vmatpush1.bf16.msra.mxu0 %v3434
    %4067 = vmatprep.subr.bf16.mxu0 %v3439
    %4068 = vmatpush1.bf16.msra.mxu0 %v3438
    %4069 = vmatprep.subr.bf16.mxu0 %v3443
    %4070 = vmatpush1.bf16.msra.mxu0 %v3442
    %4071 = vmatprep.subr.bf16.mxu0 %v3447
    %4072 = vmatpush1.bf16.msra.mxu0 %v3446
    %4073 = vmatprep.subr.bf16.mxu0 %v3451
    %4074 = vmatpush1.bf16.msra.mxu0 %v3450
    %4075 = vmatprep.subr.bf16.mxu0 %v3455
    %4076 = vmatpush1.bf16.msra.mxu0 %v3454
    %4077 = vmatprep.mubr.bf16.mxu0 %v2277
    %4078 = vmatmul.mubr.bf16.gmra.mrb[0].mxu0 %v2276
    %v4079 = vpop.f32.mrb[0].mxu0
    %v4080 = vadd.f32 %v4039, %v4079
    %v4081 = vpop.f32.mrb[0].mxu0
    %v4082 = vadd.f32 %v4041, %v4081
    %v4083 = vpop.f32.mrb[0].mxu0
    %v4084 = vpop.f32.mrb[0].mxu0
    %4085 = vdwg.mxu0
    %4086 = vmatprep.subr.bf16.mxu0 %v3459
    %4087 = vmatpush1.bf16.msra.mxu0 %v3458
    %4088 = vmatprep.subr.bf16.mxu0 %v3463
    %4089 = vmatpush1.bf16.msra.mxu0 %v3462
    %4090 = vmatprep.subr.bf16.mxu0 %v3467
    %4091 = vmatpush1.bf16.msra.mxu0 %v3466
    %4092 = vmatprep.subr.bf16.mxu0 %v3471
    %4093 = vmatpush1.bf16.msra.mxu0 %v3470
    %4094 = vmatprep.subr.bf16.mxu0 %v3475
    %4095 = vmatpush1.bf16.msra.mxu0 %v3474
    %4096 = vmatprep.subr.bf16.mxu0 %v3479
    %4097 = vmatpush1.bf16.msra.mxu0 %v3478
    %4098 = vmatprep.subr.bf16.mxu0 %v3483
    %4099 = vmatpush1.bf16.msra.mxu0 %v3482
    %4100 = vmatprep.subr.bf16.mxu0 %v3487
    %4101 = vmatpush1.bf16.msra.mxu0 %v3486
    %4102 = vmatprep.subr.bf16.mxu0 %v3491
    %4103 = vmatpush1.bf16.msra.mxu0 %v3490
    %4104 = vmatprep.subr.bf16.mxu0 %v3495
    %4105 = vmatpush1.bf16.msra.mxu0 %v3494
    %4106 = vmatprep.subr.bf16.mxu0 %v3499
    %4107 = vmatpush1.bf16.msra.mxu0 %v3498
    %4108 = vmatprep.subr.bf16.mxu0 %v3503
    %4109 = vmatpush1.bf16.msra.mxu0 %v3502
    %4110 = vmatprep.subr.bf16.mxu0 %v3507
    %4111 = vmatpush1.bf16.msra.mxu0 %v3506
    %4112 = vmatprep.subr.bf16.mxu0 %v3511
    %4113 = vmatpush1.bf16.msra.mxu0 %v3510
    %4114 = vmatprep.subr.bf16.mxu0 %v3515
    %4115 = vmatpush1.bf16.msra.mxu0 %v3514
    %4116 = vmatprep.subr.bf16.mxu0 %v3519
    %4117 = vmatpush1.bf16.msra.mxu0 %v3518
    %4118 = vmatprep.mubr.bf16.mxu0 %v2279
    %4119 = vmatmul.mubr.bf16.gmra.mrb[0].mxu0 %v2278
    %v4120 = vpop.f32.mrb[0].mxu0
    %v4121 = vadd.f32 %v4080, %v4120
    %v4122 = vpop.f32.mrb[0].mxu0
    %v4123 = vadd.f32 %v4082, %v4122
    %v4124 = vpop.f32.mrb[0].mxu0
    %v4125 = vpop.f32.mrb[0].mxu0
    %4126 = vdwg.mxu0
    %4127 = vmatprep.subr.bf16.mxu0 %v3523
    %4128 = vmatpush1.bf16.msra.mxu0 %v3522
    %4129 = vmatprep.subr.bf16.mxu0 %v3527
    %4130 = vmatpush1.bf16.msra.mxu0 %v3526
    %4131 = vmatprep.subr.bf16.mxu0 %v3531
    %4132 = vmatpush1.bf16.msra.mxu0 %v3530
    %4133 = vmatprep.subr.bf16.mxu0 %v3535
    %4134 = vmatpush1.bf16.msra.mxu0 %v3534
    %4135 = vmatprep.subr.bf16.mxu0 %v3539
    %4136 = vmatpush1.bf16.msra.mxu0 %v3538
    %4137 = vmatprep.subr.bf16.mxu0 %v3543
    %4138 = vmatpush1.bf16.msra.mxu0 %v3542
    %4139 = vmatprep.subr.bf16.mxu0 %v3547
    %4140 = vmatpush1.bf16.msra.mxu0 %v3546
    %4141 = vmatprep.subr.bf16.mxu0 %v3551
    %4142 = vmatpush1.bf16.msra.mxu0 %v3550
    %4143 = vmatprep.subr.bf16.mxu0 %v3555
    %4144 = vmatpush1.bf16.msra.mxu0 %v3554
    %4145 = vmatprep.subr.bf16.mxu0 %v3559
    %4146 = vmatpush1.bf16.msra.mxu0 %v3558
    %4147 = vmatprep.subr.bf16.mxu0 %v3563
    %4148 = vmatpush1.bf16.msra.mxu0 %v3562
    %4149 = vmatprep.subr.bf16.mxu0 %v3567
    %4150 = vmatpush1.bf16.msra.mxu0 %v3566
    %4151 = vmatprep.subr.bf16.mxu0 %v3571
    %4152 = vmatpush1.bf16.msra.mxu0 %v3570
    %4153 = vmatprep.subr.bf16.mxu0 %v3575
    %4154 = vmatpush1.bf16.msra.mxu0 %v3574
    %4155 = vmatprep.subr.bf16.mxu0 %v3579
    %4156 = vmatpush1.bf16.msra.mxu0 %v3578
    %4157 = vmatprep.subr.bf16.mxu0 %v3583
    %4158 = vmatpush1.bf16.msra.mxu0 %v3582
    %4159 = vmatprep.mubr.bf16.mxu0 %v2281
    %4160 = vmatmul.mubr.bf16.gmra.mrb[0].mxu0 %v2280
    %v4161 = vpop.f32.mrb[0].mxu0
    %v4162 = vadd.f32 %v4121, %v4161
    %v4163 = vpop.f32.mrb[0].mxu0
    %v4164 = vadd.f32 %v4123, %v4163
    %v4165 = vpop.f32.mrb[0].mxu0
    %v4166 = vpop.f32.mrb[0].mxu0
    %4167 = vdwg.mxu0
    %v4172 = vcombine.low %v3998, %v4000
    %v4173 = vcombine.low %v4162, %v4164
    %v4175 = vunpack.c.l.s4 1983009808
    %v4176 = vunpack.c.0.s8 %v4175
    %v4177 = vlaneseq
    %v4178 = vshrl.u32 %v4177, 7
    %v4179 = vsub.s32 %v4176, %v4178
    %v4180 = vrot.slane %v4172, %v4179
    %v4182 = vunpack.c.l.s4 1983009808
    %v4183 = vunpack.c.0.s8 %v4182
    %v4184 = vlaneseq
    %v4185 = vshrl.u32 %v4184, 7
    %v4186 = vsub.s32 %v4183, %v4185
    %v4187 = vrot.slane %v4173, %v4186
    %v4188 = vcombine.low %v4180, %v4187
    %4190 = vst [vmem:[#allocation5] sm:$0xff] %v4188
    // Predicated region
    $region34: #{image_encoder_forward.25} parent=1 // pred_check
      _
    $region35: #{image_encoder_forward.25} parent=1 // pred_check_branch
      %4192 = sbr.rel (0) target = $region37
    $region36: #{image_encoder_forward.25} parent=1 // pred_region
      %s4194 = ssub.s32 128, 128
      %4195 = vsyncadd [#allocation4], %s4194
      %s4197 = sshll.u32 [#allocation5], 4
      %s4198 = int_to_ptr.vmem [resolvable:$true] %s4197
      %4200 = dma.vmem_to_hbm [thread:$0]  %s4198, 128, %s7, [#allocation4]
    $region37: #{image_encoder_forward.25} parent=1 // pred_fallthru
      _
    // Predicated region
    $region38: #{image_encoder_forward.25} parent=1 // pred_check
      _
    $region39: #{image_encoder_forward.25} parent=1 // pred_check_branch
      %4202 = sbr.rel (0) target = $region41
    $region40: #{image_encoder_forward.25} parent=1 // pred_region
      %4203 = dma.done [#allocation4], 128
    $region41: #{image_encoder_forward.25} parent=1 // pred_fallthru
      _
    %4204 = vsyncpa [#allocation3], 1
    %4205 = vsyncpa [#allocation4], 1

</llo_original>
